<compile_context>
chip_gen: v7x
topology: tpu7x:2x2x1
jax: 0.10.0
libtpu: 0.0.40
codegen_flags: <defaults>
</compile_context>

<pallas_src>
import numpy as np
import jax
import jax.numpy as jnp
from jax import lax
from jax.experimental import pallas as pl
from jax.experimental.pallas import tpu as pltpu

EPS = 1e-5


# --------------------------------------------------------------------------------------
# Fused SpatialAttention kernel (one grid step = one batch element)
# --------------------------------------------------------------------------------------
def _sa_kernel(x_ref, w1_ref, s1_ref, t1_ref, wc_ref, tc_ref, o_ref,
               ypad_ref, acc_ref):
    H, W, C0 = x_ref.shape          # e.g. (8, 8, 512)
    C1 = w1_ref.shape[1]            # 256
    HW = H * W

    # ---- conv1x1 + BN (bf16 MXU, f32 epilogue) ----------------------------------
    xm = x_ref[...].reshape(HW, C0)                       # f32, reused for the gate
    y = jnp.dot(xm.astype(jnp.bfloat16), w1_ref[...],
                preferred_element_type=jnp.float32)       # [HW, C1] f32
    y = y * s1_ref[...] + t1_ref[...]

    # ---- zero-padded y held in VMEM (implicit im2col; no HBM patch tensor) ------
    ypad_ref[...] = jnp.zeros_like(ypad_ref)
    ypad_ref[1:H + 1, 1:W + 1, :] = y.reshape(H, W, C1).astype(ypad_ref.dtype)

    # ---- merged (3x3 + 1x3 + 3x1) conv: 9 taps accumulated in f32 ---------------
    acc_ref[...] = jnp.zeros_like(acc_ref)
    for dy in range(3):
        for dx in range(3):
            patch = ypad_ref[dy:dy + H, dx:dx + W, :].reshape(HW, C1)
            acc_ref[...] += jnp.dot(patch, wc_ref[dy, dx],
                                    preferred_element_type=jnp.float32)

    # ---- shift + ReLU + channel-sum gate + multiply with x (all in f32) ---------
    z = jnp.maximum(acc_ref[...] + tc_ref[...], 0.0)      # [HW, 512]
    gate = jnp.sum(z, axis=-1, keepdims=True)             # [HW, 1]
    o_ref[...] = (xm * gate).reshape(H, W, C0).astype(o_ref.dtype)


def spatial_attention_forward(packed, x_nchw):
    """x_nchw: [B, 512, H, W] float32 (PyTorch layout). Returns [B, 512, H, W]."""
    B, C0, H, W = x_nchw.shape
    C1 = packed['w1'].shape[1]
    C2 = packed['wc'].shape[-1]
    x = jnp.transpose(x_nchw, (0, 2, 3, 1)).astype(jnp.float32)   # NHWC

    out_nhwc = pl.pallas_call(
        _sa_kernel,
        out_shape=jax.ShapeDtypeStruct((B, H, W, C0), jnp.float32),
        grid_spec=pltpu.PrefetchScalarGridSpec(
            num_scalar_prefetch=0,
            grid=(B,),
            in_specs=[
                pl.BlockSpec((None, H, W, C0), lambda b: (b, 0, 0, 0)),   # x
                pl.BlockSpec((C0, C1), lambda b: (0, 0)),                 # w1 (bf16)
                pl.BlockSpec((1, C1), lambda b: (0, 0)),                  # s1
                pl.BlockSpec((1, C1), lambda b: (0, 0)),                  # t1
                pl.BlockSpec((3, 3, C1, C2), lambda b: (0, 0, 0, 0)),     # merged 3x3 (bf16)
                pl.BlockSpec((1, C2), lambda b: (0, 0)),                  # merged shift
            ],
            out_specs=pl.BlockSpec((None, H, W, C0), lambda b: (b, 0, 0, 0)),
            scratch_shapes=[
                pltpu.VMEM((H + 2, W + 2, C1), jnp.bfloat16),  # zero-padded y
                pltpu.VMEM((H * W, C2), jnp.float32),          # f32 accumulator
            ],
        ),
        compiler_params=pltpu.CompilerParams(
            dimension_semantics=("parallel",)),
    )(x, packed['w1'], packed['s1'], packed['t1'], packed['wc'], packed['tc'])

    return jnp.transpose(out_nhwc, (0, 3, 1, 2))                   # back to NCHW


# --------------------------------------------------------------------------------------
# One-time weight prepacking (outside the jitted forward)
# --------------------------------------------------------------------------------------
def prepack_params(p):
    """Fold conv bias + inference BatchNorm into per-channel scale/shift, merge the
    3x3 / 1x3 / 3x1 branches (and their BNs) exactly into one 3x3 kernel, cast the
    MXU operands to bf16."""
    def bn_fold(bias, bn):
        g, beta, mean, var = bn
        s = g / jnp.sqrt(var + EPS)
        return s, (bias - mean) * s + beta

    # conv1x1: keep scale/shift separate (applied in f32 epilogue)
    s1, t1 = bn_fold(p['b1'], p['bn1'])
    w1 = jnp.transpose(p['w1'][:, :, 0, 0])                 # [Cin=512, Cout=256]

    # branch convs: fold BN scale into the weights, sum the shifts
    s33, t33 = bn_fold(p['b33'], p['bn33'])
    s13, t13 = bn_fold(p['b13'], p['bn13'])
    s31, t31 = bn_fold(p['b31'], p['bn31'])
    w33 = jnp.transpose(p['w33'], (2, 3, 1, 0)) * s33       # [3,3,256,512]
    w13 = jnp.transpose(p['w13'], (2, 3, 1, 0)) * s13       # [1,3,256,512]
    w31 = jnp.transpose(p['w31'], (2, 3, 1, 0)) * s31       # [3,1,256,512]
    wc = w33
    wc = wc.at[1, :, :, :].add(w13[0])                      # 1x3 -> middle row
    wc = wc.at[:, 1, :, :].add(w31[:, 0])                   # 3x1 -> middle column
    tc = t33 + t13 + t31

    return {
        'w1': w1.astype(jnp.bfloat16),
        's1': s1.reshape(1, -1).astype(jnp.float32),
        't1': t1.reshape(1, -1).astype(jnp.float32),
        'wc': wc.astype(jnp.bfloat16),
        'tc': tc.reshape(1, -1).astype(jnp.float32),
    }


# --------------------------------------------------------------------------------------
# Deterministic parameter construction (matches PyTorch module shapes)
# --------------------------------------------------------------------------------------
def init_params(key):
    it = iter(jax.random.split(key, 24))

    def conv_w(shape):
        fan_in = shape[1] * shape[2] * shape[3]
        return jax.random.normal(next(it), shape, jnp.float32) * np.sqrt(2.0 / fan_in)

    def bias(n):
        return jax.random.normal(next(it), (n,), jnp.float32) * 0.05

    def bn(n):
        g = 1.0 + 0.1 * jax.random.normal(next(it), (n,), jnp.float32)
        b = 0.1 * jax.random.normal(next(it), (n,), jnp.float32)
        m = 0.1 * jax.random.normal(next(it), (n,), jnp.float32)
        v = 0.5 + jax.random.uniform(next(it), (n,), jnp.float32)
        return (g, b, m, v)

    return {
        'w1': conv_w((256, 512, 1, 1)), 'b1': bias(256), 'bn1': bn(256),
        'w33': conv_w((512, 256, 3, 3)), 'b33': bias(512), 'bn33': bn(512),
        'w13': conv_w((512, 256, 1, 3)), 'b13': bias(512), 'bn13': bn(512),
        'w31': conv_w((512, 256, 3, 1)), 'b31': bias(512), 'bn31': bn(512),
    }


# --------------------------------------------------------------------------------------
# Pure-JAX f32 reference (mirrors the PyTorch forward exactly; inference-mode BN)
# --------------------------------------------------------------------------------------
def spatial_attention_ref(p, x):
    def conv(x, w, b, pad):
        out = lax.conv_general_dilated(
            x, w, window_strides=(1, 1), padding=pad,
            dimension_numbers=('NCHW', 'OIHW', 'NCHW'))
        return out + b[None, :, None, None]

    def bn(x, stats):
        g, beta, mean, var = stats
        s = g / jnp.sqrt(var + EPS)
        return (x - mean[None, :, None, None]) * s[None, :, None, None] \
            + beta[None, :, None, None]

    y = bn(conv(x, p['w1'], p['b1'], [(0, 0), (0, 0)]), p['bn1'])
    z = (bn(conv(y, p['w33'], p['b33'], [(1, 1), (1, 1)]), p['bn33'])
         + bn(conv(y, p['w13'], p['b13'], [(0, 0), (1, 1)]), p['bn13'])
         + bn(conv(y, p['w31'], p['b31'], [(1, 1), (0, 0)]), p['bn31']))
    z = jnp.maximum(z, 0.0)
    gate = jnp.sum(z, axis=1, keepdims=True)
    return x * gate


if __name__ == "__main__":
    root = jax.random.PRNGKey(0)
    pkey, xkey = jax.random.split(root)

    params = init_params(pkey)
    packed = prepack_params(params)

    B, C, H, W = 2, 512, 8, 8                      # 512 in-channels fixed by the module
    x = jax.random.normal(xkey, (B, C, H, W), jnp.float32)

    fwd = jax.jit(spatial_attention_forward)
    out = fwd(packed, x)
    jax.block_until_ready(out)
    assert out.shape == (B, C, H, W)

    ref = spatial_attention_ref(params, x)
    denom = jnp.maximum(jnp.max(jnp.abs(ref)), 1.0)
    rel_err = float(jnp.max(jnp.abs(out - ref)) / denom)
    assert rel_err < 2e-2, f"relative error too large: {rel_err}"

    print("KERNEL_OK")
</pallas_src>

<mosaic_0001>
module attributes {stable_mosaic.version = 11 : i64} {
  func.func @_sa_kernel(%arg0: i32, %arg1: memref<1x8x8x512xf32, #tpu.memory_space<vmem>>, %arg2: memref<512x256xbf16, #tpu.memory_space<vmem>>, %arg3: memref<1x256xf32, #tpu.memory_space<vmem>>, %arg4: memref<1x256xf32, #tpu.memory_space<vmem>>, %arg5: memref<3x3x256x512xbf16, #tpu.memory_space<vmem>>, %arg6: memref<1x512xf32, #tpu.memory_space<vmem>>, %arg7: memref<1x8x8x512xf32, #tpu.memory_space<vmem>>, %arg8: memref<10x10x256xbf16, #tpu.memory_space<vmem>>, %arg9: memref<64x512xf32, #tpu.memory_space<vmem>>) attributes {dimension_semantics = [#tpu.dimension_semantics<parallel>], iteration_bounds = array<i64: 2>, scalar_prefetch = 0 : i64, scratch_operands = 2 : i64, tpu.core_type = #tpu.core_type<tc>, window_params = [{transform_indices = @transform_0, window_bounds = array<i64: 1, 8, 8, 512>}, {pipeline_mode = #tpu.pipeline_mode<synchronous>, transform_indices = @transform_1, window_bounds = array<i64: 512, 256>}, {pipeline_mode = #tpu.pipeline_mode<synchronous>, transform_indices = @transform_2, window_bounds = array<i64: 1, 256>}, {pipeline_mode = #tpu.pipeline_mode<synchronous>, transform_indices = @transform_3, window_bounds = array<i64: 1, 256>}, {pipeline_mode = #tpu.pipeline_mode<synchronous>, transform_indices = @transform_4, window_bounds = array<i64: 3, 3, 256, 512>}, {pipeline_mode = #tpu.pipeline_mode<synchronous>, transform_indices = @transform_5, window_bounds = array<i64: 1, 512>}, {transform_indices = @transform_6, window_bounds = array<i64: 1, 8, 8, 512>}]} {
    %c0 = arith.constant 0 : index
    %c0_0 = arith.constant 0 : index
    %c0_1 = arith.constant 0 : index
    %c0_2 = arith.constant 0 : index
    %0 = vector.load %arg1[%c0, %c0_0, %c0_1, %c0_2] : memref<1x8x8x512xf32, #tpu.memory_space<vmem>>, vector<1x8x8x512xf32>
    %1 = vector.shape_cast %0 : vector<1x8x8x512xf32> to vector<8x8x512xf32>
    %2 = vector.shape_cast %1 : vector<8x8x512xf32> to vector<64x512xf32>
    %3 = arith.truncf %2 : vector<64x512xf32> to vector<64x512xbf16>
    %c0_3 = arith.constant 0 : index
    %c0_4 = arith.constant 0 : index
    %4 = vector.load %arg2[%c0_3, %c0_4] : memref<512x256xbf16, #tpu.memory_space<vmem>>, vector<512x256xbf16>
    %cst = arith.constant dense<0.000000e+00> : vector<64x256xf32>
    %5 = tpu.matmul %3, %4, %cst {dimension_numbers = #tpu.dot_dimension_numbers<[1], [0], [0], [1], [0, 0, 1, 1], [], []>} : vector<64x512xbf16>, vector<512x256xbf16>, vector<64x256xf32> -> vector<64x256xf32>
    %c0_5 = arith.constant 0 : index
    %c0_6 = arith.constant 0 : index
    %6 = vector.load %arg3[%c0_5, %c0_6] : memref<1x256xf32, #tpu.memory_space<vmem>>, vector<1x256xf32>
    %7 = vector.broadcast %6 : vector<1x256xf32> to vector<64x256xf32>
    %8 = arith.mulf %5, %7 : vector<64x256xf32>
    %c0_7 = arith.constant 0 : index
    %c0_8 = arith.constant 0 : index
    %9 = vector.load %arg4[%c0_7, %c0_8] : memref<1x256xf32, #tpu.memory_space<vmem>>, vector<1x256xf32>
    %10 = vector.broadcast %9 : vector<1x256xf32> to vector<64x256xf32>
    %11 = arith.addf %8, %10 : vector<64x256xf32>
    %cst_9 = arith.constant 0.000000e+00 : bf16
    %12 = vector.broadcast %cst_9 : bf16 to vector<10x10x256xbf16>
    %c0_10 = arith.constant 0 : index
    %c0_11 = arith.constant 0 : index
    %c0_12 = arith.constant 0 : index
    %13 = vector.load %arg8[%c0_10, %c0_11, %c0_12] : memref<10x10x256xbf16, #tpu.memory_space<vmem>>, vector<10x10x256xbf16>
    tpu.vector_store %arg8[%c0_10, %c0_11, %c0_12], %12 {strides = array<i32>} : memref<10x10x256xbf16, #tpu.memory_space<vmem>>, vector<10x10x256xbf16>,
    %14 = vector.shape_cast %11 : vector<64x256xf32> to vector<8x8x256xf32>
    %15 = arith.truncf %14 : vector<8x8x256xf32> to vector<8x8x256xbf16>
    %c1 = arith.constant 1 : index
    %c1_13 = arith.constant 1 : index
    %c0_14 = arith.constant 0 : index
    %16 = vector.load %arg8[%c1, %c1_13, %c0_14] : memref<10x10x256xbf16, #tpu.memory_space<vmem>>, vector<8x8x256xbf16>
    tpu.vector_store %arg8[%c1, %c1_13, %c0_14], %15 {strides = array<i32>} : memref<10x10x256xbf16, #tpu.memory_space<vmem>>, vector<8x8x256xbf16>,
    %cst_15 = arith.constant 0.000000e+00 : f32
    %17 = vector.broadcast %cst_15 : f32 to vector<64x512xf32>
    %c0_16 = arith.constant 0 : index
    %c0_17 = arith.constant 0 : index
    %18 = vector.load %arg9[%c0_16, %c0_17] : memref<64x512xf32, #tpu.memory_space<vmem>>, vector<64x512xf32>
    tpu.vector_store %arg9[%c0_16, %c0_17], %17 {strides = array<i32>} : memref<64x512xf32, #tpu.memory_space<vmem>>, vector<64x512xf32>,
    %c0_18 = arith.constant 0 : index
    %c0_19 = arith.constant 0 : index
    %c0_20 = arith.constant 0 : index
    %19 = vector.load %arg8[%c0_18, %c0_19, %c0_20] : memref<10x10x256xbf16, #tpu.memory_space<vmem>>, vector<8x8x256xbf16>
    %20 = vector.shape_cast %19 : vector<8x8x256xbf16> to vector<64x256xbf16>
    %c0_21 = arith.constant 0 : index
    %c0_22 = arith.constant 0 : index
    %21 = vector.load %arg9[%c0_21, %c0_22] : memref<64x512xf32, #tpu.memory_space<vmem>>, vector<64x512xf32>
    %c0_23 = arith.constant 0 : index
    %c0_24 = arith.constant 0 : index
    %c0_25 = arith.constant 0 : index
    %c0_26 = arith.constant 0 : index
    %22 = vector.load %arg5[%c0_23, %c0_24, %c0_25, %c0_26] : memref<3x3x256x512xbf16, #tpu.memory_space<vmem>>, vector<1x1x256x512xbf16>
    %23 = vector.shape_cast %22 : vector<1x1x256x512xbf16> to vector<256x512xbf16>
    %cst_27 = arith.constant dense<0.000000e+00> : vector<64x512xf32>
    %24 = tpu.matmul %20, %23, %cst_27 {dimension_numbers = #tpu.dot_dimension_numbers<[1], [0], [0], [1], [0, 0, 1, 1], [], []>} : vector<64x256xbf16>, vector<256x512xbf16>, vector<64x512xf32> -> vector<64x512xf32>
    %25 = arith.addf %21, %24 : vector<64x512xf32>
    %c0_28 = arith.constant 0 : index
    %c0_29 = arith.constant 0 : index
    %26 = vector.load %arg9[%c0_28, %c0_29] : memref<64x512xf32, #tpu.memory_space<vmem>>, vector<64x512xf32>
    tpu.vector_store %arg9[%c0_28, %c0_29], %25 {strides = array<i32>} : memref<64x512xf32, #tpu.memory_space<vmem>>, vector<64x512xf32>,
    %c0_30 = arith.constant 0 : index
    %c1_31 = arith.constant 1 : index
    %c0_32 = arith.constant 0 : index
    %27 = vector.load %arg8[%c0_30, %c1_31, %c0_32] : memref<10x10x256xbf16, #tpu.memory_space<vmem>>, vector<8x8x256xbf16>
    %28 = vector.shape_cast %27 : vector<8x8x256xbf16> to vector<64x256xbf16>
    %c0_33 = arith.constant 0 : index
    %c0_34 = arith.constant 0 : index
    %29 = vector.load %arg9[%c0_33, %c0_34] : memref<64x512xf32, #tpu.memory_space<vmem>>, vector<64x512xf32>
    %c0_35 = arith.constant 0 : index
    %c1_36 = arith.constant 1 : index
    %c0_37 = arith.constant 0 : index
    %c0_38 = arith.constant 0 : index
    %30 = vector.load %arg5[%c0_35, %c1_36, %c0_37, %c0_38] : memref<3x3x256x512xbf16, #tpu.memory_space<vmem>>, vector<1x1x256x512xbf16>
    %31 = vector.shape_cast %30 : vector<1x1x256x512xbf16> to vector<256x512xbf16>
    %cst_39 = arith.constant dense<0.000000e+00> : vector<64x512xf32>
    %32 = tpu.matmul %28, %31, %cst_39 {dimension_numbers = #tpu.dot_dimension_numbers<[1], [0], [0], [1], [0, 0, 1, 1], [], []>} : vector<64x256xbf16>, vector<256x512xbf16>, vector<64x512xf32> -> vector<64x512xf32>
    %33 = arith.addf %29, %32 : vector<64x512xf32>
    %c0_40 = arith.constant 0 : index
    %c0_41 = arith.constant 0 : index
    %34 = vector.load %arg9[%c0_40, %c0_41] : memref<64x512xf32, #tpu.memory_space<vmem>>, vector<64x512xf32>
    tpu.vector_store %arg9[%c0_40, %c0_41], %33 {strides = array<i32>} : memref<64x512xf32, #tpu.memory_space<vmem>>, vector<64x512xf32>,
    %c0_42 = arith.constant 0 : index
    %c2 = arith.constant 2 : index
    %c0_43 = arith.constant 0 : index
    %35 = vector.load %arg8[%c0_42, %c2, %c0_43] : memref<10x10x256xbf16, #tpu.memory_space<vmem>>, vector<8x8x256xbf16>
    %36 = vector.shape_cast %35 : vector<8x8x256xbf16> to vector<64x256xbf16>
    %c0_44 = arith.constant 0 : index
    %c0_45 = arith.constant 0 : index
    %37 = vector.load %arg9[%c0_44, %c0_45] : memref<64x512xf32, #tpu.memory_space<vmem>>, vector<64x512xf32>
    %c0_46 = arith.constant 0 : index
    %c2_47 = arith.constant 2 : index
    %c0_48 = arith.constant 0 : index
    %c0_49 = arith.constant 0 : index
    %38 = vector.load %arg5[%c0_46, %c2_47, %c0_48, %c0_49] : memref<3x3x256x512xbf16, #tpu.memory_space<vmem>>, vector<1x1x256x512xbf16>
    %39 = vector.shape_cast %38 : vector<1x1x256x512xbf16> to vector<256x512xbf16>
    %cst_50 = arith.constant dense<0.000000e+00> : vector<64x512xf32>
    %40 = tpu.matmul %36, %39, %cst_50 {dimension_numbers = #tpu.dot_dimension_numbers<[1], [0], [0], [1], [0, 0, 1, 1], [], []>} : vector<64x256xbf16>, vector<256x512xbf16>, vector<64x512xf32> -> vector<64x512xf32>
    %41 = arith.addf %37, %40 : vector<64x512xf32>
    %c0_51 = arith.constant 0 : index
    %c0_52 = arith.constant 0 : index
    %42 = vector.load %arg9[%c0_51, %c0_52] : memref<64x512xf32, #tpu.memory_space<vmem>>, vector<64x512xf32>
    tpu.vector_store %arg9[%c0_51, %c0_52], %41 {strides = array<i32>} : memref<64x512xf32, #tpu.memory_space<vmem>>, vector<64x512xf32>,
    %c1_53 = arith.constant 1 : index
    %c0_54 = arith.constant 0 : index
    %c0_55 = arith.constant 0 : index
    %43 = vector.load %arg8[%c1_53, %c0_54, %c0_55] : memref<10x10x256xbf16, #tpu.memory_space<vmem>>, vector<8x8x256xbf16>
    %44 = vector.shape_cast %43 : vector<8x8x256xbf16> to vector<64x256xbf16>
    %c0_56 = arith.constant 0 : index
    %c0_57 = arith.constant 0 : index
    %45 = vector.load %arg9[%c0_56, %c0_57] : memref<64x512xf32, #tpu.memory_space<vmem>>, vector<64x512xf32>
    %c1_58 = arith.constant 1 : index
    %c0_59 = arith.constant 0 : index
    %c0_60 = arith.constant 0 : index
    %c0_61 = arith.constant 0 : index
    %46 = vector.load %arg5[%c1_58, %c0_59, %c0_60, %c0_61] : memref<3x3x256x512xbf16, #tpu.memory_space<vmem>>, vector<1x1x256x512xbf16>
    %47 = vector.shape_cast %46 : vector<1x1x256x512xbf16> to vector<256x512xbf16>
    %cst_62 = arith.constant dense<0.000000e+00> : vector<64x512xf32>
    %48 = tpu.matmul %44, %47, %cst_62 {dimension_numbers = #tpu.dot_dimension_numbers<[1], [0], [0], [1], [0, 0, 1, 1], [], []>} : vector<64x256xbf16>, vector<256x512xbf16>, vector<64x512xf32> -> vector<64x512xf32>
    %49 = arith.addf %45, %48 : vector<64x512xf32>
    %c0_63 = arith.constant 0 : index
    %c0_64 = arith.constant 0 : index
    %50 = vector.load %arg9[%c0_63, %c0_64] : memref<64x512xf32, #tpu.memory_space<vmem>>, vector<64x512xf32>
    tpu.vector_store %arg9[%c0_63, %c0_64], %49 {strides = array<i32>} : memref<64x512xf32, #tpu.memory_space<vmem>>, vector<64x512xf32>,
    %c1_65 = arith.constant 1 : index
    %c1_66 = arith.constant 1 : index
    %c0_67 = arith.constant 0 : index
    %51 = vector.load %arg8[%c1_65, %c1_66, %c0_67] : memref<10x10x256xbf16, #tpu.memory_space<vmem>>, vector<8x8x256xbf16>
    %52 = vector.shape_cast %51 : vector<8x8x256xbf16> to vector<64x256xbf16>
    %c0_68 = arith.constant 0 : index
    %c0_69 = arith.constant 0 : index
    %53 = vector.load %arg9[%c0_68, %c0_69] : memref<64x512xf32, #tpu.memory_space<vmem>>, vector<64x512xf32>
    %c1_70 = arith.constant 1 : index
    %c1_71 = arith.constant 1 : index
    %c0_72 = arith.constant 0 : index
    %c0_73 = arith.constant 0 : index
    %54 = vector.load %arg5[%c1_70, %c1_71, %c0_72, %c0_73] : memref<3x3x256x512xbf16, #tpu.memory_space<vmem>>, vector<1x1x256x512xbf16>
    %55 = vector.shape_cast %54 : vector<1x1x256x512xbf16> to vector<256x512xbf16>
    %cst_74 = arith.constant dense<0.000000e+00> : vector<64x512xf32>
    %56 = tpu.matmul %52, %55, %cst_74 {dimension_numbers = #tpu.dot_dimension_numbers<[1], [0], [0], [1], [0, 0, 1, 1], [], []>} : vector<64x256xbf16>, vector<256x512xbf16>, vector<64x512xf32> -> vector<64x512xf32>
    %57 = arith.addf %53, %56 : vector<64x512xf32>
    %c0_75 = arith.constant 0 : index
    %c0_76 = arith.constant 0 : index
    %58 = vector.load %arg9[%c0_75, %c0_76] : memref<64x512xf32, #tpu.memory_space<vmem>>, vector<64x512xf32>
    tpu.vector_store %arg9[%c0_75, %c0_76], %57 {strides = array<i32>} : memref<64x512xf32, #tpu.memory_space<vmem>>, vector<64x512xf32>,
    %c1_77 = arith.constant 1 : index
    %c2_78 = arith.constant 2 : index
    %c0_79 = arith.constant 0 : index
    %59 = vector.load %arg8[%c1_77, %c2_78, %c0_79] : memref<10x10x256xbf16, #tpu.memory_space<vmem>>, vector<8x8x256xbf16>
    %60 = vector.shape_cast %59 : vector<8x8x256xbf16> to vector<64x256xbf16>
    %c0_80 = arith.constant 0 : index
    %c0_81 = arith.constant 0 : index
    %61 = vector.load %arg9[%c0_80, %c0_81] : memref<64x512xf32, #tpu.memory_space<vmem>>, vector<64x512xf32>
    %c1_82 = arith.constant 1 : index
    %c2_83 = arith.constant 2 : index
    %c0_84 = arith.constant 0 : index
    %c0_85 = arith.constant 0 : index
    %62 = vector.load %arg5[%c1_82, %c2_83, %c0_84, %c0_85] : memref<3x3x256x512xbf16, #tpu.memory_space<vmem>>, vector<1x1x256x512xbf16>
    %63 = vector.shape_cast %62 : vector<1x1x256x512xbf16> to vector<256x512xbf16>
    %cst_86 = arith.constant dense<0.000000e+00> : vector<64x512xf32>
    %64 = tpu.matmul %60, %63, %cst_86 {dimension_numbers = #tpu.dot_dimension_numbers<[1], [0], [0], [1], [0, 0, 1, 1], [], []>} : vector<64x256xbf16>, vector<256x512xbf16>, vector<64x512xf32> -> vector<64x512xf32>
    %65 = arith.addf %61, %64 : vector<64x512xf32>
    %c0_87 = arith.constant 0 : index
    %c0_88 = arith.constant 0 : index
    %66 = vector.load %arg9[%c0_87, %c0_88] : memref<64x512xf32, #tpu.memory_space<vmem>>, vector<64x512xf32>
    tpu.vector_store %arg9[%c0_87, %c0_88], %65 {strides = array<i32>} : memref<64x512xf32, #tpu.memory_space<vmem>>, vector<64x512xf32>,
    %c2_89 = arith.constant 2 : index
    %c0_90 = arith.constant 0 : index
    %c0_91 = arith.constant 0 : index
    %67 = vector.load %arg8[%c2_89, %c0_90, %c0_91] : memref<10x10x256xbf16, #tpu.memory_space<vmem>>, vector<8x8x256xbf16>
    %68 = vector.shape_cast %67 : vector<8x8x256xbf16> to vector<64x256xbf16>
    %c0_92 = arith.constant 0 : index
    %c0_93 = arith.constant 0 : index
    %69 = vector.load %arg9[%c0_92, %c0_93] : memref<64x512xf32, #tpu.memory_space<vmem>>, vector<64x512xf32>
    %c2_94 = arith.constant 2 : index
    %c0_95 = arith.constant 0 : index
    %c0_96 = arith.constant 0 : index
    %c0_97 = arith.constant 0 : index
    %70 = vector.load %arg5[%c2_94, %c0_95, %c0_96, %c0_97] : memref<3x3x256x512xbf16, #tpu.memory_space<vmem>>, vector<1x1x256x512xbf16>
    %71 = vector.shape_cast %70 : vector<1x1x256x512xbf16> to vector<256x512xbf16>
    %cst_98 = arith.constant dense<0.000000e+00> : vector<64x512xf32>
    %72 = tpu.matmul %68, %71, %cst_98 {dimension_numbers = #tpu.dot_dimension_numbers<[1], [0], [0], [1], [0, 0, 1, 1], [], []>} : vector<64x256xbf16>, vector<256x512xbf16>, vector<64x512xf32> -> vector<64x512xf32>
    %73 = arith.addf %69, %72 : vector<64x512xf32>
    %c0_99 = arith.constant 0 : index
    %c0_100 = arith.constant 0 : index
    %74 = vector.load %arg9[%c0_99, %c0_100] : memref<64x512xf32, #tpu.memory_space<vmem>>, vector<64x512xf32>
    tpu.vector_store %arg9[%c0_99, %c0_100], %73 {strides = array<i32>} : memref<64x512xf32, #tpu.memory_space<vmem>>, vector<64x512xf32>,
    %c2_101 = arith.constant 2 : index
    %c1_102 = arith.constant 1 : index
    %c0_103 = arith.constant 0 : index
    %75 = vector.load %arg8[%c2_101, %c1_102, %c0_103] : memref<10x10x256xbf16, #tpu.memory_space<vmem>>, vector<8x8x256xbf16>
    %76 = vector.shape_cast %75 : vector<8x8x256xbf16> to vector<64x256xbf16>
    %c0_104 = arith.constant 0 : index
    %c0_105 = arith.constant 0 : index
    %77 = vector.load %arg9[%c0_104, %c0_105] : memref<64x512xf32, #tpu.memory_space<vmem>>, vector<64x512xf32>
    %c2_106 = arith.constant 2 : index
    %c1_107 = arith.constant 1 : index
    %c0_108 = arith.constant 0 : index
    %c0_109 = arith.constant 0 : index
    %78 = vector.load %arg5[%c2_106, %c1_107, %c0_108, %c0_109] : memref<3x3x256x512xbf16, #tpu.memory_space<vmem>>, vector<1x1x256x512xbf16>
    %79 = vector.shape_cast %78 : vector<1x1x256x512xbf16> to vector<256x512xbf16>
    %cst_110 = arith.constant dense<0.000000e+00> : vector<64x512xf32>
    %80 = tpu.matmul %76, %79, %cst_110 {dimension_numbers = #tpu.dot_dimension_numbers<[1], [0], [0], [1], [0, 0, 1, 1], [], []>} : vector<64x256xbf16>, vector<256x512xbf16>, vector<64x512xf32> -> vector<64x512xf32>
    %81 = arith.addf %77, %80 : vector<64x512xf32>
    %c0_111 = arith.constant 0 : index
    %c0_112 = arith.constant 0 : index
    %82 = vector.load %arg9[%c0_111, %c0_112] : memref<64x512xf32, #tpu.memory_space<vmem>>, vector<64x512xf32>
    tpu.vector_store %arg9[%c0_111, %c0_112], %81 {strides = array<i32>} : memref<64x512xf32, #tpu.memory_space<vmem>>, vector<64x512xf32>,
    %c2_113 = arith.constant 2 : index
    %c2_114 = arith.constant 2 : index
    %c0_115 = arith.constant 0 : index
    %83 = vector.load %arg8[%c2_113, %c2_114, %c0_115] : memref<10x10x256xbf16, #tpu.memory_space<vmem>>, vector<8x8x256xbf16>
    %84 = vector.shape_cast %83 : vector<8x8x256xbf16> to vector<64x256xbf16>
    %c0_116 = arith.constant 0 : index
    %c0_117 = arith.constant 0 : index
    %85 = vector.load %arg9[%c0_116, %c0_117] : memref<64x512xf32, #tpu.memory_space<vmem>>, vector<64x512xf32>
    %c2_118 = arith.constant 2 : index
    %c2_119 = arith.constant 2 : index
    %c0_120 = arith.constant 0 : index
    %c0_121 = arith.constant 0 : index
    %86 = vector.load %arg5[%c2_118, %c2_119, %c0_120, %c0_121] : memref<3x3x256x512xbf16, #tpu.memory_space<vmem>>, vector<1x1x256x512xbf16>
    %87 = vector.shape_cast %86 : vector<1x1x256x512xbf16> to vector<256x512xbf16>
    %cst_122 = arith.constant dense<0.000000e+00> : vector<64x512xf32>
    %88 = tpu.matmul %84, %87, %cst_122 {dimension_numbers = #tpu.dot_dimension_numbers<[1], [0], [0], [1], [0, 0, 1, 1], [], []>} : vector<64x256xbf16>, vector<256x512xbf16>, vector<64x512xf32> -> vector<64x512xf32>
    %89 = arith.addf %85, %88 : vector<64x512xf32>
    %c0_123 = arith.constant 0 : index
    %c0_124 = arith.constant 0 : index
    %90 = vector.load %arg9[%c0_123, %c0_124] : memref<64x512xf32, #tpu.memory_space<vmem>>, vector<64x512xf32>
    tpu.vector_store %arg9[%c0_123, %c0_124], %89 {strides = array<i32>} : memref<64x512xf32, #tpu.memory_space<vmem>>, vector<64x512xf32>,
    %c0_125 = arith.constant 0 : index
    %c0_126 = arith.constant 0 : index
    %91 = vector.load %arg9[%c0_125, %c0_126] : memref<64x512xf32, #tpu.memory_space<vmem>>, vector<64x512xf32>
    %c0_127 = arith.constant 0 : index
    %c0_128 = arith.constant 0 : index
    %92 = vector.load %arg6[%c0_127, %c0_128] : memref<1x512xf32, #tpu.memory_space<vmem>>, vector<1x512xf32>
    %93 = vector.broadcast %92 : vector<1x512xf32> to vector<64x512xf32>
    %94 = arith.addf %91, %93 : vector<64x512xf32>
    %cst_129 = arith.constant 0.000000e+00 : f32
    %95 = vector.broadcast %cst_129 : f32 to vector<64x512xf32>
    %96 = arith.maximumf %94, %95 : vector<64x512xf32>
    %cst_130 = arith.constant dense<0.000000e+00> : vector<64xf32>
    %97 = vector.multi_reduction <add>, %96, %cst_130 [1] : vector<64x512xf32> to vector<64xf32>
    %98 = vector.shape_cast %97 : vector<64xf32> to vector<64x1xf32>
    %99 = vector.broadcast %98 : vector<64x1xf32> to vector<64x512xf32>
    %100 = arith.mulf %2, %99 : vector<64x512xf32>
    %101 = vector.shape_cast %100 : vector<64x512xf32> to vector<8x8x512xf32>
    %c0_131 = arith.constant 0 : index
    %c0_132 = arith.constant 0 : index
    %c0_133 = arith.constant 0 : index
    %c0_134 = arith.constant 0 : index
    %102 = vector.load %arg7[%c0_131, %c0_132, %c0_133, %c0_134] : memref<1x8x8x512xf32, #tpu.memory_space<vmem>>, vector<1x8x8x512xf32>
    %103 = vector.shape_cast %102 : vector<1x8x8x512xf32> to vector<8x8x512xf32>
    %104 = vector.shape_cast %101 : vector<8x8x512xf32> to vector<1x8x8x512xf32>
    tpu.vector_store %arg7[%c0_131, %c0_132, %c0_133, %c0_134], %104 {strides = array<i32>} : memref<1x8x8x512xf32, #tpu.memory_space<vmem>>, vector<1x8x8x512xf32>,
    return
  }
  func.func @transform_0(%arg0: i32) -> (i32, i32, i32, i32) {
    %c0_i32 = arith.constant 0 : i32
    %c0_i32_0 = arith.constant 0 : i32
    %c0_i32_1 = arith.constant 0 : i32
    %c0_i32_2 = arith.constant 0 : i32
    return %arg0, %c0_i32, %c0_i32_0, %c0_i32_1 : i32, i32, i32, i32
  }
  func.func @transform_1(%arg0: i32) -> (i32, i32) {
    %c0_i32 = arith.constant 0 : i32
    %c0_i32_0 = arith.constant 0 : i32
    %c0_i32_1 = arith.constant 0 : i32
    return %c0_i32, %c0_i32_0 : i32, i32
  }
  func.func @transform_2(%arg0: i32) -> (i32, i32) {
    %c0_i32 = arith.constant 0 : i32
    %c0_i32_0 = arith.constant 0 : i32
    %c0_i32_1 = arith.constant 0 : i32
    return %c0_i32, %c0_i32_0 : i32, i32
  }
  func.func @transform_3(%arg0: i32) -> (i32, i32) {
    %c0_i32 = arith.constant 0 : i32
    %c0_i32_0 = arith.constant 0 : i32
    %c0_i32_1 = arith.constant 0 : i32
    return %c0_i32, %c0_i32_0 : i32, i32
  }
  func.func @transform_4(%arg0: i32) -> (i32, i32, i32, i32) {
    %c0_i32 = arith.constant 0 : i32
    %c0_i32_0 = arith.constant 0 : i32
    %c0_i32_1 = arith.constant 0 : i32
    %c0_i32_2 = arith.constant 0 : i32
    %c0_i32_3 = arith.constant 0 : i32
    return %c0_i32, %c0_i32_0, %c0_i32_1, %c0_i32_2 : i32, i32, i32, i32
  }
  func.func @transform_5(%arg0: i32) -> (i32, i32) {
    %c0_i32 = arith.constant 0 : i32
    %c0_i32_0 = arith.constant 0 : i32
    %c0_i32_1 = arith.constant 0 : i32
    return %c0_i32, %c0_i32_0 : i32, i32
  }
  func.func @transform_6(%arg0: i32) -> (i32, i32, i32, i32) {
    %c0_i32 = arith.constant 0 : i32
    %c0_i32_0 = arith.constant 0 : i32
    %c0_i32_1 = arith.constant 0 : i32
    %c0_i32_2 = arith.constant 0 : i32
    return %arg0, %c0_i32, %c0_i32_0, %c0_i32_1 : i32, i32, i32, i32
  }
}

</mosaic_0001>

<llo_original>
// kernel: spatial_attention_forward.1
$region0: #{spatial_attention_forward.1}
  #allocation0 [shape = 'u32[]', space=smem, size = 0x4, offset = 0x4, fixed_abs, tag = 'smem constant byte address 0x4 - core index']
  #allocation1 [shape = 'u32[144,128]{1,0:T(1,128)}', space=vmem, size = 0x12000, scoped, tag = 'internal scratch']
  #allocation2 [shape = 'bf16[10,10,256]{2,1,0:T(8,128)(2,1)}', space=vmem, size = 0x14000, scoped, tag = 'scratch operand']
  #allocation3 [shape = 'f32[64,512]{1,0:T(8,128)}', space=vmem, size = 0x20000, scoped, tag = 'scratch operand']
  %s0 = inlined_call_operand.hbm [shape: f32[2,8,8,512], index: 0, kind: input, shape index: {}]
  %s1 = inlined_call_operand.hbm [shape: bf16[512,256], index: 1, kind: input, shape index: {}]
  %s2 = inlined_call_operand.hbm [shape: f32[1,256], index: 2, kind: input, shape index: {}]
  %s3 = inlined_call_operand.hbm [shape: f32[1,256], index: 3, kind: input, shape index: {}]
  %s4 = inlined_call_operand.hbm [shape: bf16[3,3,256,512], index: 4, kind: input, shape index: {}]
  %s5 = inlined_call_operand.hbm [shape: f32[1,512], index: 5, kind: input, shape index: {}]
  %s6 = inlined_call_operand.hbm [shape: f32[2,8,8,512], index: 6, kind: output, shape index: {}]
  %s7 = sld [smem:[#allocation0]]
  $region81: #{spatial_attention_forward.1} parent=0
    _
  %s9 = ssub.s32 1, %s7
  %s10 = scalar_select 0, %s9, %s7
  $region1: #{spatial_attention_forward.1} parent=0
    #allocation4 [shape = 'u8[262144]{0}', space=vmem, size = 0x40000, scoped, tag = 'input window, operand 0']
    #allocation5 [shape = 's32[2]{0}', space=sflag, size = 0x8, scoped, tag = 'scoped memory for spatial_attention_forward.1']
    #allocation6 [shape = 's32[2]{0}', space=sflag, size = 0x8, scoped, tag = 'scoped memory for spatial_attention_forward.1']
    #allocation7 [shape = 'u8[262144]{0}', space=vmem, size = 0x40000, scoped, tag = 'input window, operand 1, single buffered']
    #allocation8 [shape = 's32[1]{0}', space=sflag, size = 0x4, scoped, tag = 'scoped memory for spatial_attention_forward.1']
    #allocation9 [shape = 'u8[1024]{0}', space=vmem, size = 0x400, scoped, tag = 'input window, operand 2, single buffered']
    #allocation10 [shape = 'u8[1024]{0}', space=vmem, size = 0x400, scoped, tag = 'input window, operand 3, single buffered']
    #allocation11 [shape = 's32[1]{0}', space=sflag, size = 0x4, scoped, tag = 'scoped memory for spatial_attention_forward.1']
    #allocation12 [shape = 'u8[2359296]{0}', space=vmem, size = 0x240000, scoped, tag = 'input window, operand 4, single buffered']
    #allocation13 [shape = 'u8[2048]{0}', space=vmem, size = 0x800, scoped, tag = 'input window, operand 5, single buffered']
    #allocation14 [shape = 's32[1]{0}', space=sflag, size = 0x4, scoped, tag = 'scoped memory for spatial_attention_forward.1']
    #allocation15 [shape = 'u8[262144]{0}', space=vmem, size = 0x40000, scoped, tag = 'output window, operand 0']
    %11 = vsyncpa [#allocation5], 0
    %s12 = scalar_lea.sflag [#allocation5], 1
    %13 = vsyncpa %s12, 0
    %14 = vsyncpa [#allocation8], 0
    %15 = vsyncpa [#allocation11], 0
    %16 = vsyncpa [#allocation14], 0
    %17 = vsyncpa [#allocation6], 0
    %s18 = scalar_lea.sflag [#allocation6], 1
    %19 = vsyncpa %s18, 0
    loop: start=0, step=1, limit=4
    $region2: #{spatial_attention_forward.1} parent=1 // loop_pre_header
      _
    $region3: #{spatial_attention_forward.1} parent=1 // loop_header
      %s21 = sphi 0, %s25
      %p22 = scmp.ge.s32.totalorder %s21, 4
      %s31 = sphi 0, %s33
      %s34 = sphi 0, %s31
      %s35 = sphi 0, %s34
      %s51 = sphi 0, %s35
      %s55 = sphi 0, %s55
      %s57 = sphi 0, %s55
      %s58 = sphi 0, %s57
      %s72 = sphi 0, %s58
      %s76 = sphi 0, %s76
      %s78 = sphi 0, %s76
      %s79 = sphi 0, %s78
      %s93 = sphi 0, %s79
      %s97 = sphi 0, %s97
      %s99 = sphi 0, %s97
      %s100 = sphi 0, %s99
      %s114 = sphi 0, %s100
      %s118 = sphi 0, %s118
      %s120 = sphi 0, %s118
      %s121 = sphi 0, %s120
      %s135 = sphi 0, %s121
      %s139 = sphi 0, %s139
      %s141 = sphi 0, %s139
      %s142 = sphi 0, %s141
      %s156 = sphi 0, %s142
      %s162 = sphi 0, %s164
      %s165 = sphi 0, %s162
      %s166 = sphi 0, %s165
      %s182 = sphi 0, %s166
    $region4: #{spatial_attention_forward.1} parent=1 // loop_header_branch
      %24 = sbr.rel (%p22) target = $region8
    $region5: #{spatial_attention_forward.1} parent=1 // loop_body
      %s26 = ssub.s32 %s21, 1
      %s27 = ssub.s32 %s21, 2
      %s28 = sadd.s32 %s21, 1
      %s29 = ssub.s32 %s21, %s28
      %p30 = scmp.eq.s32.totalorder %s29, 0
      %s32 = sadd.s32 %s31, 1
      %s33 = scalar_select %p30, %s31, %s32
      %p36 = pneg %p30
      %p37 = scmp.eq.s32.totalorder %s21, 1
      %p38 = por %p36, %p37
      %p39 = scmp.ne.s32.totalorder %s31, %s34
      %p40 = scmp.eq.s32.totalorder %s21, 0
      %p41 = por %p39, %p40
      %p42 = scmp.ne.s32.totalorder %s31, %s34
      %p43 = scmp.eq.s32.totalorder %s26, 1
      %p44 = por %p42, %p43
      %p45 = scmp.ne.s32.totalorder %s34, %s35
      %p46 = scmp.eq.s32.totalorder %s26, 0
      %p47 = por %p45, %p46
      %p48 = scmp.ne.s32.totalorder %s34, %s35
      %p49 = scmp.eq.s32.totalorder %s27, 1
      %p50 = por %p48, %p49
      %p52 = scmp.ne.s32.totalorder %s35, %s51
      %p53 = scmp.eq.s32.totalorder %s27, 0
      %p54 = por %p52, %p53
      %s56 = sadd.s32 %s55, 1
      %p59 = scmp.eq.s32.totalorder %s21, 1
      %p60 = scmp.ne.s32.totalorder %s55, %s57
      %p61 = scmp.eq.s32.totalorder %s21, 0
      %p62 = por %p60, %p61
      %p63 = scmp.ne.s32.totalorder %s55, %s57
      %p64 = scmp.eq.s32.totalorder %s26, 1
      %p65 = por %p63, %p64
      %p66 = scmp.ne.s32.totalorder %s57, %s58
      %p67 = scmp.eq.s32.totalorder %s26, 0
      %p68 = por %p66, %p67
      %p69 = scmp.ne.s32.totalorder %s57, %s58
      %p70 = scmp.eq.s32.totalorder %s27, 1
      %p71 = por %p69, %p70
      %p73 = scmp.ne.s32.totalorder %s58, %s72
      %p74 = scmp.eq.s32.totalorder %s27, 0
      %p75 = por %p73, %p74
      %s77 = sadd.s32 %s76, 1
      %p80 = scmp.eq.s32.totalorder %s21, 1
      %p81 = scmp.ne.s32.totalorder %s76, %s78
      %p82 = scmp.eq.s32.totalorder %s21, 0
      %p83 = por %p81, %p82
      %p84 = scmp.ne.s32.totalorder %s76, %s78
      %p85 = scmp.eq.s32.totalorder %s26, 1
      %p86 = por %p84, %p85
      %p87 = scmp.ne.s32.totalorder %s78, %s79
      %p88 = scmp.eq.s32.totalorder %s26, 0
      %p89 = por %p87, %p88
      %p90 = scmp.ne.s32.totalorder %s78, %s79
      %p91 = scmp.eq.s32.totalorder %s27, 1
      %p92 = por %p90, %p91
      %p94 = scmp.ne.s32.totalorder %s79, %s93
      %p95 = scmp.eq.s32.totalorder %s27, 0
      %p96 = por %p94, %p95
      %s98 = sadd.s32 %s97, 1
      %p101 = scmp.eq.s32.totalorder %s21, 1
      %p102 = scmp.ne.s32.totalorder %s97, %s99
      %p103 = scmp.eq.s32.totalorder %s21, 0
      %p104 = por %p102, %p103
      %p105 = scmp.ne.s32.totalorder %s97, %s99
      %p106 = scmp.eq.s32.totalorder %s26, 1
      %p107 = por %p105, %p106
      %p108 = scmp.ne.s32.totalorder %s99, %s100
      %p109 = scmp.eq.s32.totalorder %s26, 0
      %p110 = por %p108, %p109
      %p111 = scmp.ne.s32.totalorder %s99, %s100
      %p112 = scmp.eq.s32.totalorder %s27, 1
      %p113 = por %p111, %p112
      %p115 = scmp.ne.s32.totalorder %s100, %s114
      %p116 = scmp.eq.s32.totalorder %s27, 0
      %p117 = por %p115, %p116
      %s119 = sadd.s32 %s118, 1
      %p122 = scmp.eq.s32.totalorder %s21, 1
      %p123 = scmp.ne.s32.totalorder %s118, %s120
      %p124 = scmp.eq.s32.totalorder %s21, 0
      %p125 = por %p123, %p124
      %p126 = scmp.ne.s32.totalorder %s118, %s120
      %p127 = scmp.eq.s32.totalorder %s26, 1
      %p128 = por %p126, %p127
      %p129 = scmp.ne.s32.totalorder %s120, %s121
      %p130 = scmp.eq.s32.totalorder %s26, 0
      %p131 = por %p129, %p130
      %p132 = scmp.ne.s32.totalorder %s120, %s121
      %p133 = scmp.eq.s32.totalorder %s27, 1
      %p134 = por %p132, %p133
      %p136 = scmp.ne.s32.totalorder %s121, %s135
      %p137 = scmp.eq.s32.totalorder %s27, 0
      %p138 = por %p136, %p137
      %s140 = sadd.s32 %s139, 1
      %p143 = scmp.eq.s32.totalorder %s21, 1
      %p144 = scmp.ne.s32.totalorder %s139, %s141
      %p145 = scmp.eq.s32.totalorder %s21, 0
      %p146 = por %p144, %p145
      %p147 = scmp.ne.s32.totalorder %s139, %s141
      %p148 = scmp.eq.s32.totalorder %s26, 1
      %p149 = por %p147, %p148
      %p150 = scmp.ne.s32.totalorder %s141, %s142
      %p151 = scmp.eq.s32.totalorder %s26, 0
      %p152 = por %p150, %p151
      %p153 = scmp.ne.s32.totalorder %s141, %s142
      %p154 = scmp.eq.s32.totalorder %s27, 1
      %p155 = por %p153, %p154
      %p157 = scmp.ne.s32.totalorder %s142, %s156
      %p158 = scmp.eq.s32.totalorder %s27, 0
      %p159 = por %p157, %p158
      %s160 = ssub.s32 %s21, %s28
      %p161 = scmp.eq.s32.totalorder %s160, 0
      %s163 = sadd.s32 %s162, 1
      %s164 = scalar_select %p161, %s162, %s163
      %p167 = pneg %p161
      %p168 = scmp.eq.s32.totalorder %s21, 1
      %p169 = por %p167, %p168
      %p170 = scmp.ne.s32.totalorder %s162, %s165
      %p171 = scmp.eq.s32.totalorder %s21, 0
      %p172 = por %p170, %p171
      %p173 = scmp.ne.s32.totalorder %s162, %s165
      %p174 = scmp.eq.s32.totalorder %s26, 1
      %p175 = por %p173, %p174
      %p176 = scmp.ne.s32.totalorder %s165, %s166
      %p177 = scmp.eq.s32.totalorder %s26, 0
      %p178 = por %p176, %p177
      %p179 = scmp.ne.s32.totalorder %s165, %s166
      %p180 = scmp.eq.s32.totalorder %s27, 1
      %p181 = por %p179, %p180
      %p183 = scmp.ne.s32.totalorder %s166, %s182
      %p184 = scmp.eq.s32.totalorder %s27, 0
      %p185 = por %p183, %p184
      %p186 = scmp.le.s32.totalorder 1, %s21
      %p187 = scmp.lt.s32.totalorder %s21, 3
      %p188 = pnand %p186, %p187
      %p189 = pneg %p188
      // Predicated region
      $region9: #{spatial_attention_forward.1} parent=5 // pred_check
        _
      $region10: #{spatial_attention_forward.1} parent=5 // pred_check_branch
        %191 = sbr.rel (%p188) target = $region12
      $region11: #{spatial_attention_forward.1} parent=5 // pred_region
        %s192 = ssub.s32 %s21, 1
        // Predicated region
        $region13: #{spatial_attention_forward.1} parent=11 // pred_check
          %p193 = pneg %p68
        $region14: #{spatial_attention_forward.1} parent=11 // pred_check_branch
          %195 = sbr.rel (%p193) target = $region16
        $region15: #{spatial_attention_forward.1} parent=11 // pred_region
          %s197 = ssub.s32 8192, 8192
          %198 = vsyncadd [#allocation8], %s197
          %s199 = sshll.u32 [#allocation7], 4
          %s200 = int_to_ptr.vmem [resolvable:$true] %s199
          %205 = dma.hbm_to_vmem [thread:$0]  %s1, 8192, %s200, [#allocation8], 128, 128, 8
        $region16: #{spatial_attention_forward.1} parent=11 // pred_fallthru
          _
        // Predicated region
        $region17: #{spatial_attention_forward.1} parent=11 // pred_check
          %p206 = pneg %p89
        $region18: #{spatial_attention_forward.1} parent=11 // pred_check_branch
          %208 = sbr.rel (%p206) target = $region20
        $region19: #{spatial_attention_forward.1} parent=11 // pred_region
          %s210 = ssub.s32 32, 32
          %211 = vsyncadd [#allocation8], %s210
          %s213 = sshll.u32 [#allocation9], 4
          %s214 = int_to_ptr.vmem [resolvable:$true] %s213
          %216 = dma.hbm_to_vmem [thread:$0]  %s2, 32, %s214, [#allocation8]
        $region20: #{spatial_attention_forward.1} parent=11 // pred_fallthru
          _
        // Predicated region
        $region21: #{spatial_attention_forward.1} parent=11 // pred_check
          %p217 = pneg %p110
        $region22: #{spatial_attention_forward.1} parent=11 // pred_check_branch
          %219 = sbr.rel (%p217) target = $region24
        $region23: #{spatial_attention_forward.1} parent=11 // pred_region
          %s221 = ssub.s32 32, 32
          %222 = vsyncadd [#allocation11], %s221
          %s224 = sshll.u32 [#allocation10], 4
          %s225 = int_to_ptr.vmem [resolvable:$true] %s224
          %227 = dma.hbm_to_vmem [thread:$0]  %s3, 32, %s225, [#allocation11]
        $region24: #{spatial_attention_forward.1} parent=11 // pred_fallthru
          _
        // Predicated region
        $region25: #{spatial_attention_forward.1} parent=11 // pred_check
          %p228 = pneg %p131
        $region26: #{spatial_attention_forward.1} parent=11 // pred_check_branch
          %230 = sbr.rel (%p228) target = $region28
        $region27: #{spatial_attention_forward.1} parent=11 // pred_region
          %s232 = ssub.s32 73728, 73728
          %233 = vsyncadd [#allocation11], %s232
          %s234 = sshll.u32 [#allocation12], 4
          %s235 = int_to_ptr.vmem [resolvable:$true] %s234
          %240 = dma.hbm_to_vmem [thread:$0]  %s4, 73728, %s235, [#allocation11], 256, 256, 16
        $region28: #{spatial_attention_forward.1} parent=11 // pred_fallthru
          _
        // Predicated region
        $region29: #{spatial_attention_forward.1} parent=11 // pred_check
          %p241 = pneg %p152
        $region30: #{spatial_attention_forward.1} parent=11 // pred_check_branch
          %243 = sbr.rel (%p241) target = $region32
        $region31: #{spatial_attention_forward.1} parent=11 // pred_region
          %s245 = ssub.s32 64, 64
          %246 = vsyncadd [#allocation14], %s245
          %s248 = sshll.u32 [#allocation13], 4
          %s249 = int_to_ptr.vmem [resolvable:$true] %s248
          %251 = dma.hbm_to_vmem [thread:$0]  %s5, 64, %s249, [#allocation14]
        $region32: #{spatial_attention_forward.1} parent=11 // pred_fallthru
          _
      $region12: #{spatial_attention_forward.1} parent=5 // pred_fallthru
        _
      %p252 = scmp.lt.s32.totalorder %s21, 2
      // Predicated region
      $region33: #{spatial_attention_forward.1} parent=5 // pred_check
        %p253 = pneg %p252
      $region34: #{spatial_attention_forward.1} parent=5 // pred_check_branch
        %255 = sbr.rel (%p253) target = $region36
      $region35: #{spatial_attention_forward.1} parent=5 // pred_region
        // Predicated region
        $region37: #{spatial_attention_forward.1} parent=35 // pred_check
          %p256 = pneg %p41
        $region38: #{spatial_attention_forward.1} parent=35 // pred_check_branch
          %258 = sbr.rel (%p256) target = $region40
        $region39: #{spatial_attention_forward.1} parent=35 // pred_region
          %s259 = sand.u32 %s31, 1
          %s260 = scalar_lea.sflag [#allocation5], %s259
          %s261 = sand.u32 %s31, 1
          %s262 = smul.addr %s261, 256
          %s263 = scalar_lea.vmem [#allocation4], %s262
          %s265 = ssub.s32 4096, 4096
          %266 = vsyncadd %s260, %s265
          %s267 = smul.addr %s21, 32
          %s268 = smul.addr %s267, 128
          %s269 = scalar_lea.hbm %s0, %s268
          %s270 = sshll.u32 %s263, 4
          %s271 = int_to_ptr.vmem [resolvable:$true] %s270
          %276 = dma.hbm_to_vmem [thread:$0]  %s269, 4096, %s271, %s260, 512, 512, 32
        $region40: #{spatial_attention_forward.1} parent=35 // pred_fallthru
          _
      $region36: #{spatial_attention_forward.1} parent=5 // pred_fallthru
        _
      %p277 = scmp.le.s32.totalorder 1, %s21
      %p278 = scmp.lt.s32.totalorder %s21, 3
      %p279 = pnand %p277, %p278
      %p280 = pneg %p279
      // Predicated region
      $region41: #{spatial_attention_forward.1} parent=5 // pred_check
        _
      $region42: #{spatial_attention_forward.1} parent=5 // pred_check_branch
        %282 = sbr.rel (%p279) target = $region44
      $region43: #{spatial_attention_forward.1} parent=5 // pred_region
        %s283 = ssub.s32 %s21, 1
        %s284 = sand.u32 %s34, 1
        %s285 = scalar_lea.sflag [#allocation5], %s284
        %s286 = sand.u32 %s34, 1
        %s287 = smul.addr %s286, 256
        %s288 = scalar_lea.vmem [#allocation4], %s287
        // Predicated region
        $region45: #{spatial_attention_forward.1} parent=43 // pred_check
          %p289 = pneg %p47
        $region46: #{spatial_attention_forward.1} parent=43 // pred_check_branch
          %291 = sbr.rel (%p289) target = $region48
        $region47: #{spatial_attention_forward.1} parent=43 // pred_region
          %292 = dma.done %s285, 4096
        $region48: #{spatial_attention_forward.1} parent=43 // pred_fallthru
          _
        // Predicated region
        $region49: #{spatial_attention_forward.1} parent=43 // pred_check
          %p293 = pneg %p68
        $region50: #{spatial_attention_forward.1} parent=43 // pred_check_branch
          %295 = sbr.rel (%p293) target = $region52
        $region51: #{spatial_attention_forward.1} parent=43 // pred_region
          %296 = dma.done [#allocation8], 8192
        $region52: #{spatial_attention_forward.1} parent=43 // pred_fallthru
          _
        // Predicated region
        $region53: #{spatial_attention_forward.1} parent=43 // pred_check
          %p297 = pneg %p89
        $region54: #{spatial_attention_forward.1} parent=43 // pred_check_branch
          %299 = sbr.rel (%p297) target = $region56
        $region55: #{spatial_attention_forward.1} parent=43 // pred_region
          %300 = dma.done [#allocation8], 32
        $region56: #{spatial_attention_forward.1} parent=43 // pred_fallthru
          _
        // Predicated region
        $region57: #{spatial_attention_forward.1} parent=43 // pred_check
          %p301 = pneg %p110
        $region58: #{spatial_attention_forward.1} parent=43 // pred_check_branch
          %303 = sbr.rel (%p301) target = $region60
        $region59: #{spatial_attention_forward.1} parent=43 // pred_region
          %304 = dma.done [#allocation11], 32
        $region60: #{spatial_attention_forward.1} parent=43 // pred_fallthru
          _
        // Predicated region
        $region61: #{spatial_attention_forward.1} parent=43 // pred_check
          %p305 = pneg %p131
        $region62: #{spatial_attention_forward.1} parent=43 // pred_check_branch
          %307 = sbr.rel (%p305) target = $region64
        $region63: #{spatial_attention_forward.1} parent=43 // pred_region
          %308 = dma.done [#allocation11], 73728
        $region64: #{spatial_attention_forward.1} parent=43 // pred_fallthru
          _
        // Predicated region
        $region65: #{spatial_attention_forward.1} parent=43 // pred_check
          %p309 = pneg %p152
        $region66: #{spatial_attention_forward.1} parent=43 // pred_check_branch
          %311 = sbr.rel (%p309) target = $region68
        $region67: #{spatial_attention_forward.1} parent=43 // pred_region
          %312 = dma.done [#allocation14], 64
        $region68: #{spatial_attention_forward.1} parent=43 // pred_fallthru
          _
        %s313 = sand.u32 %s34, 1
        %s314 = scalar_lea.sflag [#allocation5], %s313
        %s315 = sand.u32 %s34, 1
        %s316 = smul.addr %s315, 256
        %s317 = scalar_lea.vmem [#allocation4], %s316
        %p318 = pneg %p47
        %p319 = pneg %p44
        %p320 = pneg %p68
        %p321 = pneg %p65
        %p322 = pneg %p89
        %p323 = pneg %p86
        %p324 = pneg %p110
        %p325 = pneg %p107
        %p326 = pneg %p131
        %p327 = pneg %p128
        %p328 = pneg %p152
        %p329 = pneg %p149
        %p330 = pneg %p178
        %p331 = pneg %p175
        %s332 = sand.u32 %s165, 1
        %s333 = scalar_lea.sflag [#allocation6], %s332
        %s334 = sand.u32 %s165, 1
        %s335 = smul.addr %s334, 256
        %s336 = scalar_lea.vmem [#allocation15], %s335
        %v338 = vld [vmem:[%s288] sm:$0xff]
        %v339 = vld [vmem:[%s288 + $0x8] sm:$0xff]
        %v340 = vld [vmem:[%s288 + $0x10] sm:$0xff]
        %v341 = vld [vmem:[%s288 + $0x18] sm:$0xff]
        %v342 = vld [vmem:[%s288 + $0x20] sm:$0xff]
        %v343 = vld [vmem:[%s288 + $0x28] sm:$0xff]
        %v344 = vld [vmem:[%s288 + $0x30] sm:$0xff]
        %v345 = vld [vmem:[%s288 + $0x38] sm:$0xff]
        %v346 = vld [vmem:[%s288 + $0x40] sm:$0xff]
        %v347 = vld [vmem:[%s288 + $0x48] sm:$0xff]
        %v348 = vld [vmem:[%s288 + $0x50] sm:$0xff]
        %v349 = vld [vmem:[%s288 + $0x58] sm:$0xff]
        %v350 = vld [vmem:[%s288 + $0x60] sm:$0xff]
        %v351 = vld [vmem:[%s288 + $0x68] sm:$0xff]
        %v352 = vld [vmem:[%s288 + $0x70] sm:$0xff]
        %v353 = vld [vmem:[%s288 + $0x78] sm:$0xff]
        %v354 = vld [vmem:[%s288 + $0x80] sm:$0xff]
        %v355 = vld [vmem:[%s288 + $0x88] sm:$0xff]
        %v356 = vld [vmem:[%s288 + $0x90] sm:$0xff]
        %v357 = vld [vmem:[%s288 + $0x98] sm:$0xff]
        %v358 = vld [vmem:[%s288 + $0xa0] sm:$0xff]
        %v359 = vld [vmem:[%s288 + $0xa8] sm:$0xff]
        %v360 = vld [vmem:[%s288 + $0xb0] sm:$0xff]
        %v361 = vld [vmem:[%s288 + $0xb8] sm:$0xff]
        %v362 = vld [vmem:[%s288 + $0xc0] sm:$0xff]
        %v363 = vld [vmem:[%s288 + $0xc8] sm:$0xff]
        %v364 = vld [vmem:[%s288 + $0xd0] sm:$0xff]
        %v365 = vld [vmem:[%s288 + $0xd8] sm:$0xff]
        %v366 = vld [vmem:[%s288 + $0xe0] sm:$0xff]
        %v367 = vld [vmem:[%s288 + $0xe8] sm:$0xff]
        %v368 = vld [vmem:[%s288 + $0xf0] sm:$0xff]
        %v369 = vld [vmem:[%s288 + $0xf8] sm:$0xff]
        %v370 = vpack.c.bf16 %v342, %v338
        %v371 = vpack.c.bf16 %v343, %v339
        %v372 = vpack.c.bf16 %v344, %v340
        %v373 = vpack.c.bf16 %v345, %v341
        %v374 = vpack.c.bf16 %v350, %v346
        %v375 = vpack.c.bf16 %v351, %v347
        %v376 = vpack.c.bf16 %v352, %v348
        %v377 = vpack.c.bf16 %v353, %v349
        %v378 = vpack.c.bf16 %v358, %v354
        %v379 = vpack.c.bf16 %v359, %v355
        %v380 = vpack.c.bf16 %v360, %v356
        %v381 = vpack.c.bf16 %v361, %v357
        %v382 = vpack.c.bf16 %v366, %v362
        %v383 = vpack.c.bf16 %v367, %v363
        %v384 = vpack.c.bf16 %v368, %v364
        %v385 = vpack.c.bf16 %v369, %v365
        %v386 = vld [vmem:[#allocation7] sm:$0xff]
        %v387 = vld [vmem:[#allocation7 + $0x8] sm:$0xff]
        %v388 = vld [vmem:[#allocation7 + $0x10] sm:$0xff]
        %v389 = vld [vmem:[#allocation7 + $0x18] sm:$0xff]
        %v390 = vld [vmem:[#allocation7 + $0x20] sm:$0xff]
        %v391 = vld [vmem:[#allocation7 + $0x28] sm:$0xff]
        %v392 = vld [vmem:[#allocation7 + $0x30] sm:$0xff]
        %v393 = vld [vmem:[#allocation7 + $0x38] sm:$0xff]
        %v394 = vld [vmem:[#allocation7 + $0x40] sm:$0xff]
        %v395 = vld [vmem:[#allocation7 + $0x48] sm:$0xff]
        %v396 = vld [vmem:[#allocation7 + $0x50] sm:$0xff]
        %v397 = vld [vmem:[#allocation7 + $0x58] sm:$0xff]
        %v398 = vld [vmem:[#allocation7 + $0x60] sm:$0xff]
        %v399 = vld [vmem:[#allocation7 + $0x68] sm:$0xff]
        %v400 = vld [vmem:[#allocation7 + $0x70] sm:$0xff]
        %v401 = vld [vmem:[#allocation7 + $0x78] sm:$0xff]
        %v402 = vld [vmem:[#allocation7 + $0x80] sm:$0xff]
        %v403 = vld [vmem:[#allocation7 + $0x88] sm:$0xff]
        %v404 = vld [vmem:[#allocation7 + $0x90] sm:$0xff]
        %v405 = vld [vmem:[#allocation7 + $0x98] sm:$0xff]
        %v406 = vld [vmem:[#allocation7 + $0xa0] sm:$0xff]
        %v407 = vld [vmem:[#allocation7 + $0xa8] sm:$0xff]
        %v408 = vld [vmem:[#allocation7 + $0xb0] sm:$0xff]
        %v409 = vld [vmem:[#allocation7 + $0xb8] sm:$0xff]
        %v410 = vld [vmem:[#allocation7 + $0xc0] sm:$0xff]
        %v411 = vld [vmem:[#allocation7 + $0xc8] sm:$0xff]
        %v412 = vld [vmem:[#allocation7 + $0xd0] sm:$0xff]
        %v413 = vld [vmem:[#allocation7 + $0xd8] sm:$0xff]
        %v414 = vld [vmem:[#allocation7 + $0xe0] sm:$0xff]
        %v415 = vld [vmem:[#allocation7 + $0xe8] sm:$0xff]
        %v416 = vld [vmem:[#allocation7 + $0xf0] sm:$0xff]
        %v417 = vld [vmem:[#allocation7 + $0xf8] sm:$0xff]
        %v418 = vld [vmem:[#allocation7 + $0x100] sm:$0xff]
        %v419 = vld [vmem:[#allocation7 + $0x108] sm:$0xff]
        %v420 = vld [vmem:[#allocation7 + $0x110] sm:$0xff]
        %v421 = vld [vmem:[#allocation7 + $0x118] sm:$0xff]
        %v422 = vld [vmem:[#allocation7 + $0x120] sm:$0xff]
        %v423 = vld [vmem:[#allocation7 + $0x128] sm:$0xff]
        %v424 = vld [vmem:[#allocation7 + $0x130] sm:$0xff]
        %v425 = vld [vmem:[#allocation7 + $0x138] sm:$0xff]
        %v426 = vld [vmem:[#allocation7 + $0x140] sm:$0xff]
        %v427 = vld [vmem:[#allocation7 + $0x148] sm:$0xff]
        %v428 = vld [vmem:[#allocation7 + $0x150] sm:$0xff]
        %v429 = vld [vmem:[#allocation7 + $0x158] sm:$0xff]
        %v430 = vld [vmem:[#allocation7 + $0x160] sm:$0xff]
        %v431 = vld [vmem:[#allocation7 + $0x168] sm:$0xff]
        %v432 = vld [vmem:[#allocation7 + $0x170] sm:$0xff]
        %v433 = vld [vmem:[#allocation7 + $0x178] sm:$0xff]
        %v434 = vld [vmem:[#allocation7 + $0x180] sm:$0xff]
        %v435 = vld [vmem:[#allocation7 + $0x188] sm:$0xff]
        %v436 = vld [vmem:[#allocation7 + $0x190] sm:$0xff]
        %v437 = vld [vmem:[#allocation7 + $0x198] sm:$0xff]
        %v438 = vld [vmem:[#allocation7 + $0x1a0] sm:$0xff]
        %v439 = vld [vmem:[#allocation7 + $0x1a8] sm:$0xff]
        %v440 = vld [vmem:[#allocation7 + $0x1b0] sm:$0xff]
        %v441 = vld [vmem:[#allocation7 + $0x1b8] sm:$0xff]
        %v442 = vld [vmem:[#allocation7 + $0x1c0] sm:$0xff]
        %v443 = vld [vmem:[#allocation7 + $0x1c8] sm:$0xff]
        %v444 = vld [vmem:[#allocation7 + $0x1d0] sm:$0xff]
        %v445 = vld [vmem:[#allocation7 + $0x1d8] sm:$0xff]
        %v446 = vld [vmem:[#allocation7 + $0x1e0] sm:$0xff]
        %v447 = vld [vmem:[#allocation7 + $0x1e8] sm:$0xff]
        %v448 = vld [vmem:[#allocation7 + $0x1f0] sm:$0xff]
        %v449 = vld [vmem:[#allocation7 + $0x1f8] sm:$0xff]
        %v514 = vunpack.c.l.b16 %v386
        %v515 = vunpack.c.h.b16 %v386
        %v516 = vunpack.c.l.b16 %v387
        %v517 = vunpack.c.h.b16 %v387
        %v518 = vunpack.c.l.b16 %v388
        %v519 = vunpack.c.h.b16 %v388
        %v520 = vunpack.c.l.b16 %v389
        %v521 = vunpack.c.h.b16 %v389
        %v522 = vunpack.c.l.b16 %v390
        %v523 = vunpack.c.h.b16 %v390
        %v524 = vunpack.c.l.b16 %v391
        %v525 = vunpack.c.h.b16 %v391
        %v526 = vunpack.c.l.b16 %v392
        %v527 = vunpack.c.h.b16 %v392
        %v528 = vunpack.c.l.b16 %v393
        %v529 = vunpack.c.h.b16 %v393
        %v530 = vunpack.c.l.b16 %v394
        %v531 = vunpack.c.h.b16 %v394
        %v532 = vunpack.c.l.b16 %v395
        %v533 = vunpack.c.h.b16 %v395
        %v534 = vunpack.c.l.b16 %v396
        %v535 = vunpack.c.h.b16 %v396
        %v536 = vunpack.c.l.b16 %v397
        %v537 = vunpack.c.h.b16 %v397
        %v538 = vunpack.c.l.b16 %v398
        %v539 = vunpack.c.h.b16 %v398
        %v540 = vunpack.c.l.b16 %v399
        %v541 = vunpack.c.h.b16 %v399
        %v542 = vunpack.c.l.b16 %v400
        %v543 = vunpack.c.h.b16 %v400
        %v544 = vunpack.c.l.b16 %v401
        %v545 = vunpack.c.h.b16 %v401
        %v546 = vunpack.c.l.b16 %v402
        %v547 = vunpack.c.h.b16 %v402
        %v548 = vunpack.c.l.b16 %v403
        %v549 = vunpack.c.h.b16 %v403
        %v550 = vunpack.c.l.b16 %v404
        %v551 = vunpack.c.h.b16 %v404
        %v552 = vunpack.c.l.b16 %v405
        %v553 = vunpack.c.h.b16 %v405
        %v554 = vunpack.c.l.b16 %v406
        %v555 = vunpack.c.h.b16 %v406
        %v556 = vunpack.c.l.b16 %v407
        %v557 = vunpack.c.h.b16 %v407
        %v558 = vunpack.c.l.b16 %v408
        %v559 = vunpack.c.h.b16 %v408
        %v560 = vunpack.c.l.b16 %v409
        %v561 = vunpack.c.h.b16 %v409
        %v562 = vunpack.c.l.b16 %v410
        %v563 = vunpack.c.h.b16 %v410
        %v564 = vunpack.c.l.b16 %v411
        %v565 = vunpack.c.h.b16 %v411
        %v566 = vunpack.c.l.b16 %v412
        %v567 = vunpack.c.h.b16 %v412
        %v568 = vunpack.c.l.b16 %v413
        %v569 = vunpack.c.h.b16 %v413
        %v570 = vunpack.c.l.b16 %v414
        %v571 = vunpack.c.h.b16 %v414
        %v572 = vunpack.c.l.b16 %v415
        %v573 = vunpack.c.h.b16 %v415
        %v574 = vunpack.c.l.b16 %v416
        %v575 = vunpack.c.h.b16 %v416
        %v576 = vunpack.c.l.b16 %v417
        %v577 = vunpack.c.h.b16 %v417
        %v578 = vunpack.c.l.b16 %v418
        %v579 = vunpack.c.h.b16 %v418
        %v580 = vunpack.c.l.b16 %v419
        %v581 = vunpack.c.h.b16 %v419
        %v582 = vunpack.c.l.b16 %v420
        %v583 = vunpack.c.h.b16 %v420
        %v584 = vunpack.c.l.b16 %v421
        %v585 = vunpack.c.h.b16 %v421
        %v586 = vunpack.c.l.b16 %v422
        %v587 = vunpack.c.h.b16 %v422
        %v588 = vunpack.c.l.b16 %v423
        %v589 = vunpack.c.h.b16 %v423
        %v590 = vunpack.c.l.b16 %v424
        %v591 = vunpack.c.h.b16 %v424
        %v592 = vunpack.c.l.b16 %v425
        %v593 = vunpack.c.h.b16 %v425
        %v594 = vunpack.c.l.b16 %v426
        %v595 = vunpack.c.h.b16 %v426
        %v596 = vunpack.c.l.b16 %v427
        %v597 = vunpack.c.h.b16 %v427
        %v598 = vunpack.c.l.b16 %v428
        %v599 = vunpack.c.h.b16 %v428
        %v600 = vunpack.c.l.b16 %v429
        %v601 = vunpack.c.h.b16 %v429
        %v602 = vunpack.c.l.b16 %v430
        %v603 = vunpack.c.h.b16 %v430
        %v604 = vunpack.c.l.b16 %v431
        %v605 = vunpack.c.h.b16 %v431
        %v606 = vunpack.c.l.b16 %v432
        %v607 = vunpack.c.h.b16 %v432
        %v608 = vunpack.c.l.b16 %v433
        %v609 = vunpack.c.h.b16 %v433
        %v610 = vunpack.c.l.b16 %v434
        %v611 = vunpack.c.h.b16 %v434
        %v612 = vunpack.c.l.b16 %v435
        %v613 = vunpack.c.h.b16 %v435
        %v614 = vunpack.c.l.b16 %v436
        %v615 = vunpack.c.h.b16 %v436
        %v616 = vunpack.c.l.b16 %v437
        %v617 = vunpack.c.h.b16 %v437
        %v618 = vunpack.c.l.b16 %v438
        %v619 = vunpack.c.h.b16 %v438
        %v620 = vunpack.c.l.b16 %v439
        %v621 = vunpack.c.h.b16 %v439
        %v622 = vunpack.c.l.b16 %v440
        %v623 = vunpack.c.h.b16 %v440
        %v624 = vunpack.c.l.b16 %v441
        %v625 = vunpack.c.h.b16 %v441
        %v626 = vunpack.c.l.b16 %v442
        %v627 = vunpack.c.h.b16 %v442
        %v628 = vunpack.c.l.b16 %v443
        %v629 = vunpack.c.h.b16 %v443
        %v630 = vunpack.c.l.b16 %v444
        %v631 = vunpack.c.h.b16 %v444
        %v632 = vunpack.c.l.b16 %v445
        %v633 = vunpack.c.h.b16 %v445
        %v634 = vunpack.c.l.b16 %v446
        %v635 = vunpack.c.h.b16 %v446
        %v636 = vunpack.c.l.b16 %v447
        %v637 = vunpack.c.h.b16 %v447
        %v638 = vunpack.c.l.b16 %v448
        %v639 = vunpack.c.h.b16 %v448
        %v640 = vunpack.c.l.b16 %v449
        %v641 = vunpack.c.h.b16 %v449
        %v642 = vpack.c.b16 %v516, %v514
        %v643 = vpack.c.b16 %v517, %v515
        %v644 = vpack.c.b16 %v520, %v518
        %v645 = vpack.c.b16 %v521, %v519
        %v646 = vpack.c.b16 %v524, %v522
        %v647 = vpack.c.b16 %v525, %v523
        %v648 = vpack.c.b16 %v528, %v526
        %v649 = vpack.c.b16 %v529, %v527
        %v650 = vpack.c.b16 %v532, %v530
        %v651 = vpack.c.b16 %v533, %v531
        %v652 = vpack.c.b16 %v536, %v534
        %v653 = vpack.c.b16 %v537, %v535
        %v654 = vpack.c.b16 %v540, %v538
        %v655 = vpack.c.b16 %v541, %v539
        %v656 = vpack.c.b16 %v544, %v542
        %v657 = vpack.c.b16 %v545, %v543
        %v658 = vpack.c.b16 %v548, %v546
        %v659 = vpack.c.b16 %v549, %v547
        %v660 = vpack.c.b16 %v552, %v550
        %v661 = vpack.c.b16 %v553, %v551
        %v662 = vpack.c.b16 %v556, %v554
        %v663 = vpack.c.b16 %v557, %v555
        %v664 = vpack.c.b16 %v560, %v558
        %v665 = vpack.c.b16 %v561, %v559
        %v666 = vpack.c.b16 %v564, %v562
        %v667 = vpack.c.b16 %v565, %v563
        %v668 = vpack.c.b16 %v568, %v566
        %v669 = vpack.c.b16 %v569, %v567
        %v670 = vpack.c.b16 %v572, %v570
        %v671 = vpack.c.b16 %v573, %v571
        %v672 = vpack.c.b16 %v576, %v574
        %v673 = vpack.c.b16 %v577, %v575
        %v674 = vpack.c.b16 %v580, %v578
        %v675 = vpack.c.b16 %v581, %v579
        %v676 = vpack.c.b16 %v584, %v582
        %v677 = vpack.c.b16 %v585, %v583
        %v678 = vpack.c.b16 %v588, %v586
        %v679 = vpack.c.b16 %v589, %v587
        %v680 = vpack.c.b16 %v592, %v590
        %v681 = vpack.c.b16 %v593, %v591
        %v682 = vpack.c.b16 %v596, %v594
        %v683 = vpack.c.b16 %v597, %v595
        %v684 = vpack.c.b16 %v600, %v598
        %v685 = vpack.c.b16 %v601, %v599
        %v686 = vpack.c.b16 %v604, %v602
        %v687 = vpack.c.b16 %v605, %v603
        %v688 = vpack.c.b16 %v608, %v606
        %v689 = vpack.c.b16 %v609, %v607
        %v690 = vpack.c.b16 %v612, %v610
        %v691 = vpack.c.b16 %v613, %v611
        %v692 = vpack.c.b16 %v616, %v614
        %v693 = vpack.c.b16 %v617, %v615
        %v694 = vpack.c.b16 %v620, %v618
        %v695 = vpack.c.b16 %v621, %v619
        %v696 = vpack.c.b16 %v624, %v622
        %v697 = vpack.c.b16 %v625, %v623
        %v698 = vpack.c.b16 %v628, %v626
        %v699 = vpack.c.b16 %v629, %v627
        %v700 = vpack.c.b16 %v632, %v630
        %v701 = vpack.c.b16 %v633, %v631
        %v702 = vpack.c.b16 %v636, %v634
        %v703 = vpack.c.b16 %v637, %v635
        %v704 = vpack.c.b16 %v640, %v638
        %v705 = vpack.c.b16 %v641, %v639
        %770 = vmatprep.subr.bf16.mxu0 %v643
        %771 = vmatpush1.bf16.msra.mxu0 %v642
        %772 = vmatprep.subr.bf16.mxu0 %v645
        %773 = vmatpush1.bf16.msra.mxu0 %v644
        %774 = vmatprep.subr.bf16.mxu0 %v647
        %775 = vmatpush1.bf16.msra.mxu0 %v646
        %776 = vmatprep.subr.bf16.mxu0 %v649
        %777 = vmatpush1.bf16.msra.mxu0 %v648
        %778 = vmatprep.subr.bf16.mxu0 %v651
        %779 = vmatpush1.bf16.msra.mxu0 %v650
        %780 = vmatprep.subr.bf16.mxu0 %v653
        %781 = vmatpush1.bf16.msra.mxu0 %v652
        %782 = vmatprep.subr.bf16.mxu0 %v655
        %783 = vmatpush1.bf16.msra.mxu0 %v654
        %784 = vmatprep.subr.bf16.mxu0 %v657
        %785 = vmatpush1.bf16.msra.mxu0 %v656
        %786 = vmatprep.subr.bf16.mxu0 %v659
        %787 = vmatpush1.bf16.msra.mxu0 %v658
        %788 = vmatprep.subr.bf16.mxu0 %v661
        %789 = vmatpush1.bf16.msra.mxu0 %v660
        %790 = vmatprep.subr.bf16.mxu0 %v663
        %791 = vmatpush1.bf16.msra.mxu0 %v662
        %792 = vmatprep.subr.bf16.mxu0 %v665
        %793 = vmatpush1.bf16.msra.mxu0 %v664
        %794 = vmatprep.subr.bf16.mxu0 %v667
        %795 = vmatpush1.bf16.msra.mxu0 %v666
        %796 = vmatprep.subr.bf16.mxu0 %v669
        %797 = vmatpush1.bf16.msra.mxu0 %v668
        %798 = vmatprep.subr.bf16.mxu0 %v671
        %799 = vmatpush1.bf16.msra.mxu0 %v670
        %800 = vmatprep.subr.bf16.mxu0 %v673
        %801 = vmatpush1.bf16.msra.mxu0 %v672
        %802 = vmatprep.mubr.bf16.mxu0 %v371
        %803 = vmatmul.mubr.bf16.gmra.mrb[0].mxu0 %v370
        %v804 = vpop.f32.mrb[0].mxu0
        %v805 = vadd.f32 0.0, %v804
        %v806 = vpop.f32.mrb[0].mxu0
        %v807 = vadd.f32 0.0, %v806
        %v808 = vpop.f32.mrb[0].mxu0
        %v809 = vadd.f32 0.0, %v808
        %v810 = vpop.f32.mrb[0].mxu0
        %v811 = vadd.f32 0.0, %v810
        %812 = vmatprep.mubr.bf16.mxu0 %v375
        %813 = vmatmul.mubr.bf16.gmra.mrb[0].mxu0 %v374
        %v814 = vpop.f32.mrb[0].mxu0
        %v815 = vadd.f32 0.0, %v814
        %v816 = vpop.f32.mrb[0].mxu0
        %v817 = vadd.f32 0.0, %v816
        %v818 = vpop.f32.mrb[0].mxu0
        %v819 = vadd.f32 0.0, %v818
        %v820 = vpop.f32.mrb[0].mxu0
        %v821 = vadd.f32 0.0, %v820
        %822 = vmatprep.mubr.bf16.mxu0 %v379
        %823 = vmatmul.mubr.bf16.gmra.mrb[0].mxu0 %v378
        %v824 = vpop.f32.mrb[0].mxu0
        %v825 = vadd.f32 0.0, %v824
        %v826 = vpop.f32.mrb[0].mxu0
        %v827 = vadd.f32 0.0, %v826
        %v828 = vpop.f32.mrb[0].mxu0
        %v829 = vadd.f32 0.0, %v828
        %v830 = vpop.f32.mrb[0].mxu0
        %v831 = vadd.f32 0.0, %v830
        %832 = vmatprep.mubr.bf16.mxu0 %v383
        %833 = vmatmul.mubr.bf16.gmra.mrb[0].mxu0 %v382
        %v834 = vpop.f32.mrb[0].mxu0
        %v835 = vadd.f32 0.0, %v834
        %v836 = vpop.f32.mrb[0].mxu0
        %v837 = vadd.f32 0.0, %v836
        %v838 = vpop.f32.mrb[0].mxu0
        %v839 = vadd.f32 0.0, %v838
        %v840 = vpop.f32.mrb[0].mxu0
        %v841 = vadd.f32 0.0, %v840
        %842 = vdwg.mxu0
        %843 = vmatprep.subr.bf16.mxu0 %v675
        %844 = vmatpush1.bf16.msra.mxu0 %v674
        %845 = vmatprep.subr.bf16.mxu0 %v677
        %846 = vmatpush1.bf16.msra.mxu0 %v676
        %847 = vmatprep.subr.bf16.mxu0 %v679
        %848 = vmatpush1.bf16.msra.mxu0 %v678
        %849 = vmatprep.subr.bf16.mxu0 %v681
        %850 = vmatpush1.bf16.msra.mxu0 %v680
        %851 = vmatprep.subr.bf16.mxu0 %v683
        %852 = vmatpush1.bf16.msra.mxu0 %v682
        %853 = vmatprep.subr.bf16.mxu0 %v685
        %854 = vmatpush1.bf16.msra.mxu0 %v684
        %855 = vmatprep.subr.bf16.mxu0 %v687
        %856 = vmatpush1.bf16.msra.mxu0 %v686
        %857 = vmatprep.subr.bf16.mxu0 %v689
        %858 = vmatpush1.bf16.msra.mxu0 %v688
        %859 = vmatprep.subr.bf16.mxu0 %v691
        %860 = vmatpush1.bf16.msra.mxu0 %v690
        %861 = vmatprep.subr.bf16.mxu0 %v693
        %862 = vmatpush1.bf16.msra.mxu0 %v692
        %863 = vmatprep.subr.bf16.mxu0 %v695
        %864 = vmatpush1.bf16.msra.mxu0 %v694
        %865 = vmatprep.subr.bf16.mxu0 %v697
        %866 = vmatpush1.bf16.msra.mxu0 %v696
        %867 = vmatprep.subr.bf16.mxu0 %v699
        %868 = vmatpush1.bf16.msra.mxu0 %v698
        %869 = vmatprep.subr.bf16.mxu0 %v701
        %870 = vmatpush1.bf16.msra.mxu0 %v700
        %871 = vmatprep.subr.bf16.mxu0 %v703
        %872 = vmatpush1.bf16.msra.mxu0 %v702
        %873 = vmatprep.subr.bf16.mxu0 %v705
        %874 = vmatpush1.bf16.msra.mxu0 %v704
        %875 = vmatprep.mubr.bf16.mxu0 %v373
        %876 = vmatmul.mubr.bf16.gmra.mrb[0].mxu0 %v372
        %v877 = vpop.f32.mrb[0].mxu0
        %v878 = vadd.f32 %v805, %v877
        %v879 = vpop.f32.mrb[0].mxu0
        %v880 = vadd.f32 %v807, %v879
        %v881 = vpop.f32.mrb[0].mxu0
        %v882 = vadd.f32 %v809, %v881
        %v883 = vpop.f32.mrb[0].mxu0
        %v884 = vadd.f32 %v811, %v883
        %885 = vmatprep.mubr.bf16.mxu0 %v377
        %886 = vmatmul.mubr.bf16.gmra.mrb[0].mxu0 %v376
        %v887 = vpop.f32.mrb[0].mxu0
        %v888 = vadd.f32 %v815, %v887
        %v889 = vpop.f32.mrb[0].mxu0
        %v890 = vadd.f32 %v817, %v889
        %v891 = vpop.f32.mrb[0].mxu0
        %v892 = vadd.f32 %v819, %v891
        %v893 = vpop.f32.mrb[0].mxu0
        %v894 = vadd.f32 %v821, %v893
        %895 = vmatprep.mubr.bf16.mxu0 %v381
        %896 = vmatmul.mubr.bf16.gmra.mrb[0].mxu0 %v380
        %v897 = vpop.f32.mrb[0].mxu0
        %v898 = vadd.f32 %v825, %v897
        %v899 = vpop.f32.mrb[0].mxu0
        %v900 = vadd.f32 %v827, %v899
        %v901 = vpop.f32.mrb[0].mxu0
        %v902 = vadd.f32 %v829, %v901
        %v903 = vpop.f32.mrb[0].mxu0
        %v904 = vadd.f32 %v831, %v903
        %905 = vmatprep.mubr.bf16.mxu0 %v385
        %906 = vmatmul.mubr.bf16.gmra.mrb[0].mxu0 %v384
        %v907 = vpop.f32.mrb[0].mxu0
        %v908 = vadd.f32 %v835, %v907
        %v909 = vpop.f32.mrb[0].mxu0
        %v910 = vadd.f32 %v837, %v909
        %v911 = vpop.f32.mrb[0].mxu0
        %v912 = vadd.f32 %v839, %v911
        %v913 = vpop.f32.mrb[0].mxu0
        %v914 = vadd.f32 %v841, %v913
        %915 = vdwg.mxu0
        %v916 = vld [vmem:[#allocation9] sm:$0x3]
        %v918 = vlaneseq
        %v919 = vshrl.u32 %v918, 7
        %v920 = vsub.s32 0, %v919
        %v921 = vrot.slane %v916, %v920
        %v922 = vlaneseq
        %v923 = vshrl.u32 %v922, 7
        %v924 = vsub.s32 1, %v923
        %v925 = vrot.slane %v916, %v924
        %v928 = vmul.f32 %v878, %v921
        %v929 = vmul.f32 %v880, %v925
        %v930 = vmul.f32 %v882, %v921
        %v931 = vmul.f32 %v884, %v925
        %v932 = vmul.f32 %v888, %v921
        %v933 = vmul.f32 %v890, %v925
        %v934 = vmul.f32 %v892, %v921
        %v935 = vmul.f32 %v894, %v925
        %v936 = vmul.f32 %v898, %v921
        %v937 = vmul.f32 %v900, %v925
        %v938 = vmul.f32 %v902, %v921
        %v939 = vmul.f32 %v904, %v925
        %v940 = vmul.f32 %v908, %v921
        %v941 = vmul.f32 %v910, %v925
        %v942 = vmul.f32 %v912, %v921
        %v943 = vmul.f32 %v914, %v925
        %v944 = vld [vmem:[#allocation10] sm:$0x3]
        %v946 = vlaneseq
        %v947 = vshrl.u32 %v946, 7
        %v948 = vsub.s32 0, %v947
        %v949 = vrot.slane %v944, %v948
        %v950 = vlaneseq
        %v951 = vshrl.u32 %v950, 7
        %v952 = vsub.s32 1, %v951
        %v953 = vrot.slane %v944, %v952
        %v956 = vadd.f32 %v928, %v949
        %v957 = vadd.f32 %v929, %v953
        %v958 = vadd.f32 %v930, %v949
        %v959 = vadd.f32 %v931, %v953
        %v960 = vadd.f32 %v932, %v949
        %v961 = vadd.f32 %v933, %v953
        %v962 = vadd.f32 %v934, %v949
        %v963 = vadd.f32 %v935, %v953
        %v964 = vadd.f32 %v936, %v949
        %v965 = vadd.f32 %v937, %v953
        %v966 = vadd.f32 %v938, %v949
        %v967 = vadd.f32 %v939, %v953
        %v968 = vadd.f32 %v940, %v949
        %v969 = vadd.f32 %v941, %v953
        %v970 = vadd.f32 %v942, %v949
        %v971 = vadd.f32 %v943, %v953
        %972 = vst [vmem:[#allocation2] sm:$0xff] 0
        %973 = vst [vmem:[#allocation2 + $0x8] sm:$0x11] 0
        %974 = vst [vmem:[#allocation2 + $0x10] sm:$0xff] 0
        %975 = vst [vmem:[#allocation2 + $0x18] sm:$0x11] 0
        %976 = vst [vmem:[#allocation2 + $0x20] sm:$0xff] 0
        %977 = vst [vmem:[#allocation2 + $0x28] sm:$0x11] 0
        %978 = vst [vmem:[#allocation2 + $0x30] sm:$0xff] 0
        %979 = vst [vmem:[#allocation2 + $0x38] sm:$0x11] 0
        %980 = vst [vmem:[#allocation2 + $0x40] sm:$0xff] 0
        %981 = vst [vmem:[#allocation2 + $0x48] sm:$0x11] 0
        %982 = vst [vmem:[#allocation2 + $0x50] sm:$0xff] 0
        %983 = vst [vmem:[#allocation2 + $0x58] sm:$0x11] 0
        %984 = vst [vmem:[#allocation2 + $0x60] sm:$0xff] 0
        %985 = vst [vmem:[#allocation2 + $0x68] sm:$0x11] 0
        %986 = vst [vmem:[#allocation2 + $0x70] sm:$0xff] 0
        %987 = vst [vmem:[#allocation2 + $0x78] sm:$0x11] 0
        %988 = vst [vmem:[#allocation2 + $0x80] sm:$0xff] 0
        %989 = vst [vmem:[#allocation2 + $0x88] sm:$0x11] 0
        %990 = vst [vmem:[#allocation2 + $0x90] sm:$0xff] 0
        %991 = vst [vmem:[#allocation2 + $0x98] sm:$0x11] 0
        %v992 = vpack.c.bf16 %v956, %v956
        %v993 = vpack.c.bf16 %v957, %v957
        %v994 = vpack.c.bf16 %v958, %v958
        %v995 = vpack.c.bf16 %v959, %v959
        %v996 = vpack.c.bf16 %v960, %v960
        %v997 = vpack.c.bf16 %v961, %v961
        %v998 = vpack.c.bf16 %v962, %v962
        %v999 = vpack.c.bf16 %v963, %v963
        %v1000 = vpack.c.bf16 %v964, %v964
        %v1001 = vpack.c.bf16 %v965, %v965
        %v1002 = vpack.c.bf16 %v966, %v966
        %v1003 = vpack.c.bf16 %v967, %v967
        %v1004 = vpack.c.bf16 %v968, %v968
        %v1005 = vpack.c.bf16 %v969, %v969
        %v1006 = vpack.c.bf16 %v970, %v970
        %v1007 = vpack.c.bf16 %v971, %v971
        %v1024 = vunpack.c.l.b16 %v992
        %v1025 = vunpack.c.l.b16 %v993
        %v1026 = vunpack.c.l.b16 %v994
        %v1027 = vunpack.c.l.b16 %v995
        %v1028 = vunpack.c.l.b16 %v996
        %v1029 = vunpack.c.l.b16 %v997
        %v1030 = vunpack.c.l.b16 %v998
        %v1031 = vunpack.c.l.b16 %v999
        %v1032 = vunpack.c.l.b16 %v1000
        %v1033 = vunpack.c.l.b16 %v1001
        %v1034 = vunpack.c.l.b16 %v1002
        %v1035 = vunpack.c.l.b16 %v1003
        %v1036 = vunpack.c.l.b16 %v1004
        %v1037 = vunpack.c.l.b16 %v1005
        %v1038 = vunpack.c.l.b16 %v1006
        %v1039 = vunpack.c.l.b16 %v1007
        %v1040 = vpack.c.b16 %v1025, %v1024
        %v1041 = vpack.c.b16 %v1027, %v1026
        %v1042 = vpack.c.b16 %v1029, %v1028
        %v1043 = vpack.c.b16 %v1031, %v1030
        %v1044 = vpack.c.b16 %v1033, %v1032
        %v1045 = vpack.c.b16 %v1035, %v1034
        %v1046 = vpack.c.b16 %v1037, %v1036
        %v1047 = vpack.c.b16 %v1039, %v1038
        %v1049 = vshrl.u32 %v1040, 16
        %v1051 = vrot.slane %v1049, 7
        %v1052 = vshll.u32 %v1040, 16
        %v1054 = vor.u32 %v1051, %v1052
        %v1055 = vrot.slane %v1051, 4
        %v1057 = vshrl.u32 %v1041, 16
        %v1059 = vrot.slane %v1057, 7
        %v1060 = vshll.u32 %v1041, 16
        %v1062 = vor.u32 %v1059, %v1060
        %v1063 = vrot.slane %v1059, 4
        %v1065 = vshrl.u32 %v1042, 16
        %v1067 = vrot.slane %v1065, 7
        %v1068 = vshll.u32 %v1042, 16
        %v1070 = vor.u32 %v1067, %v1068
        %v1071 = vrot.slane %v1067, 4
        %v1073 = vshrl.u32 %v1043, 16
        %v1075 = vrot.slane %v1073, 7
        %v1076 = vshll.u32 %v1043, 16
        %v1078 = vor.u32 %v1075, %v1076
        %v1079 = vrot.slane %v1075, 4
        %v1081 = vshrl.u32 %v1044, 16
        %v1083 = vrot.slane %v1081, 7
        %v1084 = vshll.u32 %v1044, 16
        %v1086 = vor.u32 %v1083, %v1084
        %v1087 = vrot.slane %v1083, 4
        %v1089 = vshrl.u32 %v1045, 16
        %v1091 = vrot.slane %v1089, 7
        %v1092 = vshll.u32 %v1045, 16
        %v1094 = vor.u32 %v1091, %v1092
        %v1095 = vrot.slane %v1091, 4
        %v1097 = vshrl.u32 %v1046, 16
        %v1099 = vrot.slane %v1097, 7
        %v1100 = vshll.u32 %v1046, 16
        %v1102 = vor.u32 %v1099, %v1100
        %v1103 = vrot.slane %v1099, 4
        %v1105 = vshrl.u32 %v1047, 16
        %v1107 = vrot.slane %v1105, 7
        %v1108 = vshll.u32 %v1047, 16
        %v1110 = vor.u32 %v1107, %v1108
        %v1111 = vrot.slane %v1107, 4
        %s1128 = scalar_lea.vmem [#allocation2], 16
        %vm1129 = vcmask 1043456
        %vm1130 = vsmask.f32 7938
        %vm1131 = vmand %vm1129, %vm1130
        %vm1132 = vcmask 1047556
        %vm1133 = vsmask.f32 7954
        %vm1134 = vmand %vm1132, %vm1133
        %vm1135 = vmor %vm1134, %vm1131
        %v1136 = vld [vmem:[%s1128] sm:$0xff]
        %v1137 = vsel %vm1135, %v1054, %v1136
        %1138 = vst [vmem:[%s1128] sm:$0xff] %v1137
        %vm1139 = vcmask 1040384
        %vm1140 = vsmask.f32 256
        %vm1141 = vmand %vm1139, %vm1140
        %vm1142 = vcmask 1044484
        %vm1143 = vsmask.f32 4352
        %vm1144 = vmand %vm1142, %vm1143
        %vm1145 = vmor %vm1144, %vm1141
        %v1146 = vld [vmem:[%s1128 + $0x8] sm:$0x11]
        %v1147 = vsel %vm1145, %v1055, %v1146
        %1148 = vst [vmem:[%s1128 + $0x8] sm:$0x11] %v1147
        %v1149 = vld [vmem:[%s1128 + $0x10] sm:$0xff]
        %v1150 = vsel %vm1135, %v1062, %v1149
        %1151 = vst [vmem:[%s1128 + $0x10] sm:$0xff] %v1150
        %v1152 = vld [vmem:[%s1128 + $0x18] sm:$0x11]
        %v1153 = vsel %vm1145, %v1063, %v1152
        %1154 = vst [vmem:[%s1128 + $0x18] sm:$0x11] %v1153
        %v1155 = vld [vmem:[%s1128 + $0x20] sm:$0xff]
        %v1156 = vsel %vm1135, %v1070, %v1155
        %1157 = vst [vmem:[%s1128 + $0x20] sm:$0xff] %v1156
        %v1158 = vld [vmem:[%s1128 + $0x28] sm:$0x11]
        %v1159 = vsel %vm1145, %v1071, %v1158
        %1160 = vst [vmem:[%s1128 + $0x28] sm:$0x11] %v1159
        %v1161 = vld [vmem:[%s1128 + $0x30] sm:$0xff]
        %v1162 = vsel %vm1135, %v1078, %v1161
        %1163 = vst [vmem:[%s1128 + $0x30] sm:$0xff] %v1162
        %v1164 = vld [vmem:[%s1128 + $0x38] sm:$0x11]
        %v1165 = vsel %vm1145, %v1079, %v1164
        %1166 = vst [vmem:[%s1128 + $0x38] sm:$0x11] %v1165
        %v1167 = vld [vmem:[%s1128 + $0x40] sm:$0xff]
        %v1168 = vsel %vm1135, %v1086, %v1167
        %1169 = vst [vmem:[%s1128 + $0x40] sm:$0xff] %v1168
        %v1170 = vld [vmem:[%s1128 + $0x48] sm:$0x11]
        %v1171 = vsel %vm1145, %v1087, %v1170
        %1172 = vst [vmem:[%s1128 + $0x48] sm:$0x11] %v1171
        %v1173 = vld [vmem:[%s1128 + $0x50] sm:$0xff]
        %v1174 = vsel %vm1135, %v1094, %v1173
        %1175 = vst [vmem:[%s1128 + $0x50] sm:$0xff] %v1174
        %v1176 = vld [vmem:[%s1128 + $0x58] sm:$0x11]
        %v1177 = vsel %vm1145, %v1095, %v1176
        %1178 = vst [vmem:[%s1128 + $0x58] sm:$0x11] %v1177
        %v1179 = vld [vmem:[%s1128 + $0x60] sm:$0xff]
        %v1180 = vsel %vm1135, %v1102, %v1179
        %1181 = vst [vmem:[%s1128 + $0x60] sm:$0xff] %v1180
        %v1182 = vld [vmem:[%s1128 + $0x68] sm:$0x11]
        %v1183 = vsel %vm1145, %v1103, %v1182
        %1184 = vst [vmem:[%s1128 + $0x68] sm:$0x11] %v1183
        %v1185 = vld [vmem:[%s1128 + $0x70] sm:$0xff]
        %v1186 = vsel %vm1135, %v1110, %v1185
        %1187 = vst [vmem:[%s1128 + $0x70] sm:$0xff] %v1186
        %v1188 = vld [vmem:[%s1128 + $0x78] sm:$0x11]
        %v1189 = vsel %vm1145, %v1111, %v1188
        %1190 = vst [vmem:[%s1128 + $0x78] sm:$0x11] %v1189
        %1191 = vst [vmem:[#allocation3] sm:$0xff] 0.0
        %1192 = vst [vmem:[#allocation3 + $0x8] sm:$0xff] 0.0
        %1193 = vst [vmem:[#allocation3 + $0x10] sm:$0xff] 0.0
        %1194 = vst [vmem:[#allocation3 + $0x18] sm:$0xff] 0.0
        %1195 = vst [vmem:[#allocation3 + $0x20] sm:$0xff] 0.0
        %1196 = vst [vmem:[#allocation3 + $0x28] sm:$0xff] 0.0
        %1197 = vst [vmem:[#allocation3 + $0x30] sm:$0xff] 0.0
        %1198 = vst [vmem:[#allocation3 + $0x38] sm:$0xff] 0.0
        %1199 = vst [vmem:[#allocation3 + $0x40] sm:$0xff] 0.0
        %1200 = vst [vmem:[#allocation3 + $0x48] sm:$0xff] 0.0
        %1201 = vst [vmem:[#allocation3 + $0x50] sm:$0xff] 0.0
        %1202 = vst [vmem:[#allocation3 + $0x58] sm:$0xff] 0.0
        %1203 = vst [vmem:[#allocation3 + $0x60] sm:$0xff] 0.0
        %1204 = vst [vmem:[#allocation3 + $0x68] sm:$0xff] 0.0
        %1205 = vst [vmem:[#allocation3 + $0x70] sm:$0xff] 0.0
        %1206 = vst [vmem:[#allocation3 + $0x78] sm:$0xff] 0.0
        %1207 = vst [vmem:[#allocation3 + $0x80] sm:$0xff] 0.0
        %1208 = vst [vmem:[#allocation3 + $0x88] sm:$0xff] 0.0
        %1209 = vst [vmem:[#allocation3 + $0x90] sm:$0xff] 0.0
        %1210 = vst [vmem:[#allocation3 + $0x98] sm:$0xff] 0.0
        %1211 = vst [vmem:[#allocation3 + $0xa0] sm:$0xff] 0.0
        %1212 = vst [vmem:[#allocation3 + $0xa8] sm:$0xff] 0.0
        %1213 = vst [vmem:[#allocation3 + $0xb0] sm:$0xff] 0.0
        %1214 = vst [vmem:[#allocation3 + $0xb8] sm:$0xff] 0.0
        %1215 = vst [vmem:[#allocation3 + $0xc0] sm:$0xff] 0.0
        %1216 = vst [vmem:[#allocation3 + $0xc8] sm:$0xff] 0.0
        %1217 = vst [vmem:[#allocation3 + $0xd0] sm:$0xff] 0.0
        %1218 = vst [vmem:[#allocation3 + $0xd8] sm:$0xff] 0.0
        %1219 = vst [vmem:[#allocation3 + $0xe0] sm:$0xff] 0.0
        %1220 = vst [vmem:[#allocation3 + $0xe8] sm:$0xff] 0.0
        %1221 = vst [vmem:[#allocation3 + $0xf0] sm:$0xff] 0.0
        %1222 = vst [vmem:[#allocation3 + $0xf8] sm:$0xff] 0.0
        %v1223 = vld [vmem:[#allocation2] sm:$0xff]
        %v1224 = vld [vmem:[#allocation2 + $0x10] sm:$0xff]
        %v1225 = vld [vmem:[#allocation2 + $0x20] sm:$0xff]
        %v1226 = vld [vmem:[#allocation2 + $0x30] sm:$0xff]
        %v1227 = vld [vmem:[#allocation2 + $0x40] sm:$0xff]
        %v1228 = vld [vmem:[#allocation2 + $0x50] sm:$0xff]
        %v1229 = vld [vmem:[#allocation2 + $0x60] sm:$0xff]
        %v1230 = vld [vmem:[#allocation2 + $0x70] sm:$0xff]
        %v1231 = vld [vmem:[#allocation3] sm:$0xff]
        %v1232 = vld [vmem:[#allocation3 + $0x8] sm:$0xff]
        %v1233 = vld [vmem:[#allocation3 + $0x10] sm:$0xff]
        %v1234 = vld [vmem:[#allocation3 + $0x18] sm:$0xff]
        %v1235 = vld [vmem:[#allocation3 + $0x20] sm:$0xff]
        %v1236 = vld [vmem:[#allocation3 + $0x28] sm:$0xff]
        %v1237 = vld [vmem:[#allocation3 + $0x30] sm:$0xff]
        %v1238 = vld [vmem:[#allocation3 + $0x38] sm:$0xff]
        %v1239 = vld [vmem:[#allocation3 + $0x40] sm:$0xff]
        %v1240 = vld [vmem:[#allocation3 + $0x48] sm:$0xff]
        %v1241 = vld [vmem:[#allocation3 + $0x50] sm:$0xff]
        %v1242 = vld [vmem:[#allocation3 + $0x58] sm:$0xff]
        %v1243 = vld [vmem:[#allocation3 + $0x60] sm:$0xff]
        %v1244 = vld [vmem:[#allocation3 + $0x68] sm:$0xff]
        %v1245 = vld [vmem:[#allocation3 + $0x70] sm:$0xff]
        %v1246 = vld [vmem:[#allocation3 + $0x78] sm:$0xff]
        %v1247 = vld [vmem:[#allocation3 + $0x80] sm:$0xff]
        %v1248 = vld [vmem:[#allocation3 + $0x88] sm:$0xff]
        %v1249 = vld [vmem:[#allocation3 + $0x90] sm:$0xff]
        %v1250 = vld [vmem:[#allocation3 + $0x98] sm:$0xff]
        %v1251 = vld [vmem:[#allocation3 + $0xa0] sm:$0xff]
        %v1252 = vld [vmem:[#allocation3 + $0xa8] sm:$0xff]
        %v1253 = vld [vmem:[#allocation3 + $0xb0] sm:$0xff]
        %v1254 = vld [vmem:[#allocation3 + $0xb8] sm:$0xff]
        %v1255 = vld [vmem:[#allocation3 + $0xc0] sm:$0xff]
        %v1256 = vld [vmem:[#allocation3 + $0xc8] sm:$0xff]
        %v1257 = vld [vmem:[#allocation3 + $0xd0] sm:$0xff]
        %v1258 = vld [vmem:[#allocation3 + $0xd8] sm:$0xff]
        %v1259 = vld [vmem:[#allocation3 + $0xe0] sm:$0xff]
        %v1260 = vld [vmem:[#allocation3 + $0xe8] sm:$0xff]
        %v1261 = vld [vmem:[#allocation3 + $0xf0] sm:$0xff]
        %v1262 = vld [vmem:[#allocation3 + $0xf8] sm:$0xff]
        %v1263 = vld [vmem:[#allocation12] sm:$0xff]
        %v1264 = vld [vmem:[#allocation12 + $0x8] sm:$0xff]
        %v1265 = vld [vmem:[#allocation12 + $0x10] sm:$0xff]
        %v1266 = vld [vmem:[#allocation12 + $0x18] sm:$0xff]
        %v1267 = vld [vmem:[#allocation12 + $0x20] sm:$0xff]
        %v1268 = vld [vmem:[#allocation12 + $0x28] sm:$0xff]
        %v1269 = vld [vmem:[#allocation12 + $0x30] sm:$0xff]
        %v1270 = vld [vmem:[#allocation12 + $0x38] sm:$0xff]
        %v1271 = vld [vmem:[#allocation12 + $0x40] sm:$0xff]
        %v1272 = vld [vmem:[#allocation12 + $0x48] sm:$0xff]
        %v1273 = vld [vmem:[#allocation12 + $0x50] sm:$0xff]
        %v1274 = vld [vmem:[#allocation12 + $0x58] sm:$0xff]
        %v1275 = vld [vmem:[#allocation12 + $0x60] sm:$0xff]
        %v1276 = vld [vmem:[#allocation12 + $0x68] sm:$0xff]
        %v1277 = vld [vmem:[#allocation12 + $0x70] sm:$0xff]
        %v1278 = vld [vmem:[#allocation12 + $0x78] sm:$0xff]
        %v1279 = vld [vmem:[#allocation12 + $0x80] sm:$0xff]
        %v1280 = vld [vmem:[#allocation12 + $0x88] sm:$0xff]
        %v1281 = vld [vmem:[#allocation12 + $0x90] sm:$0xff]
        %v1282 = vld [vmem:[#allocation12 + $0x98] sm:$0xff]
        %v1283 = vld [vmem:[#allocation12 + $0xa0] sm:$0xff]
        %v1284 = vld [vmem:[#allocation12 + $0xa8] sm:$0xff]
        %v1285 = vld [vmem:[#allocation12 + $0xb0] sm:$0xff]
        %v1286 = vld [vmem:[#allocation12 + $0xb8] sm:$0xff]
        %v1287 = vld [vmem:[#allocation12 + $0xc0] sm:$0xff]
        %v1288 = vld [vmem:[#allocation12 + $0xc8] sm:$0xff]
        %v1289 = vld [vmem:[#allocation12 + $0xd0] sm:$0xff]
        %v1290 = vld [vmem:[#allocation12 + $0xd8] sm:$0xff]
        %v1291 = vld [vmem:[#allocation12 + $0xe0] sm:$0xff]
        %v1292 = vld [vmem:[#allocation12 + $0xe8] sm:$0xff]
        %v1293 = vld [vmem:[#allocation12 + $0xf0] sm:$0xff]
        %v1294 = vld [vmem:[#allocation12 + $0xf8] sm:$0xff]
        %v1295 = vld [vmem:[#allocation12 + $0x100] sm:$0xff]
        %v1296 = vld [vmem:[#allocation12 + $0x108] sm:$0xff]
        %v1297 = vld [vmem:[#allocation12 + $0x110] sm:$0xff]
        %v1298 = vld [vmem:[#allocation12 + $0x118] sm:$0xff]
        %v1299 = vld [vmem:[#allocation12 + $0x120] sm:$0xff]
        %v1300 = vld [vmem:[#allocation12 + $0x128] sm:$0xff]
        %v1301 = vld [vmem:[#allocation12 + $0x130] sm:$0xff]
        %v1302 = vld [vmem:[#allocation12 + $0x138] sm:$0xff]
        %v1303 = vld [vmem:[#allocation12 + $0x140] sm:$0xff]
        %v1304 = vld [vmem:[#allocation12 + $0x148] sm:$0xff]
        %v1305 = vld [vmem:[#allocation12 + $0x150] sm:$0xff]
        %v1306 = vld [vmem:[#allocation12 + $0x158] sm:$0xff]
        %v1307 = vld [vmem:[#allocation12 + $0x160] sm:$0xff]
        %v1308 = vld [vmem:[#allocation12 + $0x168] sm:$0xff]
        %v1309 = vld [vmem:[#allocation12 + $0x170] sm:$0xff]
        %v1310 = vld [vmem:[#allocation12 + $0x178] sm:$0xff]
        %v1311 = vld [vmem:[#allocation12 + $0x180] sm:$0xff]
        %v1312 = vld [vmem:[#allocation12 + $0x188] sm:$0xff]
        %v1313 = vld [vmem:[#allocation12 + $0x190] sm:$0xff]
        %v1314 = vld [vmem:[#allocation12 + $0x198] sm:$0xff]
        %v1315 = vld [vmem:[#allocation12 + $0x1a0] sm:$0xff]
        %v1316 = vld [vmem:[#allocation12 + $0x1a8] sm:$0xff]
        %v1317 = vld [vmem:[#allocation12 + $0x1b0] sm:$0xff]
        %v1318 = vld [vmem:[#allocation12 + $0x1b8] sm:$0xff]
        %v1319 = vld [vmem:[#allocation12 + $0x1c0] sm:$0xff]
        %v1320 = vld [vmem:[#allocation12 + $0x1c8] sm:$0xff]
        %v1321 = vld [vmem:[#allocation12 + $0x1d0] sm:$0xff]
        %v1322 = vld [vmem:[#allocation12 + $0x1d8] sm:$0xff]
        %v1323 = vld [vmem:[#allocation12 + $0x1e0] sm:$0xff]
        %v1324 = vld [vmem:[#allocation12 + $0x1e8] sm:$0xff]
        %v1325 = vld [vmem:[#allocation12 + $0x1f0] sm:$0xff]
        %v1326 = vld [vmem:[#allocation12 + $0x1f8] sm:$0xff]
        %v1335 = vunpack.c.l.b16 %v1223
        %v1336 = vunpack.c.h.b16 %v1223
        %v1337 = vunpack.c.l.b16 %v1224
        %v1338 = vunpack.c.h.b16 %v1224
        %v1339 = vunpack.c.l.b16 %v1225
        %v1340 = vunpack.c.h.b16 %v1225
        %v1341 = vunpack.c.l.b16 %v1226
        %v1342 = vunpack.c.h.b16 %v1226
        %v1343 = vunpack.c.l.b16 %v1227
        %v1344 = vunpack.c.h.b16 %v1227
        %v1345 = vunpack.c.l.b16 %v1228
        %v1346 = vunpack.c.h.b16 %v1228
        %v1347 = vunpack.c.l.b16 %v1229
        %v1348 = vunpack.c.h.b16 %v1229
        %v1349 = vunpack.c.l.b16 %v1230
        %v1350 = vunpack.c.h.b16 %v1230
        %v1351 = vpack.c.b16 %v1337, %v1335
        %v1352 = vpack.c.b16 %v1338, %v1336
        %v1353 = vpack.c.b16 %v1341, %v1339
        %v1354 = vpack.c.b16 %v1342, %v1340
        %v1355 = vpack.c.b16 %v1345, %v1343
        %v1356 = vpack.c.b16 %v1346, %v1344
        %v1357 = vpack.c.b16 %v1349, %v1347
        %v1358 = vpack.c.b16 %v1350, %v1348
        %v1431 = vunpack.c.l.b16 %v1263
        %v1432 = vunpack.c.h.b16 %v1263
        %v1433 = vunpack.c.l.b16 %v1264
        %v1434 = vunpack.c.h.b16 %v1264
        %v1435 = vunpack.c.l.b16 %v1265
        %v1436 = vunpack.c.h.b16 %v1265
        %v1437 = vunpack.c.l.b16 %v1266
        %v1438 = vunpack.c.h.b16 %v1266
        %v1439 = vunpack.c.l.b16 %v1267
        %v1440 = vunpack.c.h.b16 %v1267
        %v1441 = vunpack.c.l.b16 %v1268
        %v1442 = vunpack.c.h.b16 %v1268
        %v1443 = vunpack.c.l.b16 %v1269
        %v1444 = vunpack.c.h.b16 %v1269
        %v1445 = vunpack.c.l.b16 %v1270
        %v1446 = vunpack.c.h.b16 %v1270
        %v1447 = vunpack.c.l.b16 %v1271
        %v1448 = vunpack.c.h.b16 %v1271
        %v1449 = vunpack.c.l.b16 %v1272
        %v1450 = vunpack.c.h.b16 %v1272
        %v1451 = vunpack.c.l.b16 %v1273
        %v1452 = vunpack.c.h.b16 %v1273
        %v1453 = vunpack.c.l.b16 %v1274
        %v1454 = vunpack.c.h.b16 %v1274
        %v1455 = vunpack.c.l.b16 %v1275
        %v1456 = vunpack.c.h.b16 %v1275
        %v1457 = vunpack.c.l.b16 %v1276
        %v1458 = vunpack.c.h.b16 %v1276
        %v1459 = vunpack.c.l.b16 %v1277
        %v1460 = vunpack.c.h.b16 %v1277
        %v1461 = vunpack.c.l.b16 %v1278
        %v1462 = vunpack.c.h.b16 %v1278
        %v1463 = vunpack.c.l.b16 %v1279
        %v1464 = vunpack.c.h.b16 %v1279
        %v1465 = vunpack.c.l.b16 %v1280
        %v1466 = vunpack.c.h.b16 %v1280
        %v1467 = vunpack.c.l.b16 %v1281
        %v1468 = vunpack.c.h.b16 %v1281
        %v1469 = vunpack.c.l.b16 %v1282
        %v1470 = vunpack.c.h.b16 %v1282
        %v1471 = vunpack.c.l.b16 %v1283
        %v1472 = vunpack.c.h.b16 %v1283
        %v1473 = vunpack.c.l.b16 %v1284
        %v1474 = vunpack.c.h.b16 %v1284
        %v1475 = vunpack.c.l.b16 %v1285
        %v1476 = vunpack.c.h.b16 %v1285
        %v1477 = vunpack.c.l.b16 %v1286
        %v1478 = vunpack.c.h.b16 %v1286
        %v1479 = vunpack.c.l.b16 %v1287
        %v1480 = vunpack.c.h.b16 %v1287
        %v1481 = vunpack.c.l.b16 %v1288
        %v1482 = vunpack.c.h.b16 %v1288
        %v1483 = vunpack.c.l.b16 %v1289
        %v1484 = vunpack.c.h.b16 %v1289
        %v1485 = vunpack.c.l.b16 %v1290
        %v1486 = vunpack.c.h.b16 %v1290
        %v1487 = vunpack.c.l.b16 %v1291
        %v1488 = vunpack.c.h.b16 %v1291
        %v1489 = vunpack.c.l.b16 %v1292
        %v1490 = vunpack.c.h.b16 %v1292
        %v1491 = vunpack.c.l.b16 %v1293
        %v1492 = vunpack.c.h.b16 %v1293
        %v1493 = vunpack.c.l.b16 %v1294
        %v1494 = vunpack.c.h.b16 %v1294
        %v1495 = vunpack.c.l.b16 %v1295
        %v1496 = vunpack.c.h.b16 %v1295
        %v1497 = vunpack.c.l.b16 %v1296
        %v1498 = vunpack.c.h.b16 %v1296
        %v1499 = vunpack.c.l.b16 %v1297
        %v1500 = vunpack.c.h.b16 %v1297
        %v1501 = vunpack.c.l.b16 %v1298
        %v1502 = vunpack.c.h.b16 %v1298
        %v1503 = vunpack.c.l.b16 %v1299
        %v1504 = vunpack.c.h.b16 %v1299
        %v1505 = vunpack.c.l.b16 %v1300
        %v1506 = vunpack.c.h.b16 %v1300
        %v1507 = vunpack.c.l.b16 %v1301
        %v1508 = vunpack.c.h.b16 %v1301
        %v1509 = vunpack.c.l.b16 %v1302
        %v1510 = vunpack.c.h.b16 %v1302
        %v1511 = vunpack.c.l.b16 %v1303
        %v1512 = vunpack.c.h.b16 %v1303
        %v1513 = vunpack.c.l.b16 %v1304
        %v1514 = vunpack.c.h.b16 %v1304
        %v1515 = vunpack.c.l.b16 %v1305
        %v1516 = vunpack.c.h.b16 %v1305
        %v1517 = vunpack.c.l.b16 %v1306
        %v1518 = vunpack.c.h.b16 %v1306
        %v1519 = vunpack.c.l.b16 %v1307
        %v1520 = vunpack.c.h.b16 %v1307
        %v1521 = vunpack.c.l.b16 %v1308
        %v1522 = vunpack.c.h.b16 %v1308
        %v1523 = vunpack.c.l.b16 %v1309
        %v1524 = vunpack.c.h.b16 %v1309
        %v1525 = vunpack.c.l.b16 %v1310
        %v1526 = vunpack.c.h.b16 %v1310
        %v1527 = vunpack.c.l.b16 %v1311
        %v1528 = vunpack.c.h.b16 %v1311
        %v1529 = vunpack.c.l.b16 %v1312
        %v1530 = vunpack.c.h.b16 %v1312
        %v1531 = vunpack.c.l.b16 %v1313
        %v1532 = vunpack.c.h.b16 %v1313
        %v1533 = vunpack.c.l.b16 %v1314
        %v1534 = vunpack.c.h.b16 %v1314
        %v1535 = vunpack.c.l.b16 %v1315
        %v1536 = vunpack.c.h.b16 %v1315
        %v1537 = vunpack.c.l.b16 %v1316
        %v1538 = vunpack.c.h.b16 %v1316
        %v1539 = vunpack.c.l.b16 %v1317
        %v1540 = vunpack.c.h.b16 %v1317
        %v1541 = vunpack.c.l.b16 %v1318
        %v1542 = vunpack.c.h.b16 %v1318
        %v1543 = vunpack.c.l.b16 %v1319
        %v1544 = vunpack.c.h.b16 %v1319
        %v1545 = vunpack.c.l.b16 %v1320
        %v1546 = vunpack.c.h.b16 %v1320
        %v1547 = vunpack.c.l.b16 %v1321
        %v1548 = vunpack.c.h.b16 %v1321
        %v1549 = vunpack.c.l.b16 %v1322
        %v1550 = vunpack.c.h.b16 %v1322
        %v1551 = vunpack.c.l.b16 %v1323
        %v1552 = vunpack.c.h.b16 %v1323
        %v1553 = vunpack.c.l.b16 %v1324
        %v1554 = vunpack.c.h.b16 %v1324
        %v1555 = vunpack.c.l.b16 %v1325
        %v1556 = vunpack.c.h.b16 %v1325
        %v1557 = vunpack.c.l.b16 %v1326
        %v1558 = vunpack.c.h.b16 %v1326
        %v1559 = vpack.c.b16 %v1435, %v1431
        %v1560 = vpack.c.b16 %v1436, %v1432
        %v1561 = vpack.c.b16 %v1437, %v1433
        %v1562 = vpack.c.b16 %v1438, %v1434
        %v1563 = vpack.c.b16 %v1443, %v1439
        %v1564 = vpack.c.b16 %v1444, %v1440
        %v1565 = vpack.c.b16 %v1445, %v1441
        %v1566 = vpack.c.b16 %v1446, %v1442
        %v1567 = vpack.c.b16 %v1451, %v1447
        %v1568 = vpack.c.b16 %v1452, %v1448
        %v1569 = vpack.c.b16 %v1453, %v1449
        %v1570 = vpack.c.b16 %v1454, %v1450
        %v1571 = vpack.c.b16 %v1459, %v1455
        %v1572 = vpack.c.b16 %v1460, %v1456
        %v1573 = vpack.c.b16 %v1461, %v1457
        %v1574 = vpack.c.b16 %v1462, %v1458
        %v1575 = vpack.c.b16 %v1467, %v1463
        %v1576 = vpack.c.b16 %v1468, %v1464
        %v1577 = vpack.c.b16 %v1469, %v1465
        %v1578 = vpack.c.b16 %v1470, %v1466
        %v1579 = vpack.c.b16 %v1475, %v1471
        %v1580 = vpack.c.b16 %v1476, %v1472
        %v1581 = vpack.c.b16 %v1477, %v1473
        %v1582 = vpack.c.b16 %v1478, %v1474
        %v1583 = vpack.c.b16 %v1483, %v1479
        %v1584 = vpack.c.b16 %v1484, %v1480
        %v1585 = vpack.c.b16 %v1485, %v1481
        %v1586 = vpack.c.b16 %v1486, %v1482
        %v1587 = vpack.c.b16 %v1491, %v1487
        %v1588 = vpack.c.b16 %v1492, %v1488
        %v1589 = vpack.c.b16 %v1493, %v1489
        %v1590 = vpack.c.b16 %v1494, %v1490
        %v1591 = vpack.c.b16 %v1499, %v1495
        %v1592 = vpack.c.b16 %v1500, %v1496
        %v1593 = vpack.c.b16 %v1501, %v1497
        %v1594 = vpack.c.b16 %v1502, %v1498
        %v1595 = vpack.c.b16 %v1507, %v1503
        %v1596 = vpack.c.b16 %v1508, %v1504
        %v1597 = vpack.c.b16 %v1509, %v1505
        %v1598 = vpack.c.b16 %v1510, %v1506
        %v1599 = vpack.c.b16 %v1515, %v1511
        %v1600 = vpack.c.b16 %v1516, %v1512
        %v1601 = vpack.c.b16 %v1517, %v1513
        %v1602 = vpack.c.b16 %v1518, %v1514
        %v1603 = vpack.c.b16 %v1523, %v1519
        %v1604 = vpack.c.b16 %v1524, %v1520
        %v1605 = vpack.c.b16 %v1525, %v1521
        %v1606 = vpack.c.b16 %v1526, %v1522
        %v1607 = vpack.c.b16 %v1531, %v1527
        %v1608 = vpack.c.b16 %v1532, %v1528
        %v1609 = vpack.c.b16 %v1533, %v1529
        %v1610 = vpack.c.b16 %v1534, %v1530
        %v1611 = vpack.c.b16 %v1539, %v1535
        %v1612 = vpack.c.b16 %v1540, %v1536
        %v1613 = vpack.c.b16 %v1541, %v1537
        %v1614 = vpack.c.b16 %v1542, %v1538
        %v1615 = vpack.c.b16 %v1547, %v1543
        %v1616 = vpack.c.b16 %v1548, %v1544
        %v1617 = vpack.c.b16 %v1549, %v1545
        %v1618 = vpack.c.b16 %v1550, %v1546
        %v1619 = vpack.c.b16 %v1555, %v1551
        %v1620 = vpack.c.b16 %v1556, %v1552
        %v1621 = vpack.c.b16 %v1557, %v1553
        %v1622 = vpack.c.b16 %v1558, %v1554
        %1687 = vmatprep.subr.bf16.mxu0 %v1560
        %1688 = vmatpush1.bf16.msra.mxu0 %v1559
        %1689 = vmatprep.subr.bf16.mxu0 %v1564
        %1690 = vmatpush1.bf16.msra.mxu0 %v1563
        %1691 = vmatprep.subr.bf16.mxu0 %v1568
        %1692 = vmatpush1.bf16.msra.mxu0 %v1567
        %1693 = vmatprep.subr.bf16.mxu0 %v1572
        %1694 = vmatpush1.bf16.msra.mxu0 %v1571
        %1695 = vmatprep.subr.bf16.mxu0 %v1576
        %1696 = vmatpush1.bf16.msra.mxu0 %v1575
        %1697 = vmatprep.subr.bf16.mxu0 %v1580
        %1698 = vmatpush1.bf16.msra.mxu0 %v1579
        %1699 = vmatprep.subr.bf16.mxu0 %v1584
        %1700 = vmatpush1.bf16.msra.mxu0 %v1583
        %1701 = vmatprep.subr.bf16.mxu0 %v1588
        %1702 = vmatpush1.bf16.msra.mxu0 %v1587
        %1703 = vmatprep.subr.bf16.mxu0 %v1592
        %1704 = vmatpush1.bf16.msra.mxu0 %v1591
        %1705 = vmatprep.subr.bf16.mxu0 %v1596
        %1706 = vmatpush1.bf16.msra.mxu0 %v1595
        %1707 = vmatprep.subr.bf16.mxu0 %v1600
        %1708 = vmatpush1.bf16.msra.mxu0 %v1599
        %1709 = vmatprep.subr.bf16.mxu0 %v1604
        %1710 = vmatpush1.bf16.msra.mxu0 %v1603
        %1711 = vmatprep.subr.bf16.mxu0 %v1608
        %1712 = vmatpush1.bf16.msra.mxu0 %v1607
        %1713 = vmatprep.subr.bf16.mxu0 %v1612
        %1714 = vmatpush1.bf16.msra.mxu0 %v1611
        %1715 = vmatprep.subr.bf16.mxu0 %v1616
        %1716 = vmatpush1.bf16.msra.mxu0 %v1615
        %1717 = vmatprep.subr.bf16.mxu0 %v1620
        %1718 = vmatpush1.bf16.msra.mxu0 %v1619
        %1719 = vmatprep.mubr.bf16.mxu0 %v1352
        %1720 = vmatmul.mubr.bf16.gmra.mrb[0].mxu0 %v1351
        %v1721 = vpop.f32.mrb[0].mxu0
        %v1722 = vadd.f32 0.0, %v1721
        %v1723 = vpop.f32.mrb[0].mxu0
        %v1724 = vadd.f32 0.0, %v1723
        %v1725 = vpop.f32.mrb[0].mxu0
        %v1726 = vadd.f32 0.0, %v1725
        %v1727 = vpop.f32.mrb[0].mxu0
        %v1728 = vadd.f32 0.0, %v1727
        %1729 = vmatprep.mubr.bf16.mxu0 %v1354
        %1730 = vmatmul.mubr.bf16.gmra.mrb[0].mxu0 %v1353
        %v1731 = vpop.f32.mrb[0].mxu0
        %v1732 = vadd.f32 0.0, %v1731
        %v1733 = vpop.f32.mrb[0].mxu0
        %v1734 = vadd.f32 0.0, %v1733
        %v1735 = vpop.f32.mrb[0].mxu0
        %v1736 = vadd.f32 0.0, %v1735
        %v1737 = vpop.f32.mrb[0].mxu0
        %v1738 = vadd.f32 0.0, %v1737
        %1739 = vmatprep.mubr.bf16.mxu0 %v1356
        %1740 = vmatmul.mubr.bf16.gmra.mrb[0].mxu0 %v1355
        %v1741 = vpop.f32.mrb[0].mxu0
        %v1742 = vadd.f32 0.0, %v1741
        %v1743 = vpop.f32.mrb[0].mxu0
        %v1744 = vadd.f32 0.0, %v1743
        %v1745 = vpop.f32.mrb[0].mxu0
        %v1746 = vadd.f32 0.0, %v1745
        %v1747 = vpop.f32.mrb[0].mxu0
        %v1748 = vadd.f32 0.0, %v1747
        %1749 = vmatprep.mubr.bf16.mxu0 %v1358
        %1750 = vmatmul.mubr.bf16.gmra.mrb[0].mxu0 %v1357
        %v1751 = vpop.f32.mrb[0].mxu0
        %v1752 = vadd.f32 0.0, %v1751
        %v1753 = vpop.f32.mrb[0].mxu0
        %v1754 = vadd.f32 0.0, %v1753
        %v1755 = vpop.f32.mrb[0].mxu0
        %v1756 = vadd.f32 0.0, %v1755
        %v1757 = vpop.f32.mrb[0].mxu0
        %v1758 = vadd.f32 0.0, %v1757
        %1759 = vdwg.mxu0
        %1760 = vmatprep.subr.bf16.mxu0 %v1562
        %1761 = vmatpush1.bf16.msra.mxu0 %v1561
        %1762 = vmatprep.subr.bf16.mxu0 %v1566
        %1763 = vmatpush1.bf16.msra.mxu0 %v1565
        %1764 = vmatprep.subr.bf16.mxu0 %v1570
        %1765 = vmatpush1.bf16.msra.mxu0 %v1569
        %1766 = vmatprep.subr.bf16.mxu0 %v1574
        %1767 = vmatpush1.bf16.msra.mxu0 %v1573
        %1768 = vmatprep.subr.bf16.mxu0 %v1578
        %1769 = vmatpush1.bf16.msra.mxu0 %v1577
        %1770 = vmatprep.subr.bf16.mxu0 %v1582
        %1771 = vmatpush1.bf16.msra.mxu0 %v1581
        %1772 = vmatprep.subr.bf16.mxu0 %v1586
        %1773 = vmatpush1.bf16.msra.mxu0 %v1585
        %1774 = vmatprep.subr.bf16.mxu0 %v1590
        %1775 = vmatpush1.bf16.msra.mxu0 %v1589
        %1776 = vmatprep.subr.bf16.mxu0 %v1594
        %1777 = vmatpush1.bf16.msra.mxu0 %v1593
        %1778 = vmatprep.subr.bf16.mxu0 %v1598
        %1779 = vmatpush1.bf16.msra.mxu0 %v1597
        %1780 = vmatprep.subr.bf16.mxu0 %v1602
        %1781 = vmatpush1.bf16.msra.mxu0 %v1601
        %1782 = vmatprep.subr.bf16.mxu0 %v1606
        %1783 = vmatpush1.bf16.msra.mxu0 %v1605
        %1784 = vmatprep.subr.bf16.mxu0 %v1610
        %1785 = vmatpush1.bf16.msra.mxu0 %v1609
        %1786 = vmatprep.subr.bf16.mxu0 %v1614
        %1787 = vmatpush1.bf16.msra.mxu0 %v1613
        %1788 = vmatprep.subr.bf16.mxu0 %v1618
        %1789 = vmatpush1.bf16.msra.mxu0 %v1617
        %1790 = vmatprep.subr.bf16.mxu0 %v1622
        %1791 = vmatpush1.bf16.msra.mxu0 %v1621
        %1792 = vmatprep.mubr.bf16.mxu0 %v1352
        %1793 = vmatmul.mubr.bf16.gmra.mrb[0].mxu0 %v1351
        %v1794 = vpop.f32.mrb[0].mxu0
        %v1795 = vadd.f32 0.0, %v1794
        %v1796 = vpop.f32.mrb[0].mxu0
        %v1797 = vadd.f32 0.0, %v1796
        %v1798 = vpop.f32.mrb[0].mxu0
        %v1799 = vadd.f32 0.0, %v1798
        %v1800 = vpop.f32.mrb[0].mxu0
        %v1801 = vadd.f32 0.0, %v1800
        %1802 = vmatprep.mubr.bf16.mxu0 %v1354
        %1803 = vmatmul.mubr.bf16.gmra.mrb[0].mxu0 %v1353
        %v1804 = vpop.f32.mrb[0].mxu0
        %v1805 = vadd.f32 0.0, %v1804
        %v1806 = vpop.f32.mrb[0].mxu0
        %v1807 = vadd.f32 0.0, %v1806
        %v1808 = vpop.f32.mrb[0].mxu0
        %v1809 = vadd.f32 0.0, %v1808
        %v1810 = vpop.f32.mrb[0].mxu0
        %v1811 = vadd.f32 0.0, %v1810
        %1812 = vmatprep.mubr.bf16.mxu0 %v1356
        %1813 = vmatmul.mubr.bf16.gmra.mrb[0].mxu0 %v1355
        %v1814 = vpop.f32.mrb[0].mxu0
        %v1815 = vadd.f32 0.0, %v1814
        %v1816 = vpop.f32.mrb[0].mxu0
        %v1817 = vadd.f32 0.0, %v1816
        %v1818 = vpop.f32.mrb[0].mxu0
        %v1819 = vadd.f32 0.0, %v1818
        %v1820 = vpop.f32.mrb[0].mxu0
        %v1821 = vadd.f32 0.0, %v1820
        %1822 = vmatprep.mubr.bf16.mxu0 %v1358
        %1823 = vmatmul.mubr.bf16.gmra.mrb[0].mxu0 %v1357
        %v1824 = vpop.f32.mrb[0].mxu0
        %v1825 = vadd.f32 0.0, %v1824
        %v1826 = vpop.f32.mrb[0].mxu0
        %v1827 = vadd.f32 0.0, %v1826
        %v1828 = vpop.f32.mrb[0].mxu0
        %v1829 = vadd.f32 0.0, %v1828
        %v1830 = vpop.f32.mrb[0].mxu0
        %v1831 = vadd.f32 0.0, %v1830
        %1832 = vdwg.mxu0
        %v1833 = vadd.f32 %v1231, %v1722
        %v1834 = vadd.f32 %v1232, %v1724
        %v1835 = vadd.f32 %v1233, %v1795
        %v1836 = vadd.f32 %v1234, %v1797
        %v1837 = vadd.f32 %v1235, %v1726
        %v1838 = vadd.f32 %v1236, %v1728
        %v1839 = vadd.f32 %v1237, %v1799
        %v1840 = vadd.f32 %v1238, %v1801
        %v1841 = vadd.f32 %v1239, %v1732
        %v1842 = vadd.f32 %v1240, %v1734
        %v1843 = vadd.f32 %v1241, %v1805
        %v1844 = vadd.f32 %v1242, %v1807
        %v1845 = vadd.f32 %v1243, %v1736
        %v1846 = vadd.f32 %v1244, %v1738
        %v1847 = vadd.f32 %v1245, %v1809
        %v1848 = vadd.f32 %v1246, %v1811
        %v1849 = vadd.f32 %v1247, %v1742
        %v1850 = vadd.f32 %v1248, %v1744
        %v1851 = vadd.f32 %v1249, %v1815
        %v1852 = vadd.f32 %v1250, %v1817
        %v1853 = vadd.f32 %v1251, %v1746
        %v1854 = vadd.f32 %v1252, %v1748
        %v1855 = vadd.f32 %v1253, %v1819
        %v1856 = vadd.f32 %v1254, %v1821
        %v1857 = vadd.f32 %v1255, %v1752
        %v1858 = vadd.f32 %v1256, %v1754
        %v1859 = vadd.f32 %v1257, %v1825
        %v1860 = vadd.f32 %v1258, %v1827
        %v1861 = vadd.f32 %v1259, %v1756
        %v1862 = vadd.f32 %v1260, %v1758
        %v1863 = vadd.f32 %v1261, %v1829
        %v1864 = vadd.f32 %v1262, %v1831
        %1865 = vst [vmem:[#allocation3] sm:$0xff] %v1833
        %1866 = vst [vmem:[#allocation3 + $0x8] sm:$0xff] %v1834
        %1867 = vst [vmem:[#allocation3 + $0x10] sm:$0xff] %v1835
        %1868 = vst [vmem:[#allocation3 + $0x18] sm:$0xff] %v1836
        %1869 = vst [vmem:[#allocation3 + $0x20] sm:$0xff] %v1837
        %1870 = vst [vmem:[#allocation3 + $0x28] sm:$0xff] %v1838
        %1871 = vst [vmem:[#allocation3 + $0x30] sm:$0xff] %v1839
        %1872 = vst [vmem:[#allocation3 + $0x38] sm:$0xff] %v1840
        %1873 = vst [vmem:[#allocation3 + $0x40] sm:$0xff] %v1841
        %1874 = vst [vmem:[#allocation3 + $0x48] sm:$0xff] %v1842
        %1875 = vst [vmem:[#allocation3 + $0x50] sm:$0xff] %v1843
        %1876 = vst [vmem:[#allocation3 + $0x58] sm:$0xff] %v1844
        %1877 = vst [vmem:[#allocation3 + $0x60] sm:$0xff] %v1845
        %1878 = vst [vmem:[#allocation3 + $0x68] sm:$0xff] %v1846
        %1879 = vst [vmem:[#allocation3 + $0x70] sm:$0xff] %v1847
        %1880 = vst [vmem:[#allocation3 + $0x78] sm:$0xff] %v1848
        %1881 = vst [vmem:[#allocation3 + $0x80] sm:$0xff] %v1849
        %1882 = vst [vmem:[#allocation3 + $0x88] sm:$0xff] %v1850
        %1883 = vst [vmem:[#allocation3 + $0x90] sm:$0xff] %v1851
        %1884 = vst [vmem:[#allocation3 + $0x98] sm:$0xff] %v1852
        %1885 = vst [vmem:[#allocation3 + $0xa0] sm:$0xff] %v1853
        %1886 = vst [vmem:[#allocation3 + $0xa8] sm:$0xff] %v1854
        %1887 = vst [vmem:[#allocation3 + $0xb0] sm:$0xff] %v1855
        %1888 = vst [vmem:[#allocation3 + $0xb8] sm:$0xff] %v1856
        %1889 = vst [vmem:[#allocation3 + $0xc0] sm:$0xff] %v1857
        %1890 = vst [vmem:[#allocation3 + $0xc8] sm:$0xff] %v1858
        %1891 = vst [vmem:[#allocation3 + $0xd0] sm:$0xff] %v1859
        %1892 = vst [vmem:[#allocation3 + $0xd8] sm:$0xff] %v1860
        %1893 = vst [vmem:[#allocation3 + $0xe0] sm:$0xff] %v1861
        %1894 = vst [vmem:[#allocation3 + $0xe8] sm:$0xff] %v1862
        %1895 = vst [vmem:[#allocation3 + $0xf0] sm:$0xff] %v1863
        %1896 = vst [vmem:[#allocation3 + $0xf8] sm:$0xff] %v1864
        %v1897 = vld [vmem:[#allocation2] sm:$0xff]
        %v1898 = vld [vmem:[#allocation2 + $0x8] sm:$0x11]
        %v1899 = vld [vmem:[#allocation2 + $0x10] sm:$0xff]
        %v1900 = vld [vmem:[#allocation2 + $0x18] sm:$0x11]
        %v1901 = vld [vmem:[#allocation2 + $0x20] sm:$0xff]
        %v1902 = vld [vmem:[#allocation2 + $0x28] sm:$0x11]
        %v1903 = vld [vmem:[#allocation2 + $0x30] sm:$0xff]
        %v1904 = vld [vmem:[#allocation2 + $0x38] sm:$0x11]
        %v1905 = vld [vmem:[#allocation2 + $0x40] sm:$0xff]
        %v1906 = vld [vmem:[#allocation2 + $0x48] sm:$0x11]
        %v1907 = vld [vmem:[#allocation2 + $0x50] sm:$0xff]
        %v1908 = vld [vmem:[#allocation2 + $0x58] sm:$0x11]
        %v1909 = vld [vmem:[#allocation2 + $0x60] sm:$0xff]
        %v1910 = vld [vmem:[#allocation2 + $0x68] sm:$0x11]
        %v1911 = vld [vmem:[#allocation2 + $0x70] sm:$0xff]
        %v1912 = vld [vmem:[#allocation2 + $0x78] sm:$0x11]
        %vm1913 = vsmask.f32 3328
        %vm1914 = vsmask.f32 7440
        %vm1915 = vmor %vm1913, %vm1914
        %v1917 = vshrl.u32 %v1897, 16
        %v1919 = vrot.slane %v1917, 4
        %v1920 = vshll.u32 %v1897, 16
        %v1922 = vrot.slane %v1920, 5
        %v1923 = vor.u32 %v1919, %v1922
        %v1924 = vrot.slane %v1923, 4
        %v1926 = vshll.u32 %v1898, 16
        %v1928 = vrot.slane %v1926, 5
        %v1929 = vsel %vm1915, %v1924, %v1928
        %v1931 = vshrl.u32 %v1899, 16
        %v1933 = vrot.slane %v1931, 4
        %v1934 = vshll.u32 %v1899, 16
        %v1936 = vrot.slane %v1934, 5
        %v1937 = vor.u32 %v1933, %v1936
        %v1938 = vrot.slane %v1937, 4
        %v1940 = vshll.u32 %v1900, 16
        %v1942 = vrot.slane %v1940, 5
        %v1943 = vsel %vm1915, %v1938, %v1942
        %v1945 = vshrl.u32 %v1901, 16
        %v1947 = vrot.slane %v1945, 4
        %v1948 = vshll.u32 %v1901, 16
        %v1950 = vrot.slane %v1948, 5
        %v1951 = vor.u32 %v1947, %v1950
        %v1952 = vrot.slane %v1951, 4
        %v1954 = vshll.u32 %v1902, 16
        %v1956 = vrot.slane %v1954, 5
        %v1957 = vsel %vm1915, %v1952, %v1956
        %v1959 = vshrl.u32 %v1903, 16
        %v1961 = vrot.slane %v1959, 4
        %v1962 = vshll.u32 %v1903, 16
        %v1964 = vrot.slane %v1962, 5
        %v1965 = vor.u32 %v1961, %v1964
        %v1966 = vrot.slane %v1965, 4
        %v1968 = vshll.u32 %v1904, 16
        %v1970 = vrot.slane %v1968, 5
        %v1971 = vsel %vm1915, %v1966, %v1970
        %v1973 = vshrl.u32 %v1905, 16
        %v1975 = vrot.slane %v1973, 4
        %v1976 = vshll.u32 %v1905, 16
        %v1978 = vrot.slane %v1976, 5
        %v1979 = vor.u32 %v1975, %v1978
        %v1980 = vrot.slane %v1979, 4
        %v1982 = vshll.u32 %v1906, 16
        %v1984 = vrot.slane %v1982, 5
        %v1985 = vsel %vm1915, %v1980, %v1984
        %v1987 = vshrl.u32 %v1907, 16
        %v1989 = vrot.slane %v1987, 4
        %v1990 = vshll.u32 %v1907, 16
        %v1992 = vrot.slane %v1990, 5
        %v1993 = vor.u32 %v1989, %v1992
        %v1994 = vrot.slane %v1993, 4
        %v1996 = vshll.u32 %v1908, 16
        %v1998 = vrot.slane %v1996, 5
        %v1999 = vsel %vm1915, %v1994, %v1998
        %v2001 = vshrl.u32 %v1909, 16
        %v2003 = vrot.slane %v2001, 4
        %v2004 = vshll.u32 %v1909, 16
        %v2006 = vrot.slane %v2004, 5
        %v2007 = vor.u32 %v2003, %v2006
        %v2008 = vrot.slane %v2007, 4
        %v2010 = vshll.u32 %v1910, 16
        %v2012 = vrot.slane %v2010, 5
        %v2013 = vsel %vm1915, %v2008, %v2012
        %v2015 = vshrl.u32 %v1911, 16
        %v2017 = vrot.slane %v2015, 4
        %v2018 = vshll.u32 %v1911, 16
        %v2020 = vrot.slane %v2018, 5
        %v2021 = vor.u32 %v2017, %v2020
        %v2022 = vrot.slane %v2021, 4
        %v2024 = vshll.u32 %v1912, 16
        %v2026 = vrot.slane %v2024, 5
        %v2027 = vsel %vm1915, %v2022, %v2026
        %v2028 = vld [vmem:[#allocation3] sm:$0xff]
        %v2029 = vld [vmem:[#allocation3 + $0x8] sm:$0xff]
        %v2030 = vld [vmem:[#allocation3 + $0x10] sm:$0xff]
        %v2031 = vld [vmem:[#allocation3 + $0x18] sm:$0xff]
        %v2032 = vld [vmem:[#allocation3 + $0x20] sm:$0xff]
        %v2033 = vld [vmem:[#allocation3 + $0x28] sm:$0xff]
        %v2034 = vld [vmem:[#allocation3 + $0x30] sm:$0xff]
        %v2035 = vld [vmem:[#allocation3 + $0x38] sm:$0xff]
        %v2036 = vld [vmem:[#allocation3 + $0x40] sm:$0xff]
        %v2037 = vld [vmem:[#allocation3 + $0x48] sm:$0xff]
        %v2038 = vld [vmem:[#allocation3 + $0x50] sm:$0xff]
        %v2039 = vld [vmem:[#allocation3 + $0x58] sm:$0xff]
        %v2040 = vld [vmem:[#allocation3 + $0x60] sm:$0xff]
        %v2041 = vld [vmem:[#allocation3 + $0x68] sm:$0xff]
        %v2042 = vld [vmem:[#allocation3 + $0x70] sm:$0xff]
        %v2043 = vld [vmem:[#allocation3 + $0x78] sm:$0xff]
        %v2044 = vld [vmem:[#allocation3 + $0x80] sm:$0xff]
        %v2045 = vld [vmem:[#allocation3 + $0x88] sm:$0xff]
        %v2046 = vld [vmem:[#allocation3 + $0x90] sm:$0xff]
        %v2047 = vld [vmem:[#allocation3 + $0x98] sm:$0xff]
        %v2048 = vld [vmem:[#allocation3 + $0xa0] sm:$0xff]
        %v2049 = vld [vmem:[#allocation3 + $0xa8] sm:$0xff]
        %v2050 = vld [vmem:[#allocation3 + $0xb0] sm:$0xff]
        %v2051 = vld [vmem:[#allocation3 + $0xb8] sm:$0xff]
        %v2052 = vld [vmem:[#allocation3 + $0xc0] sm:$0xff]
        %v2053 = vld [vmem:[#allocation3 + $0xc8] sm:$0xff]
        %v2054 = vld [vmem:[#allocation3 + $0xd0] sm:$0xff]
        %v2055 = vld [vmem:[#allocation3 + $0xd8] sm:$0xff]
        %v2056 = vld [vmem:[#allocation3 + $0xe0] sm:$0xff]
        %v2057 = vld [vmem:[#allocation3 + $0xe8] sm:$0xff]
        %v2058 = vld [vmem:[#allocation3 + $0xf0] sm:$0xff]
        %v2059 = vld [vmem:[#allocation3 + $0xf8] sm:$0xff]
        %s2060 = scalar_lea.vmem [#allocation12], 512
        %v2061 = vld [vmem:[%s2060] sm:$0xff]
        %v2062 = vld [vmem:[%s2060 + $0x8] sm:$0xff]
        %v2063 = vld [vmem:[%s2060 + $0x10] sm:$0xff]
        %v2064 = vld [vmem:[%s2060 + $0x18] sm:$0xff]
        %v2065 = vld [vmem:[%s2060 + $0x20] sm:$0xff]
        %v2066 = vld [vmem:[%s2060 + $0x28] sm:$0xff]
        %v2067 = vld [vmem:[%s2060 + $0x30] sm:$0xff]
        %v2068 = vld [vmem:[%s2060 + $0x38] sm:$0xff]
        %v2069 = vld [vmem:[%s2060 + $0x40] sm:$0xff]
        %v2070 = vld [vmem:[%s2060 + $0x48] sm:$0xff]
        %v2071 = vld [vmem:[%s2060 + $0x50] sm:$0xff]
        %v2072 = vld [vmem:[%s2060 + $0x58] sm:$0xff]
        %v2073 = vld [vmem:[%s2060 + $0x60] sm:$0xff]
        %v2074 = vld [vmem:[%s2060 + $0x68] sm:$0xff]
        %v2075 = vld [vmem:[%s2060 + $0x70] sm:$0xff]
        %v2076 = vld [vmem:[%s2060 + $0x78] sm:$0xff]
        %v2077 = vld [vmem:[%s2060 + $0x80] sm:$0xff]
        %v2078 = vld [vmem:[%s2060 + $0x88] sm:$0xff]
        %v2079 = vld [vmem:[%s2060 + $0x90] sm:$0xff]
        %v2080 = vld [vmem:[%s2060 + $0x98] sm:$0xff]
        %v2081 = vld [vmem:[%s2060 + $0xa0] sm:$0xff]
        %v2082 = vld [vmem:[%s2060 + $0xa8] sm:$0xff]
        %v2083 = vld [vmem:[%s2060 + $0xb0] sm:$0xff]
        %v2084 = vld [vmem:[%s2060 + $0xb8] sm:$0xff]
        %v2085 = vld [vmem:[%s2060 + $0xc0] sm:$0xff]
        %v2086 = vld [vmem:[%s2060 + $0xc8] sm:$0xff]
        %v2087 = vld [vmem:[%s2060 + $0xd0] sm:$0xff]
        %v2088 = vld [vmem:[%s2060 + $0xd8] sm:$0xff]
        %v2089 = vld [vmem:[%s2060 + $0xe0] sm:$0xff]
        %v2090 = vld [vmem:[%s2060 + $0xe8] sm:$0xff]
        %v2091 = vld [vmem:[%s2060 + $0xf0] sm:$0xff]
        %v2092 = vld [vmem:[%s2060 + $0xf8] sm:$0xff]
        %v2093 = vld [vmem:[%s2060 + $0x100] sm:$0xff]
        %v2094 = vld [vmem:[%s2060 + $0x108] sm:$0xff]
        %v2095 = vld [vmem:[%s2060 + $0x110] sm:$0xff]
        %v2096 = vld [vmem:[%s2060 + $0x118] sm:$0xff]
        %v2097 = vld [vmem:[%s2060 + $0x120] sm:$0xff]
        %v2098 = vld [vmem:[%s2060 + $0x128] sm:$0xff]
        %v2099 = vld [vmem:[%s2060 + $0x130] sm:$0xff]
        %v2100 = vld [vmem:[%s2060 + $0x138] sm:$0xff]
        %v2101 = vld [vmem:[%s2060 + $0x140] sm:$0xff]
        %v2102 = vld [vmem:[%s2060 + $0x148] sm:$0xff]
        %v2103 = vld [vmem:[%s2060 + $0x150] sm:$0xff]
        %v2104 = vld [vmem:[%s2060 + $0x158] sm:$0xff]
        %v2105 = vld [vmem:[%s2060 + $0x160] sm:$0xff]
        %v2106 = vld [vmem:[%s2060 + $0x168] sm:$0xff]
        %v2107 = vld [vmem:[%s2060 + $0x170] sm:$0xff]
        %v2108 = vld [vmem:[%s2060 + $0x178] sm:$0xff]
        %v2109 = vld [vmem:[%s2060 + $0x180] sm:$0xff]
        %v2110 = vld [vmem:[%s2060 + $0x188] sm:$0xff]
        %v2111 = vld [vmem:[%s2060 + $0x190] sm:$0xff]
        %v2112 = vld [vmem:[%s2060 + $0x198] sm:$0xff]
        %v2113 = vld [vmem:[%s2060 + $0x1a0] sm:$0xff]
        %v2114 = vld [vmem:[%s2060 + $0x1a8] sm:$0xff]
        %v2115 = vld [vmem:[%s2060 + $0x1b0] sm:$0xff]
        %v2116 = vld [vmem:[%s2060 + $0x1b8] sm:$0xff]
        %v2117 = vld [vmem:[%s2060 + $0x1c0] sm:$0xff]
        %v2118 = vld [vmem:[%s2060 + $0x1c8] sm:$0xff]
        %v2119 = vld [vmem:[%s2060 + $0x1d0] sm:$0xff]
        %v2120 = vld [vmem:[%s2060 + $0x1d8] sm:$0xff]
        %v2121 = vld [vmem:[%s2060 + $0x1e0] sm:$0xff]
        %v2122 = vld [vmem:[%s2060 + $0x1e8] sm:$0xff]
        %v2123 = vld [vmem:[%s2060 + $0x1f0] sm:$0xff]
        %v2124 = vld [vmem:[%s2060 + $0x1f8] sm:$0xff]
        %v2125 = vunpack.c.l.b16 %v1929
        %v2126 = vunpack.c.h.b16 %v1929
        %v2127 = vunpack.c.l.b16 %v1943
        %v2128 = vunpack.c.h.b16 %v1943
        %v2129 = vunpack.c.l.b16 %v1957
        %v2130 = vunpack.c.h.b16 %v1957
        %v2131 = vunpack.c.l.b16 %v1971
        %v2132 = vunpack.c.h.b16 %v1971
        %v2133 = vunpack.c.l.b16 %v1985
        %v2134 = vunpack.c.h.b16 %v1985
        %v2135 = vunpack.c.l.b16 %v1999
        %v2136 = vunpack.c.h.b16 %v1999
        %v2137 = vunpack.c.l.b16 %v2013
        %v2138 = vunpack.c.h.b16 %v2013
        %v2139 = vunpack.c.l.b16 %v2027
        %v2140 = vunpack.c.h.b16 %v2027
        %v2141 = vpack.c.b16 %v2127, %v2125
        %v2142 = vpack.c.b16 %v2128, %v2126
        %v2143 = vpack.c.b16 %v2131, %v2129
        %v2144 = vpack.c.b16 %v2132, %v2130
        %v2145 = vpack.c.b16 %v2135, %v2133
        %v2146 = vpack.c.b16 %v2136, %v2134
        %v2147 = vpack.c.b16 %v2139, %v2137
        %v2148 = vpack.c.b16 %v2140, %v2138
        %v2221 = vunpack.c.l.b16 %v2061
        %v2222 = vunpack.c.h.b16 %v2061
        %v2223 = vunpack.c.l.b16 %v2062
        %v2224 = vunpack.c.h.b16 %v2062
        %v2225 = vunpack.c.l.b16 %v2063
        %v2226 = vunpack.c.h.b16 %v2063
        %v2227 = vunpack.c.l.b16 %v2064
        %v2228 = vunpack.c.h.b16 %v2064
        %v2229 = vunpack.c.l.b16 %v2065
        %v2230 = vunpack.c.h.b16 %v2065
        %v2231 = vunpack.c.l.b16 %v2066
        %v2232 = vunpack.c.h.b16 %v2066
        %v2233 = vunpack.c.l.b16 %v2067
        %v2234 = vunpack.c.h.b16 %v2067
        %v2235 = vunpack.c.l.b16 %v2068
        %v2236 = vunpack.c.h.b16 %v2068
        %v2237 = vunpack.c.l.b16 %v2069
        %v2238 = vunpack.c.h.b16 %v2069
        %v2239 = vunpack.c.l.b16 %v2070
        %v2240 = vunpack.c.h.b16 %v2070
        %v2241 = vunpack.c.l.b16 %v2071
        %v2242 = vunpack.c.h.b16 %v2071
        %v2243 = vunpack.c.l.b16 %v2072
        %v2244 = vunpack.c.h.b16 %v2072
        %v2245 = vunpack.c.l.b16 %v2073
        %v2246 = vunpack.c.h.b16 %v2073
        %v2247 = vunpack.c.l.b16 %v2074
        %v2248 = vunpack.c.h.b16 %v2074
        %v2249 = vunpack.c.l.b16 %v2075
        %v2250 = vunpack.c.h.b16 %v2075
        %v2251 = vunpack.c.l.b16 %v2076
        %v2252 = vunpack.c.h.b16 %v2076
        %v2253 = vunpack.c.l.b16 %v2077
        %v2254 = vunpack.c.h.b16 %v2077
        %v2255 = vunpack.c.l.b16 %v2078
        %v2256 = vunpack.c.h.b16 %v2078
        %v2257 = vunpack.c.l.b16 %v2079
        %v2258 = vunpack.c.h.b16 %v2079
        %v2259 = vunpack.c.l.b16 %v2080
        %v2260 = vunpack.c.h.b16 %v2080
        %v2261 = vunpack.c.l.b16 %v2081
        %v2262 = vunpack.c.h.b16 %v2081
        %v2263 = vunpack.c.l.b16 %v2082
        %v2264 = vunpack.c.h.b16 %v2082
        %v2265 = vunpack.c.l.b16 %v2083
        %v2266 = vunpack.c.h.b16 %v2083
        %v2267 = vunpack.c.l.b16 %v2084
        %v2268 = vunpack.c.h.b16 %v2084
        %v2269 = vunpack.c.l.b16 %v2085
        %v2270 = vunpack.c.h.b16 %v2085
        %v2271 = vunpack.c.l.b16 %v2086
        %v2272 = vunpack.c.h.b16 %v2086
        %v2273 = vunpack.c.l.b16 %v2087
        %v2274 = vunpack.c.h.b16 %v2087
        %v2275 = vunpack.c.l.b16 %v2088
        %v2276 = vunpack.c.h.b16 %v2088
        %v2277 = vunpack.c.l.b16 %v2089
        %v2278 = vunpack.c.h.b16 %v2089
        %v2279 = vunpack.c.l.b16 %v2090
        %v2280 = vunpack.c.h.b16 %v2090
        %v2281 = vunpack.c.l.b16 %v2091
        %v2282 = vunpack.c.h.b16 %v2091
        %v2283 = vunpack.c.l.b16 %v2092
        %v2284 = vunpack.c.h.b16 %v2092
        %v2285 = vunpack.c.l.b16 %v2093
        %v2286 = vunpack.c.h.b16 %v2093
        %v2287 = vunpack.c.l.b16 %v2094
        %v2288 = vunpack.c.h.b16 %v2094
        %v2289 = vunpack.c.l.b16 %v2095
        %v2290 = vunpack.c.h.b16 %v2095
        %v2291 = vunpack.c.l.b16 %v2096
        %v2292 = vunpack.c.h.b16 %v2096
        %v2293 = vunpack.c.l.b16 %v2097
        %v2294 = vunpack.c.h.b16 %v2097
        %v2295 = vunpack.c.l.b16 %v2098
        %v2296 = vunpack.c.h.b16 %v2098
        %v2297 = vunpack.c.l.b16 %v2099
        %v2298 = vunpack.c.h.b16 %v2099
        %v2299 = vunpack.c.l.b16 %v2100
        %v2300 = vunpack.c.h.b16 %v2100
        %v2301 = vunpack.c.l.b16 %v2101
        %v2302 = vunpack.c.h.b16 %v2101
        %v2303 = vunpack.c.l.b16 %v2102
        %v2304 = vunpack.c.h.b16 %v2102
        %v2305 = vunpack.c.l.b16 %v2103
        %v2306 = vunpack.c.h.b16 %v2103
        %v2307 = vunpack.c.l.b16 %v2104
        %v2308 = vunpack.c.h.b16 %v2104
        %v2309 = vunpack.c.l.b16 %v2105
        %v2310 = vunpack.c.h.b16 %v2105
        %v2311 = vunpack.c.l.b16 %v2106
        %v2312 = vunpack.c.h.b16 %v2106
        %v2313 = vunpack.c.l.b16 %v2107
        %v2314 = vunpack.c.h.b16 %v2107
        %v2315 = vunpack.c.l.b16 %v2108
        %v2316 = vunpack.c.h.b16 %v2108
        %v2317 = vunpack.c.l.b16 %v2109
        %v2318 = vunpack.c.h.b16 %v2109
        %v2319 = vunpack.c.l.b16 %v2110
        %v2320 = vunpack.c.h.b16 %v2110
        %v2321 = vunpack.c.l.b16 %v2111
        %v2322 = vunpack.c.h.b16 %v2111
        %v2323 = vunpack.c.l.b16 %v2112
        %v2324 = vunpack.c.h.b16 %v2112
        %v2325 = vunpack.c.l.b16 %v2113
        %v2326 = vunpack.c.h.b16 %v2113
        %v2327 = vunpack.c.l.b16 %v2114
        %v2328 = vunpack.c.h.b16 %v2114
        %v2329 = vunpack.c.l.b16 %v2115
        %v2330 = vunpack.c.h.b16 %v2115
        %v2331 = vunpack.c.l.b16 %v2116
        %v2332 = vunpack.c.h.b16 %v2116
        %v2333 = vunpack.c.l.b16 %v2117
        %v2334 = vunpack.c.h.b16 %v2117
        %v2335 = vunpack.c.l.b16 %v2118
        %v2336 = vunpack.c.h.b16 %v2118
        %v2337 = vunpack.c.l.b16 %v2119
        %v2338 = vunpack.c.h.b16 %v2119
        %v2339 = vunpack.c.l.b16 %v2120
        %v2340 = vunpack.c.h.b16 %v2120
        %v2341 = vunpack.c.l.b16 %v2121
        %v2342 = vunpack.c.h.b16 %v2121
        %v2343 = vunpack.c.l.b16 %v2122
        %v2344 = vunpack.c.h.b16 %v2122
        %v2345 = vunpack.c.l.b16 %v2123
        %v2346 = vunpack.c.h.b16 %v2123
        %v2347 = vunpack.c.l.b16 %v2124
        %v2348 = vunpack.c.h.b16 %v2124
        %v2349 = vpack.c.b16 %v2225, %v2221
        %v2350 = vpack.c.b16 %v2226, %v2222
        %v2351 = vpack.c.b16 %v2227, %v2223
        %v2352 = vpack.c.b16 %v2228, %v2224
        %v2353 = vpack.c.b16 %v2233, %v2229
        %v2354 = vpack.c.b16 %v2234, %v2230
        %v2355 = vpack.c.b16 %v2235, %v2231
        %v2356 = vpack.c.b16 %v2236, %v2232
        %v2357 = vpack.c.b16 %v2241, %v2237
        %v2358 = vpack.c.b16 %v2242, %v2238
        %v2359 = vpack.c.b16 %v2243, %v2239
        %v2360 = vpack.c.b16 %v2244, %v2240
        %v2361 = vpack.c.b16 %v2249, %v2245
        %v2362 = vpack.c.b16 %v2250, %v2246
        %v2363 = vpack.c.b16 %v2251, %v2247
        %v2364 = vpack.c.b16 %v2252, %v2248
        %v2365 = vpack.c.b16 %v2257, %v2253
        %v2366 = vpack.c.b16 %v2258, %v2254
        %v2367 = vpack.c.b16 %v2259, %v2255
        %v2368 = vpack.c.b16 %v2260, %v2256
        %v2369 = vpack.c.b16 %v2265, %v2261
        %v2370 = vpack.c.b16 %v2266, %v2262
        %v2371 = vpack.c.b16 %v2267, %v2263
        %v2372 = vpack.c.b16 %v2268, %v2264
        %v2373 = vpack.c.b16 %v2273, %v2269
        %v2374 = vpack.c.b16 %v2274, %v2270
        %v2375 = vpack.c.b16 %v2275, %v2271
        %v2376 = vpack.c.b16 %v2276, %v2272
        %v2377 = vpack.c.b16 %v2281, %v2277
        %v2378 = vpack.c.b16 %v2282, %v2278
        %v2379 = vpack.c.b16 %v2283, %v2279
        %v2380 = vpack.c.b16 %v2284, %v2280
        %v2381 = vpack.c.b16 %v2289, %v2285
        %v2382 = vpack.c.b16 %v2290, %v2286
        %v2383 = vpack.c.b16 %v2291, %v2287
        %v2384 = vpack.c.b16 %v2292, %v2288
        %v2385 = vpack.c.b16 %v2297, %v2293
        %v2386 = vpack.c.b16 %v2298, %v2294
        %v2387 = vpack.c.b16 %v2299, %v2295
        %v2388 = vpack.c.b16 %v2300, %v2296
        %v2389 = vpack.c.b16 %v2305, %v2301
        %v2390 = vpack.c.b16 %v2306, %v2302
        %v2391 = vpack.c.b16 %v2307, %v2303
        %v2392 = vpack.c.b16 %v2308, %v2304
        %v2393 = vpack.c.b16 %v2313, %v2309
        %v2394 = vpack.c.b16 %v2314, %v2310
        %v2395 = vpack.c.b16 %v2315, %v2311
        %v2396 = vpack.c.b16 %v2316, %v2312
        %v2397 = vpack.c.b16 %v2321, %v2317
        %v2398 = vpack.c.b16 %v2322, %v2318
        %v2399 = vpack.c.b16 %v2323, %v2319
        %v2400 = vpack.c.b16 %v2324, %v2320
        %v2401 = vpack.c.b16 %v2329, %v2325
        %v2402 = vpack.c.b16 %v2330, %v2326
        %v2403 = vpack.c.b16 %v2331, %v2327
        %v2404 = vpack.c.b16 %v2332, %v2328
        %v2405 = vpack.c.b16 %v2337, %v2333
        %v2406 = vpack.c.b16 %v2338, %v2334
        %v2407 = vpack.c.b16 %v2339, %v2335
        %v2408 = vpack.c.b16 %v2340, %v2336
        %v2409 = vpack.c.b16 %v2345, %v2341
        %v2410 = vpack.c.b16 %v2346, %v2342
        %v2411 = vpack.c.b16 %v2347, %v2343
        %v2412 = vpack.c.b16 %v2348, %v2344
        %2477 = vmatprep.subr.bf16.mxu0 %v2350
        %2478 = vmatpush1.bf16.msra.mxu0 %v2349
        %2479 = vmatprep.subr.bf16.mxu0 %v2354
        %2480 = vmatpush1.bf16.msra.mxu0 %v2353
        %2481 = vmatprep.subr.bf16.mxu0 %v2358
        %2482 = vmatpush1.bf16.msra.mxu0 %v2357
        %2483 = vmatprep.subr.bf16.mxu0 %v2362
        %2484 = vmatpush1.bf16.msra.mxu0 %v2361
        %2485 = vmatprep.subr.bf16.mxu0 %v2366
        %2486 = vmatpush1.bf16.msra.mxu0 %v2365
        %2487 = vmatprep.subr.bf16.mxu0 %v2370
        %2488 = vmatpush1.bf16.msra.mxu0 %v2369
        %2489 = vmatprep.subr.bf16.mxu0 %v2374
        %2490 = vmatpush1.bf16.msra.mxu0 %v2373
        %2491 = vmatprep.subr.bf16.mxu0 %v2378
        %2492 = vmatpush1.bf16.msra.mxu0 %v2377
        %2493 = vmatprep.subr.bf16.mxu0 %v2382
        %2494 = vmatpush1.bf16.msra.mxu0 %v2381
        %2495 = vmatprep.subr.bf16.mxu0 %v2386
        %2496 = vmatpush1.bf16.msra.mxu0 %v2385
        %2497 = vmatprep.subr.bf16.mxu0 %v2390
        %2498 = vmatpush1.bf16.msra.mxu0 %v2389
        %2499 = vmatprep.subr.bf16.mxu0 %v2394
        %2500 = vmatpush1.bf16.msra.mxu0 %v2393
        %2501 = vmatprep.subr.bf16.mxu0 %v2398
        %2502 = vmatpush1.bf16.msra.mxu0 %v2397
        %2503 = vmatprep.subr.bf16.mxu0 %v2402
        %2504 = vmatpush1.bf16.msra.mxu0 %v2401
        %2505 = vmatprep.subr.bf16.mxu0 %v2406
        %2506 = vmatpush1.bf16.msra.mxu0 %v2405
        %2507 = vmatprep.subr.bf16.mxu0 %v2410
        %2508 = vmatpush1.bf16.msra.mxu0 %v2409
        %2509 = vmatprep.mubr.bf16.mxu0 %v2142
        %2510 = vmatmul.mubr.bf16.gmra.mrb[0].mxu0 %v2141
        %v2511 = vpop.f32.mrb[0].mxu0
        %v2512 = vadd.f32 0.0, %v2511
        %v2513 = vpop.f32.mrb[0].mxu0
        %v2514 = vadd.f32 0.0, %v2513
        %v2515 = vpop.f32.mrb[0].mxu0
        %v2516 = vadd.f32 0.0, %v2515
        %v2517 = vpop.f32.mrb[0].mxu0
        %v2518 = vadd.f32 0.0, %v2517
        %2519 = vmatprep.mubr.bf16.mxu0 %v2144
        %2520 = vmatmul.mubr.bf16.gmra.mrb[0].mxu0 %v2143
        %v2521 = vpop.f32.mrb[0].mxu0
        %v2522 = vadd.f32 0.0, %v2521
        %v2523 = vpop.f32.mrb[0].mxu0
        %v2524 = vadd.f32 0.0, %v2523
        %v2525 = vpop.f32.mrb[0].mxu0
        %v2526 = vadd.f32 0.0, %v2525
        %v2527 = vpop.f32.mrb[0].mxu0
        %v2528 = vadd.f32 0.0, %v2527
        %2529 = vmatprep.mubr.bf16.mxu0 %v2146
        %2530 = vmatmul.mubr.bf16.gmra.mrb[0].mxu0 %v2145
        %v2531 = vpop.f32.mrb[0].mxu0
        %v2532 = vadd.f32 0.0, %v2531
        %v2533 = vpop.f32.mrb[0].mxu0
        %v2534 = vadd.f32 0.0, %v2533
        %v2535 = vpop.f32.mrb[0].mxu0
        %v2536 = vadd.f32 0.0, %v2535
        %v2537 = vpop.f32.mrb[0].mxu0
        %v2538 = vadd.f32 0.0, %v2537
        %2539 = vmatprep.mubr.bf16.mxu0 %v2148
        %2540 = vmatmul.mubr.bf16.gmra.mrb[0].mxu0 %v2147
        %v2541 = vpop.f32.mrb[0].mxu0
        %v2542 = vadd.f32 0.0, %v2541
        %v2543 = vpop.f32.mrb[0].mxu0
        %v2544 = vadd.f32 0.0, %v2543
        %v2545 = vpop.f32.mrb[0].mxu0
        %v2546 = vadd.f32 0.0, %v2545
        %v2547 = vpop.f32.mrb[0].mxu0
        %v2548 = vadd.f32 0.0, %v2547
        %2549 = vdwg.mxu0
        %2550 = vmatprep.subr.bf16.mxu0 %v2352
        %2551 = vmatpush1.bf16.msra.mxu0 %v2351
        %2552 = vmatprep.subr.bf16.mxu0 %v2356
        %2553 = vmatpush1.bf16.msra.mxu0 %v2355
        %2554 = vmatprep.subr.bf16.mxu0 %v2360
        %2555 = vmatpush1.bf16.msra.mxu0 %v2359
        %2556 = vmatprep.subr.bf16.mxu0 %v2364
        %2557 = vmatpush1.bf16.msra.mxu0 %v2363
        %2558 = vmatprep.subr.bf16.mxu0 %v2368
        %2559 = vmatpush1.bf16.msra.mxu0 %v2367
        %2560 = vmatprep.subr.bf16.mxu0 %v2372
        %2561 = vmatpush1.bf16.msra.mxu0 %v2371
        %2562 = vmatprep.subr.bf16.mxu0 %v2376
        %2563 = vmatpush1.bf16.msra.mxu0 %v2375
        %2564 = vmatprep.subr.bf16.mxu0 %v2380
        %2565 = vmatpush1.bf16.msra.mxu0 %v2379
        %2566 = vmatprep.subr.bf16.mxu0 %v2384
        %2567 = vmatpush1.bf16.msra.mxu0 %v2383
        %2568 = vmatprep.subr.bf16.mxu0 %v2388
        %2569 = vmatpush1.bf16.msra.mxu0 %v2387
        %2570 = vmatprep.subr.bf16.mxu0 %v2392
        %2571 = vmatpush1.bf16.msra.mxu0 %v2391
        %2572 = vmatprep.subr.bf16.mxu0 %v2396
        %2573 = vmatpush1.bf16.msra.mxu0 %v2395
        %2574 = vmatprep.subr.bf16.mxu0 %v2400
        %2575 = vmatpush1.bf16.msra.mxu0 %v2399
        %2576 = vmatprep.subr.bf16.mxu0 %v2404
        %2577 = vmatpush1.bf16.msra.mxu0 %v2403
        %2578 = vmatprep.subr.bf16.mxu0 %v2408
        %2579 = vmatpush1.bf16.msra.mxu0 %v2407
        %2580 = vmatprep.subr.bf16.mxu0 %v2412
        %2581 = vmatpush1.bf16.msra.mxu0 %v2411
        %2582 = vmatprep.mubr.bf16.mxu0 %v2142
        %2583 = vmatmul.mubr.bf16.gmra.mrb[0].mxu0 %v2141
        %v2584 = vpop.f32.mrb[0].mxu0
        %v2585 = vadd.f32 0.0, %v2584
        %v2586 = vpop.f32.mrb[0].mxu0
        %v2587 = vadd.f32 0.0, %v2586
        %v2588 = vpop.f32.mrb[0].mxu0
        %v2589 = vadd.f32 0.0, %v2588
        %v2590 = vpop.f32.mrb[0].mxu0
        %v2591 = vadd.f32 0.0, %v2590
        %2592 = vmatprep.mubr.bf16.mxu0 %v2144
        %2593 = vmatmul.mubr.bf16.gmra.mrb[0].mxu0 %v2143
        %v2594 = vpop.f32.mrb[0].mxu0
        %v2595 = vadd.f32 0.0, %v2594
        %v2596 = vpop.f32.mrb[0].mxu0
        %v2597 = vadd.f32 0.0, %v2596
        %v2598 = vpop.f32.mrb[0].mxu0
        %v2599 = vadd.f32 0.0, %v2598
        %v2600 = vpop.f32.mrb[0].mxu0
        %v2601 = vadd.f32 0.0, %v2600
        %2602 = vmatprep.mubr.bf16.mxu0 %v2146
        %2603 = vmatmul.mubr.bf16.gmra.mrb[0].mxu0 %v2145
        %v2604 = vpop.f32.mrb[0].mxu0
        %v2605 = vadd.f32 0.0, %v2604
        %v2606 = vpop.f32.mrb[0].mxu0
        %v2607 = vadd.f32 0.0, %v2606
        %v2608 = vpop.f32.mrb[0].mxu0
        %v2609 = vadd.f32 0.0, %v2608
        %v2610 = vpop.f32.mrb[0].mxu0
        %v2611 = vadd.f32 0.0, %v2610
        %2612 = vmatprep.mubr.bf16.mxu0 %v2148
        %2613 = vmatmul.mubr.bf16.gmra.mrb[0].mxu0 %v2147
        %v2614 = vpop.f32.mrb[0].mxu0
        %v2615 = vadd.f32 0.0, %v2614
        %v2616 = vpop.f32.mrb[0].mxu0
        %v2617 = vadd.f32 0.0, %v2616
        %v2618 = vpop.f32.mrb[0].mxu0
        %v2619 = vadd.f32 0.0, %v2618
        %v2620 = vpop.f32.mrb[0].mxu0
        %v2621 = vadd.f32 0.0, %v2620
        %2622 = vdwg.mxu0
        %v2623 = vadd.f32 %v2028, %v2512
        %v2624 = vadd.f32 %v2029, %v2514
        %v2625 = vadd.f32 %v2030, %v2585
        %v2626 = vadd.f32 %v2031, %v2587
        %v2627 = vadd.f32 %v2032, %v2516
        %v2628 = vadd.f32 %v2033, %v2518
        %v2629 = vadd.f32 %v2034, %v2589
        %v2630 = vadd.f32 %v2035, %v2591
        %v2631 = vadd.f32 %v2036, %v2522
        %v2632 = vadd.f32 %v2037, %v2524
        %v2633 = vadd.f32 %v2038, %v2595
        %v2634 = vadd.f32 %v2039, %v2597
        %v2635 = vadd.f32 %v2040, %v2526
        %v2636 = vadd.f32 %v2041, %v2528
        %v2637 = vadd.f32 %v2042, %v2599
        %v2638 = vadd.f32 %v2043, %v2601
        %v2639 = vadd.f32 %v2044, %v2532
        %v2640 = vadd.f32 %v2045, %v2534
        %v2641 = vadd.f32 %v2046, %v2605
        %v2642 = vadd.f32 %v2047, %v2607
        %v2643 = vadd.f32 %v2048, %v2536
        %v2644 = vadd.f32 %v2049, %v2538
        %v2645 = vadd.f32 %v2050, %v2609
        %v2646 = vadd.f32 %v2051, %v2611
        %v2647 = vadd.f32 %v2052, %v2542
        %v2648 = vadd.f32 %v2053, %v2544
        %v2649 = vadd.f32 %v2054, %v2615
        %v2650 = vadd.f32 %v2055, %v2617
        %v2651 = vadd.f32 %v2056, %v2546
        %v2652 = vadd.f32 %v2057, %v2548
        %v2653 = vadd.f32 %v2058, %v2619
        %v2654 = vadd.f32 %v2059, %v2621
        %2655 = vst [vmem:[#allocation3] sm:$0xff] %v2623
        %2656 = vst [vmem:[#allocation3 + $0x8] sm:$0xff] %v2624
        %2657 = vst [vmem:[#allocation3 + $0x10] sm:$0xff] %v2625
        %2658 = vst [vmem:[#allocation3 + $0x18] sm:$0xff] %v2626
        %2659 = vst [vmem:[#allocation3 + $0x20] sm:$0xff] %v2627
        %2660 = vst [vmem:[#allocation3 + $0x28] sm:$0xff] %v2628
        %2661 = vst [vmem:[#allocation3 + $0x30] sm:$0xff] %v2629
        %2662 = vst [vmem:[#allocation3 + $0x38] sm:$0xff] %v2630
        %2663 = vst [vmem:[#allocation3 + $0x40] sm:$0xff] %v2631
        %2664 = vst [vmem:[#allocation3 + $0x48] sm:$0xff] %v2632
        %2665 = vst [vmem:[#allocation3 + $0x50] sm:$0xff] %v2633
        %2666 = vst [vmem:[#allocation3 + $0x58] sm:$0xff] %v2634
        %2667 = vst [vmem:[#allocation3 + $0x60] sm:$0xff] %v2635
        %2668 = vst [vmem:[#allocation3 + $0x68] sm:$0xff] %v2636
        %2669 = vst [vmem:[#allocation3 + $0x70] sm:$0xff] %v2637
        %2670 = vst [vmem:[#allocation3 + $0x78] sm:$0xff] %v2638
        %2671 = vst [vmem:[#allocation3 + $0x80] sm:$0xff] %v2639
        %2672 = vst [vmem:[#allocation3 + $0x88] sm:$0xff] %v2640
        %2673 = vst [vmem:[#allocation3 + $0x90] sm:$0xff] %v2641
        %2674 = vst [vmem:[#allocation3 + $0x98] sm:$0xff] %v2642
        %2675 = vst [vmem:[#allocation3 + $0xa0] sm:$0xff] %v2643
        %2676 = vst [vmem:[#allocation3 + $0xa8] sm:$0xff] %v2644
        %2677 = vst [vmem:[#allocation3 + $0xb0] sm:$0xff] %v2645
        %2678 = vst [vmem:[#allocation3 + $0xb8] sm:$0xff] %v2646
        %2679 = vst [vmem:[#allocation3 + $0xc0] sm:$0xff] %v2647
        %2680 = vst [vmem:[#allocation3 + $0xc8] sm:$0xff] %v2648
        %2681 = vst [vmem:[#allocation3 + $0xd0] sm:$0xff] %v2649
        %2682 = vst [vmem:[#allocation3 + $0xd8] sm:$0xff] %v2650
        %2683 = vst [vmem:[#allocation3 + $0xe0] sm:$0xff] %v2651
        %2684 = vst [vmem:[#allocation3 + $0xe8] sm:$0xff] %v2652
        %2685 = vst [vmem:[#allocation3 + $0xf0] sm:$0xff] %v2653
        %2686 = vst [vmem:[#allocation3 + $0xf8] sm:$0xff] %v2654
        %v2687 = vld [vmem:[#allocation2] sm:$0xee]
        %v2688 = vld [vmem:[#allocation2 + $0x8] sm:$0x11]
        %v2689 = vld [vmem:[#allocation2 + $0x10] sm:$0xee]
        %v2690 = vld [vmem:[#allocation2 + $0x18] sm:$0x11]
        %v2691 = vld [vmem:[#allocation2 + $0x20] sm:$0xee]
        %v2692 = vld [vmem:[#allocation2 + $0x28] sm:$0x11]
        %v2693 = vld [vmem:[#allocation2 + $0x30] sm:$0xee]
        %v2694 = vld [vmem:[#allocation2 + $0x38] sm:$0x11]
        %v2695 = vld [vmem:[#allocation2 + $0x40] sm:$0xee]
        %v2696 = vld [vmem:[#allocation2 + $0x48] sm:$0x11]
        %v2697 = vld [vmem:[#allocation2 + $0x50] sm:$0xee]
        %v2698 = vld [vmem:[#allocation2 + $0x58] sm:$0x11]
        %v2699 = vld [vmem:[#allocation2 + $0x60] sm:$0xee]
        %v2700 = vld [vmem:[#allocation2 + $0x68] sm:$0x11]
        %v2701 = vld [vmem:[#allocation2 + $0x70] sm:$0xee]
        %v2702 = vld [vmem:[#allocation2 + $0x78] sm:$0x11]
        %vm2719 = vcmask 1042432
        %vm2720 = vcmask 1046532
        %vm2721 = vmor %vm2719, %vm2720
        %v2722 = vrot.slane %v2687, 5
        %v2723 = vrot.slane %v2722, 4
        %v2724 = vrot.slane %v2688, 5
        %v2725 = vsel %vm2721, %v2723, %v2724
        %v2726 = vrot.slane %v2689, 5
        %v2727 = vrot.slane %v2726, 4
        %v2728 = vrot.slane %v2690, 5
        %v2729 = vsel %vm2721, %v2727, %v2728
        %v2730 = vrot.slane %v2691, 5
        %v2731 = vrot.slane %v2730, 4
        %v2732 = vrot.slane %v2692, 5
        %v2733 = vsel %vm2721, %v2731, %v2732
        %v2734 = vrot.slane %v2693, 5
        %v2735 = vrot.slane %v2734, 4
        %v2736 = vrot.slane %v2694, 5
        %v2737 = vsel %vm2721, %v2735, %v2736
        %v2738 = vrot.slane %v2695, 5
        %v2739 = vrot.slane %v2738, 4
        %v2740 = vrot.slane %v2696, 5
        %v2741 = vsel %vm2721, %v2739, %v2740
        %v2742 = vrot.slane %v2697, 5
        %v2743 = vrot.slane %v2742, 4
        %v2744 = vrot.slane %v2698, 5
        %v2745 = vsel %vm2721, %v2743, %v2744
        %v2746 = vrot.slane %v2699, 5
        %v2747 = vrot.slane %v2746, 4
        %v2748 = vrot.slane %v2700, 5
        %v2749 = vsel %vm2721, %v2747, %v2748
        %v2750 = vrot.slane %v2701, 5
        %v2751 = vrot.slane %v2750, 4
        %v2752 = vrot.slane %v2702, 5
        %v2753 = vsel %vm2721, %v2751, %v2752
        %v2754 = vld [vmem:[#allocation3] sm:$0xff]
        %v2755 = vld [vmem:[#allocation3 + $0x8] sm:$0xff]
        %v2756 = vld [vmem:[#allocation3 + $0x10] sm:$0xff]
        %v2757 = vld [vmem:[#allocation3 + $0x18] sm:$0xff]
        %v2758 = vld [vmem:[#allocation3 + $0x20] sm:$0xff]
        %v2759 = vld [vmem:[#allocation3 + $0x28] sm:$0xff]
        %v2760 = vld [vmem:[#allocation3 + $0x30] sm:$0xff]
        %v2761 = vld [vmem:[#allocation3 + $0x38] sm:$0xff]
        %v2762 = vld [vmem:[#allocation3 + $0x40] sm:$0xff]
        %v2763 = vld [vmem:[#allocation3 + $0x48] sm:$0xff]
        %v2764 = vld [vmem:[#allocation3 + $0x50] sm:$0xff]
        %v2765 = vld [vmem:[#allocation3 + $0x58] sm:$0xff]
        %v2766 = vld [vmem:[#allocation3 + $0x60] sm:$0xff]
        %v2767 = vld [vmem:[#allocation3 + $0x68] sm:$0xff]
        %v2768 = vld [vmem:[#allocation3 + $0x70] sm:$0xff]
        %v2769 = vld [vmem:[#allocation3 + $0x78] sm:$0xff]
        %v2770 = vld [vmem:[#allocation3 + $0x80] sm:$0xff]
        %v2771 = vld [vmem:[#allocation3 + $0x88] sm:$0xff]
        %v2772 = vld [vmem:[#allocation3 + $0x90] sm:$0xff]
        %v2773 = vld [vmem:[#allocation3 + $0x98] sm:$0xff]
        %v2774 = vld [vmem:[#allocation3 + $0xa0] sm:$0xff]
        %v2775 = vld [vmem:[#allocation3 + $0xa8] sm:$0xff]
        %v2776 = vld [vmem:[#allocation3 + $0xb0] sm:$0xff]
        %v2777 = vld [vmem:[#allocation3 + $0xb8] sm:$0xff]
        %v2778 = vld [vmem:[#allocation3 + $0xc0] sm:$0xff]
        %v2779 = vld [vmem:[#allocation3 + $0xc8] sm:$0xff]
        %v2780 = vld [vmem:[#allocation3 + $0xd0] sm:$0xff]
        %v2781 = vld [vmem:[#allocation3 + $0xd8] sm:$0xff]
        %v2782 = vld [vmem:[#allocation3 + $0xe0] sm:$0xff]
        %v2783 = vld [vmem:[#allocation3 + $0xe8] sm:$0xff]
        %v2784 = vld [vmem:[#allocation3 + $0xf0] sm:$0xff]
        %v2785 = vld [vmem:[#allocation3 + $0xf8] sm:$0xff]
        %s2786 = scalar_lea.vmem [#allocation12], 1024
        %v2787 = vld [vmem:[%s2786] sm:$0xff]
        %v2788 = vld [vmem:[%s2786 + $0x8] sm:$0xff]
        %v2789 = vld [vmem:[%s2786 + $0x10] sm:$0xff]
        %v2790 = vld [vmem:[%s2786 + $0x18] sm:$0xff]
        %v2791 = vld [vmem:[%s2786 + $0x20] sm:$0xff]
        %v2792 = vld [vmem:[%s2786 + $0x28] sm:$0xff]
        %v2793 = vld [vmem:[%s2786 + $0x30] sm:$0xff]
        %v2794 = vld [vmem:[%s2786 + $0x38] sm:$0xff]
        %v2795 = vld [vmem:[%s2786 + $0x40] sm:$0xff]
        %v2796 = vld [vmem:[%s2786 + $0x48] sm:$0xff]
        %v2797 = vld [vmem:[%s2786 + $0x50] sm:$0xff]
        %v2798 = vld [vmem:[%s2786 + $0x58] sm:$0xff]
        %v2799 = vld [vmem:[%s2786 + $0x60] sm:$0xff]
        %v2800 = vld [vmem:[%s2786 + $0x68] sm:$0xff]
        %v2801 = vld [vmem:[%s2786 + $0x70] sm:$0xff]
        %v2802 = vld [vmem:[%s2786 + $0x78] sm:$0xff]
        %v2803 = vld [vmem:[%s2786 + $0x80] sm:$0xff]
        %v2804 = vld [vmem:[%s2786 + $0x88] sm:$0xff]
        %v2805 = vld [vmem:[%s2786 + $0x90] sm:$0xff]
        %v2806 = vld [vmem:[%s2786 + $0x98] sm:$0xff]
        %v2807 = vld [vmem:[%s2786 + $0xa0] sm:$0xff]
        %v2808 = vld [vmem:[%s2786 + $0xa8] sm:$0xff]
        %v2809 = vld [vmem:[%s2786 + $0xb0] sm:$0xff]
        %v2810 = vld [vmem:[%s2786 + $0xb8] sm:$0xff]
        %v2811 = vld [vmem:[%s2786 + $0xc0] sm:$0xff]
        %v2812 = vld [vmem:[%s2786 + $0xc8] sm:$0xff]
        %v2813 = vld [vmem:[%s2786 + $0xd0] sm:$0xff]
        %v2814 = vld [vmem:[%s2786 + $0xd8] sm:$0xff]
        %v2815 = vld [vmem:[%s2786 + $0xe0] sm:$0xff]
        %v2816 = vld [vmem:[%s2786 + $0xe8] sm:$0xff]
        %v2817 = vld [vmem:[%s2786 + $0xf0] sm:$0xff]
        %v2818 = vld [vmem:[%s2786 + $0xf8] sm:$0xff]
        %v2819 = vld [vmem:[%s2786 + $0x100] sm:$0xff]
        %v2820 = vld [vmem:[%s2786 + $0x108] sm:$0xff]
        %v2821 = vld [vmem:[%s2786 + $0x110] sm:$0xff]
        %v2822 = vld [vmem:[%s2786 + $0x118] sm:$0xff]
        %v2823 = vld [vmem:[%s2786 + $0x120] sm:$0xff]
        %v2824 = vld [vmem:[%s2786 + $0x128] sm:$0xff]
        %v2825 = vld [vmem:[%s2786 + $0x130] sm:$0xff]
        %v2826 = vld [vmem:[%s2786 + $0x138] sm:$0xff]
        %v2827 = vld [vmem:[%s2786 + $0x140] sm:$0xff]
        %v2828 = vld [vmem:[%s2786 + $0x148] sm:$0xff]
        %v2829 = vld [vmem:[%s2786 + $0x150] sm:$0xff]
        %v2830 = vld [vmem:[%s2786 + $0x158] sm:$0xff]
        %v2831 = vld [vmem:[%s2786 + $0x160] sm:$0xff]
        %v2832 = vld [vmem:[%s2786 + $0x168] sm:$0xff]
        %v2833 = vld [vmem:[%s2786 + $0x170] sm:$0xff]
        %v2834 = vld [vmem:[%s2786 + $0x178] sm:$0xff]
        %v2835 = vld [vmem:[%s2786 + $0x180] sm:$0xff]
        %v2836 = vld [vmem:[%s2786 + $0x188] sm:$0xff]
        %v2837 = vld [vmem:[%s2786 + $0x190] sm:$0xff]
        %v2838 = vld [vmem:[%s2786 + $0x198] sm:$0xff]
        %v2839 = vld [vmem:[%s2786 + $0x1a0] sm:$0xff]
        %v2840 = vld [vmem:[%s2786 + $0x1a8] sm:$0xff]
        %v2841 = vld [vmem:[%s2786 + $0x1b0] sm:$0xff]
        %v2842 = vld [vmem:[%s2786 + $0x1b8] sm:$0xff]
        %v2843 = vld [vmem:[%s2786 + $0x1c0] sm:$0xff]
        %v2844 = vld [vmem:[%s2786 + $0x1c8] sm:$0xff]
        %v2845 = vld [vmem:[%s2786 + $0x1d0] sm:$0xff]
        %v2846 = vld [vmem:[%s2786 + $0x1d8] sm:$0xff]
        %v2847 = vld [vmem:[%s2786 + $0x1e0] sm:$0xff]
        %v2848 = vld [vmem:[%s2786 + $0x1e8] sm:$0xff]
        %v2849 = vld [vmem:[%s2786 + $0x1f0] sm:$0xff]
        %v2850 = vld [vmem:[%s2786 + $0x1f8] sm:$0xff]
        %v2851 = vunpack.c.l.b16 %v2725
        %v2852 = vunpack.c.h.b16 %v2725
        %v2853 = vunpack.c.l.b16 %v2729
        %v2854 = vunpack.c.h.b16 %v2729
        %v2855 = vunpack.c.l.b16 %v2733
        %v2856 = vunpack.c.h.b16 %v2733
        %v2857 = vunpack.c.l.b16 %v2737
        %v2858 = vunpack.c.h.b16 %v2737
        %v2859 = vunpack.c.l.b16 %v2741
        %v2860 = vunpack.c.h.b16 %v2741
        %v2861 = vunpack.c.l.b16 %v2745
        %v2862 = vunpack.c.h.b16 %v2745
        %v2863 = vunpack.c.l.b16 %v2749
        %v2864 = vunpack.c.h.b16 %v2749
        %v2865 = vunpack.c.l.b16 %v2753
        %v2866 = vunpack.c.h.b16 %v2753
        %v2867 = vpack.c.b16 %v2853, %v2851
        %v2868 = vpack.c.b16 %v2854, %v2852
        %v2869 = vpack.c.b16 %v2857, %v2855
        %v2870 = vpack.c.b16 %v2858, %v2856
        %v2871 = vpack.c.b16 %v2861, %v2859
        %v2872 = vpack.c.b16 %v2862, %v2860
        %v2873 = vpack.c.b16 %v2865, %v2863
        %v2874 = vpack.c.b16 %v2866, %v2864
        %v2947 = vunpack.c.l.b16 %v2787
        %v2948 = vunpack.c.h.b16 %v2787
        %v2949 = vunpack.c.l.b16 %v2788
        %v2950 = vunpack.c.h.b16 %v2788
        %v2951 = vunpack.c.l.b16 %v2789
        %v2952 = vunpack.c.h.b16 %v2789
        %v2953 = vunpack.c.l.b16 %v2790
        %v2954 = vunpack.c.h.b16 %v2790
        %v2955 = vunpack.c.l.b16 %v2791
        %v2956 = vunpack.c.h.b16 %v2791
        %v2957 = vunpack.c.l.b16 %v2792
        %v2958 = vunpack.c.h.b16 %v2792
        %v2959 = vunpack.c.l.b16 %v2793
        %v2960 = vunpack.c.h.b16 %v2793
        %v2961 = vunpack.c.l.b16 %v2794
        %v2962 = vunpack.c.h.b16 %v2794
        %v2963 = vunpack.c.l.b16 %v2795
        %v2964 = vunpack.c.h.b16 %v2795
        %v2965 = vunpack.c.l.b16 %v2796
        %v2966 = vunpack.c.h.b16 %v2796
        %v2967 = vunpack.c.l.b16 %v2797
        %v2968 = vunpack.c.h.b16 %v2797
        %v2969 = vunpack.c.l.b16 %v2798
        %v2970 = vunpack.c.h.b16 %v2798
        %v2971 = vunpack.c.l.b16 %v2799
        %v2972 = vunpack.c.h.b16 %v2799
        %v2973 = vunpack.c.l.b16 %v2800
        %v2974 = vunpack.c.h.b16 %v2800
        %v2975 = vunpack.c.l.b16 %v2801
        %v2976 = vunpack.c.h.b16 %v2801
        %v2977 = vunpack.c.l.b16 %v2802
        %v2978 = vunpack.c.h.b16 %v2802
        %v2979 = vunpack.c.l.b16 %v2803
        %v2980 = vunpack.c.h.b16 %v2803
        %v2981 = vunpack.c.l.b16 %v2804
        %v2982 = vunpack.c.h.b16 %v2804
        %v2983 = vunpack.c.l.b16 %v2805
        %v2984 = vunpack.c.h.b16 %v2805
        %v2985 = vunpack.c.l.b16 %v2806
        %v2986 = vunpack.c.h.b16 %v2806
        %v2987 = vunpack.c.l.b16 %v2807
        %v2988 = vunpack.c.h.b16 %v2807
        %v2989 = vunpack.c.l.b16 %v2808
        %v2990 = vunpack.c.h.b16 %v2808
        %v2991 = vunpack.c.l.b16 %v2809
        %v2992 = vunpack.c.h.b16 %v2809
        %v2993 = vunpack.c.l.b16 %v2810
        %v2994 = vunpack.c.h.b16 %v2810
        %v2995 = vunpack.c.l.b16 %v2811
        %v2996 = vunpack.c.h.b16 %v2811
        %v2997 = vunpack.c.l.b16 %v2812
        %v2998 = vunpack.c.h.b16 %v2812
        %v2999 = vunpack.c.l.b16 %v2813
        %v3000 = vunpack.c.h.b16 %v2813
        %v3001 = vunpack.c.l.b16 %v2814
        %v3002 = vunpack.c.h.b16 %v2814
        %v3003 = vunpack.c.l.b16 %v2815
        %v3004 = vunpack.c.h.b16 %v2815
        %v3005 = vunpack.c.l.b16 %v2816
        %v3006 = vunpack.c.h.b16 %v2816
        %v3007 = vunpack.c.l.b16 %v2817
        %v3008 = vunpack.c.h.b16 %v2817
        %v3009 = vunpack.c.l.b16 %v2818
        %v3010 = vunpack.c.h.b16 %v2818
        %v3011 = vunpack.c.l.b16 %v2819
        %v3012 = vunpack.c.h.b16 %v2819
        %v3013 = vunpack.c.l.b16 %v2820
        %v3014 = vunpack.c.h.b16 %v2820
        %v3015 = vunpack.c.l.b16 %v2821
        %v3016 = vunpack.c.h.b16 %v2821
        %v3017 = vunpack.c.l.b16 %v2822
        %v3018 = vunpack.c.h.b16 %v2822
        %v3019 = vunpack.c.l.b16 %v2823
        %v3020 = vunpack.c.h.b16 %v2823
        %v3021 = vunpack.c.l.b16 %v2824
        %v3022 = vunpack.c.h.b16 %v2824
        %v3023 = vunpack.c.l.b16 %v2825
        %v3024 = vunpack.c.h.b16 %v2825
        %v3025 = vunpack.c.l.b16 %v2826
        %v3026 = vunpack.c.h.b16 %v2826
        %v3027 = vunpack.c.l.b16 %v2827
        %v3028 = vunpack.c.h.b16 %v2827
        %v3029 = vunpack.c.l.b16 %v2828
        %v3030 = vunpack.c.h.b16 %v2828
        %v3031 = vunpack.c.l.b16 %v2829
        %v3032 = vunpack.c.h.b16 %v2829
        %v3033 = vunpack.c.l.b16 %v2830
        %v3034 = vunpack.c.h.b16 %v2830
        %v3035 = vunpack.c.l.b16 %v2831
        %v3036 = vunpack.c.h.b16 %v2831
        %v3037 = vunpack.c.l.b16 %v2832
        %v3038 = vunpack.c.h.b16 %v2832
        %v3039 = vunpack.c.l.b16 %v2833
        %v3040 = vunpack.c.h.b16 %v2833
        %v3041 = vunpack.c.l.b16 %v2834
        %v3042 = vunpack.c.h.b16 %v2834
        %v3043 = vunpack.c.l.b16 %v2835
        %v3044 = vunpack.c.h.b16 %v2835
        %v3045 = vunpack.c.l.b16 %v2836
        %v3046 = vunpack.c.h.b16 %v2836
        %v3047 = vunpack.c.l.b16 %v2837
        %v3048 = vunpack.c.h.b16 %v2837
        %v3049 = vunpack.c.l.b16 %v2838
        %v3050 = vunpack.c.h.b16 %v2838
        %v3051 = vunpack.c.l.b16 %v2839
        %v3052 = vunpack.c.h.b16 %v2839
        %v3053 = vunpack.c.l.b16 %v2840
        %v3054 = vunpack.c.h.b16 %v2840
        %v3055 = vunpack.c.l.b16 %v2841
        %v3056 = vunpack.c.h.b16 %v2841
        %v3057 = vunpack.c.l.b16 %v2842
        %v3058 = vunpack.c.h.b16 %v2842
        %v3059 = vunpack.c.l.b16 %v2843
        %v3060 = vunpack.c.h.b16 %v2843
        %v3061 = vunpack.c.l.b16 %v2844
        %v3062 = vunpack.c.h.b16 %v2844
        %v3063 = vunpack.c.l.b16 %v2845
        %v3064 = vunpack.c.h.b16 %v2845
        %v3065 = vunpack.c.l.b16 %v2846
        %v3066 = vunpack.c.h.b16 %v2846
        %v3067 = vunpack.c.l.b16 %v2847
        %v3068 = vunpack.c.h.b16 %v2847
        %v3069 = vunpack.c.l.b16 %v2848
        %v3070 = vunpack.c.h.b16 %v2848
        %v3071 = vunpack.c.l.b16 %v2849
        %v3072 = vunpack.c.h.b16 %v2849
        %v3073 = vunpack.c.l.b16 %v2850
        %v3074 = vunpack.c.h.b16 %v2850
        %v3075 = vpack.c.b16 %v2951, %v2947
        %v3076 = vpack.c.b16 %v2952, %v2948
        %v3077 = vpack.c.b16 %v2953, %v2949
        %v3078 = vpack.c.b16 %v2954, %v2950
        %v3079 = vpack.c.b16 %v2959, %v2955
        %v3080 = vpack.c.b16 %v2960, %v2956
        %v3081 = vpack.c.b16 %v2961, %v2957
        %v3082 = vpack.c.b16 %v2962, %v2958
        %v3083 = vpack.c.b16 %v2967, %v2963
        %v3084 = vpack.c.b16 %v2968, %v2964
        %v3085 = vpack.c.b16 %v2969, %v2965
        %v3086 = vpack.c.b16 %v2970, %v2966
        %v3087 = vpack.c.b16 %v2975, %v2971
        %v3088 = vpack.c.b16 %v2976, %v2972
        %v3089 = vpack.c.b16 %v2977, %v2973
        %v3090 = vpack.c.b16 %v2978, %v2974
        %v3091 = vpack.c.b16 %v2983, %v2979
        %v3092 = vpack.c.b16 %v2984, %v2980
        %v3093 = vpack.c.b16 %v2985, %v2981
        %v3094 = vpack.c.b16 %v2986, %v2982
        %v3095 = vpack.c.b16 %v2991, %v2987
        %v3096 = vpack.c.b16 %v2992, %v2988
        %v3097 = vpack.c.b16 %v2993, %v2989
        %v3098 = vpack.c.b16 %v2994, %v2990
        %v3099 = vpack.c.b16 %v2999, %v2995
        %v3100 = vpack.c.b16 %v3000, %v2996
        %v3101 = vpack.c.b16 %v3001, %v2997
        %v3102 = vpack.c.b16 %v3002, %v2998
        %v3103 = vpack.c.b16 %v3007, %v3003
        %v3104 = vpack.c.b16 %v3008, %v3004
        %v3105 = vpack.c.b16 %v3009, %v3005
        %v3106 = vpack.c.b16 %v3010, %v3006
        %v3107 = vpack.c.b16 %v3015, %v3011
        %v3108 = vpack.c.b16 %v3016, %v3012
        %v3109 = vpack.c.b16 %v3017, %v3013
        %v3110 = vpack.c.b16 %v3018, %v3014
        %v3111 = vpack.c.b16 %v3023, %v3019
        %v3112 = vpack.c.b16 %v3024, %v3020
        %v3113 = vpack.c.b16 %v3025, %v3021
        %v3114 = vpack.c.b16 %v3026, %v3022
        %v3115 = vpack.c.b16 %v3031, %v3027
        %v3116 = vpack.c.b16 %v3032, %v3028
        %v3117 = vpack.c.b16 %v3033, %v3029
        %v3118 = vpack.c.b16 %v3034, %v3030
        %v3119 = vpack.c.b16 %v3039, %v3035
        %v3120 = vpack.c.b16 %v3040, %v3036
        %v3121 = vpack.c.b16 %v3041, %v3037
        %v3122 = vpack.c.b16 %v3042, %v3038
        %v3123 = vpack.c.b16 %v3047, %v3043
        %v3124 = vpack.c.b16 %v3048, %v3044
        %v3125 = vpack.c.b16 %v3049, %v3045
        %v3126 = vpack.c.b16 %v3050, %v3046
        %v3127 = vpack.c.b16 %v3055, %v3051
        %v3128 = vpack.c.b16 %v3056, %v3052
        %v3129 = vpack.c.b16 %v3057, %v3053
        %v3130 = vpack.c.b16 %v3058, %v3054
        %v3131 = vpack.c.b16 %v3063, %v3059
        %v3132 = vpack.c.b16 %v3064, %v3060
        %v3133 = vpack.c.b16 %v3065, %v3061
        %v3134 = vpack.c.b16 %v3066, %v3062
        %v3135 = vpack.c.b16 %v3071, %v3067
        %v3136 = vpack.c.b16 %v3072, %v3068
        %v3137 = vpack.c.b16 %v3073, %v3069
        %v3138 = vpack.c.b16 %v3074, %v3070
        %3203 = vmatprep.subr.bf16.mxu0 %v3076
        %3204 = vmatpush1.bf16.msra.mxu0 %v3075
        %3205 = vmatprep.subr.bf16.mxu0 %v3080
        %3206 = vmatpush1.bf16.msra.mxu0 %v3079
        %3207 = vmatprep.subr.bf16.mxu0 %v3084
        %3208 = vmatpush1.bf16.msra.mxu0 %v3083
        %3209 = vmatprep.subr.bf16.mxu0 %v3088
        %3210 = vmatpush1.bf16.msra.mxu0 %v3087
        %3211 = vmatprep.subr.bf16.mxu0 %v3092
        %3212 = vmatpush1.bf16.msra.mxu0 %v3091
        %3213 = vmatprep.subr.bf16.mxu0 %v3096
        %3214 = vmatpush1.bf16.msra.mxu0 %v3095
        %3215 = vmatprep.subr.bf16.mxu0 %v3100
        %3216 = vmatpush1.bf16.msra.mxu0 %v3099
        %3217 = vmatprep.subr.bf16.mxu0 %v3104
        %3218 = vmatpush1.bf16.msra.mxu0 %v3103
        %3219 = vmatprep.subr.bf16.mxu0 %v3108
        %3220 = vmatpush1.bf16.msra.mxu0 %v3107
        %3221 = vmatprep.subr.bf16.mxu0 %v3112
        %3222 = vmatpush1.bf16.msra.mxu0 %v3111
        %3223 = vmatprep.subr.bf16.mxu0 %v3116
        %3224 = vmatpush1.bf16.msra.mxu0 %v3115
        %3225 = vmatprep.subr.bf16.mxu0 %v3120
        %3226 = vmatpush1.bf16.msra.mxu0 %v3119
        %3227 = vmatprep.subr.bf16.mxu0 %v3124
        %3228 = vmatpush1.bf16.msra.mxu0 %v3123
        %3229 = vmatprep.subr.bf16.mxu0 %v3128
        %3230 = vmatpush1.bf16.msra.mxu0 %v3127
        %3231 = vmatprep.subr.bf16.mxu0 %v3132
        %3232 = vmatpush1.bf16.msra.mxu0 %v3131
        %3233 = vmatprep.subr.bf16.mxu0 %v3136
        %3234 = vmatpush1.bf16.msra.mxu0 %v3135
        %3235 = vmatprep.mubr.bf16.mxu0 %v2868
        %3236 = vmatmul.mubr.bf16.gmra.mrb[0].mxu0 %v2867
        %v3237 = vpop.f32.mrb[0].mxu0
        %v3238 = vadd.f32 0.0, %v3237
        %v3239 = vpop.f32.mrb[0].mxu0
        %v3240 = vadd.f32 0.0, %v3239
        %v3241 = vpop.f32.mrb[0].mxu0
        %v3242 = vadd.f32 0.0, %v3241
        %v3243 = vpop.f32.mrb[0].mxu0
        %v3244 = vadd.f32 0.0, %v3243
        %3245 = vmatprep.mubr.bf16.mxu0 %v2870
        %3246 = vmatmul.mubr.bf16.gmra.mrb[0].mxu0 %v2869
        %v3247 = vpop.f32.mrb[0].mxu0
        %v3248 = vadd.f32 0.0, %v3247
        %v3249 = vpop.f32.mrb[0].mxu0
        %v3250 = vadd.f32 0.0, %v3249
        %v3251 = vpop.f32.mrb[0].mxu0
        %v3252 = vadd.f32 0.0, %v3251
        %v3253 = vpop.f32.mrb[0].mxu0
        %v3254 = vadd.f32 0.0, %v3253
        %3255 = vmatprep.mubr.bf16.mxu0 %v2872
        %3256 = vmatmul.mubr.bf16.gmra.mrb[0].mxu0 %v2871
        %v3257 = vpop.f32.mrb[0].mxu0
        %v3258 = vadd.f32 0.0, %v3257
        %v3259 = vpop.f32.mrb[0].mxu0
        %v3260 = vadd.f32 0.0, %v3259
        %v3261 = vpop.f32.mrb[0].mxu0
        %v3262 = vadd.f32 0.0, %v3261
        %v3263 = vpop.f32.mrb[0].mxu0
        %v3264 = vadd.f32 0.0, %v3263
        %3265 = vmatprep.mubr.bf16.mxu0 %v2874
        %3266 = vmatmul.mubr.bf16.gmra.mrb[0].mxu0 %v2873
        %v3267 = vpop.f32.mrb[0].mxu0
        %v3268 = vadd.f32 0.0, %v3267
        %v3269 = vpop.f32.mrb[0].mxu0
        %v3270 = vadd.f32 0.0, %v3269
        %v3271 = vpop.f32.mrb[0].mxu0
        %v3272 = vadd.f32 0.0, %v3271
        %v3273 = vpop.f32.mrb[0].mxu0
        %v3274 = vadd.f32 0.0, %v3273
        %3275 = vdwg.mxu0
        %3276 = vmatprep.subr.bf16.mxu0 %v3078
        %3277 = vmatpush1.bf16.msra.mxu0 %v3077
        %3278 = vmatprep.subr.bf16.mxu0 %v3082
        %3279 = vmatpush1.bf16.msra.mxu0 %v3081
        %3280 = vmatprep.subr.bf16.mxu0 %v3086
        %3281 = vmatpush1.bf16.msra.mxu0 %v3085
        %3282 = vmatprep.subr.bf16.mxu0 %v3090
        %3283 = vmatpush1.bf16.msra.mxu0 %v3089
        %3284 = vmatprep.subr.bf16.mxu0 %v3094
        %3285 = vmatpush1.bf16.msra.mxu0 %v3093
        %3286 = vmatprep.subr.bf16.mxu0 %v3098
        %3287 = vmatpush1.bf16.msra.mxu0 %v3097
        %3288 = vmatprep.subr.bf16.mxu0 %v3102
        %3289 = vmatpush1.bf16.msra.mxu0 %v3101
        %3290 = vmatprep.subr.bf16.mxu0 %v3106
        %3291 = vmatpush1.bf16.msra.mxu0 %v3105
        %3292 = vmatprep.subr.bf16.mxu0 %v3110
        %3293 = vmatpush1.bf16.msra.mxu0 %v3109
        %3294 = vmatprep.subr.bf16.mxu0 %v3114
        %3295 = vmatpush1.bf16.msra.mxu0 %v3113
        %3296 = vmatprep.subr.bf16.mxu0 %v3118
        %3297 = vmatpush1.bf16.msra.mxu0 %v3117
        %3298 = vmatprep.subr.bf16.mxu0 %v3122
        %3299 = vmatpush1.bf16.msra.mxu0 %v3121
        %3300 = vmatprep.subr.bf16.mxu0 %v3126
        %3301 = vmatpush1.bf16.msra.mxu0 %v3125
        %3302 = vmatprep.subr.bf16.mxu0 %v3130
        %3303 = vmatpush1.bf16.msra.mxu0 %v3129
        %3304 = vmatprep.subr.bf16.mxu0 %v3134
        %3305 = vmatpush1.bf16.msra.mxu0 %v3133
        %3306 = vmatprep.subr.bf16.mxu0 %v3138
        %3307 = vmatpush1.bf16.msra.mxu0 %v3137
        %3308 = vmatprep.mubr.bf16.mxu0 %v2868
        %3309 = vmatmul.mubr.bf16.gmra.mrb[0].mxu0 %v2867
        %v3310 = vpop.f32.mrb[0].mxu0
        %v3311 = vadd.f32 0.0, %v3310
        %v3312 = vpop.f32.mrb[0].mxu0
        %v3313 = vadd.f32 0.0, %v3312
        %v3314 = vpop.f32.mrb[0].mxu0
        %v3315 = vadd.f32 0.0, %v3314
        %v3316 = vpop.f32.mrb[0].mxu0
        %v3317 = vadd.f32 0.0, %v3316
        %3318 = vmatprep.mubr.bf16.mxu0 %v2870
        %3319 = vmatmul.mubr.bf16.gmra.mrb[0].mxu0 %v2869
        %v3320 = vpop.f32.mrb[0].mxu0
        %v3321 = vadd.f32 0.0, %v3320
        %v3322 = vpop.f32.mrb[0].mxu0
        %v3323 = vadd.f32 0.0, %v3322
        %v3324 = vpop.f32.mrb[0].mxu0
        %v3325 = vadd.f32 0.0, %v3324
        %v3326 = vpop.f32.mrb[0].mxu0
        %v3327 = vadd.f32 0.0, %v3326
        %3328 = vmatprep.mubr.bf16.mxu0 %v2872
        %3329 = vmatmul.mubr.bf16.gmra.mrb[0].mxu0 %v2871
        %v3330 = vpop.f32.mrb[0].mxu0
        %v3331 = vadd.f32 0.0, %v3330
        %v3332 = vpop.f32.mrb[0].mxu0
        %v3333 = vadd.f32 0.0, %v3332
        %v3334 = vpop.f32.mrb[0].mxu0
        %v3335 = vadd.f32 0.0, %v3334
        %v3336 = vpop.f32.mrb[0].mxu0
        %v3337 = vadd.f32 0.0, %v3336
        %3338 = vmatprep.mubr.bf16.mxu0 %v2874
        %3339 = vmatmul.mubr.bf16.gmra.mrb[0].mxu0 %v2873
        %v3340 = vpop.f32.mrb[0].mxu0
        %v3341 = vadd.f32 0.0, %v3340
        %v3342 = vpop.f32.mrb[0].mxu0
        %v3343 = vadd.f32 0.0, %v3342
        %v3344 = vpop.f32.mrb[0].mxu0
        %v3345 = vadd.f32 0.0, %v3344
        %v3346 = vpop.f32.mrb[0].mxu0
        %v3347 = vadd.f32 0.0, %v3346
        %3348 = vdwg.mxu0
        %v3349 = vadd.f32 %v2754, %v3238
        %v3350 = vadd.f32 %v2755, %v3240
        %v3351 = vadd.f32 %v2756, %v3311
        %v3352 = vadd.f32 %v2757, %v3313
        %v3353 = vadd.f32 %v2758, %v3242
        %v3354 = vadd.f32 %v2759, %v3244
        %v3355 = vadd.f32 %v2760, %v3315
        %v3356 = vadd.f32 %v2761, %v3317
        %v3357 = vadd.f32 %v2762, %v3248
        %v3358 = vadd.f32 %v2763, %v3250
        %v3359 = vadd.f32 %v2764, %v3321
        %v3360 = vadd.f32 %v2765, %v3323
        %v3361 = vadd.f32 %v2766, %v3252
        %v3362 = vadd.f32 %v2767, %v3254
        %v3363 = vadd.f32 %v2768, %v3325
        %v3364 = vadd.f32 %v2769, %v3327
        %v3365 = vadd.f32 %v2770, %v3258
        %v3366 = vadd.f32 %v2771, %v3260
        %v3367 = vadd.f32 %v2772, %v3331
        %v3368 = vadd.f32 %v2773, %v3333
        %v3369 = vadd.f32 %v2774, %v3262
        %v3370 = vadd.f32 %v2775, %v3264
        %v3371 = vadd.f32 %v2776, %v3335
        %v3372 = vadd.f32 %v2777, %v3337
        %v3373 = vadd.f32 %v2778, %v3268
        %v3374 = vadd.f32 %v2779, %v3270
        %v3375 = vadd.f32 %v2780, %v3341
        %v3376 = vadd.f32 %v2781, %v3343
        %v3377 = vadd.f32 %v2782, %v3272
        %v3378 = vadd.f32 %v2783, %v3274
        %v3379 = vadd.f32 %v2784, %v3345
        %v3380 = vadd.f32 %v2785, %v3347
        %3381 = vst [vmem:[#allocation3] sm:$0xff] %v3349
        %3382 = vst [vmem:[#allocation3 + $0x8] sm:$0xff] %v3350
        %3383 = vst [vmem:[#allocation3 + $0x10] sm:$0xff] %v3351
        %3384 = vst [vmem:[#allocation3 + $0x18] sm:$0xff] %v3352
        %3385 = vst [vmem:[#allocation3 + $0x20] sm:$0xff] %v3353
        %3386 = vst [vmem:[#allocation3 + $0x28] sm:$0xff] %v3354
        %3387 = vst [vmem:[#allocation3 + $0x30] sm:$0xff] %v3355
        %3388 = vst [vmem:[#allocation3 + $0x38] sm:$0xff] %v3356
        %3389 = vst [vmem:[#allocation3 + $0x40] sm:$0xff] %v3357
        %3390 = vst [vmem:[#allocation3 + $0x48] sm:$0xff] %v3358
        %3391 = vst [vmem:[#allocation3 + $0x50] sm:$0xff] %v3359
        %3392 = vst [vmem:[#allocation3 + $0x58] sm:$0xff] %v3360
        %3393 = vst [vmem:[#allocation3 + $0x60] sm:$0xff] %v3361
        %3394 = vst [vmem:[#allocation3 + $0x68] sm:$0xff] %v3362
        %3395 = vst [vmem:[#allocation3 + $0x70] sm:$0xff] %v3363
        %3396 = vst [vmem:[#allocation3 + $0x78] sm:$0xff] %v3364
        %3397 = vst [vmem:[#allocation3 + $0x80] sm:$0xff] %v3365
        %3398 = vst [vmem:[#allocation3 + $0x88] sm:$0xff] %v3366
        %3399 = vst [vmem:[#allocation3 + $0x90] sm:$0xff] %v3367
        %3400 = vst [vmem:[#allocation3 + $0x98] sm:$0xff] %v3368
        %3401 = vst [vmem:[#allocation3 + $0xa0] sm:$0xff] %v3369
        %3402 = vst [vmem:[#allocation3 + $0xa8] sm:$0xff] %v3370
        %3403 = vst [vmem:[#allocation3 + $0xb0] sm:$0xff] %v3371
        %3404 = vst [vmem:[#allocation3 + $0xb8] sm:$0xff] %v3372
        %3405 = vst [vmem:[#allocation3 + $0xc0] sm:$0xff] %v3373
        %3406 = vst [vmem:[#allocation3 + $0xc8] sm:$0xff] %v3374
        %3407 = vst [vmem:[#allocation3 + $0xd0] sm:$0xff] %v3375
        %3408 = vst [vmem:[#allocation3 + $0xd8] sm:$0xff] %v3376
        %3409 = vst [vmem:[#allocation3 + $0xe0] sm:$0xff] %v3377
        %3410 = vst [vmem:[#allocation3 + $0xe8] sm:$0xff] %v3378
        %3411 = vst [vmem:[#allocation3 + $0xf0] sm:$0xff] %v3379
        %3412 = vst [vmem:[#allocation3 + $0xf8] sm:$0xff] %v3380
        %v3413 = vld [vmem:[%s1128] sm:$0xff]
        %v3414 = vld [vmem:[%s1128 + $0x10] sm:$0xff]
        %v3415 = vld [vmem:[%s1128 + $0x20] sm:$0xff]
        %v3416 = vld [vmem:[%s1128 + $0x30] sm:$0xff]
        %v3417 = vld [vmem:[%s1128 + $0x40] sm:$0xff]
        %v3418 = vld [vmem:[%s1128 + $0x50] sm:$0xff]
        %v3419 = vld [vmem:[%s1128 + $0x60] sm:$0xff]
        %v3420 = vld [vmem:[%s1128 + $0x70] sm:$0xff]
        %v3421 = vld [vmem:[#allocation3] sm:$0xff]
        %v3422 = vld [vmem:[#allocation3 + $0x8] sm:$0xff]
        %v3423 = vld [vmem:[#allocation3 + $0x10] sm:$0xff]
        %v3424 = vld [vmem:[#allocation3 + $0x18] sm:$0xff]
        %v3425 = vld [vmem:[#allocation3 + $0x20] sm:$0xff]
        %v3426 = vld [vmem:[#allocation3 + $0x28] sm:$0xff]
        %v3427 = vld [vmem:[#allocation3 + $0x30] sm:$0xff]
        %v3428 = vld [vmem:[#allocation3 + $0x38] sm:$0xff]
        %v3429 = vld [vmem:[#allocation3 + $0x40] sm:$0xff]
        %v3430 = vld [vmem:[#allocation3 + $0x48] sm:$0xff]
        %v3431 = vld [vmem:[#allocation3 + $0x50] sm:$0xff]
        %v3432 = vld [vmem:[#allocation3 + $0x58] sm:$0xff]
        %v3433 = vld [vmem:[#allocation3 + $0x60] sm:$0xff]
        %v3434 = vld [vmem:[#allocation3 + $0x68] sm:$0xff]
        %v3435 = vld [vmem:[#allocation3 + $0x70] sm:$0xff]
        %v3436 = vld [vmem:[#allocation3 + $0x78] sm:$0xff]
        %v3437 = vld [vmem:[#allocation3 + $0x80] sm:$0xff]
        %v3438 = vld [vmem:[#allocation3 + $0x88] sm:$0xff]
        %v3439 = vld [vmem:[#allocation3 + $0x90] sm:$0xff]
        %v3440 = vld [vmem:[#allocation3 + $0x98] sm:$0xff]
        %v3441 = vld [vmem:[#allocation3 + $0xa0] sm:$0xff]
        %v3442 = vld [vmem:[#allocation3 + $0xa8] sm:$0xff]
        %v3443 = vld [vmem:[#allocation3 + $0xb0] sm:$0xff]
        %v3444 = vld [vmem:[#allocation3 + $0xb8] sm:$0xff]
        %v3445 = vld [vmem:[#allocation3 + $0xc0] sm:$0xff]
        %v3446 = vld [vmem:[#allocation3 + $0xc8] sm:$0xff]
        %v3447 = vld [vmem:[#allocation3 + $0xd0] sm:$0xff]
        %v3448 = vld [vmem:[#allocation3 + $0xd8] sm:$0xff]
        %v3449 = vld [vmem:[#allocation3 + $0xe0] sm:$0xff]
        %v3450 = vld [vmem:[#allocation3 + $0xe8] sm:$0xff]
        %v3451 = vld [vmem:[#allocation3 + $0xf0] sm:$0xff]
        %v3452 = vld [vmem:[#allocation3 + $0xf8] sm:$0xff]
        %s3453 = scalar_lea.vmem [#allocation12], 1536
        %v3454 = vld [vmem:[%s3453] sm:$0xff]
        %v3455 = vld [vmem:[%s3453 + $0x8] sm:$0xff]
        %v3456 = vld [vmem:[%s3453 + $0x10] sm:$0xff]
        %v3457 = vld [vmem:[%s3453 + $0x18] sm:$0xff]
        %v3458 = vld [vmem:[%s3453 + $0x20] sm:$0xff]
        %v3459 = vld [vmem:[%s3453 + $0x28] sm:$0xff]
        %v3460 = vld [vmem:[%s3453 + $0x30] sm:$0xff]
        %v3461 = vld [vmem:[%s3453 + $0x38] sm:$0xff]
        %v3462 = vld [vmem:[%s3453 + $0x40] sm:$0xff]
        %v3463 = vld [vmem:[%s3453 + $0x48] sm:$0xff]
        %v3464 = vld [vmem:[%s3453 + $0x50] sm:$0xff]
        %v3465 = vld [vmem:[%s3453 + $0x58] sm:$0xff]
        %v3466 = vld [vmem:[%s3453 + $0x60] sm:$0xff]
        %v3467 = vld [vmem:[%s3453 + $0x68] sm:$0xff]
        %v3468 = vld [vmem:[%s3453 + $0x70] sm:$0xff]
        %v3469 = vld [vmem:[%s3453 + $0x78] sm:$0xff]
        %v3470 = vld [vmem:[%s3453 + $0x80] sm:$0xff]
        %v3471 = vld [vmem:[%s3453 + $0x88] sm:$0xff]
        %v3472 = vld [vmem:[%s3453 + $0x90] sm:$0xff]
        %v3473 = vld [vmem:[%s3453 + $0x98] sm:$0xff]
        %v3474 = vld [vmem:[%s3453 + $0xa0] sm:$0xff]
        %v3475 = vld [vmem:[%s3453 + $0xa8] sm:$0xff]
        %v3476 = vld [vmem:[%s3453 + $0xb0] sm:$0xff]
        %v3477 = vld [vmem:[%s3453 + $0xb8] sm:$0xff]
        %v3478 = vld [vmem:[%s3453 + $0xc0] sm:$0xff]
        %v3479 = vld [vmem:[%s3453 + $0xc8] sm:$0xff]
        %v3480 = vld [vmem:[%s3453 + $0xd0] sm:$0xff]
        %v3481 = vld [vmem:[%s3453 + $0xd8] sm:$0xff]
        %v3482 = vld [vmem:[%s3453 + $0xe0] sm:$0xff]
        %v3483 = vld [vmem:[%s3453 + $0xe8] sm:$0xff]
        %v3484 = vld [vmem:[%s3453 + $0xf0] sm:$0xff]
        %v3485 = vld [vmem:[%s3453 + $0xf8] sm:$0xff]
        %v3486 = vld [vmem:[%s3453 + $0x100] sm:$0xff]
        %v3487 = vld [vmem:[%s3453 + $0x108] sm:$0xff]
        %v3488 = vld [vmem:[%s3453 + $0x110] sm:$0xff]
        %v3489 = vld [vmem:[%s3453 + $0x118] sm:$0xff]
        %v3490 = vld [vmem:[%s3453 + $0x120] sm:$0xff]
        %v3491 = vld [vmem:[%s3453 + $0x128] sm:$0xff]
        %v3492 = vld [vmem:[%s3453 + $0x130] sm:$0xff]
        %v3493 = vld [vmem:[%s3453 + $0x138] sm:$0xff]
        %v3494 = vld [vmem:[%s3453 + $0x140] sm:$0xff]
        %v3495 = vld [vmem:[%s3453 + $0x148] sm:$0xff]
        %v3496 = vld [vmem:[%s3453 + $0x150] sm:$0xff]
        %v3497 = vld [vmem:[%s3453 + $0x158] sm:$0xff]
        %v3498 = vld [vmem:[%s3453 + $0x160] sm:$0xff]
        %v3499 = vld [vmem:[%s3453 + $0x168] sm:$0xff]
        %v3500 = vld [vmem:[%s3453 + $0x170] sm:$0xff]
        %v3501 = vld [vmem:[%s3453 + $0x178] sm:$0xff]
        %v3502 = vld [vmem:[%s3453 + $0x180] sm:$0xff]
        %v3503 = vld [vmem:[%s3453 + $0x188] sm:$0xff]
        %v3504 = vld [vmem:[%s3453 + $0x190] sm:$0xff]
        %v3505 = vld [vmem:[%s3453 + $0x198] sm:$0xff]
        %v3506 = vld [vmem:[%s3453 + $0x1a0] sm:$0xff]
        %v3507 = vld [vmem:[%s3453 + $0x1a8] sm:$0xff]
        %v3508 = vld [vmem:[%s3453 + $0x1b0] sm:$0xff]
        %v3509 = vld [vmem:[%s3453 + $0x1b8] sm:$0xff]
        %v3510 = vld [vmem:[%s3453 + $0x1c0] sm:$0xff]
        %v3511 = vld [vmem:[%s3453 + $0x1c8] sm:$0xff]
        %v3512 = vld [vmem:[%s3453 + $0x1d0] sm:$0xff]
        %v3513 = vld [vmem:[%s3453 + $0x1d8] sm:$0xff]
        %v3514 = vld [vmem:[%s3453 + $0x1e0] sm:$0xff]
        %v3515 = vld [vmem:[%s3453 + $0x1e8] sm:$0xff]
        %v3516 = vld [vmem:[%s3453 + $0x1f0] sm:$0xff]
        %v3517 = vld [vmem:[%s3453 + $0x1f8] sm:$0xff]
        %v3526 = vunpack.c.l.b16 %v3413
        %v3527 = vunpack.c.h.b16 %v3413
        %v3528 = vunpack.c.l.b16 %v3414
        %v3529 = vunpack.c.h.b16 %v3414
        %v3530 = vunpack.c.l.b16 %v3415
        %v3531 = vunpack.c.h.b16 %v3415
        %v3532 = vunpack.c.l.b16 %v3416
        %v3533 = vunpack.c.h.b16 %v3416
        %v3534 = vunpack.c.l.b16 %v3417
        %v3535 = vunpack.c.h.b16 %v3417
        %v3536 = vunpack.c.l.b16 %v3418
        %v3537 = vunpack.c.h.b16 %v3418
        %v3538 = vunpack.c.l.b16 %v3419
        %v3539 = vunpack.c.h.b16 %v3419
        %v3540 = vunpack.c.l.b16 %v3420
        %v3541 = vunpack.c.h.b16 %v3420
        %v3542 = vpack.c.b16 %v3528, %v3526
        %v3543 = vpack.c.b16 %v3529, %v3527
        %v3544 = vpack.c.b16 %v3532, %v3530
        %v3545 = vpack.c.b16 %v3533, %v3531
        %v3546 = vpack.c.b16 %v3536, %v3534
        %v3547 = vpack.c.b16 %v3537, %v3535
        %v3548 = vpack.c.b16 %v3540, %v3538
        %v3549 = vpack.c.b16 %v3541, %v3539
        %v3622 = vunpack.c.l.b16 %v3454
        %v3623 = vunpack.c.h.b16 %v3454
        %v3624 = vunpack.c.l.b16 %v3455
        %v3625 = vunpack.c.h.b16 %v3455
        %v3626 = vunpack.c.l.b16 %v3456
        %v3627 = vunpack.c.h.b16 %v3456
        %v3628 = vunpack.c.l.b16 %v3457
        %v3629 = vunpack.c.h.b16 %v3457
        %v3630 = vunpack.c.l.b16 %v3458
        %v3631 = vunpack.c.h.b16 %v3458
        %v3632 = vunpack.c.l.b16 %v3459
        %v3633 = vunpack.c.h.b16 %v3459
        %v3634 = vunpack.c.l.b16 %v3460
        %v3635 = vunpack.c.h.b16 %v3460
        %v3636 = vunpack.c.l.b16 %v3461
        %v3637 = vunpack.c.h.b16 %v3461
        %v3638 = vunpack.c.l.b16 %v3462
        %v3639 = vunpack.c.h.b16 %v3462
        %v3640 = vunpack.c.l.b16 %v3463
        %v3641 = vunpack.c.h.b16 %v3463
        %v3642 = vunpack.c.l.b16 %v3464
        %v3643 = vunpack.c.h.b16 %v3464
        %v3644 = vunpack.c.l.b16 %v3465
        %v3645 = vunpack.c.h.b16 %v3465
        %v3646 = vunpack.c.l.b16 %v3466
        %v3647 = vunpack.c.h.b16 %v3466
        %v3648 = vunpack.c.l.b16 %v3467
        %v3649 = vunpack.c.h.b16 %v3467
        %v3650 = vunpack.c.l.b16 %v3468
        %v3651 = vunpack.c.h.b16 %v3468
        %v3652 = vunpack.c.l.b16 %v3469
        %v3653 = vunpack.c.h.b16 %v3469
        %v3654 = vunpack.c.l.b16 %v3470
        %v3655 = vunpack.c.h.b16 %v3470
        %v3656 = vunpack.c.l.b16 %v3471
        %v3657 = vunpack.c.h.b16 %v3471
        %v3658 = vunpack.c.l.b16 %v3472
        %v3659 = vunpack.c.h.b16 %v3472
        %v3660 = vunpack.c.l.b16 %v3473
        %v3661 = vunpack.c.h.b16 %v3473
        %v3662 = vunpack.c.l.b16 %v3474
        %v3663 = vunpack.c.h.b16 %v3474
        %v3664 = vunpack.c.l.b16 %v3475
        %v3665 = vunpack.c.h.b16 %v3475
        %v3666 = vunpack.c.l.b16 %v3476
        %v3667 = vunpack.c.h.b16 %v3476
        %v3668 = vunpack.c.l.b16 %v3477
        %v3669 = vunpack.c.h.b16 %v3477
        %v3670 = vunpack.c.l.b16 %v3478
        %v3671 = vunpack.c.h.b16 %v3478
        %v3672 = vunpack.c.l.b16 %v3479
        %v3673 = vunpack.c.h.b16 %v3479
        %v3674 = vunpack.c.l.b16 %v3480
        %v3675 = vunpack.c.h.b16 %v3480
        %v3676 = vunpack.c.l.b16 %v3481
        %v3677 = vunpack.c.h.b16 %v3481
        %v3678 = vunpack.c.l.b16 %v3482
        %v3679 = vunpack.c.h.b16 %v3482
        %v3680 = vunpack.c.l.b16 %v3483
        %v3681 = vunpack.c.h.b16 %v3483
        %v3682 = vunpack.c.l.b16 %v3484
        %v3683 = vunpack.c.h.b16 %v3484
        %v3684 = vunpack.c.l.b16 %v3485
        %v3685 = vunpack.c.h.b16 %v3485
        %v3686 = vunpack.c.l.b16 %v3486
        %v3687 = vunpack.c.h.b16 %v3486
        %v3688 = vunpack.c.l.b16 %v3487
        %v3689 = vunpack.c.h.b16 %v3487
        %v3690 = vunpack.c.l.b16 %v3488
        %v3691 = vunpack.c.h.b16 %v3488
        %v3692 = vunpack.c.l.b16 %v3489
        %v3693 = vunpack.c.h.b16 %v3489
        %v3694 = vunpack.c.l.b16 %v3490
        %v3695 = vunpack.c.h.b16 %v3490
        %v3696 = vunpack.c.l.b16 %v3491
        %v3697 = vunpack.c.h.b16 %v3491
        %v3698 = vunpack.c.l.b16 %v3492
        %v3699 = vunpack.c.h.b16 %v3492
        %v3700 = vunpack.c.l.b16 %v3493
        %v3701 = vunpack.c.h.b16 %v3493
        %v3702 = vunpack.c.l.b16 %v3494
        %v3703 = vunpack.c.h.b16 %v3494
        %v3704 = vunpack.c.l.b16 %v3495
        %v3705 = vunpack.c.h.b16 %v3495
        %v3706 = vunpack.c.l.b16 %v3496
        %v3707 = vunpack.c.h.b16 %v3496
        %v3708 = vunpack.c.l.b16 %v3497
        %v3709 = vunpack.c.h.b16 %v3497
        %v3710 = vunpack.c.l.b16 %v3498
        %v3711 = vunpack.c.h.b16 %v3498
        %v3712 = vunpack.c.l.b16 %v3499
        %v3713 = vunpack.c.h.b16 %v3499
        %v3714 = vunpack.c.l.b16 %v3500
        %v3715 = vunpack.c.h.b16 %v3500
        %v3716 = vunpack.c.l.b16 %v3501
        %v3717 = vunpack.c.h.b16 %v3501
        %v3718 = vunpack.c.l.b16 %v3502
        %v3719 = vunpack.c.h.b16 %v3502
        %v3720 = vunpack.c.l.b16 %v3503
        %v3721 = vunpack.c.h.b16 %v3503
        %v3722 = vunpack.c.l.b16 %v3504
        %v3723 = vunpack.c.h.b16 %v3504
        %v3724 = vunpack.c.l.b16 %v3505
        %v3725 = vunpack.c.h.b16 %v3505
        %v3726 = vunpack.c.l.b16 %v3506
        %v3727 = vunpack.c.h.b16 %v3506
        %v3728 = vunpack.c.l.b16 %v3507
        %v3729 = vunpack.c.h.b16 %v3507
        %v3730 = vunpack.c.l.b16 %v3508
        %v3731 = vunpack.c.h.b16 %v3508
        %v3732 = vunpack.c.l.b16 %v3509
        %v3733 = vunpack.c.h.b16 %v3509
        %v3734 = vunpack.c.l.b16 %v3510
        %v3735 = vunpack.c.h.b16 %v3510
        %v3736 = vunpack.c.l.b16 %v3511
        %v3737 = vunpack.c.h.b16 %v3511
        %v3738 = vunpack.c.l.b16 %v3512
        %v3739 = vunpack.c.h.b16 %v3512
        %v3740 = vunpack.c.l.b16 %v3513
        %v3741 = vunpack.c.h.b16 %v3513
        %v3742 = vunpack.c.l.b16 %v3514
        %v3743 = vunpack.c.h.b16 %v3514
        %v3744 = vunpack.c.l.b16 %v3515
        %v3745 = vunpack.c.h.b16 %v3515
        %v3746 = vunpack.c.l.b16 %v3516
        %v3747 = vunpack.c.h.b16 %v3516
        %v3748 = vunpack.c.l.b16 %v3517
        %v3749 = vunpack.c.h.b16 %v3517
        %v3750 = vpack.c.b16 %v3626, %v3622
        %v3751 = vpack.c.b16 %v3627, %v3623
        %v3752 = vpack.c.b16 %v3628, %v3624
        %v3753 = vpack.c.b16 %v3629, %v3625
        %v3754 = vpack.c.b16 %v3634, %v3630
        %v3755 = vpack.c.b16 %v3635, %v3631
        %v3756 = vpack.c.b16 %v3636, %v3632
        %v3757 = vpack.c.b16 %v3637, %v3633
        %v3758 = vpack.c.b16 %v3642, %v3638
        %v3759 = vpack.c.b16 %v3643, %v3639
        %v3760 = vpack.c.b16 %v3644, %v3640
        %v3761 = vpack.c.b16 %v3645, %v3641
        %v3762 = vpack.c.b16 %v3650, %v3646
        %v3763 = vpack.c.b16 %v3651, %v3647
        %v3764 = vpack.c.b16 %v3652, %v3648
        %v3765 = vpack.c.b16 %v3653, %v3649
        %v3766 = vpack.c.b16 %v3658, %v3654
        %v3767 = vpack.c.b16 %v3659, %v3655
        %v3768 = vpack.c.b16 %v3660, %v3656
        %v3769 = vpack.c.b16 %v3661, %v3657
        %v3770 = vpack.c.b16 %v3666, %v3662
        %v3771 = vpack.c.b16 %v3667, %v3663
        %v3772 = vpack.c.b16 %v3668, %v3664
        %v3773 = vpack.c.b16 %v3669, %v3665
        %v3774 = vpack.c.b16 %v3674, %v3670
        %v3775 = vpack.c.b16 %v3675, %v3671
        %v3776 = vpack.c.b16 %v3676, %v3672
        %v3777 = vpack.c.b16 %v3677, %v3673
        %v3778 = vpack.c.b16 %v3682, %v3678
        %v3779 = vpack.c.b16 %v3683, %v3679
        %v3780 = vpack.c.b16 %v3684, %v3680
        %v3781 = vpack.c.b16 %v3685, %v3681
        %v3782 = vpack.c.b16 %v3690, %v3686
        %v3783 = vpack.c.b16 %v3691, %v3687
        %v3784 = vpack.c.b16 %v3692, %v3688
        %v3785 = vpack.c.b16 %v3693, %v3689
        %v3786 = vpack.c.b16 %v3698, %v3694
        %v3787 = vpack.c.b16 %v3699, %v3695
        %v3788 = vpack.c.b16 %v3700, %v3696
        %v3789 = vpack.c.b16 %v3701, %v3697
        %v3790 = vpack.c.b16 %v3706, %v3702
        %v3791 = vpack.c.b16 %v3707, %v3703
        %v3792 = vpack.c.b16 %v3708, %v3704
        %v3793 = vpack.c.b16 %v3709, %v3705
        %v3794 = vpack.c.b16 %v3714, %v3710
        %v3795 = vpack.c.b16 %v3715, %v3711
        %v3796 = vpack.c.b16 %v3716, %v3712
        %v3797 = vpack.c.b16 %v3717, %v3713
        %v3798 = vpack.c.b16 %v3722, %v3718
        %v3799 = vpack.c.b16 %v3723, %v3719
        %v3800 = vpack.c.b16 %v3724, %v3720
        %v3801 = vpack.c.b16 %v3725, %v3721
        %v3802 = vpack.c.b16 %v3730, %v3726
        %v3803 = vpack.c.b16 %v3731, %v3727
        %v3804 = vpack.c.b16 %v3732, %v3728
        %v3805 = vpack.c.b16 %v3733, %v3729
        %v3806 = vpack.c.b16 %v3738, %v3734
        %v3807 = vpack.c.b16 %v3739, %v3735
        %v3808 = vpack.c.b16 %v3740, %v3736
        %v3809 = vpack.c.b16 %v3741, %v3737
        %v3810 = vpack.c.b16 %v3746, %v3742
        %v3811 = vpack.c.b16 %v3747, %v3743
        %v3812 = vpack.c.b16 %v3748, %v3744
        %v3813 = vpack.c.b16 %v3749, %v3745
        %3878 = vmatprep.subr.bf16.mxu0 %v3751
        %3879 = vmatpush1.bf16.msra.mxu0 %v3750
        %3880 = vmatprep.subr.bf16.mxu0 %v3755
        %3881 = vmatpush1.bf16.msra.mxu0 %v3754
        %3882 = vmatprep.subr.bf16.mxu0 %v3759
        %3883 = vmatpush1.bf16.msra.mxu0 %v3758
        %3884 = vmatprep.subr.bf16.mxu0 %v3763
        %3885 = vmatpush1.bf16.msra.mxu0 %v3762
        %3886 = vmatprep.subr.bf16.mxu0 %v3767
        %3887 = vmatpush1.bf16.msra.mxu0 %v3766
        %3888 = vmatprep.subr.bf16.mxu0 %v3771
        %3889 = vmatpush1.bf16.msra.mxu0 %v3770
        %3890 = vmatprep.subr.bf16.mxu0 %v3775
        %3891 = vmatpush1.bf16.msra.mxu0 %v3774
        %3892 = vmatprep.subr.bf16.mxu0 %v3779
        %3893 = vmatpush1.bf16.msra.mxu0 %v3778
        %3894 = vmatprep.subr.bf16.mxu0 %v3783
        %3895 = vmatpush1.bf16.msra.mxu0 %v3782
        %3896 = vmatprep.subr.bf16.mxu0 %v3787
        %3897 = vmatpush1.bf16.msra.mxu0 %v3786
        %3898 = vmatprep.subr.bf16.mxu0 %v3791
        %3899 = vmatpush1.bf16.msra.mxu0 %v3790
        %3900 = vmatprep.subr.bf16.mxu0 %v3795
        %3901 = vmatpush1.bf16.msra.mxu0 %v3794
        %3902 = vmatprep.subr.bf16.mxu0 %v3799
        %3903 = vmatpush1.bf16.msra.mxu0 %v3798
        %3904 = vmatprep.subr.bf16.mxu0 %v3803
        %3905 = vmatpush1.bf16.msra.mxu0 %v3802
        %3906 = vmatprep.subr.bf16.mxu0 %v3807
        %3907 = vmatpush1.bf16.msra.mxu0 %v3806
        %3908 = vmatprep.subr.bf16.mxu0 %v3811
        %3909 = vmatpush1.bf16.msra.mxu0 %v3810
        %3910 = vmatprep.mubr.bf16.mxu0 %v3543
        %3911 = vmatmul.mubr.bf16.gmra.mrb[0].mxu0 %v3542
        %v3912 = vpop.f32.mrb[0].mxu0
        %v3913 = vadd.f32 0.0, %v3912
        %v3914 = vpop.f32.mrb[0].mxu0
        %v3915 = vadd.f32 0.0, %v3914
        %v3916 = vpop.f32.mrb[0].mxu0
        %v3917 = vadd.f32 0.0, %v3916
        %v3918 = vpop.f32.mrb[0].mxu0
        %v3919 = vadd.f32 0.0, %v3918
        %3920 = vmatprep.mubr.bf16.mxu0 %v3545
        %3921 = vmatmul.mubr.bf16.gmra.mrb[0].mxu0 %v3544
        %v3922 = vpop.f32.mrb[0].mxu0
        %v3923 = vadd.f32 0.0, %v3922
        %v3924 = vpop.f32.mrb[0].mxu0
        %v3925 = vadd.f32 0.0, %v3924
        %v3926 = vpop.f32.mrb[0].mxu0
        %v3927 = vadd.f32 0.0, %v3926
        %v3928 = vpop.f32.mrb[0].mxu0
        %v3929 = vadd.f32 0.0, %v3928
        %3930 = vmatprep.mubr.bf16.mxu0 %v3547
        %3931 = vmatmul.mubr.bf16.gmra.mrb[0].mxu0 %v3546
        %v3932 = vpop.f32.mrb[0].mxu0
        %v3933 = vadd.f32 0.0, %v3932
        %v3934 = vpop.f32.mrb[0].mxu0
        %v3935 = vadd.f32 0.0, %v3934
        %v3936 = vpop.f32.mrb[0].mxu0
        %v3937 = vadd.f32 0.0, %v3936
        %v3938 = vpop.f32.mrb[0].mxu0
        %v3939 = vadd.f32 0.0, %v3938
        %3940 = vmatprep.mubr.bf16.mxu0 %v3549
        %3941 = vmatmul.mubr.bf16.gmra.mrb[0].mxu0 %v3548
        %v3942 = vpop.f32.mrb[0].mxu0
        %v3943 = vadd.f32 0.0, %v3942
        %v3944 = vpop.f32.mrb[0].mxu0
        %v3945 = vadd.f32 0.0, %v3944
        %v3946 = vpop.f32.mrb[0].mxu0
        %v3947 = vadd.f32 0.0, %v3946
        %v3948 = vpop.f32.mrb[0].mxu0
        %v3949 = vadd.f32 0.0, %v3948
        %3950 = vdwg.mxu0
        %3951 = vmatprep.subr.bf16.mxu0 %v3753
        %3952 = vmatpush1.bf16.msra.mxu0 %v3752
        %3953 = vmatprep.subr.bf16.mxu0 %v3757
        %3954 = vmatpush1.bf16.msra.mxu0 %v3756
        %3955 = vmatprep.subr.bf16.mxu0 %v3761
        %3956 = vmatpush1.bf16.msra.mxu0 %v3760
        %3957 = vmatprep.subr.bf16.mxu0 %v3765
        %3958 = vmatpush1.bf16.msra.mxu0 %v3764
        %3959 = vmatprep.subr.bf16.mxu0 %v3769
        %3960 = vmatpush1.bf16.msra.mxu0 %v3768
        %3961 = vmatprep.subr.bf16.mxu0 %v3773
        %3962 = vmatpush1.bf16.msra.mxu0 %v3772
        %3963 = vmatprep.subr.bf16.mxu0 %v3777
        %3964 = vmatpush1.bf16.msra.mxu0 %v3776
        %3965 = vmatprep.subr.bf16.mxu0 %v3781
        %3966 = vmatpush1.bf16.msra.mxu0 %v3780
        %3967 = vmatprep.subr.bf16.mxu0 %v3785
        %3968 = vmatpush1.bf16.msra.mxu0 %v3784
        %3969 = vmatprep.subr.bf16.mxu0 %v3789
        %3970 = vmatpush1.bf16.msra.mxu0 %v3788
        %3971 = vmatprep.subr.bf16.mxu0 %v3793
        %3972 = vmatpush1.bf16.msra.mxu0 %v3792
        %3973 = vmatprep.subr.bf16.mxu0 %v3797
        %3974 = vmatpush1.bf16.msra.mxu0 %v3796
        %3975 = vmatprep.subr.bf16.mxu0 %v3801
        %3976 = vmatpush1.bf16.msra.mxu0 %v3800
        %3977 = vmatprep.subr.bf16.mxu0 %v3805
        %3978 = vmatpush1.bf16.msra.mxu0 %v3804
        %3979 = vmatprep.subr.bf16.mxu0 %v3809
        %3980 = vmatpush1.bf16.msra.mxu0 %v3808
        %3981 = vmatprep.subr.bf16.mxu0 %v3813
        %3982 = vmatpush1.bf16.msra.mxu0 %v3812
        %3983 = vmatprep.mubr.bf16.mxu0 %v3543
        %3984 = vmatmul.mubr.bf16.gmra.mrb[0].mxu0 %v3542
        %v3985 = vpop.f32.mrb[0].mxu0
        %v3986 = vadd.f32 0.0, %v3985
        %v3987 = vpop.f32.mrb[0].mxu0
        %v3988 = vadd.f32 0.0, %v3987
        %v3989 = vpop.f32.mrb[0].mxu0
        %v3990 = vadd.f32 0.0, %v3989
        %v3991 = vpop.f32.mrb[0].mxu0
        %v3992 = vadd.f32 0.0, %v3991
        %3993 = vmatprep.mubr.bf16.mxu0 %v3545
        %3994 = vmatmul.mubr.bf16.gmra.mrb[0].mxu0 %v3544
        %v3995 = vpop.f32.mrb[0].mxu0
        %v3996 = vadd.f32 0.0, %v3995
        %v3997 = vpop.f32.mrb[0].mxu0
        %v3998 = vadd.f32 0.0, %v3997
        %v3999 = vpop.f32.mrb[0].mxu0
        %v4000 = vadd.f32 0.0, %v3999
        %v4001 = vpop.f32.mrb[0].mxu0
        %v4002 = vadd.f32 0.0, %v4001
        %4003 = vmatprep.mubr.bf16.mxu0 %v3547
        %4004 = vmatmul.mubr.bf16.gmra.mrb[0].mxu0 %v3546
        %v4005 = vpop.f32.mrb[0].mxu0
        %v4006 = vadd.f32 0.0, %v4005
        %v4007 = vpop.f32.mrb[0].mxu0
        %v4008 = vadd.f32 0.0, %v4007
        %v4009 = vpop.f32.mrb[0].mxu0
        %v4010 = vadd.f32 0.0, %v4009
        %v4011 = vpop.f32.mrb[0].mxu0
        %v4012 = vadd.f32 0.0, %v4011
        %4013 = vmatprep.mubr.bf16.mxu0 %v3549
        %4014 = vmatmul.mubr.bf16.gmra.mrb[0].mxu0 %v3548
        %v4015 = vpop.f32.mrb[0].mxu0
        %v4016 = vadd.f32 0.0, %v4015
        %v4017 = vpop.f32.mrb[0].mxu0
        %v4018 = vadd.f32 0.0, %v4017
        %v4019 = vpop.f32.mrb[0].mxu0
        %v4020 = vadd.f32 0.0, %v4019
        %v4021 = vpop.f32.mrb[0].mxu0
        %v4022 = vadd.f32 0.0, %v4021
        %4023 = vdwg.mxu0
        %v4024 = vadd.f32 %v3421, %v3913
        %v4025 = vadd.f32 %v3422, %v3915
        %v4026 = vadd.f32 %v3423, %v3986
        %v4027 = vadd.f32 %v3424, %v3988
        %v4028 = vadd.f32 %v3425, %v3917
        %v4029 = vadd.f32 %v3426, %v3919
        %v4030 = vadd.f32 %v3427, %v3990
        %v4031 = vadd.f32 %v3428, %v3992
        %v4032 = vadd.f32 %v3429, %v3923
        %v4033 = vadd.f32 %v3430, %v3925
        %v4034 = vadd.f32 %v3431, %v3996
        %v4035 = vadd.f32 %v3432, %v3998
        %v4036 = vadd.f32 %v3433, %v3927
        %v4037 = vadd.f32 %v3434, %v3929
        %v4038 = vadd.f32 %v3435, %v4000
        %v4039 = vadd.f32 %v3436, %v4002
        %v4040 = vadd.f32 %v3437, %v3933
        %v4041 = vadd.f32 %v3438, %v3935
        %v4042 = vadd.f32 %v3439, %v4006
        %v4043 = vadd.f32 %v3440, %v4008
        %v4044 = vadd.f32 %v3441, %v3937
        %v4045 = vadd.f32 %v3442, %v3939
        %v4046 = vadd.f32 %v3443, %v4010
        %v4047 = vadd.f32 %v3444, %v4012
        %v4048 = vadd.f32 %v3445, %v3943
        %v4049 = vadd.f32 %v3446, %v3945
        %v4050 = vadd.f32 %v3447, %v4016
        %v4051 = vadd.f32 %v3448, %v4018
        %v4052 = vadd.f32 %v3449, %v3947
        %v4053 = vadd.f32 %v3450, %v3949
        %v4054 = vadd.f32 %v3451, %v4020
        %v4055 = vadd.f32 %v3452, %v4022
        %4056 = vst [vmem:[#allocation3] sm:$0xff] %v4024
        %4057 = vst [vmem:[#allocation3 + $0x8] sm:$0xff] %v4025
        %4058 = vst [vmem:[#allocation3 + $0x10] sm:$0xff] %v4026
        %4059 = vst [vmem:[#allocation3 + $0x18] sm:$0xff] %v4027
        %4060 = vst [vmem:[#allocation3 + $0x20] sm:$0xff] %v4028
        %4061 = vst [vmem:[#allocation3 + $0x28] sm:$0xff] %v4029
        %4062 = vst [vmem:[#allocation3 + $0x30] sm:$0xff] %v4030
        %4063 = vst [vmem:[#allocation3 + $0x38] sm:$0xff] %v4031
        %4064 = vst [vmem:[#allocation3 + $0x40] sm:$0xff] %v4032
        %4065 = vst [vmem:[#allocation3 + $0x48] sm:$0xff] %v4033
        %4066 = vst [vmem:[#allocation3 + $0x50] sm:$0xff] %v4034
        %4067 = vst [vmem:[#allocation3 + $0x58] sm:$0xff] %v4035
        %4068 = vst [vmem:[#allocation3 + $0x60] sm:$0xff] %v4036
        %4069 = vst [vmem:[#allocation3 + $0x68] sm:$0xff] %v4037
        %4070 = vst [vmem:[#allocation3 + $0x70] sm:$0xff] %v4038
        %4071 = vst [vmem:[#allocation3 + $0x78] sm:$0xff] %v4039
        %4072 = vst [vmem:[#allocation3 + $0x80] sm:$0xff] %v4040
        %4073 = vst [vmem:[#allocation3 + $0x88] sm:$0xff] %v4041
        %4074 = vst [vmem:[#allocation3 + $0x90] sm:$0xff] %v4042
        %4075 = vst [vmem:[#allocation3 + $0x98] sm:$0xff] %v4043
        %4076 = vst [vmem:[#allocation3 + $0xa0] sm:$0xff] %v4044
        %4077 = vst [vmem:[#allocation3 + $0xa8] sm:$0xff] %v4045
        %4078 = vst [vmem:[#allocation3 + $0xb0] sm:$0xff] %v4046
        %4079 = vst [vmem:[#allocation3 + $0xb8] sm:$0xff] %v4047
        %4080 = vst [vmem:[#allocation3 + $0xc0] sm:$0xff] %v4048
        %4081 = vst [vmem:[#allocation3 + $0xc8] sm:$0xff] %v4049
        %4082 = vst [vmem:[#allocation3 + $0xd0] sm:$0xff] %v4050
        %4083 = vst [vmem:[#allocation3 + $0xd8] sm:$0xff] %v4051
        %4084 = vst [vmem:[#allocation3 + $0xe0] sm:$0xff] %v4052
        %4085 = vst [vmem:[#allocation3 + $0xe8] sm:$0xff] %v4053
        %4086 = vst [vmem:[#allocation3 + $0xf0] sm:$0xff] %v4054
        %4087 = vst [vmem:[#allocation3 + $0xf8] sm:$0xff] %v4055
        %v4088 = vld [vmem:[%s1128] sm:$0xff]
        %v4089 = vld [vmem:[%s1128 + $0x8] sm:$0x11]
        %v4090 = vld [vmem:[%s1128 + $0x10] sm:$0xff]
        %v4091 = vld [vmem:[%s1128 + $0x18] sm:$0x11]
        %v4092 = vld [vmem:[%s1128 + $0x20] sm:$0xff]
        %v4093 = vld [vmem:[%s1128 + $0x28] sm:$0x11]
        %v4094 = vld [vmem:[%s1128 + $0x30] sm:$0xff]
        %v4095 = vld [vmem:[%s1128 + $0x38] sm:$0x11]
        %v4096 = vld [vmem:[%s1128 + $0x40] sm:$0xff]
        %v4097 = vld [vmem:[%s1128 + $0x48] sm:$0x11]
        %v4098 = vld [vmem:[%s1128 + $0x50] sm:$0xff]
        %v4099 = vld [vmem:[%s1128 + $0x58] sm:$0x11]
        %v4100 = vld [vmem:[%s1128 + $0x60] sm:$0xff]
        %v4101 = vld [vmem:[%s1128 + $0x68] sm:$0x11]
        %v4102 = vld [vmem:[%s1128 + $0x70] sm:$0xff]
        %v4103 = vld [vmem:[%s1128 + $0x78] sm:$0x11]
        %v4105 = vshrl.u32 %v4088, 16
        %v4107 = vrot.slane %v4105, 4
        %v4108 = vshll.u32 %v4088, 16
        %v4110 = vrot.slane %v4108, 5
        %v4111 = vor.u32 %v4107, %v4110
        %v4112 = vrot.slane %v4111, 4
        %v4114 = vshll.u32 %v4089, 16
        %v4116 = vrot.slane %v4114, 5
        %v4117 = vsel %vm1915, %v4112, %v4116
        %v4119 = vshrl.u32 %v4090, 16
        %v4121 = vrot.slane %v4119, 4
        %v4122 = vshll.u32 %v4090, 16
        %v4124 = vrot.slane %v4122, 5
        %v4125 = vor.u32 %v4121, %v4124
        %v4126 = vrot.slane %v4125, 4
        %v4128 = vshll.u32 %v4091, 16
        %v4130 = vrot.slane %v4128, 5
        %v4131 = vsel %vm1915, %v4126, %v4130
        %v4133 = vshrl.u32 %v4092, 16
        %v4135 = vrot.slane %v4133, 4
        %v4136 = vshll.u32 %v4092, 16
        %v4138 = vrot.slane %v4136, 5
        %v4139 = vor.u32 %v4135, %v4138
        %v4140 = vrot.slane %v4139, 4
        %v4142 = vshll.u32 %v4093, 16
        %v4144 = vrot.slane %v4142, 5
        %v4145 = vsel %vm1915, %v4140, %v4144
        %v4147 = vshrl.u32 %v4094, 16
        %v4149 = vrot.slane %v4147, 4
        %v4150 = vshll.u32 %v4094, 16
        %v4152 = vrot.slane %v4150, 5
        %v4153 = vor.u32 %v4149, %v4152
        %v4154 = vrot.slane %v4153, 4
        %v4156 = vshll.u32 %v4095, 16
        %v4158 = vrot.slane %v4156, 5
        %v4159 = vsel %vm1915, %v4154, %v4158
        %v4161 = vshrl.u32 %v4096, 16
        %v4163 = vrot.slane %v4161, 4
        %v4164 = vshll.u32 %v4096, 16
        %v4166 = vrot.slane %v4164, 5
        %v4167 = vor.u32 %v4163, %v4166
        %v4168 = vrot.slane %v4167, 4
        %v4170 = vshll.u32 %v4097, 16
        %v4172 = vrot.slane %v4170, 5
        %v4173 = vsel %vm1915, %v4168, %v4172
        %v4175 = vshrl.u32 %v4098, 16
        %v4177 = vrot.slane %v4175, 4
        %v4178 = vshll.u32 %v4098, 16
        %v4180 = vrot.slane %v4178, 5
        %v4181 = vor.u32 %v4177, %v4180
        %v4182 = vrot.slane %v4181, 4
        %v4184 = vshll.u32 %v4099, 16
        %v4186 = vrot.slane %v4184, 5
        %v4187 = vsel %vm1915, %v4182, %v4186
        %v4189 = vshrl.u32 %v4100, 16
        %v4191 = vrot.slane %v4189, 4
        %v4192 = vshll.u32 %v4100, 16
        %v4194 = vrot.slane %v4192, 5
        %v4195 = vor.u32 %v4191, %v4194
        %v4196 = vrot.slane %v4195, 4
        %v4198 = vshll.u32 %v4101, 16
        %v4200 = vrot.slane %v4198, 5
        %v4201 = vsel %vm1915, %v4196, %v4200
        %v4203 = vshrl.u32 %v4102, 16
        %v4205 = vrot.slane %v4203, 4
        %v4206 = vshll.u32 %v4102, 16
        %v4208 = vrot.slane %v4206, 5
        %v4209 = vor.u32 %v4205, %v4208
        %v4210 = vrot.slane %v4209, 4
        %v4212 = vshll.u32 %v4103, 16
        %v4214 = vrot.slane %v4212, 5
        %v4215 = vsel %vm1915, %v4210, %v4214
        %v4216 = vld [vmem:[#allocation3] sm:$0xff]
        %v4217 = vld [vmem:[#allocation3 + $0x8] sm:$0xff]
        %v4218 = vld [vmem:[#allocation3 + $0x10] sm:$0xff]
        %v4219 = vld [vmem:[#allocation3 + $0x18] sm:$0xff]
        %v4220 = vld [vmem:[#allocation3 + $0x20] sm:$0xff]
        %v4221 = vld [vmem:[#allocation3 + $0x28] sm:$0xff]
        %v4222 = vld [vmem:[#allocation3 + $0x30] sm:$0xff]
        %v4223 = vld [vmem:[#allocation3 + $0x38] sm:$0xff]
        %v4224 = vld [vmem:[#allocation3 + $0x40] sm:$0xff]
        %v4225 = vld [vmem:[#allocation3 + $0x48] sm:$0xff]
        %v4226 = vld [vmem:[#allocation3 + $0x50] sm:$0xff]
        %v4227 = vld [vmem:[#allocation3 + $0x58] sm:$0xff]
        %v4228 = vld [vmem:[#allocation3 + $0x60] sm:$0xff]
        %v4229 = vld [vmem:[#allocation3 + $0x68] sm:$0xff]
        %v4230 = vld [vmem:[#allocation3 + $0x70] sm:$0xff]
        %v4231 = vld [vmem:[#allocation3 + $0x78] sm:$0xff]
        %v4232 = vld [vmem:[#allocation3 + $0x80] sm:$0xff]
        %v4233 = vld [vmem:[#allocation3 + $0x88] sm:$0xff]
        %v4234 = vld [vmem:[#allocation3 + $0x90] sm:$0xff]
        %v4235 = vld [vmem:[#allocation3 + $0x98] sm:$0xff]
        %v4236 = vld [vmem:[#allocation3 + $0xa0] sm:$0xff]
        %v4237 = vld [vmem:[#allocation3 + $0xa8] sm:$0xff]
        %v4238 = vld [vmem:[#allocation3 + $0xb0] sm:$0xff]
        %v4239 = vld [vmem:[#allocation3 + $0xb8] sm:$0xff]
        %v4240 = vld [vmem:[#allocation3 + $0xc0] sm:$0xff]
        %v4241 = vld [vmem:[#allocation3 + $0xc8] sm:$0xff]
        %v4242 = vld [vmem:[#allocation3 + $0xd0] sm:$0xff]
        %v4243 = vld [vmem:[#allocation3 + $0xd8] sm:$0xff]
        %v4244 = vld [vmem:[#allocation3 + $0xe0] sm:$0xff]
        %v4245 = vld [vmem:[#allocation3 + $0xe8] sm:$0xff]
        %v4246 = vld [vmem:[#allocation3 + $0xf0] sm:$0xff]
        %v4247 = vld [vmem:[#allocation3 + $0xf8] sm:$0xff]
        %s4248 = scalar_lea.vmem [#allocation12], 2048
        %v4249 = vld [vmem:[%s4248] sm:$0xff]
        %v4250 = vld [vmem:[%s4248 + $0x8] sm:$0xff]
        %v4251 = vld [vmem:[%s4248 + $0x10] sm:$0xff]
        %v4252 = vld [vmem:[%s4248 + $0x18] sm:$0xff]
        %v4253 = vld [vmem:[%s4248 + $0x20] sm:$0xff]
        %v4254 = vld [vmem:[%s4248 + $0x28] sm:$0xff]
        %v4255 = vld [vmem:[%s4248 + $0x30] sm:$0xff]
        %v4256 = vld [vmem:[%s4248 + $0x38] sm:$0xff]
        %v4257 = vld [vmem:[%s4248 + $0x40] sm:$0xff]
        %v4258 = vld [vmem:[%s4248 + $0x48] sm:$0xff]
        %v4259 = vld [vmem:[%s4248 + $0x50] sm:$0xff]
        %v4260 = vld [vmem:[%s4248 + $0x58] sm:$0xff]
        %v4261 = vld [vmem:[%s4248 + $0x60] sm:$0xff]
        %v4262 = vld [vmem:[%s4248 + $0x68] sm:$0xff]
        %v4263 = vld [vmem:[%s4248 + $0x70] sm:$0xff]
        %v4264 = vld [vmem:[%s4248 + $0x78] sm:$0xff]
        %v4265 = vld [vmem:[%s4248 + $0x80] sm:$0xff]
        %v4266 = vld [vmem:[%s4248 + $0x88] sm:$0xff]
        %v4267 = vld [vmem:[%s4248 + $0x90] sm:$0xff]
        %v4268 = vld [vmem:[%s4248 + $0x98] sm:$0xff]
        %v4269 = vld [vmem:[%s4248 + $0xa0] sm:$0xff]
        %v4270 = vld [vmem:[%s4248 + $0xa8] sm:$0xff]
        %v4271 = vld [vmem:[%s4248 + $0xb0] sm:$0xff]
        %v4272 = vld [vmem:[%s4248 + $0xb8] sm:$0xff]
        %v4273 = vld [vmem:[%s4248 + $0xc0] sm:$0xff]
        %v4274 = vld [vmem:[%s4248 + $0xc8] sm:$0xff]
        %v4275 = vld [vmem:[%s4248 + $0xd0] sm:$0xff]
        %v4276 = vld [vmem:[%s4248 + $0xd8] sm:$0xff]
        %v4277 = vld [vmem:[%s4248 + $0xe0] sm:$0xff]
        %v4278 = vld [vmem:[%s4248 + $0xe8] sm:$0xff]
        %v4279 = vld [vmem:[%s4248 + $0xf0] sm:$0xff]
        %v4280 = vld [vmem:[%s4248 + $0xf8] sm:$0xff]
        %v4281 = vld [vmem:[%s4248 + $0x100] sm:$0xff]
        %v4282 = vld [vmem:[%s4248 + $0x108] sm:$0xff]
        %v4283 = vld [vmem:[%s4248 + $0x110] sm:$0xff]
        %v4284 = vld [vmem:[%s4248 + $0x118] sm:$0xff]
        %v4285 = vld [vmem:[%s4248 + $0x120] sm:$0xff]
        %v4286 = vld [vmem:[%s4248 + $0x128] sm:$0xff]
        %v4287 = vld [vmem:[%s4248 + $0x130] sm:$0xff]
        %v4288 = vld [vmem:[%s4248 + $0x138] sm:$0xff]
        %v4289 = vld [vmem:[%s4248 + $0x140] sm:$0xff]
        %v4290 = vld [vmem:[%s4248 + $0x148] sm:$0xff]
        %v4291 = vld [vmem:[%s4248 + $0x150] sm:$0xff]
        %v4292 = vld [vmem:[%s4248 + $0x158] sm:$0xff]
        %v4293 = vld [vmem:[%s4248 + $0x160] sm:$0xff]
        %v4294 = vld [vmem:[%s4248 + $0x168] sm:$0xff]
        %v4295 = vld [vmem:[%s4248 + $0x170] sm:$0xff]
        %v4296 = vld [vmem:[%s4248 + $0x178] sm:$0xff]
        %v4297 = vld [vmem:[%s4248 + $0x180] sm:$0xff]
        %v4298 = vld [vmem:[%s4248 + $0x188] sm:$0xff]
        %v4299 = vld [vmem:[%s4248 + $0x190] sm:$0xff]
        %v4300 = vld [vmem:[%s4248 + $0x198] sm:$0xff]
        %v4301 = vld [vmem:[%s4248 + $0x1a0] sm:$0xff]
        %v4302 = vld [vmem:[%s4248 + $0x1a8] sm:$0xff]
        %v4303 = vld [vmem:[%s4248 + $0x1b0] sm:$0xff]
        %v4304 = vld [vmem:[%s4248 + $0x1b8] sm:$0xff]
        %v4305 = vld [vmem:[%s4248 + $0x1c0] sm:$0xff]
        %v4306 = vld [vmem:[%s4248 + $0x1c8] sm:$0xff]
        %v4307 = vld [vmem:[%s4248 + $0x1d0] sm:$0xff]
        %v4308 = vld [vmem:[%s4248 + $0x1d8] sm:$0xff]
        %v4309 = vld [vmem:[%s4248 + $0x1e0] sm:$0xff]
        %v4310 = vld [vmem:[%s4248 + $0x1e8] sm:$0xff]
        %v4311 = vld [vmem:[%s4248 + $0x1f0] sm:$0xff]
        %v4312 = vld [vmem:[%s4248 + $0x1f8] sm:$0xff]
        %v4313 = vunpack.c.l.b16 %v4117
        %v4314 = vunpack.c.h.b16 %v4117
        %v4315 = vunpack.c.l.b16 %v4131
        %v4316 = vunpack.c.h.b16 %v4131
        %v4317 = vunpack.c.l.b16 %v4145
        %v4318 = vunpack.c.h.b16 %v4145
        %v4319 = vunpack.c.l.b16 %v4159
        %v4320 = vunpack.c.h.b16 %v4159
        %v4321 = vunpack.c.l.b16 %v4173
        %v4322 = vunpack.c.h.b16 %v4173
        %v4323 = vunpack.c.l.b16 %v4187
        %v4324 = vunpack.c.h.b16 %v4187
        %v4325 = vunpack.c.l.b16 %v4201
        %v4326 = vunpack.c.h.b16 %v4201
        %v4327 = vunpack.c.l.b16 %v4215
        %v4328 = vunpack.c.h.b16 %v4215
        %v4329 = vpack.c.b16 %v4315, %v4313
        %v4330 = vpack.c.b16 %v4316, %v4314
        %v4331 = vpack.c.b16 %v4319, %v4317
        %v4332 = vpack.c.b16 %v4320, %v4318
        %v4333 = vpack.c.b16 %v4323, %v4321
        %v4334 = vpack.c.b16 %v4324, %v4322
        %v4335 = vpack.c.b16 %v4327, %v4325
        %v4336 = vpack.c.b16 %v4328, %v4326
        %v4409 = vunpack.c.l.b16 %v4249
        %v4410 = vunpack.c.h.b16 %v4249
        %v4411 = vunpack.c.l.b16 %v4250
        %v4412 = vunpack.c.h.b16 %v4250
        %v4413 = vunpack.c.l.b16 %v4251
        %v4414 = vunpack.c.h.b16 %v4251
        %v4415 = vunpack.c.l.b16 %v4252
        %v4416 = vunpack.c.h.b16 %v4252
        %v4417 = vunpack.c.l.b16 %v4253
        %v4418 = vunpack.c.h.b16 %v4253
        %v4419 = vunpack.c.l.b16 %v4254
        %v4420 = vunpack.c.h.b16 %v4254
        %v4421 = vunpack.c.l.b16 %v4255
        %v4422 = vunpack.c.h.b16 %v4255
        %v4423 = vunpack.c.l.b16 %v4256
        %v4424 = vunpack.c.h.b16 %v4256
        %v4425 = vunpack.c.l.b16 %v4257
        %v4426 = vunpack.c.h.b16 %v4257
        %v4427 = vunpack.c.l.b16 %v4258
        %v4428 = vunpack.c.h.b16 %v4258
        %v4429 = vunpack.c.l.b16 %v4259
        %v4430 = vunpack.c.h.b16 %v4259
        %v4431 = vunpack.c.l.b16 %v4260
        %v4432 = vunpack.c.h.b16 %v4260
        %v4433 = vunpack.c.l.b16 %v4261
        %v4434 = vunpack.c.h.b16 %v4261
        %v4435 = vunpack.c.l.b16 %v4262
        %v4436 = vunpack.c.h.b16 %v4262
        %v4437 = vunpack.c.l.b16 %v4263
        %v4438 = vunpack.c.h.b16 %v4263
        %v4439 = vunpack.c.l.b16 %v4264
        %v4440 = vunpack.c.h.b16 %v4264
        %v4441 = vunpack.c.l.b16 %v4265
        %v4442 = vunpack.c.h.b16 %v4265
        %v4443 = vunpack.c.l.b16 %v4266
        %v4444 = vunpack.c.h.b16 %v4266
        %v4445 = vunpack.c.l.b16 %v4267
        %v4446 = vunpack.c.h.b16 %v4267
        %v4447 = vunpack.c.l.b16 %v4268
        %v4448 = vunpack.c.h.b16 %v4268
        %v4449 = vunpack.c.l.b16 %v4269
        %v4450 = vunpack.c.h.b16 %v4269
        %v4451 = vunpack.c.l.b16 %v4270
        %v4452 = vunpack.c.h.b16 %v4270
        %v4453 = vunpack.c.l.b16 %v4271
        %v4454 = vunpack.c.h.b16 %v4271
        %v4455 = vunpack.c.l.b16 %v4272
        %v4456 = vunpack.c.h.b16 %v4272
        %v4457 = vunpack.c.l.b16 %v4273
        %v4458 = vunpack.c.h.b16 %v4273
        %v4459 = vunpack.c.l.b16 %v4274
        %v4460 = vunpack.c.h.b16 %v4274
        %v4461 = vunpack.c.l.b16 %v4275
        %v4462 = vunpack.c.h.b16 %v4275
        %v4463 = vunpack.c.l.b16 %v4276
        %v4464 = vunpack.c.h.b16 %v4276
        %v4465 = vunpack.c.l.b16 %v4277
        %v4466 = vunpack.c.h.b16 %v4277
        %v4467 = vunpack.c.l.b16 %v4278
        %v4468 = vunpack.c.h.b16 %v4278
        %v4469 = vunpack.c.l.b16 %v4279
        %v4470 = vunpack.c.h.b16 %v4279
        %v4471 = vunpack.c.l.b16 %v4280
        %v4472 = vunpack.c.h.b16 %v4280
        %v4473 = vunpack.c.l.b16 %v4281
        %v4474 = vunpack.c.h.b16 %v4281
        %v4475 = vunpack.c.l.b16 %v4282
        %v4476 = vunpack.c.h.b16 %v4282
        %v4477 = vunpack.c.l.b16 %v4283
        %v4478 = vunpack.c.h.b16 %v4283
        %v4479 = vunpack.c.l.b16 %v4284
        %v4480 = vunpack.c.h.b16 %v4284
        %v4481 = vunpack.c.l.b16 %v4285
        %v4482 = vunpack.c.h.b16 %v4285
        %v4483 = vunpack.c.l.b16 %v4286
        %v4484 = vunpack.c.h.b16 %v4286
        %v4485 = vunpack.c.l.b16 %v4287
        %v4486 = vunpack.c.h.b16 %v4287
        %v4487 = vunpack.c.l.b16 %v4288
        %v4488 = vunpack.c.h.b16 %v4288
        %v4489 = vunpack.c.l.b16 %v4289
        %v4490 = vunpack.c.h.b16 %v4289
        %v4491 = vunpack.c.l.b16 %v4290
        %v4492 = vunpack.c.h.b16 %v4290
        %v4493 = vunpack.c.l.b16 %v4291
        %v4494 = vunpack.c.h.b16 %v4291
        %v4495 = vunpack.c.l.b16 %v4292
        %v4496 = vunpack.c.h.b16 %v4292
        %v4497 = vunpack.c.l.b16 %v4293
        %v4498 = vunpack.c.h.b16 %v4293
        %v4499 = vunpack.c.l.b16 %v4294
        %v4500 = vunpack.c.h.b16 %v4294
        %v4501 = vunpack.c.l.b16 %v4295
        %v4502 = vunpack.c.h.b16 %v4295
        %v4503 = vunpack.c.l.b16 %v4296
        %v4504 = vunpack.c.h.b16 %v4296
        %v4505 = vunpack.c.l.b16 %v4297
        %v4506 = vunpack.c.h.b16 %v4297
        %v4507 = vunpack.c.l.b16 %v4298
        %v4508 = vunpack.c.h.b16 %v4298
        %v4509 = vunpack.c.l.b16 %v4299
        %v4510 = vunpack.c.h.b16 %v4299
        %v4511 = vunpack.c.l.b16 %v4300
        %v4512 = vunpack.c.h.b16 %v4300
        %v4513 = vunpack.c.l.b16 %v4301
        %v4514 = vunpack.c.h.b16 %v4301
        %v4515 = vunpack.c.l.b16 %v4302
        %v4516 = vunpack.c.h.b16 %v4302
        %v4517 = vunpack.c.l.b16 %v4303
        %v4518 = vunpack.c.h.b16 %v4303
        %v4519 = vunpack.c.l.b16 %v4304
        %v4520 = vunpack.c.h.b16 %v4304
        %v4521 = vunpack.c.l.b16 %v4305
        %v4522 = vunpack.c.h.b16 %v4305
        %v4523 = vunpack.c.l.b16 %v4306
        %v4524 = vunpack.c.h.b16 %v4306
        %v4525 = vunpack.c.l.b16 %v4307
        %v4526 = vunpack.c.h.b16 %v4307
        %v4527 = vunpack.c.l.b16 %v4308
        %v4528 = vunpack.c.h.b16 %v4308
        %v4529 = vunpack.c.l.b16 %v4309
        %v4530 = vunpack.c.h.b16 %v4309
        %v4531 = vunpack.c.l.b16 %v4310
        %v4532 = vunpack.c.h.b16 %v4310
        %v4533 = vunpack.c.l.b16 %v4311
        %v4534 = vunpack.c.h.b16 %v4311
        %v4535 = vunpack.c.l.b16 %v4312
        %v4536 = vunpack.c.h.b16 %v4312
        %v4537 = vpack.c.b16 %v4413, %v4409
        %v4538 = vpack.c.b16 %v4414, %v4410
        %v4539 = vpack.c.b16 %v4415, %v4411
        %v4540 = vpack.c.b16 %v4416, %v4412
        %v4541 = vpack.c.b16 %v4421, %v4417
        %v4542 = vpack.c.b16 %v4422, %v4418
        %v4543 = vpack.c.b16 %v4423, %v4419
        %v4544 = vpack.c.b16 %v4424, %v4420
        %v4545 = vpack.c.b16 %v4429, %v4425
        %v4546 = vpack.c.b16 %v4430, %v4426
        %v4547 = vpack.c.b16 %v4431, %v4427
        %v4548 = vpack.c.b16 %v4432, %v4428
        %v4549 = vpack.c.b16 %v4437, %v4433
        %v4550 = vpack.c.b16 %v4438, %v4434
        %v4551 = vpack.c.b16 %v4439, %v4435
        %v4552 = vpack.c.b16 %v4440, %v4436
        %v4553 = vpack.c.b16 %v4445, %v4441
        %v4554 = vpack.c.b16 %v4446, %v4442
        %v4555 = vpack.c.b16 %v4447, %v4443
        %v4556 = vpack.c.b16 %v4448, %v4444
        %v4557 = vpack.c.b16 %v4453, %v4449
        %v4558 = vpack.c.b16 %v4454, %v4450
        %v4559 = vpack.c.b16 %v4455, %v4451
        %v4560 = vpack.c.b16 %v4456, %v4452
        %v4561 = vpack.c.b16 %v4461, %v4457
        %v4562 = vpack.c.b16 %v4462, %v4458
        %v4563 = vpack.c.b16 %v4463, %v4459
        %v4564 = vpack.c.b16 %v4464, %v4460
        %v4565 = vpack.c.b16 %v4469, %v4465
        %v4566 = vpack.c.b16 %v4470, %v4466
        %v4567 = vpack.c.b16 %v4471, %v4467
        %v4568 = vpack.c.b16 %v4472, %v4468
        %v4569 = vpack.c.b16 %v4477, %v4473
        %v4570 = vpack.c.b16 %v4478, %v4474
        %v4571 = vpack.c.b16 %v4479, %v4475
        %v4572 = vpack.c.b16 %v4480, %v4476
        %v4573 = vpack.c.b16 %v4485, %v4481
        %v4574 = vpack.c.b16 %v4486, %v4482
        %v4575 = vpack.c.b16 %v4487, %v4483
        %v4576 = vpack.c.b16 %v4488, %v4484
        %v4577 = vpack.c.b16 %v4493, %v4489
        %v4578 = vpack.c.b16 %v4494, %v4490
        %v4579 = vpack.c.b16 %v4495, %v4491
        %v4580 = vpack.c.b16 %v4496, %v4492
        %v4581 = vpack.c.b16 %v4501, %v4497
        %v4582 = vpack.c.b16 %v4502, %v4498
        %v4583 = vpack.c.b16 %v4503, %v4499
        %v4584 = vpack.c.b16 %v4504, %v4500
        %v4585 = vpack.c.b16 %v4509, %v4505
        %v4586 = vpack.c.b16 %v4510, %v4506
        %v4587 = vpack.c.b16 %v4511, %v4507
        %v4588 = vpack.c.b16 %v4512, %v4508
        %v4589 = vpack.c.b16 %v4517, %v4513
        %v4590 = vpack.c.b16 %v4518, %v4514
        %v4591 = vpack.c.b16 %v4519, %v4515
        %v4592 = vpack.c.b16 %v4520, %v4516
        %v4593 = vpack.c.b16 %v4525, %v4521
        %v4594 = vpack.c.b16 %v4526, %v4522
        %v4595 = vpack.c.b16 %v4527, %v4523
        %v4596 = vpack.c.b16 %v4528, %v4524
        %v4597 = vpack.c.b16 %v4533, %v4529
        %v4598 = vpack.c.b16 %v4534, %v4530
        %v4599 = vpack.c.b16 %v4535, %v4531
        %v4600 = vpack.c.b16 %v4536, %v4532
        %4665 = vmatprep.subr.bf16.mxu0 %v4538
        %4666 = vmatpush1.bf16.msra.mxu0 %v4537
        %4667 = vmatprep.subr.bf16.mxu0 %v4542
        %4668 = vmatpush1.bf16.msra.mxu0 %v4541
        %4669 = vmatprep.subr.bf16.mxu0 %v4546
        %4670 = vmatpush1.bf16.msra.mxu0 %v4545
        %4671 = vmatprep.subr.bf16.mxu0 %v4550
        %4672 = vmatpush1.bf16.msra.mxu0 %v4549
        %4673 = vmatprep.subr.bf16.mxu0 %v4554
        %4674 = vmatpush1.bf16.msra.mxu0 %v4553
        %4675 = vmatprep.subr.bf16.mxu0 %v4558
        %4676 = vmatpush1.bf16.msra.mxu0 %v4557
        %4677 = vmatprep.subr.bf16.mxu0 %v4562
        %4678 = vmatpush1.bf16.msra.mxu0 %v4561
        %4679 = vmatprep.subr.bf16.mxu0 %v4566
        %4680 = vmatpush1.bf16.msra.mxu0 %v4565
        %4681 = vmatprep.subr.bf16.mxu0 %v4570
        %4682 = vmatpush1.bf16.msra.mxu0 %v4569
        %4683 = vmatprep.subr.bf16.mxu0 %v4574
        %4684 = vmatpush1.bf16.msra.mxu0 %v4573
        %4685 = vmatprep.subr.bf16.mxu0 %v4578
        %4686 = vmatpush1.bf16.msra.mxu0 %v4577
        %4687 = vmatprep.subr.bf16.mxu0 %v4582
        %4688 = vmatpush1.bf16.msra.mxu0 %v4581
        %4689 = vmatprep.subr.bf16.mxu0 %v4586
        %4690 = vmatpush1.bf16.msra.mxu0 %v4585
        %4691 = vmatprep.subr.bf16.mxu0 %v4590
        %4692 = vmatpush1.bf16.msra.mxu0 %v4589
        %4693 = vmatprep.subr.bf16.mxu0 %v4594
        %4694 = vmatpush1.bf16.msra.mxu0 %v4593
        %4695 = vmatprep.subr.bf16.mxu0 %v4598
        %4696 = vmatpush1.bf16.msra.mxu0 %v4597
        %4697 = vmatprep.mubr.bf16.mxu0 %v4330
        %4698 = vmatmul.mubr.bf16.gmra.mrb[0].mxu0 %v4329
        %v4699 = vpop.f32.mrb[0].mxu0
        %v4700 = vadd.f32 0.0, %v4699
        %v4701 = vpop.f32.mrb[0].mxu0
        %v4702 = vadd.f32 0.0, %v4701
        %v4703 = vpop.f32.mrb[0].mxu0
        %v4704 = vadd.f32 0.0, %v4703
        %v4705 = vpop.f32.mrb[0].mxu0
        %v4706 = vadd.f32 0.0, %v4705
        %4707 = vmatprep.mubr.bf16.mxu0 %v4332
        %4708 = vmatmul.mubr.bf16.gmra.mrb[0].mxu0 %v4331
        %v4709 = vpop.f32.mrb[0].mxu0
        %v4710 = vadd.f32 0.0, %v4709
        %v4711 = vpop.f32.mrb[0].mxu0
        %v4712 = vadd.f32 0.0, %v4711
        %v4713 = vpop.f32.mrb[0].mxu0
        %v4714 = vadd.f32 0.0, %v4713
        %v4715 = vpop.f32.mrb[0].mxu0
        %v4716 = vadd.f32 0.0, %v4715
        %4717 = vmatprep.mubr.bf16.mxu0 %v4334
        %4718 = vmatmul.mubr.bf16.gmra.mrb[0].mxu0 %v4333
        %v4719 = vpop.f32.mrb[0].mxu0
        %v4720 = vadd.f32 0.0, %v4719
        %v4721 = vpop.f32.mrb[0].mxu0
        %v4722 = vadd.f32 0.0, %v4721
        %v4723 = vpop.f32.mrb[0].mxu0
        %v4724 = vadd.f32 0.0, %v4723
        %v4725 = vpop.f32.mrb[0].mxu0
        %v4726 = vadd.f32 0.0, %v4725
        %4727 = vmatprep.mubr.bf16.mxu0 %v4336
        %4728 = vmatmul.mubr.bf16.gmra.mrb[0].mxu0 %v4335
        %v4729 = vpop.f32.mrb[0].mxu0
        %v4730 = vadd.f32 0.0, %v4729
        %v4731 = vpop.f32.mrb[0].mxu0
        %v4732 = vadd.f32 0.0, %v4731
        %v4733 = vpop.f32.mrb[0].mxu0
        %v4734 = vadd.f32 0.0, %v4733
        %v4735 = vpop.f32.mrb[0].mxu0
        %v4736 = vadd.f32 0.0, %v4735
        %4737 = vdwg.mxu0
        %4738 = vmatprep.subr.bf16.mxu0 %v4540
        %4739 = vmatpush1.bf16.msra.mxu0 %v4539
        %4740 = vmatprep.subr.bf16.mxu0 %v4544
        %4741 = vmatpush1.bf16.msra.mxu0 %v4543
        %4742 = vmatprep.subr.bf16.mxu0 %v4548
        %4743 = vmatpush1.bf16.msra.mxu0 %v4547
        %4744 = vmatprep.subr.bf16.mxu0 %v4552
        %4745 = vmatpush1.bf16.msra.mxu0 %v4551
        %4746 = vmatprep.subr.bf16.mxu0 %v4556
        %4747 = vmatpush1.bf16.msra.mxu0 %v4555
        %4748 = vmatprep.subr.bf16.mxu0 %v4560
        %4749 = vmatpush1.bf16.msra.mxu0 %v4559
        %4750 = vmatprep.subr.bf16.mxu0 %v4564
        %4751 = vmatpush1.bf16.msra.mxu0 %v4563
        %4752 = vmatprep.subr.bf16.mxu0 %v4568
        %4753 = vmatpush1.bf16.msra.mxu0 %v4567
        %4754 = vmatprep.subr.bf16.mxu0 %v4572
        %4755 = vmatpush1.bf16.msra.mxu0 %v4571
        %4756 = vmatprep.subr.bf16.mxu0 %v4576
        %4757 = vmatpush1.bf16.msra.mxu0 %v4575
        %4758 = vmatprep.subr.bf16.mxu0 %v4580
        %4759 = vmatpush1.bf16.msra.mxu0 %v4579
        %4760 = vmatprep.subr.bf16.mxu0 %v4584
        %4761 = vmatpush1.bf16.msra.mxu0 %v4583
        %4762 = vmatprep.subr.bf16.mxu0 %v4588
        %4763 = vmatpush1.bf16.msra.mxu0 %v4587
        %4764 = vmatprep.subr.bf16.mxu0 %v4592
        %4765 = vmatpush1.bf16.msra.mxu0 %v4591
        %4766 = vmatprep.subr.bf16.mxu0 %v4596
        %4767 = vmatpush1.bf16.msra.mxu0 %v4595
        %4768 = vmatprep.subr.bf16.mxu0 %v4600
        %4769 = vmatpush1.bf16.msra.mxu0 %v4599
        %4770 = vmatprep.mubr.bf16.mxu0 %v4330
        %4771 = vmatmul.mubr.bf16.gmra.mrb[0].mxu0 %v4329
        %v4772 = vpop.f32.mrb[0].mxu0
        %v4773 = vadd.f32 0.0, %v4772
        %v4774 = vpop.f32.mrb[0].mxu0
        %v4775 = vadd.f32 0.0, %v4774
        %v4776 = vpop.f32.mrb[0].mxu0
        %v4777 = vadd.f32 0.0, %v4776
        %v4778 = vpop.f32.mrb[0].mxu0
        %v4779 = vadd.f32 0.0, %v4778
        %4780 = vmatprep.mubr.bf16.mxu0 %v4332
        %4781 = vmatmul.mubr.bf16.gmra.mrb[0].mxu0 %v4331
        %v4782 = vpop.f32.mrb[0].mxu0
        %v4783 = vadd.f32 0.0, %v4782
        %v4784 = vpop.f32.mrb[0].mxu0
        %v4785 = vadd.f32 0.0, %v4784
        %v4786 = vpop.f32.mrb[0].mxu0
        %v4787 = vadd.f32 0.0, %v4786
        %v4788 = vpop.f32.mrb[0].mxu0
        %v4789 = vadd.f32 0.0, %v4788
        %4790 = vmatprep.mubr.bf16.mxu0 %v4334
        %4791 = vmatmul.mubr.bf16.gmra.mrb[0].mxu0 %v4333
        %v4792 = vpop.f32.mrb[0].mxu0
        %v4793 = vadd.f32 0.0, %v4792
        %v4794 = vpop.f32.mrb[0].mxu0
        %v4795 = vadd.f32 0.0, %v4794
        %v4796 = vpop.f32.mrb[0].mxu0
        %v4797 = vadd.f32 0.0, %v4796
        %v4798 = vpop.f32.mrb[0].mxu0
        %v4799 = vadd.f32 0.0, %v4798
        %4800 = vmatprep.mubr.bf16.mxu0 %v4336
        %4801 = vmatmul.mubr.bf16.gmra.mrb[0].mxu0 %v4335
        %v4802 = vpop.f32.mrb[0].mxu0
        %v4803 = vadd.f32 0.0, %v4802
        %v4804 = vpop.f32.mrb[0].mxu0
        %v4805 = vadd.f32 0.0, %v4804
        %v4806 = vpop.f32.mrb[0].mxu0
        %v4807 = vadd.f32 0.0, %v4806
        %v4808 = vpop.f32.mrb[0].mxu0
        %v4809 = vadd.f32 0.0, %v4808
        %4810 = vdwg.mxu0
        %v4811 = vadd.f32 %v4216, %v4700
        %v4812 = vadd.f32 %v4217, %v4702
        %v4813 = vadd.f32 %v4218, %v4773
        %v4814 = vadd.f32 %v4219, %v4775
        %v4815 = vadd.f32 %v4220, %v4704
        %v4816 = vadd.f32 %v4221, %v4706
        %v4817 = vadd.f32 %v4222, %v4777
        %v4818 = vadd.f32 %v4223, %v4779
        %v4819 = vadd.f32 %v4224, %v4710
        %v4820 = vadd.f32 %v4225, %v4712
        %v4821 = vadd.f32 %v4226, %v4783
        %v4822 = vadd.f32 %v4227, %v4785
        %v4823 = vadd.f32 %v4228, %v4714
        %v4824 = vadd.f32 %v4229, %v4716
        %v4825 = vadd.f32 %v4230, %v4787
        %v4826 = vadd.f32 %v4231, %v4789
        %v4827 = vadd.f32 %v4232, %v4720
        %v4828 = vadd.f32 %v4233, %v4722
        %v4829 = vadd.f32 %v4234, %v4793
        %v4830 = vadd.f32 %v4235, %v4795
        %v4831 = vadd.f32 %v4236, %v4724
        %v4832 = vadd.f32 %v4237, %v4726
        %v4833 = vadd.f32 %v4238, %v4797
        %v4834 = vadd.f32 %v4239, %v4799
        %v4835 = vadd.f32 %v4240, %v4730
        %v4836 = vadd.f32 %v4241, %v4732
        %v4837 = vadd.f32 %v4242, %v4803
        %v4838 = vadd.f32 %v4243, %v4805
        %v4839 = vadd.f32 %v4244, %v4734
        %v4840 = vadd.f32 %v4245, %v4736
        %v4841 = vadd.f32 %v4246, %v4807
        %v4842 = vadd.f32 %v4247, %v4809
        %4843 = vst [vmem:[#allocation3] sm:$0xff] %v4811
        %4844 = vst [vmem:[#allocation3 + $0x8] sm:$0xff] %v4812
        %4845 = vst [vmem:[#allocation3 + $0x10] sm:$0xff] %v4813
        %4846 = vst [vmem:[#allocation3 + $0x18] sm:$0xff] %v4814
        %4847 = vst [vmem:[#allocation3 + $0x20] sm:$0xff] %v4815
        %4848 = vst [vmem:[#allocation3 + $0x28] sm:$0xff] %v4816
        %4849 = vst [vmem:[#allocation3 + $0x30] sm:$0xff] %v4817
        %4850 = vst [vmem:[#allocation3 + $0x38] sm:$0xff] %v4818
        %4851 = vst [vmem:[#allocation3 + $0x40] sm:$0xff] %v4819
        %4852 = vst [vmem:[#allocation3 + $0x48] sm:$0xff] %v4820
        %4853 = vst [vmem:[#allocation3 + $0x50] sm:$0xff] %v4821
        %4854 = vst [vmem:[#allocation3 + $0x58] sm:$0xff] %v4822
        %4855 = vst [vmem:[#allocation3 + $0x60] sm:$0xff] %v4823
        %4856 = vst [vmem:[#allocation3 + $0x68] sm:$0xff] %v4824
        %4857 = vst [vmem:[#allocation3 + $0x70] sm:$0xff] %v4825
        %4858 = vst [vmem:[#allocation3 + $0x78] sm:$0xff] %v4826
        %4859 = vst [vmem:[#allocation3 + $0x80] sm:$0xff] %v4827
        %4860 = vst [vmem:[#allocation3 + $0x88] sm:$0xff] %v4828
        %4861 = vst [vmem:[#allocation3 + $0x90] sm:$0xff] %v4829
        %4862 = vst [vmem:[#allocation3 + $0x98] sm:$0xff] %v4830
        %4863 = vst [vmem:[#allocation3 + $0xa0] sm:$0xff] %v4831
        %4864 = vst [vmem:[#allocation3 + $0xa8] sm:$0xff] %v4832
        %4865 = vst [vmem:[#allocation3 + $0xb0] sm:$0xff] %v4833
        %4866 = vst [vmem:[#allocation3 + $0xb8] sm:$0xff] %v4834
        %4867 = vst [vmem:[#allocation3 + $0xc0] sm:$0xff] %v4835
        %4868 = vst [vmem:[#allocation3 + $0xc8] sm:$0xff] %v4836
        %4869 = vst [vmem:[#allocation3 + $0xd0] sm:$0xff] %v4837
        %4870 = vst [vmem:[#allocation3 + $0xd8] sm:$0xff] %v4838
        %4871 = vst [vmem:[#allocation3 + $0xe0] sm:$0xff] %v4839
        %4872 = vst [vmem:[#allocation3 + $0xe8] sm:$0xff] %v4840
        %4873 = vst [vmem:[#allocation3 + $0xf0] sm:$0xff] %v4841
        %4874 = vst [vmem:[#allocation3 + $0xf8] sm:$0xff] %v4842
        %v4875 = vld [vmem:[%s1128] sm:$0xee]
        %v4876 = vld [vmem:[%s1128 + $0x8] sm:$0x11]
        %v4877 = vld [vmem:[%s1128 + $0x10] sm:$0xee]
        %v4878 = vld [vmem:[%s1128 + $0x18] sm:$0x11]
        %v4879 = vld [vmem:[%s1128 + $0x20] sm:$0xee]
        %v4880 = vld [vmem:[%s1128 + $0x28] sm:$0x11]
        %v4881 = vld [vmem:[%s1128 + $0x30] sm:$0xee]
        %v4882 = vld [vmem:[%s1128 + $0x38] sm:$0x11]
        %v4883 = vld [vmem:[%s1128 + $0x40] sm:$0xee]
        %v4884 = vld [vmem:[%s1128 + $0x48] sm:$0x11]
        %v4885 = vld [vmem:[%s1128 + $0x50] sm:$0xee]
        %v4886 = vld [vmem:[%s1128 + $0x58] sm:$0x11]
        %v4887 = vld [vmem:[%s1128 + $0x60] sm:$0xee]
        %v4888 = vld [vmem:[%s1128 + $0x68] sm:$0x11]
        %v4889 = vld [vmem:[%s1128 + $0x70] sm:$0xee]
        %v4890 = vld [vmem:[%s1128 + $0x78] sm:$0x11]
        %v4907 = vrot.slane %v4875, 5
        %v4908 = vrot.slane %v4907, 4
        %v4909 = vrot.slane %v4876, 5
        %v4910 = vsel %vm2721, %v4908, %v4909
        %v4911 = vrot.slane %v4877, 5
        %v4912 = vrot.slane %v4911, 4
        %v4913 = vrot.slane %v4878, 5
        %v4914 = vsel %vm2721, %v4912, %v4913
        %v4915 = vrot.slane %v4879, 5
        %v4916 = vrot.slane %v4915, 4
        %v4917 = vrot.slane %v4880, 5
        %v4918 = vsel %vm2721, %v4916, %v4917
        %v4919 = vrot.slane %v4881, 5
        %v4920 = vrot.slane %v4919, 4
        %v4921 = vrot.slane %v4882, 5
        %v4922 = vsel %vm2721, %v4920, %v4921
        %v4923 = vrot.slane %v4883, 5
        %v4924 = vrot.slane %v4923, 4
        %v4925 = vrot.slane %v4884, 5
        %v4926 = vsel %vm2721, %v4924, %v4925
        %v4927 = vrot.slane %v4885, 5
        %v4928 = vrot.slane %v4927, 4
        %v4929 = vrot.slane %v4886, 5
        %v4930 = vsel %vm2721, %v4928, %v4929
        %v4931 = vrot.slane %v4887, 5
        %v4932 = vrot.slane %v4931, 4
        %v4933 = vrot.slane %v4888, 5
        %v4934 = vsel %vm2721, %v4932, %v4933
        %v4935 = vrot.slane %v4889, 5
        %v4936 = vrot.slane %v4935, 4
        %v4937 = vrot.slane %v4890, 5
        %v4938 = vsel %vm2721, %v4936, %v4937
        %v4939 = vld [vmem:[#allocation3] sm:$0xff]
        %v4940 = vld [vmem:[#allocation3 + $0x8] sm:$0xff]
        %v4941 = vld [vmem:[#allocation3 + $0x10] sm:$0xff]
        %v4942 = vld [vmem:[#allocation3 + $0x18] sm:$0xff]
        %v4943 = vld [vmem:[#allocation3 + $0x20] sm:$0xff]
        %v4944 = vld [vmem:[#allocation3 + $0x28] sm:$0xff]
        %v4945 = vld [vmem:[#allocation3 + $0x30] sm:$0xff]
        %v4946 = vld [vmem:[#allocation3 + $0x38] sm:$0xff]
        %v4947 = vld [vmem:[#allocation3 + $0x40] sm:$0xff]
        %v4948 = vld [vmem:[#allocation3 + $0x48] sm:$0xff]
        %v4949 = vld [vmem:[#allocation3 + $0x50] sm:$0xff]
        %v4950 = vld [vmem:[#allocation3 + $0x58] sm:$0xff]
        %v4951 = vld [vmem:[#allocation3 + $0x60] sm:$0xff]
        %v4952 = vld [vmem:[#allocation3 + $0x68] sm:$0xff]
        %v4953 = vld [vmem:[#allocation3 + $0x70] sm:$0xff]
        %v4954 = vld [vmem:[#allocation3 + $0x78] sm:$0xff]
        %v4955 = vld [vmem:[#allocation3 + $0x80] sm:$0xff]
        %v4956 = vld [vmem:[#allocation3 + $0x88] sm:$0xff]
        %v4957 = vld [vmem:[#allocation3 + $0x90] sm:$0xff]
        %v4958 = vld [vmem:[#allocation3 + $0x98] sm:$0xff]
        %v4959 = vld [vmem:[#allocation3 + $0xa0] sm:$0xff]
        %v4960 = vld [vmem:[#allocation3 + $0xa8] sm:$0xff]
        %v4961 = vld [vmem:[#allocation3 + $0xb0] sm:$0xff]
        %v4962 = vld [vmem:[#allocation3 + $0xb8] sm:$0xff]
        %v4963 = vld [vmem:[#allocation3 + $0xc0] sm:$0xff]
        %v4964 = vld [vmem:[#allocation3 + $0xc8] sm:$0xff]
        %v4965 = vld [vmem:[#allocation3 + $0xd0] sm:$0xff]
        %v4966 = vld [vmem:[#allocation3 + $0xd8] sm:$0xff]
        %v4967 = vld [vmem:[#allocation3 + $0xe0] sm:$0xff]
        %v4968 = vld [vmem:[#allocation3 + $0xe8] sm:$0xff]
        %v4969 = vld [vmem:[#allocation3 + $0xf0] sm:$0xff]
        %v4970 = vld [vmem:[#allocation3 + $0xf8] sm:$0xff]
        %s4971 = scalar_lea.vmem [#allocation12], 2560
        %v4972 = vld [vmem:[%s4971] sm:$0xff]
        %v4973 = vld [vmem:[%s4971 + $0x8] sm:$0xff]
        %v4974 = vld [vmem:[%s4971 + $0x10] sm:$0xff]
        %v4975 = vld [vmem:[%s4971 + $0x18] sm:$0xff]
        %v4976 = vld [vmem:[%s4971 + $0x20] sm:$0xff]
        %v4977 = vld [vmem:[%s4971 + $0x28] sm:$0xff]
        %v4978 = vld [vmem:[%s4971 + $0x30] sm:$0xff]
        %v4979 = vld [vmem:[%s4971 + $0x38] sm:$0xff]
        %v4980 = vld [vmem:[%s4971 + $0x40] sm:$0xff]
        %v4981 = vld [vmem:[%s4971 + $0x48] sm:$0xff]
        %v4982 = vld [vmem:[%s4971 + $0x50] sm:$0xff]
        %v4983 = vld [vmem:[%s4971 + $0x58] sm:$0xff]
        %v4984 = vld [vmem:[%s4971 + $0x60] sm:$0xff]
        %v4985 = vld [vmem:[%s4971 + $0x68] sm:$0xff]
        %v4986 = vld [vmem:[%s4971 + $0x70] sm:$0xff]
        %v4987 = vld [vmem:[%s4971 + $0x78] sm:$0xff]
        %v4988 = vld [vmem:[%s4971 + $0x80] sm:$0xff]
        %v4989 = vld [vmem:[%s4971 + $0x88] sm:$0xff]
        %v4990 = vld [vmem:[%s4971 + $0x90] sm:$0xff]
        %v4991 = vld [vmem:[%s4971 + $0x98] sm:$0xff]
        %v4992 = vld [vmem:[%s4971 + $0xa0] sm:$0xff]
        %v4993 = vld [vmem:[%s4971 + $0xa8] sm:$0xff]
        %v4994 = vld [vmem:[%s4971 + $0xb0] sm:$0xff]
        %v4995 = vld [vmem:[%s4971 + $0xb8] sm:$0xff]
        %v4996 = vld [vmem:[%s4971 + $0xc0] sm:$0xff]
        %v4997 = vld [vmem:[%s4971 + $0xc8] sm:$0xff]
        %v4998 = vld [vmem:[%s4971 + $0xd0] sm:$0xff]
        %v4999 = vld [vmem:[%s4971 + $0xd8] sm:$0xff]
        %v5000 = vld [vmem:[%s4971 + $0xe0] sm:$0xff]
        %v5001 = vld [vmem:[%s4971 + $0xe8] sm:$0xff]
        %v5002 = vld [vmem:[%s4971 + $0xf0] sm:$0xff]
        %v5003 = vld [vmem:[%s4971 + $0xf8] sm:$0xff]
        %v5004 = vld [vmem:[%s4971 + $0x100] sm:$0xff]
        %v5005 = vld [vmem:[%s4971 + $0x108] sm:$0xff]
        %v5006 = vld [vmem:[%s4971 + $0x110] sm:$0xff]
        %v5007 = vld [vmem:[%s4971 + $0x118] sm:$0xff]
        %v5008 = vld [vmem:[%s4971 + $0x120] sm:$0xff]
        %v5009 = vld [vmem:[%s4971 + $0x128] sm:$0xff]
        %v5010 = vld [vmem:[%s4971 + $0x130] sm:$0xff]
        %v5011 = vld [vmem:[%s4971 + $0x138] sm:$0xff]
        %v5012 = vld [vmem:[%s4971 + $0x140] sm:$0xff]
        %v5013 = vld [vmem:[%s4971 + $0x148] sm:$0xff]
        %v5014 = vld [vmem:[%s4971 + $0x150] sm:$0xff]
        %v5015 = vld [vmem:[%s4971 + $0x158] sm:$0xff]
        %v5016 = vld [vmem:[%s4971 + $0x160] sm:$0xff]
        %v5017 = vld [vmem:[%s4971 + $0x168] sm:$0xff]
        %v5018 = vld [vmem:[%s4971 + $0x170] sm:$0xff]
        %v5019 = vld [vmem:[%s4971 + $0x178] sm:$0xff]
        %v5020 = vld [vmem:[%s4971 + $0x180] sm:$0xff]
        %v5021 = vld [vmem:[%s4971 + $0x188] sm:$0xff]
        %v5022 = vld [vmem:[%s4971 + $0x190] sm:$0xff]
        %v5023 = vld [vmem:[%s4971 + $0x198] sm:$0xff]
        %v5024 = vld [vmem:[%s4971 + $0x1a0] sm:$0xff]
        %v5025 = vld [vmem:[%s4971 + $0x1a8] sm:$0xff]
        %v5026 = vld [vmem:[%s4971 + $0x1b0] sm:$0xff]
        %v5027 = vld [vmem:[%s4971 + $0x1b8] sm:$0xff]
        %v5028 = vld [vmem:[%s4971 + $0x1c0] sm:$0xff]
        %v5029 = vld [vmem:[%s4971 + $0x1c8] sm:$0xff]
        %v5030 = vld [vmem:[%s4971 + $0x1d0] sm:$0xff]
        %v5031 = vld [vmem:[%s4971 + $0x1d8] sm:$0xff]
        %v5032 = vld [vmem:[%s4971 + $0x1e0] sm:$0xff]
        %v5033 = vld [vmem:[%s4971 + $0x1e8] sm:$0xff]
        %v5034 = vld [vmem:[%s4971 + $0x1f0] sm:$0xff]
        %v5035 = vld [vmem:[%s4971 + $0x1f8] sm:$0xff]
        %v5036 = vunpack.c.l.b16 %v4910
        %v5037 = vunpack.c.h.b16 %v4910
        %v5038 = vunpack.c.l.b16 %v4914
        %v5039 = vunpack.c.h.b16 %v4914
        %v5040 = vunpack.c.l.b16 %v4918
        %v5041 = vunpack.c.h.b16 %v4918
        %v5042 = vunpack.c.l.b16 %v4922
        %v5043 = vunpack.c.h.b16 %v4922
        %v5044 = vunpack.c.l.b16 %v4926
        %v5045 = vunpack.c.h.b16 %v4926
        %v5046 = vunpack.c.l.b16 %v4930
        %v5047 = vunpack.c.h.b16 %v4930
        %v5048 = vunpack.c.l.b16 %v4934
        %v5049 = vunpack.c.h.b16 %v4934
        %v5050 = vunpack.c.l.b16 %v4938
        %v5051 = vunpack.c.h.b16 %v4938
        %v5052 = vpack.c.b16 %v5038, %v5036
        %v5053 = vpack.c.b16 %v5039, %v5037
        %v5054 = vpack.c.b16 %v5042, %v5040
        %v5055 = vpack.c.b16 %v5043, %v5041
        %v5056 = vpack.c.b16 %v5046, %v5044
        %v5057 = vpack.c.b16 %v5047, %v5045
        %v5058 = vpack.c.b16 %v5050, %v5048
        %v5059 = vpack.c.b16 %v5051, %v5049
        %v5132 = vunpack.c.l.b16 %v4972
        %v5133 = vunpack.c.h.b16 %v4972
        %v5134 = vunpack.c.l.b16 %v4973
        %v5135 = vunpack.c.h.b16 %v4973
        %v5136 = vunpack.c.l.b16 %v4974
        %v5137 = vunpack.c.h.b16 %v4974
        %v5138 = vunpack.c.l.b16 %v4975
        %v5139 = vunpack.c.h.b16 %v4975
        %v5140 = vunpack.c.l.b16 %v4976
        %v5141 = vunpack.c.h.b16 %v4976
        %v5142 = vunpack.c.l.b16 %v4977
        %v5143 = vunpack.c.h.b16 %v4977
        %v5144 = vunpack.c.l.b16 %v4978
        %v5145 = vunpack.c.h.b16 %v4978
        %v5146 = vunpack.c.l.b16 %v4979
        %v5147 = vunpack.c.h.b16 %v4979
        %v5148 = vunpack.c.l.b16 %v4980
        %v5149 = vunpack.c.h.b16 %v4980
        %v5150 = vunpack.c.l.b16 %v4981
        %v5151 = vunpack.c.h.b16 %v4981
        %v5152 = vunpack.c.l.b16 %v4982
        %v5153 = vunpack.c.h.b16 %v4982
        %v5154 = vunpack.c.l.b16 %v4983
        %v5155 = vunpack.c.h.b16 %v4983
        %v5156 = vunpack.c.l.b16 %v4984
        %v5157 = vunpack.c.h.b16 %v4984
        %v5158 = vunpack.c.l.b16 %v4985
        %v5159 = vunpack.c.h.b16 %v4985
        %v5160 = vunpack.c.l.b16 %v4986
        %v5161 = vunpack.c.h.b16 %v4986
        %v5162 = vunpack.c.l.b16 %v4987
        %v5163 = vunpack.c.h.b16 %v4987
        %v5164 = vunpack.c.l.b16 %v4988
        %v5165 = vunpack.c.h.b16 %v4988
        %v5166 = vunpack.c.l.b16 %v4989
        %v5167 = vunpack.c.h.b16 %v4989
        %v5168 = vunpack.c.l.b16 %v4990
        %v5169 = vunpack.c.h.b16 %v4990
        %v5170 = vunpack.c.l.b16 %v4991
        %v5171 = vunpack.c.h.b16 %v4991
        %v5172 = vunpack.c.l.b16 %v4992
        %v5173 = vunpack.c.h.b16 %v4992
        %v5174 = vunpack.c.l.b16 %v4993
        %v5175 = vunpack.c.h.b16 %v4993
        %v5176 = vunpack.c.l.b16 %v4994
        %v5177 = vunpack.c.h.b16 %v4994
        %v5178 = vunpack.c.l.b16 %v4995
        %v5179 = vunpack.c.h.b16 %v4995
        %v5180 = vunpack.c.l.b16 %v4996
        %v5181 = vunpack.c.h.b16 %v4996
        %v5182 = vunpack.c.l.b16 %v4997
        %v5183 = vunpack.c.h.b16 %v4997
        %v5184 = vunpack.c.l.b16 %v4998
        %v5185 = vunpack.c.h.b16 %v4998
        %v5186 = vunpack.c.l.b16 %v4999
        %v5187 = vunpack.c.h.b16 %v4999
        %v5188 = vunpack.c.l.b16 %v5000
        %v5189 = vunpack.c.h.b16 %v5000
        %v5190 = vunpack.c.l.b16 %v5001
        %v5191 = vunpack.c.h.b16 %v5001
        %v5192 = vunpack.c.l.b16 %v5002
        %v5193 = vunpack.c.h.b16 %v5002
        %v5194 = vunpack.c.l.b16 %v5003
        %v5195 = vunpack.c.h.b16 %v5003
        %v5196 = vunpack.c.l.b16 %v5004
        %v5197 = vunpack.c.h.b16 %v5004
        %v5198 = vunpack.c.l.b16 %v5005
        %v5199 = vunpack.c.h.b16 %v5005
        %v5200 = vunpack.c.l.b16 %v5006
        %v5201 = vunpack.c.h.b16 %v5006
        %v5202 = vunpack.c.l.b16 %v5007
        %v5203 = vunpack.c.h.b16 %v5007
        %v5204 = vunpack.c.l.b16 %v5008
        %v5205 = vunpack.c.h.b16 %v5008
        %v5206 = vunpack.c.l.b16 %v5009
        %v5207 = vunpack.c.h.b16 %v5009
        %v5208 = vunpack.c.l.b16 %v5010
        %v5209 = vunpack.c.h.b16 %v5010
        %v5210 = vunpack.c.l.b16 %v5011
        %v5211 = vunpack.c.h.b16 %v5011
        %v5212 = vunpack.c.l.b16 %v5012
        %v5213 = vunpack.c.h.b16 %v5012
        %v5214 = vunpack.c.l.b16 %v5013
        %v5215 = vunpack.c.h.b16 %v5013
        %v5216 = vunpack.c.l.b16 %v5014
        %v5217 = vunpack.c.h.b16 %v5014
        %v5218 = vunpack.c.l.b16 %v5015
        %v5219 = vunpack.c.h.b16 %v5015
        %v5220 = vunpack.c.l.b16 %v5016
        %v5221 = vunpack.c.h.b16 %v5016
        %v5222 = vunpack.c.l.b16 %v5017
        %v5223 = vunpack.c.h.b16 %v5017
        %v5224 = vunpack.c.l.b16 %v5018
        %v5225 = vunpack.c.h.b16 %v5018
        %v5226 = vunpack.c.l.b16 %v5019
        %v5227 = vunpack.c.h.b16 %v5019
        %v5228 = vunpack.c.l.b16 %v5020
        %v5229 = vunpack.c.h.b16 %v5020
        %v5230 = vunpack.c.l.b16 %v5021
        %v5231 = vunpack.c.h.b16 %v5021
        %v5232 = vunpack.c.l.b16 %v5022
        %v5233 = vunpack.c.h.b16 %v5022
        %v5234 = vunpack.c.l.b16 %v5023
        %v5235 = vunpack.c.h.b16 %v5023
        %v5236 = vunpack.c.l.b16 %v5024
        %v5237 = vunpack.c.h.b16 %v5024
        %v5238 = vunpack.c.l.b16 %v5025
        %v5239 = vunpack.c.h.b16 %v5025
        %v5240 = vunpack.c.l.b16 %v5026
        %v5241 = vunpack.c.h.b16 %v5026
        %v5242 = vunpack.c.l.b16 %v5027
        %v5243 = vunpack.c.h.b16 %v5027
        %v5244 = vunpack.c.l.b16 %v5028
        %v5245 = vunpack.c.h.b16 %v5028
        %v5246 = vunpack.c.l.b16 %v5029
        %v5247 = vunpack.c.h.b16 %v5029
        %v5248 = vunpack.c.l.b16 %v5030
        %v5249 = vunpack.c.h.b16 %v5030
        %v5250 = vunpack.c.l.b16 %v5031
        %v5251 = vunpack.c.h.b16 %v5031
        %v5252 = vunpack.c.l.b16 %v5032
        %v5253 = vunpack.c.h.b16 %v5032
        %v5254 = vunpack.c.l.b16 %v5033
        %v5255 = vunpack.c.h.b16 %v5033
        %v5256 = vunpack.c.l.b16 %v5034
        %v5257 = vunpack.c.h.b16 %v5034
        %v5258 = vunpack.c.l.b16 %v5035
        %v5259 = vunpack.c.h.b16 %v5035
        %v5260 = vpack.c.b16 %v5136, %v5132
        %v5261 = vpack.c.b16 %v5137, %v5133
        %v5262 = vpack.c.b16 %v5138, %v5134
        %v5263 = vpack.c.b16 %v5139, %v5135
        %v5264 = vpack.c.b16 %v5144, %v5140
        %v5265 = vpack.c.b16 %v5145, %v5141
        %v5266 = vpack.c.b16 %v5146, %v5142
        %v5267 = vpack.c.b16 %v5147, %v5143
        %v5268 = vpack.c.b16 %v5152, %v5148
        %v5269 = vpack.c.b16 %v5153, %v5149
        %v5270 = vpack.c.b16 %v5154, %v5150
        %v5271 = vpack.c.b16 %v5155, %v5151
        %v5272 = vpack.c.b16 %v5160, %v5156
        %v5273 = vpack.c.b16 %v5161, %v5157
        %v5274 = vpack.c.b16 %v5162, %v5158
        %v5275 = vpack.c.b16 %v5163, %v5159
        %v5276 = vpack.c.b16 %v5168, %v5164
        %v5277 = vpack.c.b16 %v5169, %v5165
        %v5278 = vpack.c.b16 %v5170, %v5166
        %v5279 = vpack.c.b16 %v5171, %v5167
        %v5280 = vpack.c.b16 %v5176, %v5172
        %v5281 = vpack.c.b16 %v5177, %v5173
        %v5282 = vpack.c.b16 %v5178, %v5174
        %v5283 = vpack.c.b16 %v5179, %v5175
        %v5284 = vpack.c.b16 %v5184, %v5180
        %v5285 = vpack.c.b16 %v5185, %v5181
        %v5286 = vpack.c.b16 %v5186, %v5182
        %v5287 = vpack.c.b16 %v5187, %v5183
        %v5288 = vpack.c.b16 %v5192, %v5188
        %v5289 = vpack.c.b16 %v5193, %v5189
        %v5290 = vpack.c.b16 %v5194, %v5190
        %v5291 = vpack.c.b16 %v5195, %v5191
        %v5292 = vpack.c.b16 %v5200, %v5196
        %v5293 = vpack.c.b16 %v5201, %v5197
        %v5294 = vpack.c.b16 %v5202, %v5198
        %v5295 = vpack.c.b16 %v5203, %v5199
        %v5296 = vpack.c.b16 %v5208, %v5204
        %v5297 = vpack.c.b16 %v5209, %v5205
        %v5298 = vpack.c.b16 %v5210, %v5206
        %v5299 = vpack.c.b16 %v5211, %v5207
        %v5300 = vpack.c.b16 %v5216, %v5212
        %v5301 = vpack.c.b16 %v5217, %v5213
        %v5302 = vpack.c.b16 %v5218, %v5214
        %v5303 = vpack.c.b16 %v5219, %v5215
        %v5304 = vpack.c.b16 %v5224, %v5220
        %v5305 = vpack.c.b16 %v5225, %v5221
        %v5306 = vpack.c.b16 %v5226, %v5222
        %v5307 = vpack.c.b16 %v5227, %v5223
        %v5308 = vpack.c.b16 %v5232, %v5228
        %v5309 = vpack.c.b16 %v5233, %v5229
        %v5310 = vpack.c.b16 %v5234, %v5230
        %v5311 = vpack.c.b16 %v5235, %v5231
        %v5312 = vpack.c.b16 %v5240, %v5236
        %v5313 = vpack.c.b16 %v5241, %v5237
        %v5314 = vpack.c.b16 %v5242, %v5238
        %v5315 = vpack.c.b16 %v5243, %v5239
        %v5316 = vpack.c.b16 %v5248, %v5244
        %v5317 = vpack.c.b16 %v5249, %v5245
        %v5318 = vpack.c.b16 %v5250, %v5246
        %v5319 = vpack.c.b16 %v5251, %v5247
        %v5320 = vpack.c.b16 %v5256, %v5252
        %v5321 = vpack.c.b16 %v5257, %v5253
        %v5322 = vpack.c.b16 %v5258, %v5254
        %v5323 = vpack.c.b16 %v5259, %v5255
        %5388 = vmatprep.subr.bf16.mxu0 %v5261
        %5389 = vmatpush1.bf16.msra.mxu0 %v5260
        %5390 = vmatprep.subr.bf16.mxu0 %v5265
        %5391 = vmatpush1.bf16.msra.mxu0 %v5264
        %5392 = vmatprep.subr.bf16.mxu0 %v5269
        %5393 = vmatpush1.bf16.msra.mxu0 %v5268
        %5394 = vmatprep.subr.bf16.mxu0 %v5273
        %5395 = vmatpush1.bf16.msra.mxu0 %v5272
        %5396 = vmatprep.subr.bf16.mxu0 %v5277
        %5397 = vmatpush1.bf16.msra.mxu0 %v5276
        %5398 = vmatprep.subr.bf16.mxu0 %v5281
        %5399 = vmatpush1.bf16.msra.mxu0 %v5280
        %5400 = vmatprep.subr.bf16.mxu0 %v5285
        %5401 = vmatpush1.bf16.msra.mxu0 %v5284
        %5402 = vmatprep.subr.bf16.mxu0 %v5289
        %5403 = vmatpush1.bf16.msra.mxu0 %v5288
        %5404 = vmatprep.subr.bf16.mxu0 %v5293
        %5405 = vmatpush1.bf16.msra.mxu0 %v5292
        %5406 = vmatprep.subr.bf16.mxu0 %v5297
        %5407 = vmatpush1.bf16.msra.mxu0 %v5296
        %5408 = vmatprep.subr.bf16.mxu0 %v5301
        %5409 = vmatpush1.bf16.msra.mxu0 %v5300
        %5410 = vmatprep.subr.bf16.mxu0 %v5305
        %5411 = vmatpush1.bf16.msra.mxu0 %v5304
        %5412 = vmatprep.subr.bf16.mxu0 %v5309
        %5413 = vmatpush1.bf16.msra.mxu0 %v5308
        %5414 = vmatprep.subr.bf16.mxu0 %v5313
        %5415 = vmatpush1.bf16.msra.mxu0 %v5312
        %5416 = vmatprep.subr.bf16.mxu0 %v5317
        %5417 = vmatpush1.bf16.msra.mxu0 %v5316
        %5418 = vmatprep.subr.bf16.mxu0 %v5321
        %5419 = vmatpush1.bf16.msra.mxu0 %v5320
        %5420 = vmatprep.mubr.bf16.mxu0 %v5053
        %5421 = vmatmul.mubr.bf16.gmra.mrb[0].mxu0 %v5052
        %v5422 = vpop.f32.mrb[0].mxu0
        %v5423 = vadd.f32 0.0, %v5422
        %v5424 = vpop.f32.mrb[0].mxu0
        %v5425 = vadd.f32 0.0, %v5424
        %v5426 = vpop.f32.mrb[0].mxu0
        %v5427 = vadd.f32 0.0, %v5426
        %v5428 = vpop.f32.mrb[0].mxu0
        %v5429 = vadd.f32 0.0, %v5428
        %5430 = vmatprep.mubr.bf16.mxu0 %v5055
        %5431 = vmatmul.mubr.bf16.gmra.mrb[0].mxu0 %v5054
        %v5432 = vpop.f32.mrb[0].mxu0
        %v5433 = vadd.f32 0.0, %v5432
        %v5434 = vpop.f32.mrb[0].mxu0
        %v5435 = vadd.f32 0.0, %v5434
        %v5436 = vpop.f32.mrb[0].mxu0
        %v5437 = vadd.f32 0.0, %v5436
        %v5438 = vpop.f32.mrb[0].mxu0
        %v5439 = vadd.f32 0.0, %v5438
        %5440 = vmatprep.mubr.bf16.mxu0 %v5057
        %5441 = vmatmul.mubr.bf16.gmra.mrb[0].mxu0 %v5056
        %v5442 = vpop.f32.mrb[0].mxu0
        %v5443 = vadd.f32 0.0, %v5442
        %v5444 = vpop.f32.mrb[0].mxu0
        %v5445 = vadd.f32 0.0, %v5444
        %v5446 = vpop.f32.mrb[0].mxu0
        %v5447 = vadd.f32 0.0, %v5446
        %v5448 = vpop.f32.mrb[0].mxu0
        %v5449 = vadd.f32 0.0, %v5448
        %5450 = vmatprep.mubr.bf16.mxu0 %v5059
        %5451 = vmatmul.mubr.bf16.gmra.mrb[0].mxu0 %v5058
        %v5452 = vpop.f32.mrb[0].mxu0
        %v5453 = vadd.f32 0.0, %v5452
        %v5454 = vpop.f32.mrb[0].mxu0
        %v5455 = vadd.f32 0.0, %v5454
        %v5456 = vpop.f32.mrb[0].mxu0
        %v5457 = vadd.f32 0.0, %v5456
        %v5458 = vpop.f32.mrb[0].mxu0
        %v5459 = vadd.f32 0.0, %v5458
        %5460 = vdwg.mxu0
        %5461 = vmatprep.subr.bf16.mxu0 %v5263
        %5462 = vmatpush1.bf16.msra.mxu0 %v5262
        %5463 = vmatprep.subr.bf16.mxu0 %v5267
        %5464 = vmatpush1.bf16.msra.mxu0 %v5266
        %5465 = vmatprep.subr.bf16.mxu0 %v5271
        %5466 = vmatpush1.bf16.msra.mxu0 %v5270
        %5467 = vmatprep.subr.bf16.mxu0 %v5275
        %5468 = vmatpush1.bf16.msra.mxu0 %v5274
        %5469 = vmatprep.subr.bf16.mxu0 %v5279
        %5470 = vmatpush1.bf16.msra.mxu0 %v5278
        %5471 = vmatprep.subr.bf16.mxu0 %v5283
        %5472 = vmatpush1.bf16.msra.mxu0 %v5282
        %5473 = vmatprep.subr.bf16.mxu0 %v5287
        %5474 = vmatpush1.bf16.msra.mxu0 %v5286
        %5475 = vmatprep.subr.bf16.mxu0 %v5291
        %5476 = vmatpush1.bf16.msra.mxu0 %v5290
        %5477 = vmatprep.subr.bf16.mxu0 %v5295
        %5478 = vmatpush1.bf16.msra.mxu0 %v5294
        %5479 = vmatprep.subr.bf16.mxu0 %v5299
        %5480 = vmatpush1.bf16.msra.mxu0 %v5298
        %5481 = vmatprep.subr.bf16.mxu0 %v5303
        %5482 = vmatpush1.bf16.msra.mxu0 %v5302
        %5483 = vmatprep.subr.bf16.mxu0 %v5307
        %5484 = vmatpush1.bf16.msra.mxu0 %v5306
        %5485 = vmatprep.subr.bf16.mxu0 %v5311
        %5486 = vmatpush1.bf16.msra.mxu0 %v5310
        %5487 = vmatprep.subr.bf16.mxu0 %v5315
        %5488 = vmatpush1.bf16.msra.mxu0 %v5314
        %5489 = vmatprep.subr.bf16.mxu0 %v5319
        %5490 = vmatpush1.bf16.msra.mxu0 %v5318
        %5491 = vmatprep.subr.bf16.mxu0 %v5323
        %5492 = vmatpush1.bf16.msra.mxu0 %v5322
        %5493 = vmatprep.mubr.bf16.mxu0 %v5053
        %5494 = vmatmul.mubr.bf16.gmra.mrb[0].mxu0 %v5052
        %v5495 = vpop.f32.mrb[0].mxu0
        %v5496 = vadd.f32 0.0, %v5495
        %v5497 = vpop.f32.mrb[0].mxu0
        %v5498 = vadd.f32 0.0, %v5497
        %v5499 = vpop.f32.mrb[0].mxu0
        %v5500 = vadd.f32 0.0, %v5499
        %v5501 = vpop.f32.mrb[0].mxu0
        %v5502 = vadd.f32 0.0, %v5501
        %5503 = vmatprep.mubr.bf16.mxu0 %v5055
        %5504 = vmatmul.mubr.bf16.gmra.mrb[0].mxu0 %v5054
        %v5505 = vpop.f32.mrb[0].mxu0
        %v5506 = vadd.f32 0.0, %v5505
        %v5507 = vpop.f32.mrb[0].mxu0
        %v5508 = vadd.f32 0.0, %v5507
        %v5509 = vpop.f32.mrb[0].mxu0
        %v5510 = vadd.f32 0.0, %v5509
        %v5511 = vpop.f32.mrb[0].mxu0
        %v5512 = vadd.f32 0.0, %v5511
        %5513 = vmatprep.mubr.bf16.mxu0 %v5057
        %5514 = vmatmul.mubr.bf16.gmra.mrb[0].mxu0 %v5056
        %v5515 = vpop.f32.mrb[0].mxu0
        %v5516 = vadd.f32 0.0, %v5515
        %v5517 = vpop.f32.mrb[0].mxu0
        %v5518 = vadd.f32 0.0, %v5517
        %v5519 = vpop.f32.mrb[0].mxu0
        %v5520 = vadd.f32 0.0, %v5519
        %v5521 = vpop.f32.mrb[0].mxu0
        %v5522 = vadd.f32 0.0, %v5521
        %5523 = vmatprep.mubr.bf16.mxu0 %v5059
        %5524 = vmatmul.mubr.bf16.gmra.mrb[0].mxu0 %v5058
        %v5525 = vpop.f32.mrb[0].mxu0
        %v5526 = vadd.f32 0.0, %v5525
        %v5527 = vpop.f32.mrb[0].mxu0
        %v5528 = vadd.f32 0.0, %v5527
        %v5529 = vpop.f32.mrb[0].mxu0
        %v5530 = vadd.f32 0.0, %v5529
        %v5531 = vpop.f32.mrb[0].mxu0
        %v5532 = vadd.f32 0.0, %v5531
        %5533 = vdwg.mxu0
        %v5534 = vadd.f32 %v4939, %v5423
        %v5535 = vadd.f32 %v4940, %v5425
        %v5536 = vadd.f32 %v4941, %v5496
        %v5537 = vadd.f32 %v4942, %v5498
        %v5538 = vadd.f32 %v4943, %v5427
        %v5539 = vadd.f32 %v4944, %v5429
        %v5540 = vadd.f32 %v4945, %v5500
        %v5541 = vadd.f32 %v4946, %v5502
        %v5542 = vadd.f32 %v4947, %v5433
        %v5543 = vadd.f32 %v4948, %v5435
        %v5544 = vadd.f32 %v4949, %v5506
        %v5545 = vadd.f32 %v4950, %v5508
        %v5546 = vadd.f32 %v4951, %v5437
        %v5547 = vadd.f32 %v4952, %v5439
        %v5548 = vadd.f32 %v4953, %v5510
        %v5549 = vadd.f32 %v4954, %v5512
        %v5550 = vadd.f32 %v4955, %v5443
        %v5551 = vadd.f32 %v4956, %v5445
        %v5552 = vadd.f32 %v4957, %v5516
        %v5553 = vadd.f32 %v4958, %v5518
        %v5554 = vadd.f32 %v4959, %v5447
        %v5555 = vadd.f32 %v4960, %v5449
        %v5556 = vadd.f32 %v4961, %v5520
        %v5557 = vadd.f32 %v4962, %v5522
        %v5558 = vadd.f32 %v4963, %v5453
        %v5559 = vadd.f32 %v4964, %v5455
        %v5560 = vadd.f32 %v4965, %v5526
        %v5561 = vadd.f32 %v4966, %v5528
        %v5562 = vadd.f32 %v4967, %v5457
        %v5563 = vadd.f32 %v4968, %v5459
        %v5564 = vadd.f32 %v4969, %v5530
        %v5565 = vadd.f32 %v4970, %v5532
        %5566 = vst [vmem:[#allocation3] sm:$0xff] %v5534
        %5567 = vst [vmem:[#allocation3 + $0x8] sm:$0xff] %v5535
        %5568 = vst [vmem:[#allocation3 + $0x10] sm:$0xff] %v5536
        %5569 = vst [vmem:[#allocation3 + $0x18] sm:$0xff] %v5537
        %5570 = vst [vmem:[#allocation3 + $0x20] sm:$0xff] %v5538
        %5571 = vst [vmem:[#allocation3 + $0x28] sm:$0xff] %v5539
        %5572 = vst [vmem:[#allocation3 + $0x30] sm:$0xff] %v5540
        %5573 = vst [vmem:[#allocation3 + $0x38] sm:$0xff] %v5541
        %5574 = vst [vmem:[#allocation3 + $0x40] sm:$0xff] %v5542
        %5575 = vst [vmem:[#allocation3 + $0x48] sm:$0xff] %v5543
        %5576 = vst [vmem:[#allocation3 + $0x50] sm:$0xff] %v5544
        %5577 = vst [vmem:[#allocation3 + $0x58] sm:$0xff] %v5545
        %5578 = vst [vmem:[#allocation3 + $0x60] sm:$0xff] %v5546
        %5579 = vst [vmem:[#allocation3 + $0x68] sm:$0xff] %v5547
        %5580 = vst [vmem:[#allocation3 + $0x70] sm:$0xff] %v5548
        %5581 = vst [vmem:[#allocation3 + $0x78] sm:$0xff] %v5549
        %5582 = vst [vmem:[#allocation3 + $0x80] sm:$0xff] %v5550
        %5583 = vst [vmem:[#allocation3 + $0x88] sm:$0xff] %v5551
        %5584 = vst [vmem:[#allocation3 + $0x90] sm:$0xff] %v5552
        %5585 = vst [vmem:[#allocation3 + $0x98] sm:$0xff] %v5553
        %5586 = vst [vmem:[#allocation3 + $0xa0] sm:$0xff] %v5554
        %5587 = vst [vmem:[#allocation3 + $0xa8] sm:$0xff] %v5555
        %5588 = vst [vmem:[#allocation3 + $0xb0] sm:$0xff] %v5556
        %5589 = vst [vmem:[#allocation3 + $0xb8] sm:$0xff] %v5557
        %5590 = vst [vmem:[#allocation3 + $0xc0] sm:$0xff] %v5558
        %5591 = vst [vmem:[#allocation3 + $0xc8] sm:$0xff] %v5559
        %5592 = vst [vmem:[#allocation3 + $0xd0] sm:$0xff] %v5560
        %5593 = vst [vmem:[#allocation3 + $0xd8] sm:$0xff] %v5561
        %5594 = vst [vmem:[#allocation3 + $0xe0] sm:$0xff] %v5562
        %5595 = vst [vmem:[#allocation3 + $0xe8] sm:$0xff] %v5563
        %5596 = vst [vmem:[#allocation3 + $0xf0] sm:$0xff] %v5564
        %5597 = vst [vmem:[#allocation3 + $0xf8] sm:$0xff] %v5565
        %s5598 = scalar_lea.vmem [#allocation2], 32
        %v5599 = vld [vmem:[%s5598] sm:$0xff]
        %v5600 = vld [vmem:[%s5598 + $0x10] sm:$0xff]
        %v5601 = vld [vmem:[%s5598 + $0x20] sm:$0xff]
        %v5602 = vld [vmem:[%s5598 + $0x30] sm:$0xff]
        %v5603 = vld [vmem:[%s5598 + $0x40] sm:$0xff]
        %v5604 = vld [vmem:[%s5598 + $0x50] sm:$0xff]
        %v5605 = vld [vmem:[%s5598 + $0x60] sm:$0xff]
        %v5606 = vld [vmem:[%s5598 + $0x70] sm:$0xff]
        %v5607 = vld [vmem:[#allocation3] sm:$0xff]
        %v5608 = vld [vmem:[#allocation3 + $0x8] sm:$0xff]
        %v5609 = vld [vmem:[#allocation3 + $0x10] sm:$0xff]
        %v5610 = vld [vmem:[#allocation3 + $0x18] sm:$0xff]
        %v5611 = vld [vmem:[#allocation3 + $0x20] sm:$0xff]
        %v5612 = vld [vmem:[#allocation3 + $0x28] sm:$0xff]
        %v5613 = vld [vmem:[#allocation3 + $0x30] sm:$0xff]
        %v5614 = vld [vmem:[#allocation3 + $0x38] sm:$0xff]
        %v5615 = vld [vmem:[#allocation3 + $0x40] sm:$0xff]
        %v5616 = vld [vmem:[#allocation3 + $0x48] sm:$0xff]
        %v5617 = vld [vmem:[#allocation3 + $0x50] sm:$0xff]
        %v5618 = vld [vmem:[#allocation3 + $0x58] sm:$0xff]
        %v5619 = vld [vmem:[#allocation3 + $0x60] sm:$0xff]
        %v5620 = vld [vmem:[#allocation3 + $0x68] sm:$0xff]
        %v5621 = vld [vmem:[#allocation3 + $0x70] sm:$0xff]
        %v5622 = vld [vmem:[#allocation3 + $0x78] sm:$0xff]
        %v5623 = vld [vmem:[#allocation3 + $0x80] sm:$0xff]
        %v5624 = vld [vmem:[#allocation3 + $0x88] sm:$0xff]
        %v5625 = vld [vmem:[#allocation3 + $0x90] sm:$0xff]
        %v5626 = vld [vmem:[#allocation3 + $0x98] sm:$0xff]
        %v5627 = vld [vmem:[#allocation3 + $0xa0] sm:$0xff]
        %v5628 = vld [vmem:[#allocation3 + $0xa8] sm:$0xff]
        %v5629 = vld [vmem:[#allocation3 + $0xb0] sm:$0xff]
        %v5630 = vld [vmem:[#allocation3 + $0xb8] sm:$0xff]
        %v5631 = vld [vmem:[#allocation3 + $0xc0] sm:$0xff]
        %v5632 = vld [vmem:[#allocation3 + $0xc8] sm:$0xff]
        %v5633 = vld [vmem:[#allocation3 + $0xd0] sm:$0xff]
        %v5634 = vld [vmem:[#allocation3 + $0xd8] sm:$0xff]
        %v5635 = vld [vmem:[#allocation3 + $0xe0] sm:$0xff]
        %v5636 = vld [vmem:[#allocation3 + $0xe8] sm:$0xff]
        %v5637 = vld [vmem:[#allocation3 + $0xf0] sm:$0xff]
        %v5638 = vld [vmem:[#allocation3 + $0xf8] sm:$0xff]
        %s5639 = scalar_lea.vmem [#allocation12], 3072
        %v5640 = vld [vmem:[%s5639] sm:$0xff]
        %v5641 = vld [vmem:[%s5639 + $0x8] sm:$0xff]
        %v5642 = vld [vmem:[%s5639 + $0x10] sm:$0xff]
        %v5643 = vld [vmem:[%s5639 + $0x18] sm:$0xff]
        %v5644 = vld [vmem:[%s5639 + $0x20] sm:$0xff]
        %v5645 = vld [vmem:[%s5639 + $0x28] sm:$0xff]
        %v5646 = vld [vmem:[%s5639 + $0x30] sm:$0xff]
        %v5647 = vld [vmem:[%s5639 + $0x38] sm:$0xff]
        %v5648 = vld [vmem:[%s5639 + $0x40] sm:$0xff]
        %v5649 = vld [vmem:[%s5639 + $0x48] sm:$0xff]
        %v5650 = vld [vmem:[%s5639 + $0x50] sm:$0xff]
        %v5651 = vld [vmem:[%s5639 + $0x58] sm:$0xff]
        %v5652 = vld [vmem:[%s5639 + $0x60] sm:$0xff]
        %v5653 = vld [vmem:[%s5639 + $0x68] sm:$0xff]
        %v5654 = vld [vmem:[%s5639 + $0x70] sm:$0xff]
        %v5655 = vld [vmem:[%s5639 + $0x78] sm:$0xff]
        %v5656 = vld [vmem:[%s5639 + $0x80] sm:$0xff]
        %v5657 = vld [vmem:[%s5639 + $0x88] sm:$0xff]
        %v5658 = vld [vmem:[%s5639 + $0x90] sm:$0xff]
        %v5659 = vld [vmem:[%s5639 + $0x98] sm:$0xff]
        %v5660 = vld [vmem:[%s5639 + $0xa0] sm:$0xff]
        %v5661 = vld [vmem:[%s5639 + $0xa8] sm:$0xff]
        %v5662 = vld [vmem:[%s5639 + $0xb0] sm:$0xff]
        %v5663 = vld [vmem:[%s5639 + $0xb8] sm:$0xff]
        %v5664 = vld [vmem:[%s5639 + $0xc0] sm:$0xff]
        %v5665 = vld [vmem:[%s5639 + $0xc8] sm:$0xff]
        %v5666 = vld [vmem:[%s5639 + $0xd0] sm:$0xff]
        %v5667 = vld [vmem:[%s5639 + $0xd8] sm:$0xff]
        %v5668 = vld [vmem:[%s5639 + $0xe0] sm:$0xff]
        %v5669 = vld [vmem:[%s5639 + $0xe8] sm:$0xff]
        %v5670 = vld [vmem:[%s5639 + $0xf0] sm:$0xff]
        %v5671 = vld [vmem:[%s5639 + $0xf8] sm:$0xff]
        %v5672 = vld [vmem:[%s5639 + $0x100] sm:$0xff]
        %v5673 = vld [vmem:[%s5639 + $0x108] sm:$0xff]
        %v5674 = vld [vmem:[%s5639 + $0x110] sm:$0xff]
        %v5675 = vld [vmem:[%s5639 + $0x118] sm:$0xff]
        %v5676 = vld [vmem:[%s5639 + $0x120] sm:$0xff]
        %v5677 = vld [vmem:[%s5639 + $0x128] sm:$0xff]
        %v5678 = vld [vmem:[%s5639 + $0x130] sm:$0xff]
        %v5679 = vld [vmem:[%s5639 + $0x138] sm:$0xff]
        %v5680 = vld [vmem:[%s5639 + $0x140] sm:$0xff]
        %v5681 = vld [vmem:[%s5639 + $0x148] sm:$0xff]
        %v5682 = vld [vmem:[%s5639 + $0x150] sm:$0xff]
        %v5683 = vld [vmem:[%s5639 + $0x158] sm:$0xff]
        %v5684 = vld [vmem:[%s5639 + $0x160] sm:$0xff]
        %v5685 = vld [vmem:[%s5639 + $0x168] sm:$0xff]
        %v5686 = vld [vmem:[%s5639 + $0x170] sm:$0xff]
        %v5687 = vld [vmem:[%s5639 + $0x178] sm:$0xff]
        %v5688 = vld [vmem:[%s5639 + $0x180] sm:$0xff]
        %v5689 = vld [vmem:[%s5639 + $0x188] sm:$0xff]
        %v5690 = vld [vmem:[%s5639 + $0x190] sm:$0xff]
        %v5691 = vld [vmem:[%s5639 + $0x198] sm:$0xff]
        %v5692 = vld [vmem:[%s5639 + $0x1a0] sm:$0xff]
        %v5693 = vld [vmem:[%s5639 + $0x1a8] sm:$0xff]
        %v5694 = vld [vmem:[%s5639 + $0x1b0] sm:$0xff]
        %v5695 = vld [vmem:[%s5639 + $0x1b8] sm:$0xff]
        %v5696 = vld [vmem:[%s5639 + $0x1c0] sm:$0xff]
        %v5697 = vld [vmem:[%s5639 + $0x1c8] sm:$0xff]
        %v5698 = vld [vmem:[%s5639 + $0x1d0] sm:$0xff]
        %v5699 = vld [vmem:[%s5639 + $0x1d8] sm:$0xff]
        %v5700 = vld [vmem:[%s5639 + $0x1e0] sm:$0xff]
        %v5701 = vld [vmem:[%s5639 + $0x1e8] sm:$0xff]
        %v5702 = vld [vmem:[%s5639 + $0x1f0] sm:$0xff]
        %v5703 = vld [vmem:[%s5639 + $0x1f8] sm:$0xff]
        %v5712 = vunpack.c.l.b16 %v5599
        %v5713 = vunpack.c.h.b16 %v5599
        %v5714 = vunpack.c.l.b16 %v5600
        %v5715 = vunpack.c.h.b16 %v5600
        %v5716 = vunpack.c.l.b16 %v5601
        %v5717 = vunpack.c.h.b16 %v5601
        %v5718 = vunpack.c.l.b16 %v5602
        %v5719 = vunpack.c.h.b16 %v5602
        %v5720 = vunpack.c.l.b16 %v5603
        %v5721 = vunpack.c.h.b16 %v5603
        %v5722 = vunpack.c.l.b16 %v5604
        %v5723 = vunpack.c.h.b16 %v5604
        %v5724 = vunpack.c.l.b16 %v5605
        %v5725 = vunpack.c.h.b16 %v5605
        %v5726 = vunpack.c.l.b16 %v5606
        %v5727 = vunpack.c.h.b16 %v5606
        %v5728 = vpack.c.b16 %v5714, %v5712
        %v5729 = vpack.c.b16 %v5715, %v5713
        %v5730 = vpack.c.b16 %v5718, %v5716
        %v5731 = vpack.c.b16 %v5719, %v5717
        %v5732 = vpack.c.b16 %v5722, %v5720
        %v5733 = vpack.c.b16 %v5723, %v5721
        %v5734 = vpack.c.b16 %v5726, %v5724
        %v5735 = vpack.c.b16 %v5727, %v5725
        %v5808 = vunpack.c.l.b16 %v5640
        %v5809 = vunpack.c.h.b16 %v5640
        %v5810 = vunpack.c.l.b16 %v5641
        %v5811 = vunpack.c.h.b16 %v5641
        %v5812 = vunpack.c.l.b16 %v5642
        %v5813 = vunpack.c.h.b16 %v5642
        %v5814 = vunpack.c.l.b16 %v5643
        %v5815 = vunpack.c.h.b16 %v5643
        %v5816 = vunpack.c.l.b16 %v5644
        %v5817 = vunpack.c.h.b16 %v5644
        %v5818 = vunpack.c.l.b16 %v5645
        %v5819 = vunpack.c.h.b16 %v5645
        %v5820 = vunpack.c.l.b16 %v5646
        %v5821 = vunpack.c.h.b16 %v5646
        %v5822 = vunpack.c.l.b16 %v5647
        %v5823 = vunpack.c.h.b16 %v5647
        %v5824 = vunpack.c.l.b16 %v5648
        %v5825 = vunpack.c.h.b16 %v5648
        %v5826 = vunpack.c.l.b16 %v5649
        %v5827 = vunpack.c.h.b16 %v5649
        %v5828 = vunpack.c.l.b16 %v5650
        %v5829 = vunpack.c.h.b16 %v5650
        %v5830 = vunpack.c.l.b16 %v5651
        %v5831 = vunpack.c.h.b16 %v5651
        %v5832 = vunpack.c.l.b16 %v5652
        %v5833 = vunpack.c.h.b16 %v5652
        %v5834 = vunpack.c.l.b16 %v5653
        %v5835 = vunpack.c.h.b16 %v5653
        %v5836 = vunpack.c.l.b16 %v5654
        %v5837 = vunpack.c.h.b16 %v5654
        %v5838 = vunpack.c.l.b16 %v5655
        %v5839 = vunpack.c.h.b16 %v5655
        %v5840 = vunpack.c.l.b16 %v5656
        %v5841 = vunpack.c.h.b16 %v5656
        %v5842 = vunpack.c.l.b16 %v5657
        %v5843 = vunpack.c.h.b16 %v5657
        %v5844 = vunpack.c.l.b16 %v5658
        %v5845 = vunpack.c.h.b16 %v5658
        %v5846 = vunpack.c.l.b16 %v5659
        %v5847 = vunpack.c.h.b16 %v5659
        %v5848 = vunpack.c.l.b16 %v5660
        %v5849 = vunpack.c.h.b16 %v5660
        %v5850 = vunpack.c.l.b16 %v5661
        %v5851 = vunpack.c.h.b16 %v5661
        %v5852 = vunpack.c.l.b16 %v5662
        %v5853 = vunpack.c.h.b16 %v5662
        %v5854 = vunpack.c.l.b16 %v5663
        %v5855 = vunpack.c.h.b16 %v5663
        %v5856 = vunpack.c.l.b16 %v5664
        %v5857 = vunpack.c.h.b16 %v5664
        %v5858 = vunpack.c.l.b16 %v5665
        %v5859 = vunpack.c.h.b16 %v5665
        %v5860 = vunpack.c.l.b16 %v5666
        %v5861 = vunpack.c.h.b16 %v5666
        %v5862 = vunpack.c.l.b16 %v5667
        %v5863 = vunpack.c.h.b16 %v5667
        %v5864 = vunpack.c.l.b16 %v5668
        %v5865 = vunpack.c.h.b16 %v5668
        %v5866 = vunpack.c.l.b16 %v5669
        %v5867 = vunpack.c.h.b16 %v5669
        %v5868 = vunpack.c.l.b16 %v5670
        %v5869 = vunpack.c.h.b16 %v5670
        %v5870 = vunpack.c.l.b16 %v5671
        %v5871 = vunpack.c.h.b16 %v5671
        %v5872 = vunpack.c.l.b16 %v5672
        %v5873 = vunpack.c.h.b16 %v5672
        %v5874 = vunpack.c.l.b16 %v5673
        %v5875 = vunpack.c.h.b16 %v5673
        %v5876 = vunpack.c.l.b16 %v5674
        %v5877 = vunpack.c.h.b16 %v5674
        %v5878 = vunpack.c.l.b16 %v5675
        %v5879 = vunpack.c.h.b16 %v5675
        %v5880 = vunpack.c.l.b16 %v5676
        %v5881 = vunpack.c.h.b16 %v5676
        %v5882 = vunpack.c.l.b16 %v5677
        %v5883 = vunpack.c.h.b16 %v5677
        %v5884 = vunpack.c.l.b16 %v5678
        %v5885 = vunpack.c.h.b16 %v5678
        %v5886 = vunpack.c.l.b16 %v5679
        %v5887 = vunpack.c.h.b16 %v5679
        %v5888 = vunpack.c.l.b16 %v5680
        %v5889 = vunpack.c.h.b16 %v5680
        %v5890 = vunpack.c.l.b16 %v5681
        %v5891 = vunpack.c.h.b16 %v5681
        %v5892 = vunpack.c.l.b16 %v5682
        %v5893 = vunpack.c.h.b16 %v5682
        %v5894 = vunpack.c.l.b16 %v5683
        %v5895 = vunpack.c.h.b16 %v5683
        %v5896 = vunpack.c.l.b16 %v5684
        %v5897 = vunpack.c.h.b16 %v5684
        %v5898 = vunpack.c.l.b16 %v5685
        %v5899 = vunpack.c.h.b16 %v5685
        %v5900 = vunpack.c.l.b16 %v5686
        %v5901 = vunpack.c.h.b16 %v5686
        %v5902 = vunpack.c.l.b16 %v5687
        %v5903 = vunpack.c.h.b16 %v5687
        %v5904 = vunpack.c.l.b16 %v5688
        %v5905 = vunpack.c.h.b16 %v5688
        %v5906 = vunpack.c.l.b16 %v5689
        %v5907 = vunpack.c.h.b16 %v5689
        %v5908 = vunpack.c.l.b16 %v5690
        %v5909 = vunpack.c.h.b16 %v5690
        %v5910 = vunpack.c.l.b16 %v5691
        %v5911 = vunpack.c.h.b16 %v5691
        %v5912 = vunpack.c.l.b16 %v5692
        %v5913 = vunpack.c.h.b16 %v5692
        %v5914 = vunpack.c.l.b16 %v5693
        %v5915 = vunpack.c.h.b16 %v5693
        %v5916 = vunpack.c.l.b16 %v5694
        %v5917 = vunpack.c.h.b16 %v5694
        %v5918 = vunpack.c.l.b16 %v5695
        %v5919 = vunpack.c.h.b16 %v5695
        %v5920 = vunpack.c.l.b16 %v5696
        %v5921 = vunpack.c.h.b16 %v5696
        %v5922 = vunpack.c.l.b16 %v5697
        %v5923 = vunpack.c.h.b16 %v5697
        %v5924 = vunpack.c.l.b16 %v5698
        %v5925 = vunpack.c.h.b16 %v5698
        %v5926 = vunpack.c.l.b16 %v5699
        %v5927 = vunpack.c.h.b16 %v5699
        %v5928 = vunpack.c.l.b16 %v5700
        %v5929 = vunpack.c.h.b16 %v5700
        %v5930 = vunpack.c.l.b16 %v5701
        %v5931 = vunpack.c.h.b16 %v5701
        %v5932 = vunpack.c.l.b16 %v5702
        %v5933 = vunpack.c.h.b16 %v5702
        %v5934 = vunpack.c.l.b16 %v5703
        %v5935 = vunpack.c.h.b16 %v5703
        %v5936 = vpack.c.b16 %v5812, %v5808
        %v5937 = vpack.c.b16 %v5813, %v5809
        %v5938 = vpack.c.b16 %v5814, %v5810
        %v5939 = vpack.c.b16 %v5815, %v5811
        %v5940 = vpack.c.b16 %v5820, %v5816
        %v5941 = vpack.c.b16 %v5821, %v5817
        %v5942 = vpack.c.b16 %v5822, %v5818
        %v5943 = vpack.c.b16 %v5823, %v5819
        %v5944 = vpack.c.b16 %v5828, %v5824
        %v5945 = vpack.c.b16 %v5829, %v5825
        %v5946 = vpack.c.b16 %v5830, %v5826
        %v5947 = vpack.c.b16 %v5831, %v5827
        %v5948 = vpack.c.b16 %v5836, %v5832
        %v5949 = vpack.c.b16 %v5837, %v5833
        %v5950 = vpack.c.b16 %v5838, %v5834
        %v5951 = vpack.c.b16 %v5839, %v5835
        %v5952 = vpack.c.b16 %v5844, %v5840
        %v5953 = vpack.c.b16 %v5845, %v5841
        %v5954 = vpack.c.b16 %v5846, %v5842
        %v5955 = vpack.c.b16 %v5847, %v5843
        %v5956 = vpack.c.b16 %v5852, %v5848
        %v5957 = vpack.c.b16 %v5853, %v5849
        %v5958 = vpack.c.b16 %v5854, %v5850
        %v5959 = vpack.c.b16 %v5855, %v5851
        %v5960 = vpack.c.b16 %v5860, %v5856
        %v5961 = vpack.c.b16 %v5861, %v5857
        %v5962 = vpack.c.b16 %v5862, %v5858
        %v5963 = vpack.c.b16 %v5863, %v5859
        %v5964 = vpack.c.b16 %v5868, %v5864
        %v5965 = vpack.c.b16 %v5869, %v5865
        %v5966 = vpack.c.b16 %v5870, %v5866
        %v5967 = vpack.c.b16 %v5871, %v5867
        %v5968 = vpack.c.b16 %v5876, %v5872
        %v5969 = vpack.c.b16 %v5877, %v5873
        %v5970 = vpack.c.b16 %v5878, %v5874
        %v5971 = vpack.c.b16 %v5879, %v5875
        %v5972 = vpack.c.b16 %v5884, %v5880
        %v5973 = vpack.c.b16 %v5885, %v5881
        %v5974 = vpack.c.b16 %v5886, %v5882
        %v5975 = vpack.c.b16 %v5887, %v5883
        %v5976 = vpack.c.b16 %v5892, %v5888
        %v5977 = vpack.c.b16 %v5893, %v5889
        %v5978 = vpack.c.b16 %v5894, %v5890
        %v5979 = vpack.c.b16 %v5895, %v5891
        %v5980 = vpack.c.b16 %v5900, %v5896
        %v5981 = vpack.c.b16 %v5901, %v5897
        %v5982 = vpack.c.b16 %v5902, %v5898
        %v5983 = vpack.c.b16 %v5903, %v5899
        %v5984 = vpack.c.b16 %v5908, %v5904
        %v5985 = vpack.c.b16 %v5909, %v5905
        %v5986 = vpack.c.b16 %v5910, %v5906
        %v5987 = vpack.c.b16 %v5911, %v5907
        %v5988 = vpack.c.b16 %v5916, %v5912
        %v5989 = vpack.c.b16 %v5917, %v5913
        %v5990 = vpack.c.b16 %v5918, %v5914
        %v5991 = vpack.c.b16 %v5919, %v5915
        %v5992 = vpack.c.b16 %v5924, %v5920
        %v5993 = vpack.c.b16 %v5925, %v5921
        %v5994 = vpack.c.b16 %v5926, %v5922
        %v5995 = vpack.c.b16 %v5927, %v5923
        %v5996 = vpack.c.b16 %v5932, %v5928
        %v5997 = vpack.c.b16 %v5933, %v5929
        %v5998 = vpack.c.b16 %v5934, %v5930
        %v5999 = vpack.c.b16 %v5935, %v5931
        %6064 = vmatprep.subr.bf16.mxu0 %v5937
        %6065 = vmatpush1.bf16.msra.mxu0 %v5936
        %6066 = vmatprep.subr.bf16.mxu0 %v5941
        %6067 = vmatpush1.bf16.msra.mxu0 %v5940
        %6068 = vmatprep.subr.bf16.mxu0 %v5945
        %6069 = vmatpush1.bf16.msra.mxu0 %v5944
        %6070 = vmatprep.subr.bf16.mxu0 %v5949
        %6071 = vmatpush1.bf16.msra.mxu0 %v5948
        %6072 = vmatprep.subr.bf16.mxu0 %v5953
        %6073 = vmatpush1.bf16.msra.mxu0 %v5952
        %6074 = vmatprep.subr.bf16.mxu0 %v5957
        %6075 = vmatpush1.bf16.msra.mxu0 %v5956
        %6076 = vmatprep.subr.bf16.mxu0 %v5961
        %6077 = vmatpush1.bf16.msra.mxu0 %v5960
        %6078 = vmatprep.subr.bf16.mxu0 %v5965
        %6079 = vmatpush1.bf16.msra.mxu0 %v5964
        %6080 = vmatprep.subr.bf16.mxu0 %v5969
        %6081 = vmatpush1.bf16.msra.mxu0 %v5968
        %6082 = vmatprep.subr.bf16.mxu0 %v5973
        %6083 = vmatpush1.bf16.msra.mxu0 %v5972
        %6084 = vmatprep.subr.bf16.mxu0 %v5977
        %6085 = vmatpush1.bf16.msra.mxu0 %v5976
        %6086 = vmatprep.subr.bf16.mxu0 %v5981
        %6087 = vmatpush1.bf16.msra.mxu0 %v5980
        %6088 = vmatprep.subr.bf16.mxu0 %v5985
        %6089 = vmatpush1.bf16.msra.mxu0 %v5984
        %6090 = vmatprep.subr.bf16.mxu0 %v5989
        %6091 = vmatpush1.bf16.msra.mxu0 %v5988
        %6092 = vmatprep.subr.bf16.mxu0 %v5993
        %6093 = vmatpush1.bf16.msra.mxu0 %v5992
        %6094 = vmatprep.subr.bf16.mxu0 %v5997
        %6095 = vmatpush1.bf16.msra.mxu0 %v5996
        %6096 = vmatprep.mubr.bf16.mxu0 %v5729
        %6097 = vmatmul.mubr.bf16.gmra.mrb[0].mxu0 %v5728
        %v6098 = vpop.f32.mrb[0].mxu0
        %v6099 = vadd.f32 0.0, %v6098
        %v6100 = vpop.f32.mrb[0].mxu0
        %v6101 = vadd.f32 0.0, %v6100
        %v6102 = vpop.f32.mrb[0].mxu0
        %v6103 = vadd.f32 0.0, %v6102
        %v6104 = vpop.f32.mrb[0].mxu0
        %v6105 = vadd.f32 0.0, %v6104
        %6106 = vmatprep.mubr.bf16.mxu0 %v5731
        %6107 = vmatmul.mubr.bf16.gmra.mrb[0].mxu0 %v5730
        %v6108 = vpop.f32.mrb[0].mxu0
        %v6109 = vadd.f32 0.0, %v6108
        %v6110 = vpop.f32.mrb[0].mxu0
        %v6111 = vadd.f32 0.0, %v6110
        %v6112 = vpop.f32.mrb[0].mxu0
        %v6113 = vadd.f32 0.0, %v6112
        %v6114 = vpop.f32.mrb[0].mxu0
        %v6115 = vadd.f32 0.0, %v6114
        %6116 = vmatprep.mubr.bf16.mxu0 %v5733
        %6117 = vmatmul.mubr.bf16.gmra.mrb[0].mxu0 %v5732
        %v6118 = vpop.f32.mrb[0].mxu0
        %v6119 = vadd.f32 0.0, %v6118
        %v6120 = vpop.f32.mrb[0].mxu0
        %v6121 = vadd.f32 0.0, %v6120
        %v6122 = vpop.f32.mrb[0].mxu0
        %v6123 = vadd.f32 0.0, %v6122
        %v6124 = vpop.f32.mrb[0].mxu0
        %v6125 = vadd.f32 0.0, %v6124
        %6126 = vmatprep.mubr.bf16.mxu0 %v5735
        %6127 = vmatmul.mubr.bf16.gmra.mrb[0].mxu0 %v5734
        %v6128 = vpop.f32.mrb[0].mxu0
        %v6129 = vadd.f32 0.0, %v6128
        %v6130 = vpop.f32.mrb[0].mxu0
        %v6131 = vadd.f32 0.0, %v6130
        %v6132 = vpop.f32.mrb[0].mxu0
        %v6133 = vadd.f32 0.0, %v6132
        %v6134 = vpop.f32.mrb[0].mxu0
        %v6135 = vadd.f32 0.0, %v6134
        %6136 = vdwg.mxu0
        %6137 = vmatprep.subr.bf16.mxu0 %v5939
        %6138 = vmatpush1.bf16.msra.mxu0 %v5938
        %6139 = vmatprep.subr.bf16.mxu0 %v5943
        %6140 = vmatpush1.bf16.msra.mxu0 %v5942
        %6141 = vmatprep.subr.bf16.mxu0 %v5947
        %6142 = vmatpush1.bf16.msra.mxu0 %v5946
        %6143 = vmatprep.subr.bf16.mxu0 %v5951
        %6144 = vmatpush1.bf16.msra.mxu0 %v5950
        %6145 = vmatprep.subr.bf16.mxu0 %v5955
        %6146 = vmatpush1.bf16.msra.mxu0 %v5954
        %6147 = vmatprep.subr.bf16.mxu0 %v5959
        %6148 = vmatpush1.bf16.msra.mxu0 %v5958
        %6149 = vmatprep.subr.bf16.mxu0 %v5963
        %6150 = vmatpush1.bf16.msra.mxu0 %v5962
        %6151 = vmatprep.subr.bf16.mxu0 %v5967
        %6152 = vmatpush1.bf16.msra.mxu0 %v5966
        %6153 = vmatprep.subr.bf16.mxu0 %v5971
        %6154 = vmatpush1.bf16.msra.mxu0 %v5970
        %6155 = vmatprep.subr.bf16.mxu0 %v5975
        %6156 = vmatpush1.bf16.msra.mxu0 %v5974
        %6157 = vmatprep.subr.bf16.mxu0 %v5979
        %6158 = vmatpush1.bf16.msra.mxu0 %v5978
        %6159 = vmatprep.subr.bf16.mxu0 %v5983
        %6160 = vmatpush1.bf16.msra.mxu0 %v5982
        %6161 = vmatprep.subr.bf16.mxu0 %v5987
        %6162 = vmatpush1.bf16.msra.mxu0 %v5986
        %6163 = vmatprep.subr.bf16.mxu0 %v5991
        %6164 = vmatpush1.bf16.msra.mxu0 %v5990
        %6165 = vmatprep.subr.bf16.mxu0 %v5995
        %6166 = vmatpush1.bf16.msra.mxu0 %v5994
        %6167 = vmatprep.subr.bf16.mxu0 %v5999
        %6168 = vmatpush1.bf16.msra.mxu0 %v5998
        %6169 = vmatprep.mubr.bf16.mxu0 %v5729
        %6170 = vmatmul.mubr.bf16.gmra.mrb[0].mxu0 %v5728
        %v6171 = vpop.f32.mrb[0].mxu0
        %v6172 = vadd.f32 0.0, %v6171
        %v6173 = vpop.f32.mrb[0].mxu0
        %v6174 = vadd.f32 0.0, %v6173
        %v6175 = vpop.f32.mrb[0].mxu0
        %v6176 = vadd.f32 0.0, %v6175
        %v6177 = vpop.f32.mrb[0].mxu0
        %v6178 = vadd.f32 0.0, %v6177
        %6179 = vmatprep.mubr.bf16.mxu0 %v5731
        %6180 = vmatmul.mubr.bf16.gmra.mrb[0].mxu0 %v5730
        %v6181 = vpop.f32.mrb[0].mxu0
        %v6182 = vadd.f32 0.0, %v6181
        %v6183 = vpop.f32.mrb[0].mxu0
        %v6184 = vadd.f32 0.0, %v6183
        %v6185 = vpop.f32.mrb[0].mxu0
        %v6186 = vadd.f32 0.0, %v6185
        %v6187 = vpop.f32.mrb[0].mxu0
        %v6188 = vadd.f32 0.0, %v6187
        %6189 = vmatprep.mubr.bf16.mxu0 %v5733
        %6190 = vmatmul.mubr.bf16.gmra.mrb[0].mxu0 %v5732
        %v6191 = vpop.f32.mrb[0].mxu0
        %v6192 = vadd.f32 0.0, %v6191
        %v6193 = vpop.f32.mrb[0].mxu0
        %v6194 = vadd.f32 0.0, %v6193
        %v6195 = vpop.f32.mrb[0].mxu0
        %v6196 = vadd.f32 0.0, %v6195
        %v6197 = vpop.f32.mrb[0].mxu0
        %v6198 = vadd.f32 0.0, %v6197
        %6199 = vmatprep.mubr.bf16.mxu0 %v5735
        %6200 = vmatmul.mubr.bf16.gmra.mrb[0].mxu0 %v5734
        %v6201 = vpop.f32.mrb[0].mxu0
        %v6202 = vadd.f32 0.0, %v6201
        %v6203 = vpop.f32.mrb[0].mxu0
        %v6204 = vadd.f32 0.0, %v6203
        %v6205 = vpop.f32.mrb[0].mxu0
        %v6206 = vadd.f32 0.0, %v6205
        %v6207 = vpop.f32.mrb[0].mxu0
        %v6208 = vadd.f32 0.0, %v6207
        %6209 = vdwg.mxu0
        %v6210 = vadd.f32 %v5607, %v6099
        %v6211 = vadd.f32 %v5608, %v6101
        %v6212 = vadd.f32 %v5609, %v6172
        %v6213 = vadd.f32 %v5610, %v6174
        %v6214 = vadd.f32 %v5611, %v6103
        %v6215 = vadd.f32 %v5612, %v6105
        %v6216 = vadd.f32 %v5613, %v6176
        %v6217 = vadd.f32 %v5614, %v6178
        %v6218 = vadd.f32 %v5615, %v6109
        %v6219 = vadd.f32 %v5616, %v6111
        %v6220 = vadd.f32 %v5617, %v6182
        %v6221 = vadd.f32 %v5618, %v6184
        %v6222 = vadd.f32 %v5619, %v6113
        %v6223 = vadd.f32 %v5620, %v6115
        %v6224 = vadd.f32 %v5621, %v6186
        %v6225 = vadd.f32 %v5622, %v6188
        %v6226 = vadd.f32 %v5623, %v6119
        %v6227 = vadd.f32 %v5624, %v6121
        %v6228 = vadd.f32 %v5625, %v6192
        %v6229 = vadd.f32 %v5626, %v6194
        %v6230 = vadd.f32 %v5627, %v6123
        %v6231 = vadd.f32 %v5628, %v6125
        %v6232 = vadd.f32 %v5629, %v6196
        %v6233 = vadd.f32 %v5630, %v6198
        %v6234 = vadd.f32 %v5631, %v6129
        %v6235 = vadd.f32 %v5632, %v6131
        %v6236 = vadd.f32 %v5633, %v6202
        %v6237 = vadd.f32 %v5634, %v6204
        %v6238 = vadd.f32 %v5635, %v6133
        %v6239 = vadd.f32 %v5636, %v6135
        %v6240 = vadd.f32 %v5637, %v6206
        %v6241 = vadd.f32 %v5638, %v6208
        %6242 = vst [vmem:[#allocation3] sm:$0xff] %v6210
        %6243 = vst [vmem:[#allocation3 + $0x8] sm:$0xff] %v6211
        %6244 = vst [vmem:[#allocation3 + $0x10] sm:$0xff] %v6212
        %6245 = vst [vmem:[#allocation3 + $0x18] sm:$0xff] %v6213
        %6246 = vst [vmem:[#allocation3 + $0x20] sm:$0xff] %v6214
        %6247 = vst [vmem:[#allocation3 + $0x28] sm:$0xff] %v6215
        %6248 = vst [vmem:[#allocation3 + $0x30] sm:$0xff] %v6216
        %6249 = vst [vmem:[#allocation3 + $0x38] sm:$0xff] %v6217
        %6250 = vst [vmem:[#allocation3 + $0x40] sm:$0xff] %v6218
        %6251 = vst [vmem:[#allocation3 + $0x48] sm:$0xff] %v6219
        %6252 = vst [vmem:[#allocation3 + $0x50] sm:$0xff] %v6220
        %6253 = vst [vmem:[#allocation3 + $0x58] sm:$0xff] %v6221
        %6254 = vst [vmem:[#allocation3 + $0x60] sm:$0xff] %v6222
        %6255 = vst [vmem:[#allocation3 + $0x68] sm:$0xff] %v6223
        %6256 = vst [vmem:[#allocation3 + $0x70] sm:$0xff] %v6224
        %6257 = vst [vmem:[#allocation3 + $0x78] sm:$0xff] %v6225
        %6258 = vst [vmem:[#allocation3 + $0x80] sm:$0xff] %v6226
        %6259 = vst [vmem:[#allocation3 + $0x88] sm:$0xff] %v6227
        %6260 = vst [vmem:[#allocation3 + $0x90] sm:$0xff] %v6228
        %6261 = vst [vmem:[#allocation3 + $0x98] sm:$0xff] %v6229
        %6262 = vst [vmem:[#allocation3 + $0xa0] sm:$0xff] %v6230
        %6263 = vst [vmem:[#allocation3 + $0xa8] sm:$0xff] %v6231
        %6264 = vst [vmem:[#allocation3 + $0xb0] sm:$0xff] %v6232
        %6265 = vst [vmem:[#allocation3 + $0xb8] sm:$0xff] %v6233
        %6266 = vst [vmem:[#allocation3 + $0xc0] sm:$0xff] %v6234
        %6267 = vst [vmem:[#allocation3 + $0xc8] sm:$0xff] %v6235
        %6268 = vst [vmem:[#allocation3 + $0xd0] sm:$0xff] %v6236
        %6269 = vst [vmem:[#allocation3 + $0xd8] sm:$0xff] %v6237
        %6270 = vst [vmem:[#allocation3 + $0xe0] sm:$0xff] %v6238
        %6271 = vst [vmem:[#allocation3 + $0xe8] sm:$0xff] %v6239
        %6272 = vst [vmem:[#allocation3 + $0xf0] sm:$0xff] %v6240
        %6273 = vst [vmem:[#allocation3 + $0xf8] sm:$0xff] %v6241
        %v6274 = vld [vmem:[%s5598] sm:$0xff]
        %v6275 = vld [vmem:[%s5598 + $0x8] sm:$0x11]
        %v6276 = vld [vmem:[%s5598 + $0x10] sm:$0xff]
        %v6277 = vld [vmem:[%s5598 + $0x18] sm:$0x11]
        %v6278 = vld [vmem:[%s5598 + $0x20] sm:$0xff]
        %v6279 = vld [vmem:[%s5598 + $0x28] sm:$0x11]
        %v6280 = vld [vmem:[%s5598 + $0x30] sm:$0xff]
        %v6281 = vld [vmem:[%s5598 + $0x38] sm:$0x11]
        %v6282 = vld [vmem:[%s5598 + $0x40] sm:$0xff]
        %v6283 = vld [vmem:[%s5598 + $0x48] sm:$0x11]
        %v6284 = vld [vmem:[%s5598 + $0x50] sm:$0xff]
        %v6285 = vld [vmem:[%s5598 + $0x58] sm:$0x11]
        %v6286 = vld [vmem:[%s5598 + $0x60] sm:$0xff]
        %v6287 = vld [vmem:[%s5598 + $0x68] sm:$0x11]
        %v6288 = vld [vmem:[%s5598 + $0x70] sm:$0xff]
        %v6289 = vld [vmem:[%s5598 + $0x78] sm:$0x11]
        %v6291 = vshrl.u32 %v6274, 16
        %v6293 = vrot.slane %v6291, 4
        %v6294 = vshll.u32 %v6274, 16
        %v6296 = vrot.slane %v6294, 5
        %v6297 = vor.u32 %v6293, %v6296
        %v6298 = vrot.slane %v6297, 4
        %v6300 = vshll.u32 %v6275, 16
        %v6302 = vrot.slane %v6300, 5
        %v6303 = vsel %vm1915, %v6298, %v6302
        %v6305 = vshrl.u32 %v6276, 16
        %v6307 = vrot.slane %v6305, 4
        %v6308 = vshll.u32 %v6276, 16
        %v6310 = vrot.slane %v6308, 5
        %v6311 = vor.u32 %v6307, %v6310
        %v6312 = vrot.slane %v6311, 4
        %v6314 = vshll.u32 %v6277, 16
        %v6316 = vrot.slane %v6314, 5
        %v6317 = vsel %vm1915, %v6312, %v6316
        %v6319 = vshrl.u32 %v6278, 16
        %v6321 = vrot.slane %v6319, 4
        %v6322 = vshll.u32 %v6278, 16
        %v6324 = vrot.slane %v6322, 5
        %v6325 = vor.u32 %v6321, %v6324
        %v6326 = vrot.slane %v6325, 4
        %v6328 = vshll.u32 %v6279, 16
        %v6330 = vrot.slane %v6328, 5
        %v6331 = vsel %vm1915, %v6326, %v6330
        %v6333 = vshrl.u32 %v6280, 16
        %v6335 = vrot.slane %v6333, 4
        %v6336 = vshll.u32 %v6280, 16
        %v6338 = vrot.slane %v6336, 5
        %v6339 = vor.u32 %v6335, %v6338
        %v6340 = vrot.slane %v6339, 4
        %v6342 = vshll.u32 %v6281, 16
        %v6344 = vrot.slane %v6342, 5
        %v6345 = vsel %vm1915, %v6340, %v6344
        %v6347 = vshrl.u32 %v6282, 16
        %v6349 = vrot.slane %v6347, 4
        %v6350 = vshll.u32 %v6282, 16
        %v6352 = vrot.slane %v6350, 5
        %v6353 = vor.u32 %v6349, %v6352
        %v6354 = vrot.slane %v6353, 4
        %v6356 = vshll.u32 %v6283, 16
        %v6358 = vrot.slane %v6356, 5
        %v6359 = vsel %vm1915, %v6354, %v6358
        %v6361 = vshrl.u32 %v6284, 16
        %v6363 = vrot.slane %v6361, 4
        %v6364 = vshll.u32 %v6284, 16
        %v6366 = vrot.slane %v6364, 5
        %v6367 = vor.u32 %v6363, %v6366
        %v6368 = vrot.slane %v6367, 4
        %v6370 = vshll.u32 %v6285, 16
        %v6372 = vrot.slane %v6370, 5
        %v6373 = vsel %vm1915, %v6368, %v6372
        %v6375 = vshrl.u32 %v6286, 16
        %v6377 = vrot.slane %v6375, 4
        %v6378 = vshll.u32 %v6286, 16
        %v6380 = vrot.slane %v6378, 5
        %v6381 = vor.u32 %v6377, %v6380
        %v6382 = vrot.slane %v6381, 4
        %v6384 = vshll.u32 %v6287, 16
        %v6386 = vrot.slane %v6384, 5
        %v6387 = vsel %vm1915, %v6382, %v6386
        %v6389 = vshrl.u32 %v6288, 16
        %v6391 = vrot.slane %v6389, 4
        %v6392 = vshll.u32 %v6288, 16
        %v6394 = vrot.slane %v6392, 5
        %v6395 = vor.u32 %v6391, %v6394
        %v6396 = vrot.slane %v6395, 4
        %v6398 = vshll.u32 %v6289, 16
        %v6400 = vrot.slane %v6398, 5
        %v6401 = vsel %vm1915, %v6396, %v6400
        %v6402 = vld [vmem:[#allocation3] sm:$0xff]
        %v6403 = vld [vmem:[#allocation3 + $0x8] sm:$0xff]
        %v6404 = vld [vmem:[#allocation3 + $0x10] sm:$0xff]
        %v6405 = vld [vmem:[#allocation3 + $0x18] sm:$0xff]
        %v6406 = vld [vmem:[#allocation3 + $0x20] sm:$0xff]
        %v6407 = vld [vmem:[#allocation3 + $0x28] sm:$0xff]
        %v6408 = vld [vmem:[#allocation3 + $0x30] sm:$0xff]
        %v6409 = vld [vmem:[#allocation3 + $0x38] sm:$0xff]
        %v6410 = vld [vmem:[#allocation3 + $0x40] sm:$0xff]
        %v6411 = vld [vmem:[#allocation3 + $0x48] sm:$0xff]
        %v6412 = vld [vmem:[#allocation3 + $0x50] sm:$0xff]
        %v6413 = vld [vmem:[#allocation3 + $0x58] sm:$0xff]
        %v6414 = vld [vmem:[#allocation3 + $0x60] sm:$0xff]
        %v6415 = vld [vmem:[#allocation3 + $0x68] sm:$0xff]
        %v6416 = vld [vmem:[#allocation3 + $0x70] sm:$0xff]
        %v6417 = vld [vmem:[#allocation3 + $0x78] sm:$0xff]
        %v6418 = vld [vmem:[#allocation3 + $0x80] sm:$0xff]
        %v6419 = vld [vmem:[#allocation3 + $0x88] sm:$0xff]
        %v6420 = vld [vmem:[#allocation3 + $0x90] sm:$0xff]
        %v6421 = vld [vmem:[#allocation3 + $0x98] sm:$0xff]
        %v6422 = vld [vmem:[#allocation3 + $0xa0] sm:$0xff]
        %v6423 = vld [vmem:[#allocation3 + $0xa8] sm:$0xff]
        %v6424 = vld [vmem:[#allocation3 + $0xb0] sm:$0xff]
        %v6425 = vld [vmem:[#allocation3 + $0xb8] sm:$0xff]
        %v6426 = vld [vmem:[#allocation3 + $0xc0] sm:$0xff]
        %v6427 = vld [vmem:[#allocation3 + $0xc8] sm:$0xff]
        %v6428 = vld [vmem:[#allocation3 + $0xd0] sm:$0xff]
        %v6429 = vld [vmem:[#allocation3 + $0xd8] sm:$0xff]
        %v6430 = vld [vmem:[#allocation3 + $0xe0] sm:$0xff]
        %v6431 = vld [vmem:[#allocation3 + $0xe8] sm:$0xff]
        %v6432 = vld [vmem:[#allocation3 + $0xf0] sm:$0xff]
        %v6433 = vld [vmem:[#allocation3 + $0xf8] sm:$0xff]
        %s6434 = scalar_lea.vmem [#allocation12], 3584
        %v6435 = vld [vmem:[%s6434] sm:$0xff]
        %v6436 = vld [vmem:[%s6434 + $0x8] sm:$0xff]
        %v6437 = vld [vmem:[%s6434 + $0x10] sm:$0xff]
        %v6438 = vld [vmem:[%s6434 + $0x18] sm:$0xff]
        %v6439 = vld [vmem:[%s6434 + $0x20] sm:$0xff]
        %v6440 = vld [vmem:[%s6434 + $0x28] sm:$0xff]
        %v6441 = vld [vmem:[%s6434 + $0x30] sm:$0xff]
        %v6442 = vld [vmem:[%s6434 + $0x38] sm:$0xff]
        %v6443 = vld [vmem:[%s6434 + $0x40] sm:$0xff]
        %v6444 = vld [vmem:[%s6434 + $0x48] sm:$0xff]
        %v6445 = vld [vmem:[%s6434 + $0x50] sm:$0xff]
        %v6446 = vld [vmem:[%s6434 + $0x58] sm:$0xff]
        %v6447 = vld [vmem:[%s6434 + $0x60] sm:$0xff]
        %v6448 = vld [vmem:[%s6434 + $0x68] sm:$0xff]
        %v6449 = vld [vmem:[%s6434 + $0x70] sm:$0xff]
        %v6450 = vld [vmem:[%s6434 + $0x78] sm:$0xff]
        %v6451 = vld [vmem:[%s6434 + $0x80] sm:$0xff]
        %v6452 = vld [vmem:[%s6434 + $0x88] sm:$0xff]
        %v6453 = vld [vmem:[%s6434 + $0x90] sm:$0xff]
        %v6454 = vld [vmem:[%s6434 + $0x98] sm:$0xff]
        %v6455 = vld [vmem:[%s6434 + $0xa0] sm:$0xff]
        %v6456 = vld [vmem:[%s6434 + $0xa8] sm:$0xff]
        %v6457 = vld [vmem:[%s6434 + $0xb0] sm:$0xff]
        %v6458 = vld [vmem:[%s6434 + $0xb8] sm:$0xff]
        %v6459 = vld [vmem:[%s6434 + $0xc0] sm:$0xff]
        %v6460 = vld [vmem:[%s6434 + $0xc8] sm:$0xff]
        %v6461 = vld [vmem:[%s6434 + $0xd0] sm:$0xff]
        %v6462 = vld [vmem:[%s6434 + $0xd8] sm:$0xff]
        %v6463 = vld [vmem:[%s6434 + $0xe0] sm:$0xff]
        %v6464 = vld [vmem:[%s6434 + $0xe8] sm:$0xff]
        %v6465 = vld [vmem:[%s6434 + $0xf0] sm:$0xff]
        %v6466 = vld [vmem:[%s6434 + $0xf8] sm:$0xff]
        %v6467 = vld [vmem:[%s6434 + $0x100] sm:$0xff]
        %v6468 = vld [vmem:[%s6434 + $0x108] sm:$0xff]
        %v6469 = vld [vmem:[%s6434 + $0x110] sm:$0xff]
        %v6470 = vld [vmem:[%s6434 + $0x118] sm:$0xff]
        %v6471 = vld [vmem:[%s6434 + $0x120] sm:$0xff]
        %v6472 = vld [vmem:[%s6434 + $0x128] sm:$0xff]
        %v6473 = vld [vmem:[%s6434 + $0x130] sm:$0xff]
        %v6474 = vld [vmem:[%s6434 + $0x138] sm:$0xff]
        %v6475 = vld [vmem:[%s6434 + $0x140] sm:$0xff]
        %v6476 = vld [vmem:[%s6434 + $0x148] sm:$0xff]
        %v6477 = vld [vmem:[%s6434 + $0x150] sm:$0xff]
        %v6478 = vld [vmem:[%s6434 + $0x158] sm:$0xff]
        %v6479 = vld [vmem:[%s6434 + $0x160] sm:$0xff]
        %v6480 = vld [vmem:[%s6434 + $0x168] sm:$0xff]
        %v6481 = vld [vmem:[%s6434 + $0x170] sm:$0xff]
        %v6482 = vld [vmem:[%s6434 + $0x178] sm:$0xff]
        %v6483 = vld [vmem:[%s6434 + $0x180] sm:$0xff]
        %v6484 = vld [vmem:[%s6434 + $0x188] sm:$0xff]
        %v6485 = vld [vmem:[%s6434 + $0x190] sm:$0xff]
        %v6486 = vld [vmem:[%s6434 + $0x198] sm:$0xff]
        %v6487 = vld [vmem:[%s6434 + $0x1a0] sm:$0xff]
        %v6488 = vld [vmem:[%s6434 + $0x1a8] sm:$0xff]
        %v6489 = vld [vmem:[%s6434 + $0x1b0] sm:$0xff]
        %v6490 = vld [vmem:[%s6434 + $0x1b8] sm:$0xff]
        %v6491 = vld [vmem:[%s6434 + $0x1c0] sm:$0xff]
        %v6492 = vld [vmem:[%s6434 + $0x1c8] sm:$0xff]
        %v6493 = vld [vmem:[%s6434 + $0x1d0] sm:$0xff]
        %v6494 = vld [vmem:[%s6434 + $0x1d8] sm:$0xff]
        %v6495 = vld [vmem:[%s6434 + $0x1e0] sm:$0xff]
        %v6496 = vld [vmem:[%s6434 + $0x1e8] sm:$0xff]
        %v6497 = vld [vmem:[%s6434 + $0x1f0] sm:$0xff]
        %v6498 = vld [vmem:[%s6434 + $0x1f8] sm:$0xff]
        %v6499 = vunpack.c.l.b16 %v6303
        %v6500 = vunpack.c.h.b16 %v6303
        %v6501 = vunpack.c.l.b16 %v6317
        %v6502 = vunpack.c.h.b16 %v6317
        %v6503 = vunpack.c.l.b16 %v6331
        %v6504 = vunpack.c.h.b16 %v6331
        %v6505 = vunpack.c.l.b16 %v6345
        %v6506 = vunpack.c.h.b16 %v6345
        %v6507 = vunpack.c.l.b16 %v6359
        %v6508 = vunpack.c.h.b16 %v6359
        %v6509 = vunpack.c.l.b16 %v6373
        %v6510 = vunpack.c.h.b16 %v6373
        %v6511 = vunpack.c.l.b16 %v6387
        %v6512 = vunpack.c.h.b16 %v6387
        %v6513 = vunpack.c.l.b16 %v6401
        %v6514 = vunpack.c.h.b16 %v6401
        %v6515 = vpack.c.b16 %v6501, %v6499
        %v6516 = vpack.c.b16 %v6502, %v6500
        %v6517 = vpack.c.b16 %v6505, %v6503
        %v6518 = vpack.c.b16 %v6506, %v6504
        %v6519 = vpack.c.b16 %v6509, %v6507
        %v6520 = vpack.c.b16 %v6510, %v6508
        %v6521 = vpack.c.b16 %v6513, %v6511
        %v6522 = vpack.c.b16 %v6514, %v6512
        %v6595 = vunpack.c.l.b16 %v6435
        %v6596 = vunpack.c.h.b16 %v6435
        %v6597 = vunpack.c.l.b16 %v6436
        %v6598 = vunpack.c.h.b16 %v6436
        %v6599 = vunpack.c.l.b16 %v6437
        %v6600 = vunpack.c.h.b16 %v6437
        %v6601 = vunpack.c.l.b16 %v6438
        %v6602 = vunpack.c.h.b16 %v6438
        %v6603 = vunpack.c.l.b16 %v6439
        %v6604 = vunpack.c.h.b16 %v6439
        %v6605 = vunpack.c.l.b16 %v6440
        %v6606 = vunpack.c.h.b16 %v6440
        %v6607 = vunpack.c.l.b16 %v6441
        %v6608 = vunpack.c.h.b16 %v6441
        %v6609 = vunpack.c.l.b16 %v6442
        %v6610 = vunpack.c.h.b16 %v6442
        %v6611 = vunpack.c.l.b16 %v6443
        %v6612 = vunpack.c.h.b16 %v6443
        %v6613 = vunpack.c.l.b16 %v6444
        %v6614 = vunpack.c.h.b16 %v6444
        %v6615 = vunpack.c.l.b16 %v6445
        %v6616 = vunpack.c.h.b16 %v6445
        %v6617 = vunpack.c.l.b16 %v6446
        %v6618 = vunpack.c.h.b16 %v6446
        %v6619 = vunpack.c.l.b16 %v6447
        %v6620 = vunpack.c.h.b16 %v6447
        %v6621 = vunpack.c.l.b16 %v6448
        %v6622 = vunpack.c.h.b16 %v6448
        %v6623 = vunpack.c.l.b16 %v6449
        %v6624 = vunpack.c.h.b16 %v6449
        %v6625 = vunpack.c.l.b16 %v6450
        %v6626 = vunpack.c.h.b16 %v6450
        %v6627 = vunpack.c.l.b16 %v6451
        %v6628 = vunpack.c.h.b16 %v6451
        %v6629 = vunpack.c.l.b16 %v6452
        %v6630 = vunpack.c.h.b16 %v6452
        %v6631 = vunpack.c.l.b16 %v6453
        %v6632 = vunpack.c.h.b16 %v6453
        %v6633 = vunpack.c.l.b16 %v6454
        %v6634 = vunpack.c.h.b16 %v6454
        %v6635 = vunpack.c.l.b16 %v6455
        %v6636 = vunpack.c.h.b16 %v6455
        %v6637 = vunpack.c.l.b16 %v6456
        %v6638 = vunpack.c.h.b16 %v6456
        %v6639 = vunpack.c.l.b16 %v6457
        %v6640 = vunpack.c.h.b16 %v6457
        %v6641 = vunpack.c.l.b16 %v6458
        %v6642 = vunpack.c.h.b16 %v6458
        %v6643 = vunpack.c.l.b16 %v6459
        %v6644 = vunpack.c.h.b16 %v6459
        %v6645 = vunpack.c.l.b16 %v6460
        %v6646 = vunpack.c.h.b16 %v6460
        %v6647 = vunpack.c.l.b16 %v6461
        %v6648 = vunpack.c.h.b16 %v6461
        %v6649 = vunpack.c.l.b16 %v6462
        %v6650 = vunpack.c.h.b16 %v6462
        %v6651 = vunpack.c.l.b16 %v6463
        %v6652 = vunpack.c.h.b16 %v6463
        %v6653 = vunpack.c.l.b16 %v6464
        %v6654 = vunpack.c.h.b16 %v6464
        %v6655 = vunpack.c.l.b16 %v6465
        %v6656 = vunpack.c.h.b16 %v6465
        %v6657 = vunpack.c.l.b16 %v6466
        %v6658 = vunpack.c.h.b16 %v6466
        %v6659 = vunpack.c.l.b16 %v6467
        %v6660 = vunpack.c.h.b16 %v6467
        %v6661 = vunpack.c.l.b16 %v6468
        %v6662 = vunpack.c.h.b16 %v6468
        %v6663 = vunpack.c.l.b16 %v6469
        %v6664 = vunpack.c.h.b16 %v6469
        %v6665 = vunpack.c.l.b16 %v6470
        %v6666 = vunpack.c.h.b16 %v6470
        %v6667 = vunpack.c.l.b16 %v6471
        %v6668 = vunpack.c.h.b16 %v6471
        %v6669 = vunpack.c.l.b16 %v6472
        %v6670 = vunpack.c.h.b16 %v6472
        %v6671 = vunpack.c.l.b16 %v6473
        %v6672 = vunpack.c.h.b16 %v6473
        %v6673 = vunpack.c.l.b16 %v6474
        %v6674 = vunpack.c.h.b16 %v6474
        %v6675 = vunpack.c.l.b16 %v6475
        %v6676 = vunpack.c.h.b16 %v6475
        %v6677 = vunpack.c.l.b16 %v6476
        %v6678 = vunpack.c.h.b16 %v6476
        %v6679 = vunpack.c.l.b16 %v6477
        %v6680 = vunpack.c.h.b16 %v6477
        %v6681 = vunpack.c.l.b16 %v6478
        %v6682 = vunpack.c.h.b16 %v6478
        %v6683 = vunpack.c.l.b16 %v6479
        %v6684 = vunpack.c.h.b16 %v6479
        %v6685 = vunpack.c.l.b16 %v6480
        %v6686 = vunpack.c.h.b16 %v6480
        %v6687 = vunpack.c.l.b16 %v6481
        %v6688 = vunpack.c.h.b16 %v6481
        %v6689 = vunpack.c.l.b16 %v6482
        %v6690 = vunpack.c.h.b16 %v6482
        %v6691 = vunpack.c.l.b16 %v6483
        %v6692 = vunpack.c.h.b16 %v6483
        %v6693 = vunpack.c.l.b16 %v6484
        %v6694 = vunpack.c.h.b16 %v6484
        %v6695 = vunpack.c.l.b16 %v6485
        %v6696 = vunpack.c.h.b16 %v6485
        %v6697 = vunpack.c.l.b16 %v6486
        %v6698 = vunpack.c.h.b16 %v6486
        %v6699 = vunpack.c.l.b16 %v6487
        %v6700 = vunpack.c.h.b16 %v6487
        %v6701 = vunpack.c.l.b16 %v6488
        %v6702 = vunpack.c.h.b16 %v6488
        %v6703 = vunpack.c.l.b16 %v6489
        %v6704 = vunpack.c.h.b16 %v6489
        %v6705 = vunpack.c.l.b16 %v6490
        %v6706 = vunpack.c.h.b16 %v6490
        %v6707 = vunpack.c.l.b16 %v6491
        %v6708 = vunpack.c.h.b16 %v6491
        %v6709 = vunpack.c.l.b16 %v6492
        %v6710 = vunpack.c.h.b16 %v6492
        %v6711 = vunpack.c.l.b16 %v6493
        %v6712 = vunpack.c.h.b16 %v6493
        %v6713 = vunpack.c.l.b16 %v6494
        %v6714 = vunpack.c.h.b16 %v6494
        %v6715 = vunpack.c.l.b16 %v6495
        %v6716 = vunpack.c.h.b16 %v6495
        %v6717 = vunpack.c.l.b16 %v6496
        %v6718 = vunpack.c.h.b16 %v6496
        %v6719 = vunpack.c.l.b16 %v6497
        %v6720 = vunpack.c.h.b16 %v6497
        %v6721 = vunpack.c.l.b16 %v6498
        %v6722 = vunpack.c.h.b16 %v6498
        %v6723 = vpack.c.b16 %v6599, %v6595
        %v6724 = vpack.c.b16 %v6600, %v6596
        %v6725 = vpack.c.b16 %v6601, %v6597
        %v6726 = vpack.c.b16 %v6602, %v6598
        %v6727 = vpack.c.b16 %v6607, %v6603
        %v6728 = vpack.c.b16 %v6608, %v6604
        %v6729 = vpack.c.b16 %v6609, %v6605
        %v6730 = vpack.c.b16 %v6610, %v6606
        %v6731 = vpack.c.b16 %v6615, %v6611
        %v6732 = vpack.c.b16 %v6616, %v6612
        %v6733 = vpack.c.b16 %v6617, %v6613
        %v6734 = vpack.c.b16 %v6618, %v6614
        %v6735 = vpack.c.b16 %v6623, %v6619
        %v6736 = vpack.c.b16 %v6624, %v6620
        %v6737 = vpack.c.b16 %v6625, %v6621
        %v6738 = vpack.c.b16 %v6626, %v6622
        %v6739 = vpack.c.b16 %v6631, %v6627
        %v6740 = vpack.c.b16 %v6632, %v6628
        %v6741 = vpack.c.b16 %v6633, %v6629
        %v6742 = vpack.c.b16 %v6634, %v6630
        %v6743 = vpack.c.b16 %v6639, %v6635
        %v6744 = vpack.c.b16 %v6640, %v6636
        %v6745 = vpack.c.b16 %v6641, %v6637
        %v6746 = vpack.c.b16 %v6642, %v6638
        %v6747 = vpack.c.b16 %v6647, %v6643
        %v6748 = vpack.c.b16 %v6648, %v6644
        %v6749 = vpack.c.b16 %v6649, %v6645
        %v6750 = vpack.c.b16 %v6650, %v6646
        %v6751 = vpack.c.b16 %v6655, %v6651
        %v6752 = vpack.c.b16 %v6656, %v6652
        %v6753 = vpack.c.b16 %v6657, %v6653
        %v6754 = vpack.c.b16 %v6658, %v6654
        %v6755 = vpack.c.b16 %v6663, %v6659
        %v6756 = vpack.c.b16 %v6664, %v6660
        %v6757 = vpack.c.b16 %v6665, %v6661
        %v6758 = vpack.c.b16 %v6666, %v6662
        %v6759 = vpack.c.b16 %v6671, %v6667
        %v6760 = vpack.c.b16 %v6672, %v6668
        %v6761 = vpack.c.b16 %v6673, %v6669
        %v6762 = vpack.c.b16 %v6674, %v6670
        %v6763 = vpack.c.b16 %v6679, %v6675
        %v6764 = vpack.c.b16 %v6680, %v6676
        %v6765 = vpack.c.b16 %v6681, %v6677
        %v6766 = vpack.c.b16 %v6682, %v6678
        %v6767 = vpack.c.b16 %v6687, %v6683
        %v6768 = vpack.c.b16 %v6688, %v6684
        %v6769 = vpack.c.b16 %v6689, %v6685
        %v6770 = vpack.c.b16 %v6690, %v6686
        %v6771 = vpack.c.b16 %v6695, %v6691
        %v6772 = vpack.c.b16 %v6696, %v6692
        %v6773 = vpack.c.b16 %v6697, %v6693
        %v6774 = vpack.c.b16 %v6698, %v6694
        %v6775 = vpack.c.b16 %v6703, %v6699
        %v6776 = vpack.c.b16 %v6704, %v6700
        %v6777 = vpack.c.b16 %v6705, %v6701
        %v6778 = vpack.c.b16 %v6706, %v6702
        %v6779 = vpack.c.b16 %v6711, %v6707
        %v6780 = vpack.c.b16 %v6712, %v6708
        %v6781 = vpack.c.b16 %v6713, %v6709
        %v6782 = vpack.c.b16 %v6714, %v6710
        %v6783 = vpack.c.b16 %v6719, %v6715
        %v6784 = vpack.c.b16 %v6720, %v6716
        %v6785 = vpack.c.b16 %v6721, %v6717
        %v6786 = vpack.c.b16 %v6722, %v6718
        %6851 = vmatprep.subr.bf16.mxu0 %v6724
        %6852 = vmatpush1.bf16.msra.mxu0 %v6723
        %6853 = vmatprep.subr.bf16.mxu0 %v6728
        %6854 = vmatpush1.bf16.msra.mxu0 %v6727
        %6855 = vmatprep.subr.bf16.mxu0 %v6732
        %6856 = vmatpush1.bf16.msra.mxu0 %v6731
        %6857 = vmatprep.subr.bf16.mxu0 %v6736
        %6858 = vmatpush1.bf16.msra.mxu0 %v6735
        %6859 = vmatprep.subr.bf16.mxu0 %v6740
        %6860 = vmatpush1.bf16.msra.mxu0 %v6739
        %6861 = vmatprep.subr.bf16.mxu0 %v6744
        %6862 = vmatpush1.bf16.msra.mxu0 %v6743
        %6863 = vmatprep.subr.bf16.mxu0 %v6748
        %6864 = vmatpush1.bf16.msra.mxu0 %v6747
        %6865 = vmatprep.subr.bf16.mxu0 %v6752
        %6866 = vmatpush1.bf16.msra.mxu0 %v6751
        %6867 = vmatprep.subr.bf16.mxu0 %v6756
        %6868 = vmatpush1.bf16.msra.mxu0 %v6755
        %6869 = vmatprep.subr.bf16.mxu0 %v6760
        %6870 = vmatpush1.bf16.msra.mxu0 %v6759
        %6871 = vmatprep.subr.bf16.mxu0 %v6764
        %6872 = vmatpush1.bf16.msra.mxu0 %v6763
        %6873 = vmatprep.subr.bf16.mxu0 %v6768
        %6874 = vmatpush1.bf16.msra.mxu0 %v6767
        %6875 = vmatprep.subr.bf16.mxu0 %v6772
        %6876 = vmatpush1.bf16.msra.mxu0 %v6771
        %6877 = vmatprep.subr.bf16.mxu0 %v6776
        %6878 = vmatpush1.bf16.msra.mxu0 %v6775
        %6879 = vmatprep.subr.bf16.mxu0 %v6780
        %6880 = vmatpush1.bf16.msra.mxu0 %v6779
        %6881 = vmatprep.subr.bf16.mxu0 %v6784
        %6882 = vmatpush1.bf16.msra.mxu0 %v6783
        %6883 = vmatprep.mubr.bf16.mxu0 %v6516
        %6884 = vmatmul.mubr.bf16.gmra.mrb[0].mxu0 %v6515
        %v6885 = vpop.f32.mrb[0].mxu0
        %v6886 = vadd.f32 0.0, %v6885
        %v6887 = vpop.f32.mrb[0].mxu0
        %v6888 = vadd.f32 0.0, %v6887
        %v6889 = vpop.f32.mrb[0].mxu0
        %v6890 = vadd.f32 0.0, %v6889
        %v6891 = vpop.f32.mrb[0].mxu0
        %v6892 = vadd.f32 0.0, %v6891
        %6893 = vmatprep.mubr.bf16.mxu0 %v6518
        %6894 = vmatmul.mubr.bf16.gmra.mrb[0].mxu0 %v6517
        %v6895 = vpop.f32.mrb[0].mxu0
        %v6896 = vadd.f32 0.0, %v6895
        %v6897 = vpop.f32.mrb[0].mxu0
        %v6898 = vadd.f32 0.0, %v6897
        %v6899 = vpop.f32.mrb[0].mxu0
        %v6900 = vadd.f32 0.0, %v6899
        %v6901 = vpop.f32.mrb[0].mxu0
        %v6902 = vadd.f32 0.0, %v6901
        %6903 = vmatprep.mubr.bf16.mxu0 %v6520
        %6904 = vmatmul.mubr.bf16.gmra.mrb[0].mxu0 %v6519
        %v6905 = vpop.f32.mrb[0].mxu0
        %v6906 = vadd.f32 0.0, %v6905
        %v6907 = vpop.f32.mrb[0].mxu0
        %v6908 = vadd.f32 0.0, %v6907
        %v6909 = vpop.f32.mrb[0].mxu0
        %v6910 = vadd.f32 0.0, %v6909
        %v6911 = vpop.f32.mrb[0].mxu0
        %v6912 = vadd.f32 0.0, %v6911
        %6913 = vmatprep.mubr.bf16.mxu0 %v6522
        %6914 = vmatmul.mubr.bf16.gmra.mrb[0].mxu0 %v6521
        %v6915 = vpop.f32.mrb[0].mxu0
        %v6916 = vadd.f32 0.0, %v6915
        %v6917 = vpop.f32.mrb[0].mxu0
        %v6918 = vadd.f32 0.0, %v6917
        %v6919 = vpop.f32.mrb[0].mxu0
        %v6920 = vadd.f32 0.0, %v6919
        %v6921 = vpop.f32.mrb[0].mxu0
        %v6922 = vadd.f32 0.0, %v6921
        %6923 = vdwg.mxu0
        %6924 = vmatprep.subr.bf16.mxu0 %v6726
        %6925 = vmatpush1.bf16.msra.mxu0 %v6725
        %6926 = vmatprep.subr.bf16.mxu0 %v6730
        %6927 = vmatpush1.bf16.msra.mxu0 %v6729
        %6928 = vmatprep.subr.bf16.mxu0 %v6734
        %6929 = vmatpush1.bf16.msra.mxu0 %v6733
        %6930 = vmatprep.subr.bf16.mxu0 %v6738
        %6931 = vmatpush1.bf16.msra.mxu0 %v6737
        %6932 = vmatprep.subr.bf16.mxu0 %v6742
        %6933 = vmatpush1.bf16.msra.mxu0 %v6741
        %6934 = vmatprep.subr.bf16.mxu0 %v6746
        %6935 = vmatpush1.bf16.msra.mxu0 %v6745
        %6936 = vmatprep.subr.bf16.mxu0 %v6750
        %6937 = vmatpush1.bf16.msra.mxu0 %v6749
        %6938 = vmatprep.subr.bf16.mxu0 %v6754
        %6939 = vmatpush1.bf16.msra.mxu0 %v6753
        %6940 = vmatprep.subr.bf16.mxu0 %v6758
        %6941 = vmatpush1.bf16.msra.mxu0 %v6757
        %6942 = vmatprep.subr.bf16.mxu0 %v6762
        %6943 = vmatpush1.bf16.msra.mxu0 %v6761
        %6944 = vmatprep.subr.bf16.mxu0 %v6766
        %6945 = vmatpush1.bf16.msra.mxu0 %v6765
        %6946 = vmatprep.subr.bf16.mxu0 %v6770
        %6947 = vmatpush1.bf16.msra.mxu0 %v6769
        %6948 = vmatprep.subr.bf16.mxu0 %v6774
        %6949 = vmatpush1.bf16.msra.mxu0 %v6773
        %6950 = vmatprep.subr.bf16.mxu0 %v6778
        %6951 = vmatpush1.bf16.msra.mxu0 %v6777
        %6952 = vmatprep.subr.bf16.mxu0 %v6782
        %6953 = vmatpush1.bf16.msra.mxu0 %v6781
        %6954 = vmatprep.subr.bf16.mxu0 %v6786
        %6955 = vmatpush1.bf16.msra.mxu0 %v6785
        %6956 = vmatprep.mubr.bf16.mxu0 %v6516
        %6957 = vmatmul.mubr.bf16.gmra.mrb[0].mxu0 %v6515
        %v6958 = vpop.f32.mrb[0].mxu0
        %v6959 = vadd.f32 0.0, %v6958
        %v6960 = vpop.f32.mrb[0].mxu0
        %v6961 = vadd.f32 0.0, %v6960
        %v6962 = vpop.f32.mrb[0].mxu0
        %v6963 = vadd.f32 0.0, %v6962
        %v6964 = vpop.f32.mrb[0].mxu0
        %v6965 = vadd.f32 0.0, %v6964
        %6966 = vmatprep.mubr.bf16.mxu0 %v6518
        %6967 = vmatmul.mubr.bf16.gmra.mrb[0].mxu0 %v6517
        %v6968 = vpop.f32.mrb[0].mxu0
        %v6969 = vadd.f32 0.0, %v6968
        %v6970 = vpop.f32.mrb[0].mxu0
        %v6971 = vadd.f32 0.0, %v6970
        %v6972 = vpop.f32.mrb[0].mxu0
        %v6973 = vadd.f32 0.0, %v6972
        %v6974 = vpop.f32.mrb[0].mxu0
        %v6975 = vadd.f32 0.0, %v6974
        %6976 = vmatprep.mubr.bf16.mxu0 %v6520
        %6977 = vmatmul.mubr.bf16.gmra.mrb[0].mxu0 %v6519
        %v6978 = vpop.f32.mrb[0].mxu0
        %v6979 = vadd.f32 0.0, %v6978
        %v6980 = vpop.f32.mrb[0].mxu0
        %v6981 = vadd.f32 0.0, %v6980
        %v6982 = vpop.f32.mrb[0].mxu0
        %v6983 = vadd.f32 0.0, %v6982
        %v6984 = vpop.f32.mrb[0].mxu0
        %v6985 = vadd.f32 0.0, %v6984
        %6986 = vmatprep.mubr.bf16.mxu0 %v6522
        %6987 = vmatmul.mubr.bf16.gmra.mrb[0].mxu0 %v6521
        %v6988 = vpop.f32.mrb[0].mxu0
        %v6989 = vadd.f32 0.0, %v6988
        %v6990 = vpop.f32.mrb[0].mxu0
        %v6991 = vadd.f32 0.0, %v6990
        %v6992 = vpop.f32.mrb[0].mxu0
        %v6993 = vadd.f32 0.0, %v6992
        %v6994 = vpop.f32.mrb[0].mxu0
        %v6995 = vadd.f32 0.0, %v6994
        %6996 = vdwg.mxu0
        %v6997 = vadd.f32 %v6402, %v6886
        %v6998 = vadd.f32 %v6403, %v6888
        %v6999 = vadd.f32 %v6404, %v6959
        %v7000 = vadd.f32 %v6405, %v6961
        %v7001 = vadd.f32 %v6406, %v6890
        %v7002 = vadd.f32 %v6407, %v6892
        %v7003 = vadd.f32 %v6408, %v6963
        %v7004 = vadd.f32 %v6409, %v6965
        %v7005 = vadd.f32 %v6410, %v6896
        %v7006 = vadd.f32 %v6411, %v6898
        %v7007 = vadd.f32 %v6412, %v6969
        %v7008 = vadd.f32 %v6413, %v6971
        %v7009 = vadd.f32 %v6414, %v6900
        %v7010 = vadd.f32 %v6415, %v6902
        %v7011 = vadd.f32 %v6416, %v6973
        %v7012 = vadd.f32 %v6417, %v6975
        %v7013 = vadd.f32 %v6418, %v6906
        %v7014 = vadd.f32 %v6419, %v6908
        %v7015 = vadd.f32 %v6420, %v6979
        %v7016 = vadd.f32 %v6421, %v6981
        %v7017 = vadd.f32 %v6422, %v6910
        %v7018 = vadd.f32 %v6423, %v6912
        %v7019 = vadd.f32 %v6424, %v6983
        %v7020 = vadd.f32 %v6425, %v6985
        %v7021 = vadd.f32 %v6426, %v6916
        %v7022 = vadd.f32 %v6427, %v6918
        %v7023 = vadd.f32 %v6428, %v6989
        %v7024 = vadd.f32 %v6429, %v6991
        %v7025 = vadd.f32 %v6430, %v6920
        %v7026 = vadd.f32 %v6431, %v6922
        %v7027 = vadd.f32 %v6432, %v6993
        %v7028 = vadd.f32 %v6433, %v6995
        %7029 = vst [vmem:[#allocation3] sm:$0xff] %v6997
        %7030 = vst [vmem:[#allocation3 + $0x8] sm:$0xff] %v6998
        %7031 = vst [vmem:[#allocation3 + $0x10] sm:$0xff] %v6999
        %7032 = vst [vmem:[#allocation3 + $0x18] sm:$0xff] %v7000
        %7033 = vst [vmem:[#allocation3 + $0x20] sm:$0xff] %v7001
        %7034 = vst [vmem:[#allocation3 + $0x28] sm:$0xff] %v7002
        %7035 = vst [vmem:[#allocation3 + $0x30] sm:$0xff] %v7003
        %7036 = vst [vmem:[#allocation3 + $0x38] sm:$0xff] %v7004
        %7037 = vst [vmem:[#allocation3 + $0x40] sm:$0xff] %v7005
        %7038 = vst [vmem:[#allocation3 + $0x48] sm:$0xff] %v7006
        %7039 = vst [vmem:[#allocation3 + $0x50] sm:$0xff] %v7007
        %7040 = vst [vmem:[#allocation3 + $0x58] sm:$0xff] %v7008
        %7041 = vst [vmem:[#allocation3 + $0x60] sm:$0xff] %v7009
        %7042 = vst [vmem:[#allocation3 + $0x68] sm:$0xff] %v7010
        %7043 = vst [vmem:[#allocation3 + $0x70] sm:$0xff] %v7011
        %7044 = vst [vmem:[#allocation3 + $0x78] sm:$0xff] %v7012
        %7045 = vst [vmem:[#allocation3 + $0x80] sm:$0xff] %v7013
        %7046 = vst [vmem:[#allocation3 + $0x88] sm:$0xff] %v7014
        %7047 = vst [vmem:[#allocation3 + $0x90] sm:$0xff] %v7015
        %7048 = vst [vmem:[#allocation3 + $0x98] sm:$0xff] %v7016
        %7049 = vst [vmem:[#allocation3 + $0xa0] sm:$0xff] %v7017
        %7050 = vst [vmem:[#allocation3 + $0xa8] sm:$0xff] %v7018
        %7051 = vst [vmem:[#allocation3 + $0xb0] sm:$0xff] %v7019
        %7052 = vst [vmem:[#allocation3 + $0xb8] sm:$0xff] %v7020
        %7053 = vst [vmem:[#allocation3 + $0xc0] sm:$0xff] %v7021
        %7054 = vst [vmem:[#allocation3 + $0xc8] sm:$0xff] %v7022
        %7055 = vst [vmem:[#allocation3 + $0xd0] sm:$0xff] %v7023
        %7056 = vst [vmem:[#allocation3 + $0xd8] sm:$0xff] %v7024
        %7057 = vst [vmem:[#allocation3 + $0xe0] sm:$0xff] %v7025
        %7058 = vst [vmem:[#allocation3 + $0xe8] sm:$0xff] %v7026
        %7059 = vst [vmem:[#allocation3 + $0xf0] sm:$0xff] %v7027
        %7060 = vst [vmem:[#allocation3 + $0xf8] sm:$0xff] %v7028
        %v7061 = vld [vmem:[%s5598] sm:$0xee]
        %v7062 = vld [vmem:[%s5598 + $0x8] sm:$0x11]
        %v7063 = vld [vmem:[%s5598 + $0x10] sm:$0xee]
        %v7064 = vld [vmem:[%s5598 + $0x18] sm:$0x11]
        %v7065 = vld [vmem:[%s5598 + $0x20] sm:$0xee]
        %v7066 = vld [vmem:[%s5598 + $0x28] sm:$0x11]
        %v7067 = vld [vmem:[%s5598 + $0x30] sm:$0xee]
        %v7068 = vld [vmem:[%s5598 + $0x38] sm:$0x11]
        %v7069 = vld [vmem:[%s5598 + $0x40] sm:$0xee]
        %v7070 = vld [vmem:[%s5598 + $0x48] sm:$0x11]
        %v7071 = vld [vmem:[%s5598 + $0x50] sm:$0xee]
        %v7072 = vld [vmem:[%s5598 + $0x58] sm:$0x11]
        %v7073 = vld [vmem:[%s5598 + $0x60] sm:$0xee]
        %v7074 = vld [vmem:[%s5598 + $0x68] sm:$0x11]
        %v7075 = vld [vmem:[%s5598 + $0x70] sm:$0xee]
        %v7076 = vld [vmem:[%s5598 + $0x78] sm:$0x11]
        %v7093 = vrot.slane %v7061, 5
        %v7094 = vrot.slane %v7093, 4
        %v7095 = vrot.slane %v7062, 5
        %v7096 = vsel %vm2721, %v7094, %v7095
        %v7097 = vrot.slane %v7063, 5
        %v7098 = vrot.slane %v7097, 4
        %v7099 = vrot.slane %v7064, 5
        %v7100 = vsel %vm2721, %v7098, %v7099
        %v7101 = vrot.slane %v7065, 5
        %v7102 = vrot.slane %v7101, 4
        %v7103 = vrot.slane %v7066, 5
        %v7104 = vsel %vm2721, %v7102, %v7103
        %v7105 = vrot.slane %v7067, 5
        %v7106 = vrot.slane %v7105, 4
        %v7107 = vrot.slane %v7068, 5
        %v7108 = vsel %vm2721, %v7106, %v7107
        %v7109 = vrot.slane %v7069, 5
        %v7110 = vrot.slane %v7109, 4
        %v7111 = vrot.slane %v7070, 5
        %v7112 = vsel %vm2721, %v7110, %v7111
        %v7113 = vrot.slane %v7071, 5
        %v7114 = vrot.slane %v7113, 4
        %v7115 = vrot.slane %v7072, 5
        %v7116 = vsel %vm2721, %v7114, %v7115
        %v7117 = vrot.slane %v7073, 5
        %v7118 = vrot.slane %v7117, 4
        %v7119 = vrot.slane %v7074, 5
        %v7120 = vsel %vm2721, %v7118, %v7119
        %v7121 = vrot.slane %v7075, 5
        %v7122 = vrot.slane %v7121, 4
        %v7123 = vrot.slane %v7076, 5
        %v7124 = vsel %vm2721, %v7122, %v7123
        %v7125 = vld [vmem:[#allocation3] sm:$0xff]
        %v7126 = vld [vmem:[#allocation3 + $0x8] sm:$0xff]
        %v7127 = vld [vmem:[#allocation3 + $0x10] sm:$0xff]
        %v7128 = vld [vmem:[#allocation3 + $0x18] sm:$0xff]
        %v7129 = vld [vmem:[#allocation3 + $0x20] sm:$0xff]
        %v7130 = vld [vmem:[#allocation3 + $0x28] sm:$0xff]
        %v7131 = vld [vmem:[#allocation3 + $0x30] sm:$0xff]
        %v7132 = vld [vmem:[#allocation3 + $0x38] sm:$0xff]
        %v7133 = vld [vmem:[#allocation3 + $0x40] sm:$0xff]
        %v7134 = vld [vmem:[#allocation3 + $0x48] sm:$0xff]
        %v7135 = vld [vmem:[#allocation3 + $0x50] sm:$0xff]
        %v7136 = vld [vmem:[#allocation3 + $0x58] sm:$0xff]
        %v7137 = vld [vmem:[#allocation3 + $0x60] sm:$0xff]
        %v7138 = vld [vmem:[#allocation3 + $0x68] sm:$0xff]
        %v7139 = vld [vmem:[#allocation3 + $0x70] sm:$0xff]
        %v7140 = vld [vmem:[#allocation3 + $0x78] sm:$0xff]
        %v7141 = vld [vmem:[#allocation3 + $0x80] sm:$0xff]
        %v7142 = vld [vmem:[#allocation3 + $0x88] sm:$0xff]
        %v7143 = vld [vmem:[#allocation3 + $0x90] sm:$0xff]
        %v7144 = vld [vmem:[#allocation3 + $0x98] sm:$0xff]
        %v7145 = vld [vmem:[#allocation3 + $0xa0] sm:$0xff]
        %v7146 = vld [vmem:[#allocation3 + $0xa8] sm:$0xff]
        %v7147 = vld [vmem:[#allocation3 + $0xb0] sm:$0xff]
        %v7148 = vld [vmem:[#allocation3 + $0xb8] sm:$0xff]
        %v7149 = vld [vmem:[#allocation3 + $0xc0] sm:$0xff]
        %v7150 = vld [vmem:[#allocation3 + $0xc8] sm:$0xff]
        %v7151 = vld [vmem:[#allocation3 + $0xd0] sm:$0xff]
        %v7152 = vld [vmem:[#allocation3 + $0xd8] sm:$0xff]
        %v7153 = vld [vmem:[#allocation3 + $0xe0] sm:$0xff]
        %v7154 = vld [vmem:[#allocation3 + $0xe8] sm:$0xff]
        %v7155 = vld [vmem:[#allocation3 + $0xf0] sm:$0xff]
        %v7156 = vld [vmem:[#allocation3 + $0xf8] sm:$0xff]
        %s7157 = scalar_lea.vmem [#allocation12], 4096
        %v7158 = vld [vmem:[%s7157] sm:$0xff]
        %v7159 = vld [vmem:[%s7157 + $0x8] sm:$0xff]
        %v7160 = vld [vmem:[%s7157 + $0x10] sm:$0xff]
        %v7161 = vld [vmem:[%s7157 + $0x18] sm:$0xff]
        %v7162 = vld [vmem:[%s7157 + $0x20] sm:$0xff]
        %v7163 = vld [vmem:[%s7157 + $0x28] sm:$0xff]
        %v7164 = vld [vmem:[%s7157 + $0x30] sm:$0xff]
        %v7165 = vld [vmem:[%s7157 + $0x38] sm:$0xff]
        %v7166 = vld [vmem:[%s7157 + $0x40] sm:$0xff]
        %v7167 = vld [vmem:[%s7157 + $0x48] sm:$0xff]
        %v7168 = vld [vmem:[%s7157 + $0x50] sm:$0xff]
        %v7169 = vld [vmem:[%s7157 + $0x58] sm:$0xff]
        %v7170 = vld [vmem:[%s7157 + $0x60] sm:$0xff]
        %v7171 = vld [vmem:[%s7157 + $0x68] sm:$0xff]
        %v7172 = vld [vmem:[%s7157 + $0x70] sm:$0xff]
        %v7173 = vld [vmem:[%s7157 + $0x78] sm:$0xff]
        %v7174 = vld [vmem:[%s7157 + $0x80] sm:$0xff]
        %v7175 = vld [vmem:[%s7157 + $0x88] sm:$0xff]
        %v7176 = vld [vmem:[%s7157 + $0x90] sm:$0xff]
        %v7177 = vld [vmem:[%s7157 + $0x98] sm:$0xff]
        %v7178 = vld [vmem:[%s7157 + $0xa0] sm:$0xff]
        %v7179 = vld [vmem:[%s7157 + $0xa8] sm:$0xff]
        %v7180 = vld [vmem:[%s7157 + $0xb0] sm:$0xff]
        %v7181 = vld [vmem:[%s7157 + $0xb8] sm:$0xff]
        %v7182 = vld [vmem:[%s7157 + $0xc0] sm:$0xff]
        %v7183 = vld [vmem:[%s7157 + $0xc8] sm:$0xff]
        %v7184 = vld [vmem:[%s7157 + $0xd0] sm:$0xff]
        %v7185 = vld [vmem:[%s7157 + $0xd8] sm:$0xff]
        %v7186 = vld [vmem:[%s7157 + $0xe0] sm:$0xff]
        %v7187 = vld [vmem:[%s7157 + $0xe8] sm:$0xff]
        %v7188 = vld [vmem:[%s7157 + $0xf0] sm:$0xff]
        %v7189 = vld [vmem:[%s7157 + $0xf8] sm:$0xff]
        %v7190 = vld [vmem:[%s7157 + $0x100] sm:$0xff]
        %v7191 = vld [vmem:[%s7157 + $0x108] sm:$0xff]
        %v7192 = vld [vmem:[%s7157 + $0x110] sm:$0xff]
        %v7193 = vld [vmem:[%s7157 + $0x118] sm:$0xff]
        %v7194 = vld [vmem:[%s7157 + $0x120] sm:$0xff]
        %v7195 = vld [vmem:[%s7157 + $0x128] sm:$0xff]
        %v7196 = vld [vmem:[%s7157 + $0x130] sm:$0xff]
        %v7197 = vld [vmem:[%s7157 + $0x138] sm:$0xff]
        %v7198 = vld [vmem:[%s7157 + $0x140] sm:$0xff]
        %v7199 = vld [vmem:[%s7157 + $0x148] sm:$0xff]
        %v7200 = vld [vmem:[%s7157 + $0x150] sm:$0xff]
        %v7201 = vld [vmem:[%s7157 + $0x158] sm:$0xff]
        %v7202 = vld [vmem:[%s7157 + $0x160] sm:$0xff]
        %v7203 = vld [vmem:[%s7157 + $0x168] sm:$0xff]
        %v7204 = vld [vmem:[%s7157 + $0x170] sm:$0xff]
        %v7205 = vld [vmem:[%s7157 + $0x178] sm:$0xff]
        %v7206 = vld [vmem:[%s7157 + $0x180] sm:$0xff]
        %v7207 = vld [vmem:[%s7157 + $0x188] sm:$0xff]
        %v7208 = vld [vmem:[%s7157 + $0x190] sm:$0xff]
        %v7209 = vld [vmem:[%s7157 + $0x198] sm:$0xff]
        %v7210 = vld [vmem:[%s7157 + $0x1a0] sm:$0xff]
        %v7211 = vld [vmem:[%s7157 + $0x1a8] sm:$0xff]
        %v7212 = vld [vmem:[%s7157 + $0x1b0] sm:$0xff]
        %v7213 = vld [vmem:[%s7157 + $0x1b8] sm:$0xff]
        %v7214 = vld [vmem:[%s7157 + $0x1c0] sm:$0xff]
        %v7215 = vld [vmem:[%s7157 + $0x1c8] sm:$0xff]
        %v7216 = vld [vmem:[%s7157 + $0x1d0] sm:$0xff]
        %v7217 = vld [vmem:[%s7157 + $0x1d8] sm:$0xff]
        %v7218 = vld [vmem:[%s7157 + $0x1e0] sm:$0xff]
        %v7219 = vld [vmem:[%s7157 + $0x1e8] sm:$0xff]
        %v7220 = vld [vmem:[%s7157 + $0x1f0] sm:$0xff]
        %v7221 = vld [vmem:[%s7157 + $0x1f8] sm:$0xff]
        %v7222 = vunpack.c.l.b16 %v7096
        %v7223 = vunpack.c.h.b16 %v7096
        %v7224 = vunpack.c.l.b16 %v7100
        %v7225 = vunpack.c.h.b16 %v7100
        %v7226 = vunpack.c.l.b16 %v7104
        %v7227 = vunpack.c.h.b16 %v7104
        %v7228 = vunpack.c.l.b16 %v7108
        %v7229 = vunpack.c.h.b16 %v7108
        %v7230 = vunpack.c.l.b16 %v7112
        %v7231 = vunpack.c.h.b16 %v7112
        %v7232 = vunpack.c.l.b16 %v7116
        %v7233 = vunpack.c.h.b16 %v7116
        %v7234 = vunpack.c.l.b16 %v7120
        %v7235 = vunpack.c.h.b16 %v7120
        %v7236 = vunpack.c.l.b16 %v7124
        %v7237 = vunpack.c.h.b16 %v7124
        %v7238 = vpack.c.b16 %v7224, %v7222
        %v7239 = vpack.c.b16 %v7225, %v7223
        %v7240 = vpack.c.b16 %v7228, %v7226
        %v7241 = vpack.c.b16 %v7229, %v7227
        %v7242 = vpack.c.b16 %v7232, %v7230
        %v7243 = vpack.c.b16 %v7233, %v7231
        %v7244 = vpack.c.b16 %v7236, %v7234
        %v7245 = vpack.c.b16 %v7237, %v7235
        %v7318 = vunpack.c.l.b16 %v7158
        %v7319 = vunpack.c.h.b16 %v7158
        %v7320 = vunpack.c.l.b16 %v7159
        %v7321 = vunpack.c.h.b16 %v7159
        %v7322 = vunpack.c.l.b16 %v7160
        %v7323 = vunpack.c.h.b16 %v7160
        %v7324 = vunpack.c.l.b16 %v7161
        %v7325 = vunpack.c.h.b16 %v7161
        %v7326 = vunpack.c.l.b16 %v7162
        %v7327 = vunpack.c.h.b16 %v7162
        %v7328 = vunpack.c.l.b16 %v7163
        %v7329 = vunpack.c.h.b16 %v7163
        %v7330 = vunpack.c.l.b16 %v7164
        %v7331 = vunpack.c.h.b16 %v7164
        %v7332 = vunpack.c.l.b16 %v7165
        %v7333 = vunpack.c.h.b16 %v7165
        %v7334 = vunpack.c.l.b16 %v7166
        %v7335 = vunpack.c.h.b16 %v7166
        %v7336 = vunpack.c.l.b16 %v7167
        %v7337 = vunpack.c.h.b16 %v7167
        %v7338 = vunpack.c.l.b16 %v7168
        %v7339 = vunpack.c.h.b16 %v7168
        %v7340 = vunpack.c.l.b16 %v7169
        %v7341 = vunpack.c.h.b16 %v7169
        %v7342 = vunpack.c.l.b16 %v7170
        %v7343 = vunpack.c.h.b16 %v7170
        %v7344 = vunpack.c.l.b16 %v7171
        %v7345 = vunpack.c.h.b16 %v7171
        %v7346 = vunpack.c.l.b16 %v7172
        %v7347 = vunpack.c.h.b16 %v7172
        %v7348 = vunpack.c.l.b16 %v7173
        %v7349 = vunpack.c.h.b16 %v7173
        %v7350 = vunpack.c.l.b16 %v7174
        %v7351 = vunpack.c.h.b16 %v7174
        %v7352 = vunpack.c.l.b16 %v7175
        %v7353 = vunpack.c.h.b16 %v7175
        %v7354 = vunpack.c.l.b16 %v7176
        %v7355 = vunpack.c.h.b16 %v7176
        %v7356 = vunpack.c.l.b16 %v7177
        %v7357 = vunpack.c.h.b16 %v7177
        %v7358 = vunpack.c.l.b16 %v7178
        %v7359 = vunpack.c.h.b16 %v7178
        %v7360 = vunpack.c.l.b16 %v7179
        %v7361 = vunpack.c.h.b16 %v7179
        %v7362 = vunpack.c.l.b16 %v7180
        %v7363 = vunpack.c.h.b16 %v7180
        %v7364 = vunpack.c.l.b16 %v7181
        %v7365 = vunpack.c.h.b16 %v7181
        %v7366 = vunpack.c.l.b16 %v7182
        %v7367 = vunpack.c.h.b16 %v7182
        %v7368 = vunpack.c.l.b16 %v7183
        %v7369 = vunpack.c.h.b16 %v7183
        %v7370 = vunpack.c.l.b16 %v7184
        %v7371 = vunpack.c.h.b16 %v7184
        %v7372 = vunpack.c.l.b16 %v7185
        %v7373 = vunpack.c.h.b16 %v7185
        %v7374 = vunpack.c.l.b16 %v7186
        %v7375 = vunpack.c.h.b16 %v7186
        %v7376 = vunpack.c.l.b16 %v7187
        %v7377 = vunpack.c.h.b16 %v7187
        %v7378 = vunpack.c.l.b16 %v7188
        %v7379 = vunpack.c.h.b16 %v7188
        %v7380 = vunpack.c.l.b16 %v7189
        %v7381 = vunpack.c.h.b16 %v7189
        %v7382 = vunpack.c.l.b16 %v7190
        %v7383 = vunpack.c.h.b16 %v7190
        %v7384 = vunpack.c.l.b16 %v7191
        %v7385 = vunpack.c.h.b16 %v7191
        %v7386 = vunpack.c.l.b16 %v7192
        %v7387 = vunpack.c.h.b16 %v7192
        %v7388 = vunpack.c.l.b16 %v7193
        %v7389 = vunpack.c.h.b16 %v7193
        %v7390 = vunpack.c.l.b16 %v7194
        %v7391 = vunpack.c.h.b16 %v7194
        %v7392 = vunpack.c.l.b16 %v7195
        %v7393 = vunpack.c.h.b16 %v7195
        %v7394 = vunpack.c.l.b16 %v7196
        %v7395 = vunpack.c.h.b16 %v7196
        %v7396 = vunpack.c.l.b16 %v7197
        %v7397 = vunpack.c.h.b16 %v7197
        %v7398 = vunpack.c.l.b16 %v7198
        %v7399 = vunpack.c.h.b16 %v7198
        %v7400 = vunpack.c.l.b16 %v7199
        %v7401 = vunpack.c.h.b16 %v7199
        %v7402 = vunpack.c.l.b16 %v7200
        %v7403 = vunpack.c.h.b16 %v7200
        %v7404 = vunpack.c.l.b16 %v7201
        %v7405 = vunpack.c.h.b16 %v7201
        %v7406 = vunpack.c.l.b16 %v7202
        %v7407 = vunpack.c.h.b16 %v7202
        %v7408 = vunpack.c.l.b16 %v7203
        %v7409 = vunpack.c.h.b16 %v7203
        %v7410 = vunpack.c.l.b16 %v7204
        %v7411 = vunpack.c.h.b16 %v7204
        %v7412 = vunpack.c.l.b16 %v7205
        %v7413 = vunpack.c.h.b16 %v7205
        %v7414 = vunpack.c.l.b16 %v7206
        %v7415 = vunpack.c.h.b16 %v7206
        %v7416 = vunpack.c.l.b16 %v7207
        %v7417 = vunpack.c.h.b16 %v7207
        %v7418 = vunpack.c.l.b16 %v7208
        %v7419 = vunpack.c.h.b16 %v7208
        %v7420 = vunpack.c.l.b16 %v7209
        %v7421 = vunpack.c.h.b16 %v7209
        %v7422 = vunpack.c.l.b16 %v7210
        %v7423 = vunpack.c.h.b16 %v7210
        %v7424 = vunpack.c.l.b16 %v7211
        %v7425 = vunpack.c.h.b16 %v7211
        %v7426 = vunpack.c.l.b16 %v7212
        %v7427 = vunpack.c.h.b16 %v7212
        %v7428 = vunpack.c.l.b16 %v7213
        %v7429 = vunpack.c.h.b16 %v7213
        %v7430 = vunpack.c.l.b16 %v7214
        %v7431 = vunpack.c.h.b16 %v7214
        %v7432 = vunpack.c.l.b16 %v7215
        %v7433 = vunpack.c.h.b16 %v7215
        %v7434 = vunpack.c.l.b16 %v7216
        %v7435 = vunpack.c.h.b16 %v7216
        %v7436 = vunpack.c.l.b16 %v7217
        %v7437 = vunpack.c.h.b16 %v7217
        %v7438 = vunpack.c.l.b16 %v7218
        %v7439 = vunpack.c.h.b16 %v7218
        %v7440 = vunpack.c.l.b16 %v7219
        %v7441 = vunpack.c.h.b16 %v7219
        %v7442 = vunpack.c.l.b16 %v7220
        %v7443 = vunpack.c.h.b16 %v7220
        %v7444 = vunpack.c.l.b16 %v7221
        %v7445 = vunpack.c.h.b16 %v7221
        %v7446 = vpack.c.b16 %v7322, %v7318
        %v7447 = vpack.c.b16 %v7323, %v7319
        %v7448 = vpack.c.b16 %v7324, %v7320
        %v7449 = vpack.c.b16 %v7325, %v7321
        %v7450 = vpack.c.b16 %v7330, %v7326
        %v7451 = vpack.c.b16 %v7331, %v7327
        %v7452 = vpack.c.b16 %v7332, %v7328
        %v7453 = vpack.c.b16 %v7333, %v7329
        %v7454 = vpack.c.b16 %v7338, %v7334
        %v7455 = vpack.c.b16 %v7339, %v7335
        %v7456 = vpack.c.b16 %v7340, %v7336
        %v7457 = vpack.c.b16 %v7341, %v7337
        %v7458 = vpack.c.b16 %v7346, %v7342
        %v7459 = vpack.c.b16 %v7347, %v7343
        %v7460 = vpack.c.b16 %v7348, %v7344
        %v7461 = vpack.c.b16 %v7349, %v7345
        %v7462 = vpack.c.b16 %v7354, %v7350
        %v7463 = vpack.c.b16 %v7355, %v7351
        %v7464 = vpack.c.b16 %v7356, %v7352
        %v7465 = vpack.c.b16 %v7357, %v7353
        %v7466 = vpack.c.b16 %v7362, %v7358
        %v7467 = vpack.c.b16 %v7363, %v7359
        %v7468 = vpack.c.b16 %v7364, %v7360
        %v7469 = vpack.c.b16 %v7365, %v7361
        %v7470 = vpack.c.b16 %v7370, %v7366
        %v7471 = vpack.c.b16 %v7371, %v7367
        %v7472 = vpack.c.b16 %v7372, %v7368
        %v7473 = vpack.c.b16 %v7373, %v7369
        %v7474 = vpack.c.b16 %v7378, %v7374
        %v7475 = vpack.c.b16 %v7379, %v7375
        %v7476 = vpack.c.b16 %v7380, %v7376
        %v7477 = vpack.c.b16 %v7381, %v7377
        %v7478 = vpack.c.b16 %v7386, %v7382
        %v7479 = vpack.c.b16 %v7387, %v7383
        %v7480 = vpack.c.b16 %v7388, %v7384
        %v7481 = vpack.c.b16 %v7389, %v7385
        %v7482 = vpack.c.b16 %v7394, %v7390
        %v7483 = vpack.c.b16 %v7395, %v7391
        %v7484 = vpack.c.b16 %v7396, %v7392
        %v7485 = vpack.c.b16 %v7397, %v7393
        %v7486 = vpack.c.b16 %v7402, %v7398
        %v7487 = vpack.c.b16 %v7403, %v7399
        %v7488 = vpack.c.b16 %v7404, %v7400
        %v7489 = vpack.c.b16 %v7405, %v7401
        %v7490 = vpack.c.b16 %v7410, %v7406
        %v7491 = vpack.c.b16 %v7411, %v7407
        %v7492 = vpack.c.b16 %v7412, %v7408
        %v7493 = vpack.c.b16 %v7413, %v7409
        %v7494 = vpack.c.b16 %v7418, %v7414
        %v7495 = vpack.c.b16 %v7419, %v7415
        %v7496 = vpack.c.b16 %v7420, %v7416
        %v7497 = vpack.c.b16 %v7421, %v7417
        %v7498 = vpack.c.b16 %v7426, %v7422
        %v7499 = vpack.c.b16 %v7427, %v7423
        %v7500 = vpack.c.b16 %v7428, %v7424
        %v7501 = vpack.c.b16 %v7429, %v7425
        %v7502 = vpack.c.b16 %v7434, %v7430
        %v7503 = vpack.c.b16 %v7435, %v7431
        %v7504 = vpack.c.b16 %v7436, %v7432
        %v7505 = vpack.c.b16 %v7437, %v7433
        %v7506 = vpack.c.b16 %v7442, %v7438
        %v7507 = vpack.c.b16 %v7443, %v7439
        %v7508 = vpack.c.b16 %v7444, %v7440
        %v7509 = vpack.c.b16 %v7445, %v7441
        %7574 = vmatprep.subr.bf16.mxu0 %v7447
        %7575 = vmatpush1.bf16.msra.mxu0 %v7446
        %7576 = vmatprep.subr.bf16.mxu0 %v7451
        %7577 = vmatpush1.bf16.msra.mxu0 %v7450
        %7578 = vmatprep.subr.bf16.mxu0 %v7455
        %7579 = vmatpush1.bf16.msra.mxu0 %v7454
        %7580 = vmatprep.subr.bf16.mxu0 %v7459
        %7581 = vmatpush1.bf16.msra.mxu0 %v7458
        %7582 = vmatprep.subr.bf16.mxu0 %v7463
        %7583 = vmatpush1.bf16.msra.mxu0 %v7462
        %7584 = vmatprep.subr.bf16.mxu0 %v7467
        %7585 = vmatpush1.bf16.msra.mxu0 %v7466
        %7586 = vmatprep.subr.bf16.mxu0 %v7471
        %7587 = vmatpush1.bf16.msra.mxu0 %v7470
        %7588 = vmatprep.subr.bf16.mxu0 %v7475
        %7589 = vmatpush1.bf16.msra.mxu0 %v7474
        %7590 = vmatprep.subr.bf16.mxu0 %v7479
        %7591 = vmatpush1.bf16.msra.mxu0 %v7478
        %7592 = vmatprep.subr.bf16.mxu0 %v7483
        %7593 = vmatpush1.bf16.msra.mxu0 %v7482
        %7594 = vmatprep.subr.bf16.mxu0 %v7487
        %7595 = vmatpush1.bf16.msra.mxu0 %v7486
        %7596 = vmatprep.subr.bf16.mxu0 %v7491
        %7597 = vmatpush1.bf16.msra.mxu0 %v7490
        %7598 = vmatprep.subr.bf16.mxu0 %v7495
        %7599 = vmatpush1.bf16.msra.mxu0 %v7494
        %7600 = vmatprep.subr.bf16.mxu0 %v7499
        %7601 = vmatpush1.bf16.msra.mxu0 %v7498
        %7602 = vmatprep.subr.bf16.mxu0 %v7503
        %7603 = vmatpush1.bf16.msra.mxu0 %v7502
        %7604 = vmatprep.subr.bf16.mxu0 %v7507
        %7605 = vmatpush1.bf16.msra.mxu0 %v7506
        %7606 = vmatprep.mubr.bf16.mxu0 %v7239
        %7607 = vmatmul.mubr.bf16.gmra.mrb[0].mxu0 %v7238
        %v7608 = vpop.f32.mrb[0].mxu0
        %v7609 = vadd.f32 0.0, %v7608
        %v7610 = vpop.f32.mrb[0].mxu0
        %v7611 = vadd.f32 0.0, %v7610
        %v7612 = vpop.f32.mrb[0].mxu0
        %v7613 = vadd.f32 0.0, %v7612
        %v7614 = vpop.f32.mrb[0].mxu0
        %v7615 = vadd.f32 0.0, %v7614
        %7616 = vmatprep.mubr.bf16.mxu0 %v7241
        %7617 = vmatmul.mubr.bf16.gmra.mrb[0].mxu0 %v7240
        %v7618 = vpop.f32.mrb[0].mxu0
        %v7619 = vadd.f32 0.0, %v7618
        %v7620 = vpop.f32.mrb[0].mxu0
        %v7621 = vadd.f32 0.0, %v7620
        %v7622 = vpop.f32.mrb[0].mxu0
        %v7623 = vadd.f32 0.0, %v7622
        %v7624 = vpop.f32.mrb[0].mxu0
        %v7625 = vadd.f32 0.0, %v7624
        %7626 = vmatprep.mubr.bf16.mxu0 %v7243
        %7627 = vmatmul.mubr.bf16.gmra.mrb[0].mxu0 %v7242
        %v7628 = vpop.f32.mrb[0].mxu0
        %v7629 = vadd.f32 0.0, %v7628
        %v7630 = vpop.f32.mrb[0].mxu0
        %v7631 = vadd.f32 0.0, %v7630
        %v7632 = vpop.f32.mrb[0].mxu0
        %v7633 = vadd.f32 0.0, %v7632
        %v7634 = vpop.f32.mrb[0].mxu0
        %v7635 = vadd.f32 0.0, %v7634
        %7636 = vmatprep.mubr.bf16.mxu0 %v7245
        %7637 = vmatmul.mubr.bf16.gmra.mrb[0].mxu0 %v7244
        %v7638 = vpop.f32.mrb[0].mxu0
        %v7639 = vadd.f32 0.0, %v7638
        %v7640 = vpop.f32.mrb[0].mxu0
        %v7641 = vadd.f32 0.0, %v7640
        %v7642 = vpop.f32.mrb[0].mxu0
        %v7643 = vadd.f32 0.0, %v7642
        %v7644 = vpop.f32.mrb[0].mxu0
        %v7645 = vadd.f32 0.0, %v7644
        %7646 = vdwg.mxu0
        %7647 = vmatprep.subr.bf16.mxu0 %v7449
        %7648 = vmatpush1.bf16.msra.mxu0 %v7448
        %7649 = vmatprep.subr.bf16.mxu0 %v7453
        %7650 = vmatpush1.bf16.msra.mxu0 %v7452
        %7651 = vmatprep.subr.bf16.mxu0 %v7457
        %7652 = vmatpush1.bf16.msra.mxu0 %v7456
        %7653 = vmatprep.subr.bf16.mxu0 %v7461
        %7654 = vmatpush1.bf16.msra.mxu0 %v7460
        %7655 = vmatprep.subr.bf16.mxu0 %v7465
        %7656 = vmatpush1.bf16.msra.mxu0 %v7464
        %7657 = vmatprep.subr.bf16.mxu0 %v7469
        %7658 = vmatpush1.bf16.msra.mxu0 %v7468
        %7659 = vmatprep.subr.bf16.mxu0 %v7473
        %7660 = vmatpush1.bf16.msra.mxu0 %v7472
        %7661 = vmatprep.subr.bf16.mxu0 %v7477
        %7662 = vmatpush1.bf16.msra.mxu0 %v7476
        %7663 = vmatprep.subr.bf16.mxu0 %v7481
        %7664 = vmatpush1.bf16.msra.mxu0 %v7480
        %7665 = vmatprep.subr.bf16.mxu0 %v7485
        %7666 = vmatpush1.bf16.msra.mxu0 %v7484
        %7667 = vmatprep.subr.bf16.mxu0 %v7489
        %7668 = vmatpush1.bf16.msra.mxu0 %v7488
        %7669 = vmatprep.subr.bf16.mxu0 %v7493
        %7670 = vmatpush1.bf16.msra.mxu0 %v7492
        %7671 = vmatprep.subr.bf16.mxu0 %v7497
        %7672 = vmatpush1.bf16.msra.mxu0 %v7496
        %7673 = vmatprep.subr.bf16.mxu0 %v7501
        %7674 = vmatpush1.bf16.msra.mxu0 %v7500
        %7675 = vmatprep.subr.bf16.mxu0 %v7505
        %7676 = vmatpush1.bf16.msra.mxu0 %v7504
        %7677 = vmatprep.subr.bf16.mxu0 %v7509
        %7678 = vmatpush1.bf16.msra.mxu0 %v7508
        %7679 = vmatprep.mubr.bf16.mxu0 %v7239
        %7680 = vmatmul.mubr.bf16.gmra.mrb[0].mxu0 %v7238
        %v7681 = vpop.f32.mrb[0].mxu0
        %v7682 = vadd.f32 0.0, %v7681
        %v7683 = vpop.f32.mrb[0].mxu0
        %v7684 = vadd.f32 0.0, %v7683
        %v7685 = vpop.f32.mrb[0].mxu0
        %v7686 = vadd.f32 0.0, %v7685
        %v7687 = vpop.f32.mrb[0].mxu0
        %v7688 = vadd.f32 0.0, %v7687
        %7689 = vmatprep.mubr.bf16.mxu0 %v7241
        %7690 = vmatmul.mubr.bf16.gmra.mrb[0].mxu0 %v7240
        %v7691 = vpop.f32.mrb[0].mxu0
        %v7692 = vadd.f32 0.0, %v7691
        %v7693 = vpop.f32.mrb[0].mxu0
        %v7694 = vadd.f32 0.0, %v7693
        %v7695 = vpop.f32.mrb[0].mxu0
        %v7696 = vadd.f32 0.0, %v7695
        %v7697 = vpop.f32.mrb[0].mxu0
        %v7698 = vadd.f32 0.0, %v7697
        %7699 = vmatprep.mubr.bf16.mxu0 %v7243
        %7700 = vmatmul.mubr.bf16.gmra.mrb[0].mxu0 %v7242
        %v7701 = vpop.f32.mrb[0].mxu0
        %v7702 = vadd.f32 0.0, %v7701
        %v7703 = vpop.f32.mrb[0].mxu0
        %v7704 = vadd.f32 0.0, %v7703
        %v7705 = vpop.f32.mrb[0].mxu0
        %v7706 = vadd.f32 0.0, %v7705
        %v7707 = vpop.f32.mrb[0].mxu0
        %v7708 = vadd.f32 0.0, %v7707
        %7709 = vmatprep.mubr.bf16.mxu0 %v7245
        %7710 = vmatmul.mubr.bf16.gmra.mrb[0].mxu0 %v7244
        %v7711 = vpop.f32.mrb[0].mxu0
        %v7712 = vadd.f32 0.0, %v7711
        %v7713 = vpop.f32.mrb[0].mxu0
        %v7714 = vadd.f32 0.0, %v7713
        %v7715 = vpop.f32.mrb[0].mxu0
        %v7716 = vadd.f32 0.0, %v7715
        %v7717 = vpop.f32.mrb[0].mxu0
        %v7718 = vadd.f32 0.0, %v7717
        %7719 = vdwg.mxu0
        %v7720 = vadd.f32 %v7125, %v7609
        %v7721 = vadd.f32 %v7126, %v7611
        %v7722 = vadd.f32 %v7127, %v7682
        %v7723 = vadd.f32 %v7128, %v7684
        %v7724 = vadd.f32 %v7129, %v7613
        %v7725 = vadd.f32 %v7130, %v7615
        %v7726 = vadd.f32 %v7131, %v7686
        %v7727 = vadd.f32 %v7132, %v7688
        %v7728 = vadd.f32 %v7133, %v7619
        %v7729 = vadd.f32 %v7134, %v7621
        %v7730 = vadd.f32 %v7135, %v7692
        %v7731 = vadd.f32 %v7136, %v7694
        %v7732 = vadd.f32 %v7137, %v7623
        %v7733 = vadd.f32 %v7138, %v7625
        %v7734 = vadd.f32 %v7139, %v7696
        %v7735 = vadd.f32 %v7140, %v7698
        %v7736 = vadd.f32 %v7141, %v7629
        %v7737 = vadd.f32 %v7142, %v7631
        %v7738 = vadd.f32 %v7143, %v7702
        %v7739 = vadd.f32 %v7144, %v7704
        %v7740 = vadd.f32 %v7145, %v7633
        %v7741 = vadd.f32 %v7146, %v7635
        %v7742 = vadd.f32 %v7147, %v7706
        %v7743 = vadd.f32 %v7148, %v7708
        %v7744 = vadd.f32 %v7149, %v7639
        %v7745 = vadd.f32 %v7150, %v7641
        %v7746 = vadd.f32 %v7151, %v7712
        %v7747 = vadd.f32 %v7152, %v7714
        %v7748 = vadd.f32 %v7153, %v7643
        %v7749 = vadd.f32 %v7154, %v7645
        %v7750 = vadd.f32 %v7155, %v7716
        %v7751 = vadd.f32 %v7156, %v7718
        %7752 = vst [vmem:[#allocation3] sm:$0xff] %v7720
        %7753 = vst [vmem:[#allocation3 + $0x8] sm:$0xff] %v7721
        %7754 = vst [vmem:[#allocation3 + $0x10] sm:$0xff] %v7722
        %7755 = vst [vmem:[#allocation3 + $0x18] sm:$0xff] %v7723
        %7756 = vst [vmem:[#allocation3 + $0x20] sm:$0xff] %v7724
        %7757 = vst [vmem:[#allocation3 + $0x28] sm:$0xff] %v7725
        %7758 = vst [vmem:[#allocation3 + $0x30] sm:$0xff] %v7726
        %7759 = vst [vmem:[#allocation3 + $0x38] sm:$0xff] %v7727
        %7760 = vst [vmem:[#allocation3 + $0x40] sm:$0xff] %v7728
        %7761 = vst [vmem:[#allocation3 + $0x48] sm:$0xff] %v7729
        %7762 = vst [vmem:[#allocation3 + $0x50] sm:$0xff] %v7730
        %7763 = vst [vmem:[#allocation3 + $0x58] sm:$0xff] %v7731
        %7764 = vst [vmem:[#allocation3 + $0x60] sm:$0xff] %v7732
        %7765 = vst [vmem:[#allocation3 + $0x68] sm:$0xff] %v7733
        %7766 = vst [vmem:[#allocation3 + $0x70] sm:$0xff] %v7734
        %7767 = vst [vmem:[#allocation3 + $0x78] sm:$0xff] %v7735
        %7768 = vst [vmem:[#allocation3 + $0x80] sm:$0xff] %v7736
        %7769 = vst [vmem:[#allocation3 + $0x88] sm:$0xff] %v7737
        %7770 = vst [vmem:[#allocation3 + $0x90] sm:$0xff] %v7738
        %7771 = vst [vmem:[#allocation3 + $0x98] sm:$0xff] %v7739
        %7772 = vst [vmem:[#allocation3 + $0xa0] sm:$0xff] %v7740
        %7773 = vst [vmem:[#allocation3 + $0xa8] sm:$0xff] %v7741
        %7774 = vst [vmem:[#allocation3 + $0xb0] sm:$0xff] %v7742
        %7775 = vst [vmem:[#allocation3 + $0xb8] sm:$0xff] %v7743
        %7776 = vst [vmem:[#allocation3 + $0xc0] sm:$0xff] %v7744
        %7777 = vst [vmem:[#allocation3 + $0xc8] sm:$0xff] %v7745
        %7778 = vst [vmem:[#allocation3 + $0xd0] sm:$0xff] %v7746
        %7779 = vst [vmem:[#allocation3 + $0xd8] sm:$0xff] %v7747
        %7780 = vst [vmem:[#allocation3 + $0xe0] sm:$0xff] %v7748
        %7781 = vst [vmem:[#allocation3 + $0xe8] sm:$0xff] %v7749
        %7782 = vst [vmem:[#allocation3 + $0xf0] sm:$0xff] %v7750
        %7783 = vst [vmem:[#allocation3 + $0xf8] sm:$0xff] %v7751
        %v7784 = vld [vmem:[#allocation3] sm:$0xff]
        %v7785 = vld [vmem:[#allocation3 + $0x8] sm:$0xff]
        %v7786 = vld [vmem:[#allocation3 + $0x10] sm:$0xff]
        %v7787 = vld [vmem:[#allocation3 + $0x18] sm:$0xff]
        %v7788 = vld [vmem:[#allocation3 + $0x20] sm:$0xff]
        %v7789 = vld [vmem:[#allocation3 + $0x28] sm:$0xff]
        %v7790 = vld [vmem:[#allocation3 + $0x30] sm:$0xff]
        %v7791 = vld [vmem:[#allocation3 + $0x38] sm:$0xff]
        %v7792 = vld [vmem:[#allocation3 + $0x40] sm:$0xff]
        %v7793 = vld [vmem:[#allocation3 + $0x48] sm:$0xff]
        %v7794 = vld [vmem:[#allocation3 + $0x50] sm:$0xff]
        %v7795 = vld [vmem:[#allocation3 + $0x58] sm:$0xff]
        %v7796 = vld [vmem:[#allocation3 + $0x60] sm:$0xff]
        %v7797 = vld [vmem:[#allocation3 + $0x68] sm:$0xff]
        %v7798 = vld [vmem:[#allocation3 + $0x70] sm:$0xff]
        %v7799 = vld [vmem:[#allocation3 + $0x78] sm:$0xff]
        %v7800 = vld [vmem:[#allocation3 + $0x80] sm:$0xff]
        %v7801 = vld [vmem:[#allocation3 + $0x88] sm:$0xff]
        %v7802 = vld [vmem:[#allocation3 + $0x90] sm:$0xff]
        %v7803 = vld [vmem:[#allocation3 + $0x98] sm:$0xff]
        %v7804 = vld [vmem:[#allocation3 + $0xa0] sm:$0xff]
        %v7805 = vld [vmem:[#allocation3 + $0xa8] sm:$0xff]
        %v7806 = vld [vmem:[#allocation3 + $0xb0] sm:$0xff]
        %v7807 = vld [vmem:[#allocation3 + $0xb8] sm:$0xff]
        %v7808 = vld [vmem:[#allocation3 + $0xc0] sm:$0xff]
        %v7809 = vld [vmem:[#allocation3 + $0xc8] sm:$0xff]
        %v7810 = vld [vmem:[#allocation3 + $0xd0] sm:$0xff]
        %v7811 = vld [vmem:[#allocation3 + $0xd8] sm:$0xff]
        %v7812 = vld [vmem:[#allocation3 + $0xe0] sm:$0xff]
        %v7813 = vld [vmem:[#allocation3 + $0xe8] sm:$0xff]
        %v7814 = vld [vmem:[#allocation3 + $0xf0] sm:$0xff]
        %v7815 = vld [vmem:[#allocation3 + $0xf8] sm:$0xff]
        %v7816 = vld [vmem:[#allocation13] sm:$0xf]
        %v7818 = vlaneseq
        %v7819 = vshrl.u32 %v7818, 7
        %v7820 = vsub.s32 0, %v7819
        %v7821 = vrot.slane %v7816, %v7820
        %v7822 = vlaneseq
        %v7823 = vshrl.u32 %v7822, 7
        %v7824 = vsub.s32 1, %v7823
        %v7825 = vrot.slane %v7816, %v7824
        %v7826 = vlaneseq
        %v7827 = vshrl.u32 %v7826, 7
        %v7828 = vsub.s32 2, %v7827
        %v7829 = vrot.slane %v7816, %v7828
        %v7830 = vlaneseq
        %v7831 = vshrl.u32 %v7830, 7
        %v7832 = vsub.s32 3, %v7831
        %v7833 = vrot.slane %v7816, %v7832
        %v7838 = vadd.f32 %v7784, %v7821
        %v7839 = vadd.f32 %v7785, %v7825
        %v7840 = vadd.f32 %v7786, %v7829
        %v7841 = vadd.f32 %v7787, %v7833
        %v7842 = vadd.f32 %v7788, %v7821
        %v7843 = vadd.f32 %v7789, %v7825
        %v7844 = vadd.f32 %v7790, %v7829
        %v7845 = vadd.f32 %v7791, %v7833
        %v7846 = vadd.f32 %v7792, %v7821
        %v7847 = vadd.f32 %v7793, %v7825
        %v7848 = vadd.f32 %v7794, %v7829
        %v7849 = vadd.f32 %v7795, %v7833
        %v7850 = vadd.f32 %v7796, %v7821
        %v7851 = vadd.f32 %v7797, %v7825
        %v7852 = vadd.f32 %v7798, %v7829
        %v7853 = vadd.f32 %v7799, %v7833
        %v7854 = vadd.f32 %v7800, %v7821
        %v7855 = vadd.f32 %v7801, %v7825
        %v7856 = vadd.f32 %v7802, %v7829
        %v7857 = vadd.f32 %v7803, %v7833
        %v7858 = vadd.f32 %v7804, %v7821
        %v7859 = vadd.f32 %v7805, %v7825
        %v7860 = vadd.f32 %v7806, %v7829
        %v7861 = vadd.f32 %v7807, %v7833
        %v7862 = vadd.f32 %v7808, %v7821
        %v7863 = vadd.f32 %v7809, %v7825
        %v7864 = vadd.f32 %v7810, %v7829
        %v7865 = vadd.f32 %v7811, %v7833
        %v7866 = vadd.f32 %v7812, %v7821
        %v7867 = vadd.f32 %v7813, %v7825
        %v7868 = vadd.f32 %v7814, %v7829
        %v7869 = vadd.f32 %v7815, %v7833
        %v7870 = vmax.f32 %v7838, 0.0
        %v7871 = vmax.f32 %v7839, 0.0
        %v7872 = vmax.f32 %v7840, 0.0
        %v7873 = vmax.f32 %v7841, 0.0
        %v7874 = vmax.f32 %v7842, 0.0
        %v7875 = vmax.f32 %v7843, 0.0
        %v7876 = vmax.f32 %v7844, 0.0
        %v7877 = vmax.f32 %v7845, 0.0
        %v7878 = vmax.f32 %v7846, 0.0
        %v7879 = vmax.f32 %v7847, 0.0
        %v7880 = vmax.f32 %v7848, 0.0
        %v7881 = vmax.f32 %v7849, 0.0
        %v7882 = vmax.f32 %v7850, 0.0
        %v7883 = vmax.f32 %v7851, 0.0
        %v7884 = vmax.f32 %v7852, 0.0
        %v7885 = vmax.f32 %v7853, 0.0
        %v7886 = vmax.f32 %v7854, 0.0
        %v7887 = vmax.f32 %v7855, 0.0
        %v7888 = vmax.f32 %v7856, 0.0
        %v7889 = vmax.f32 %v7857, 0.0
        %v7890 = vmax.f32 %v7858, 0.0
        %v7891 = vmax.f32 %v7859, 0.0
        %v7892 = vmax.f32 %v7860, 0.0
        %v7893 = vmax.f32 %v7861, 0.0
        %v7894 = vmax.f32 %v7862, 0.0
        %v7895 = vmax.f32 %v7863, 0.0
        %v7896 = vmax.f32 %v7864, 0.0
        %v7897 = vmax.f32 %v7865, 0.0
        %v7898 = vmax.f32 %v7866, 0.0
        %v7899 = vmax.f32 %v7867, 0.0
        %v7900 = vmax.f32 %v7868, 0.0
        %v7901 = vmax.f32 %v7869, 0.0
        %v7902 = vadd.f32 %v7870, %v7871
        %v7903 = vadd.f32 %v7902, %v7872
        %v7904 = vadd.f32 %v7903, %v7873
        %7905 = vadd.xlane.f32.xlu0 %v7904
        %v7906 = vpop.xlane.xlu0 %7905
        %v7907 = vadd.f32 %v7874, %v7875
        %v7908 = vadd.f32 %v7907, %v7876
        %v7909 = vadd.f32 %v7908, %v7877
        %7910 = vadd.xlane.f32.xlu0 %v7909
        %v7911 = vpop.xlane.xlu0 %7910
        %v7912 = vadd.f32 %v7878, %v7879
        %v7913 = vadd.f32 %v7912, %v7880
        %v7914 = vadd.f32 %v7913, %v7881
        %7915 = vadd.xlane.f32.xlu0 %v7914
        %v7916 = vpop.xlane.xlu0 %7915
        %v7917 = vadd.f32 %v7882, %v7883
        %v7918 = vadd.f32 %v7917, %v7884
        %v7919 = vadd.f32 %v7918, %v7885
        %7920 = vadd.xlane.f32.xlu0 %v7919
        %v7921 = vpop.xlane.xlu0 %7920
        %v7922 = vadd.f32 %v7886, %v7887
        %v7923 = vadd.f32 %v7922, %v7888
        %v7924 = vadd.f32 %v7923, %v7889
        %7925 = vadd.xlane.f32.xlu0 %v7924
        %v7926 = vpop.xlane.xlu0 %7925
        %v7927 = vadd.f32 %v7890, %v7891
        %v7928 = vadd.f32 %v7927, %v7892
        %v7929 = vadd.f32 %v7928, %v7893
        %7930 = vadd.xlane.f32.xlu0 %v7929
        %v7931 = vpop.xlane.xlu0 %7930
        %v7932 = vadd.f32 %v7894, %v7895
        %v7933 = vadd.f32 %v7932, %v7896
        %v7934 = vadd.f32 %v7933, %v7897
        %7935 = vadd.xlane.f32.xlu0 %v7934
        %v7936 = vpop.xlane.xlu0 %7935
        %v7937 = vadd.f32 %v7898, %v7899
        %v7938 = vadd.f32 %v7937, %v7900
        %v7939 = vadd.f32 %v7938, %v7901
        %7940 = vadd.xlane.f32.xlu0 %v7939
        %v7941 = vpop.xlane.xlu0 %7940
        %v7942 = vmul.f32 %v338, %v7906
        %v7943 = vmul.f32 %v339, %v7906
        %v7944 = vmul.f32 %v340, %v7906
        %v7945 = vmul.f32 %v341, %v7906
        %v7946 = vmul.f32 %v342, %v7911
        %v7947 = vmul.f32 %v343, %v7911
        %v7948 = vmul.f32 %v344, %v7911
        %v7949 = vmul.f32 %v345, %v7911
        %v7950 = vmul.f32 %v346, %v7916
        %v7951 = vmul.f32 %v347, %v7916
        %v7952 = vmul.f32 %v348, %v7916
        %v7953 = vmul.f32 %v349, %v7916
        %v7954 = vmul.f32 %v350, %v7921
        %v7955 = vmul.f32 %v351, %v7921
        %v7956 = vmul.f32 %v352, %v7921
        %v7957 = vmul.f32 %v353, %v7921
        %v7958 = vmul.f32 %v354, %v7926
        %v7959 = vmul.f32 %v355, %v7926
        %v7960 = vmul.f32 %v356, %v7926
        %v7961 = vmul.f32 %v357, %v7926
        %v7962 = vmul.f32 %v358, %v7931
        %v7963 = vmul.f32 %v359, %v7931
        %v7964 = vmul.f32 %v360, %v7931
        %v7965 = vmul.f32 %v361, %v7931
        %v7966 = vmul.f32 %v362, %v7936
        %v7967 = vmul.f32 %v363, %v7936
        %v7968 = vmul.f32 %v364, %v7936
        %v7969 = vmul.f32 %v365, %v7936
        %v7970 = vmul.f32 %v366, %v7941
        %v7971 = vmul.f32 %v367, %v7941
        %v7972 = vmul.f32 %v368, %v7941
        %v7973 = vmul.f32 %v369, %v7941
        %7974 = vst [vmem:[%s336] sm:$0xff] %v7942
        %7975 = vst [vmem:[%s336 + $0x8] sm:$0xff] %v7943
        %7976 = vst [vmem:[%s336 + $0x10] sm:$0xff] %v7944
        %7977 = vst [vmem:[%s336 + $0x18] sm:$0xff] %v7945
        %7978 = vst [vmem:[%s336 + $0x20] sm:$0xff] %v7946
        %7979 = vst [vmem:[%s336 + $0x28] sm:$0xff] %v7947
        %7980 = vst [vmem:[%s336 + $0x30] sm:$0xff] %v7948
        %7981 = vst [vmem:[%s336 + $0x38] sm:$0xff] %v7949
        %7982 = vst [vmem:[%s336 + $0x40] sm:$0xff] %v7950
        %7983 = vst [vmem:[%s336 + $0x48] sm:$0xff] %v7951
        %7984 = vst [vmem:[%s336 + $0x50] sm:$0xff] %v7952
        %7985 = vst [vmem:[%s336 + $0x58] sm:$0xff] %v7953
        %7986 = vst [vmem:[%s336 + $0x60] sm:$0xff] %v7954
        %7987 = vst [vmem:[%s336 + $0x68] sm:$0xff] %v7955
        %7988 = vst [vmem:[%s336 + $0x70] sm:$0xff] %v7956
        %7989 = vst [vmem:[%s336 + $0x78] sm:$0xff] %v7957
        %7990 = vst [vmem:[%s336 + $0x80] sm:$0xff] %v7958
        %7991 = vst [vmem:[%s336 + $0x88] sm:$0xff] %v7959
        %7992 = vst [vmem:[%s336 + $0x90] sm:$0xff] %v7960
        %7993 = vst [vmem:[%s336 + $0x98] sm:$0xff] %v7961
        %7994 = vst [vmem:[%s336 + $0xa0] sm:$0xff] %v7962
        %7995 = vst [vmem:[%s336 + $0xa8] sm:$0xff] %v7963
        %7996 = vst [vmem:[%s336 + $0xb0] sm:$0xff] %v7964
        %7997 = vst [vmem:[%s336 + $0xb8] sm:$0xff] %v7965
        %7998 = vst [vmem:[%s336 + $0xc0] sm:$0xff] %v7966
        %7999 = vst [vmem:[%s336 + $0xc8] sm:$0xff] %v7967
        %8000 = vst [vmem:[%s336 + $0xd0] sm:$0xff] %v7968
        %8001 = vst [vmem:[%s336 + $0xd8] sm:$0xff] %v7969
        %8002 = vst [vmem:[%s336 + $0xe0] sm:$0xff] %v7970
        %8003 = vst [vmem:[%s336 + $0xe8] sm:$0xff] %v7971
        %8004 = vst [vmem:[%s336 + $0xf0] sm:$0xff] %v7972
        %8005 = vst [vmem:[%s336 + $0xf8] sm:$0xff] %v7973
        %s8006 = sand.u32 %s165, 1
        %s8007 = scalar_lea.sflag [#allocation6], %s8006
        %s8008 = sand.u32 %s165, 1
        %s8009 = smul.addr %s8008, 256
        %s8010 = scalar_lea.vmem [#allocation15], %s8009
        // Predicated region
        $region69: #{spatial_attention_forward.1} parent=43 // pred_check
          %p8011 = pneg %p175
        $region70: #{spatial_attention_forward.1} parent=43 // pred_check_branch
          %8013 = sbr.rel (%p8011) target = $region72
        $region71: #{spatial_attention_forward.1} parent=43 // pred_region
          %s8015 = ssub.s32 4096, 4096
          %8016 = vsyncadd %s8007, %s8015
          %s8017 = smul.addr %s26, 32
          %s8018 = smul.addr %s8017, 128
          %s8019 = scalar_lea.hbm %s6, %s8018
          %s8020 = sshll.u32 %s8010, 4
          %s8021 = int_to_ptr.vmem [resolvable:$true] %s8020
          %8026 = dma.vmem_to_hbm [thread:$0]  %s8021, 4096, %s8019, %s8007, 512, 512, 32
        $region72: #{spatial_attention_forward.1} parent=43 // pred_fallthru
          _
      $region44: #{spatial_attention_forward.1} parent=5 // pred_fallthru
        _
      %p8027 = scmp.le.s32.totalorder 2, %s21
      // Predicated region
      $region73: #{spatial_attention_forward.1} parent=5 // pred_check
        %p8028 = pneg %p8027
      $region74: #{spatial_attention_forward.1} parent=5 // pred_check_branch
        %8030 = sbr.rel (%p8028) target = $region76
      $region75: #{spatial_attention_forward.1} parent=5 // pred_region
        %s8031 = ssub.s32 %s21, 2
        // Predicated region
        $region77: #{spatial_attention_forward.1} parent=75 // pred_check
          %p8032 = pneg %p181
        $region78: #{spatial_attention_forward.1} parent=75 // pred_check_branch
          %8034 = sbr.rel (%p8032) target = $region80
        $region79: #{spatial_attention_forward.1} parent=75 // pred_region
          %s8035 = sand.u32 %s166, 1
          %s8036 = scalar_lea.sflag [#allocation6], %s8035
          %s8037 = sand.u32 %s166, 1
          %s8038 = smul.addr %s8037, 256
          %s8039 = scalar_lea.vmem [#allocation15], %s8038
          %8040 = dma.done %s8036, 4096
        $region80: #{spatial_attention_forward.1} parent=75 // pred_fallthru
          _
      $region76: #{spatial_attention_forward.1} parent=5 // pred_fallthru
        _
    $region6: #{spatial_attention_forward.1} parent=1 // loop_footer
      %s25 = sadd.s32 1, %s21
    $region7: #{spatial_attention_forward.1} parent=1 // loop_footer_branch
      %20 = sbr.rel target = $region3
    $region8: #{spatial_attention_forward.1} parent=1 // loop_exit
      _
    %8041 = vsyncpa [#allocation5], 1
    %s8042 = scalar_lea.sflag [#allocation5], 1
    %8043 = vsyncpa %s8042, 1
    %8044 = vsyncpa [#allocation8], 1
    %8045 = vsyncpa [#allocation11], 1
    %8046 = vsyncpa [#allocation14], 1
    %8047 = vsyncpa [#allocation6], 1
    %s8048 = scalar_lea.sflag [#allocation6], 1
    %8049 = vsyncpa %s8048, 1

</llo_original>
